<compile_context>
chip_gen: v5e
topology: v5e:2x2
jax: 0.10.0
libtpu: 0.0.40
codegen_flags: <defaults>
</compile_context>

<pallas_src>
import math
from functools import partial

import jax
import jax.numpy as jnp
import numpy as np
from jax.experimental import pallas as pl
from jax.experimental.pallas import tpu as pltpu

HID = 256
EPS = 1e-5
N_PARAMS = 40


# ----------------------------------------------------------------------------
# Kernel
# ----------------------------------------------------------------------------
def _icm_kernel(sn_ref, act_ref, w_in_ref, w_early_ref, w_act_ref, w_out_ref,
                b_ref, bo_ref, w_late_hbm,
                real_out, pred_out, act_out,
                w_late, dma_sem):
    # Kick off the DMA of the "late" weights (residual + both forward nets,
    # ~1.5 MB bf16) immediately so it overlaps with the feature-extractor and
    # inverse-net matmuls below instead of being exposed before the body runs.
    late_cp = pltpu.make_async_copy(w_late_hbm, w_late, dma_sem)
    late_cp.start()

    B = real_out.shape[0]

    def bias(i):                              # (1, 256) f32 row of the stack
        return b_ref[pl.ds(i, 1), :]

    def swish(x):                             # x * sigmoid(x); exp/rcp on EUP
        return x * pl.reciprocal(1.0 + jnp.exp(-x), approx=False)

    def mm(x, w):                             # bf16 MXU matmul, f32 accumulate
        return jnp.dot(x.astype(jnp.bfloat16), w,
                       preferred_element_type=jnp.float32)

    def bn(x, gi, bi):                        # BatchNorm1d, training-mode stats
        mean = jnp.mean(x, axis=0, keepdims=True)
        var = jnp.mean((x - mean) ** 2, axis=0, keepdims=True)
        return (x - mean) * jax.lax.rsqrt(var + EPS) * bias(gi) + bias(bi)

    sn = sn_ref[...]                          # (2B, in) f32
    action = act_ref[...].astype(jnp.bfloat16)   # (B, k_pad), zero padded

    # ---- feature extractor on stacked [state ; next_state] ------------------
    h = swish(mm(sn, w_in_ref[...]) + bias(0))
    h = swish(mm(h, w_early_ref[0]) + bias(1))
    feats = mm(h, w_early_ref[1]) + bias(2)   # (2B, 256) f32
    enc_s = feats[:B, :]
    enc_ns = feats[B:, :]

    # ---- inverse net: Lin -> BN -> Swish -> Lin -> BN -> Swish -> Lin -------
    h = mm(enc_s, w_early_ref[2]) + mm(enc_ns, w_early_ref[3]) + bias(3)
    h = swish(bn(h, 4, 5))
    h = mm(h, w_early_ref[4]) + bias(6)
    h = swish(bn(h, 7, 8))
    pred_action = mm(h, w_out_ref[...]) + bo_ref[...]   # (B, out_pad)

    real_out[...] = enc_ns
    act_out[...] = pred_action

    # ---- single fused action matmul: the 3 hoisted (action @ W + b) terms ---
    act_all = mm(action, w_act_ref[...])      # (B, 3*256)
    act_res = act_all[:, 0 * HID:1 * HID] + bias(9)    # shared residual, L0
    act_f1 = act_all[:, 1 * HID:2 * HID] + bias(11)    # forward_net_1, L0
    act_f2 = act_all[:, 2 * HID:3 * HID] + bias(16)    # forward_net_2, L0

    # Late weights are only needed from this point on.
    late_cp.wait()

    def fwd_net(x, act_term, wb, bb):
        h = swish(mm(x, w_late[wb]) + act_term)
        for j in range(1, 5):
            h = mm(h, w_late[wb + j]) + bias(bb + j)
            if j < 4:
                h = swish(h)
        return h

    # Hoist loop-invariant loads out of the fully-unrolled residual loop
    # (JAX does not CSE them; this chain is the serial critical path).
    w_res0 = w_late[0]
    w_res1 = w_late[1]
    b_res1 = bias(10)

    def res_block(x):                         # shared weights for all 8 blocks
        h = swish(mm(x, w_res0) + act_res)
        return mm(h, w_res1) + b_res1

    f = fwd_net(enc_s, act_f1, 2, 11)         # forward_net_1
    for _ in range(4):                        # resnet_time = 4
        t = res_block(f)
        f = res_block(t) + f
    pred_out[...] = fwd_net(f, act_f2, 7, 16)  # forward_net_2


# ----------------------------------------------------------------------------
# Host-side parameter packing and wrapper
# ----------------------------------------------------------------------------
def pack_params(params, output_size):
    p = params
    bf = jnp.bfloat16
    out_pad = -(-output_size // 128) * 128     # lane pad for pred_action
    k_pad = -(-output_size // 32) * 32         # contraction pad for action matmul

    # "Early" 256x256 weights: everything needed before the residual chain.
    early = [
        p[2], p[4],                          # feature L1, L2
        p[6][:HID, :], p[6][HID:, :],        # inverse L0 split (enc_s / enc_ns)
        p[10],                               # inverse L1
    ]
    w_early = jnp.stack(early).astype(bf)    # (5, 256, 256) bf16

    # "Late" 256x256 weights: residual block + both forward nets. DMA'd
    # manually inside the kernel so the copy overlaps the early compute.
    late = [
        p[16][:HID, :], p[18],                        # shared residual L0, L1
        p[20][:HID, :], p[22], p[24], p[26], p[28],   # forward_net_1 L0..L4
        p[30][:HID, :], p[32], p[34], p[36], p[38],   # forward_net_2 L0..L4
    ]
    w_late = jnp.stack(late).astype(bf)      # (12, 256, 256) bf16

    # Action-row blocks of the three concat layers, fused into a single
    # (k_pad, 3*256) matrix so the three hoisted action matmuls become one.
    w_act = jnp.concatenate([p[16][HID:, :], p[20][HID:, :], p[30][HID:, :]],
                            axis=1)                           # (out, 768)
    w_act = jnp.pad(w_act, ((0, k_pad - output_size), (0, 0))).astype(bf)

    b_list = [p[1], p[3], p[5],                        # feature biases
              p[7], p[8], p[9],                        # inv b0, gamma1, beta1
              p[11], p[12], p[13],                     # inv b1, gamma2, beta2
              p[17], p[19],                            # residual b0, b1
              p[21], p[23], p[25], p[27], p[29],       # fwd1 b0..b4
              p[31], p[33], p[35], p[37], p[39]]       # fwd2 b0..b4
    assert len(b_list) == 21
    b_sq = jnp.concatenate(b_list, axis=0)             # (21, 256) f32

    w_out = jnp.pad(p[14], ((0, 0), (0, out_pad - output_size))).astype(bf)
    b_out = jnp.pad(p[15], ((0, 0), (0, out_pad - output_size)))

    return {"w_in": p[0].astype(bf), "w_early": w_early, "w_late": w_late,
            "w_act": w_act, "w_out": w_out, "b_sq": b_sq, "b_out": b_out}


@partial(jax.jit, static_argnames=("output_size",))
def icm_forward(state, next_state, action, packed, *, output_size):
    B = state.shape[0]
    sn = jnp.concatenate([state, next_state], axis=0)       # (2B, in)
    k_pad = packed["w_act"].shape[0]
    act_p = jnp.pad(action, ((0, 0), (0, k_pad - action.shape[1])))
    out_pad = packed["w_out"].shape[1]

    inputs = (sn, act_p, packed["w_in"], packed["w_early"], packed["w_act"],
              packed["w_out"], packed["b_sq"], packed["b_out"],
              packed["w_late"])

    def vmem():
        return pl.BlockSpec(memory_space=pltpu.MemorySpace.VMEM)

    out_shape = (
        jax.ShapeDtypeStruct((B, HID), jnp.float32),        # real_next_state_feature
        jax.ShapeDtypeStruct((B, HID), jnp.float32),        # pred_next_state_feature
        jax.ShapeDtypeStruct((B, out_pad), jnp.float32),    # pred_action (lane padded)
    )
    real, pred, pact = pl.pallas_call(
        _icm_kernel,
        out_shape=out_shape,
        # No grid: the kernel runs once; every VMEM input is copied in exactly
        # once (no double-buffering); the "late" weight stack stays in HBM
        # (pl.ANY) and is DMA'd manually inside the kernel.
        in_specs=[vmem() for _ in range(8)]
                 + [pl.BlockSpec(memory_space=pl.ANY)],
        out_specs=tuple(vmem() for _ in range(3)),
        scratch_shapes=[
            pltpu.VMEM(packed["w_late"].shape, jnp.bfloat16),
            pltpu.SemaphoreType.DMA,
        ],
        compiler_params=pltpu.CompilerParams(vmem_limit_bytes=32 << 20),
    )(*inputs)
    return real, pred, pact[:, :output_size]


# ----------------------------------------------------------------------------
# Parameter initialization (PyTorch-like layout: 40 raw f32 tensors)
# ----------------------------------------------------------------------------
def init_params(key, input_size, output_size):
    params = []

    def add_linear(k, fan_in, fan_out):
        k1, k2 = jax.random.split(k)
        bound = 1.0 / math.sqrt(fan_in)
        params.append(jax.random.uniform(k1, (fan_in, fan_out), jnp.float32,
                                         -bound, bound))
        params.append(jax.random.uniform(k2, (1, fan_out), jnp.float32,
                                         -bound, bound))

    def add_bn(dim):
        params.append(jnp.ones((1, dim), jnp.float32))   # gamma
        params.append(jnp.zeros((1, dim), jnp.float32))  # beta

    keys = iter(jax.random.split(key, 32))
    # feature
    add_linear(next(keys), input_size, HID)
    add_linear(next(keys), HID, HID)
    add_linear(next(keys), HID, HID)
    # inverse_net
    add_linear(next(keys), 2 * HID, HID); add_bn(HID)
    add_linear(next(keys), HID, HID);     add_bn(HID)
    add_linear(next(keys), HID, output_size)
    # residual (single shared block: Linear -> Swish -> Linear)
    add_linear(next(keys), output_size + HID, HID)
    add_linear(next(keys), HID, HID)
    # forward_net_1
    add_linear(next(keys), output_size + HID, HID)
    for _ in range(4):
        add_linear(next(keys), HID, HID)
    # forward_net_2
    add_linear(next(keys), output_size + HID, HID)
    for _ in range(4):
        add_linear(next(keys), HID, HID)
    assert len(params) == N_PARAMS
    return params


# ----------------------------------------------------------------------------
# Pure-JAX (f32) reference mirroring the PyTorch forward
# ----------------------------------------------------------------------------
def icm_reference(state, next_state, action, params):
    p = params

    def swish(x):
        return x * jax.nn.sigmoid(x)

    def lin(x, wi):
        return x @ p[wi] + p[wi + 1]

    def bn(x, gi):
        mean = x.mean(0, keepdims=True)
        var = ((x - mean) ** 2).mean(0, keepdims=True)
        return (x - mean) / jnp.sqrt(var + EPS) * p[gi] + p[gi + 1]

    def feature(x):
        return lin(swish(lin(swish(lin(x, 0)), 2)), 4)

    es, ens = feature(state), feature(next_state)
    h = jnp.concatenate([es, ens], 1)
    h = swish(bn(lin(h, 6), 8))
    h = swish(bn(lin(h, 10), 12))
    pa = lin(h, 14)

    def fwd(x, base):
        h = swish(lin(x, base))
        h = swish(lin(h, base + 2))
        h = swish(lin(h, base + 4))
        h = swish(lin(h, base + 6))
        return lin(h, base + 8)

    def res(x):
        return lin(swish(lin(x, 16)), 18)

    f = fwd(jnp.concatenate([es, action], 1), 20)
    for _ in range(4):
        t = res(jnp.concatenate([f, action], 1))
        f = res(jnp.concatenate([t, action], 1)) + f
    pn = fwd(jnp.concatenate([f, action], 1), 30)
    return ens, pn, pa


if __name__ == "__main__":
    key = jax.random.PRNGKey(0)
    kp, ks, kn, ka = jax.random.split(key, 4)

    B, INPUT_SIZE, OUTPUT_SIZE = 8, 32, 8
    params = init_params(kp, INPUT_SIZE, OUTPUT_SIZE)
    packed = pack_params(params, OUTPUT_SIZE)

    state = jax.random.normal(ks, (B, INPUT_SIZE), jnp.float32)
    next_state = jax.random.normal(kn, (B, INPUT_SIZE), jnp.float32)
    action = jax.random.normal(ka, (B, OUTPUT_SIZE), jnp.float32)

    real, pred, pact = icm_forward(state, next_state, action, packed,
                                   output_size=OUTPUT_SIZE)
    jax.block_until_ready((real, pred, pact))

    # Reference is full f32; the kernel uses bf16 MXU operands (f32 accumulate),
    # so use a tolerance that absorbs bf16 rounding over the ~30-matmul chain.
    ref_real, ref_pred, ref_pact = icm_reference(state, next_state, action, params)
    np.testing.assert_allclose(np.asarray(real), np.asarray(ref_real),
                               rtol=5e-2, atol=5e-2)
    np.testing.assert_allclose(np.asarray(pred), np.asarray(ref_pred),
                               rtol=5e-2, atol=5e-2)
    np.testing.assert_allclose(np.asarray(pact), np.asarray(ref_pact),
                               rtol=5e-2, atol=5e-2)

    print("KERNEL_OK")
</pallas_src>

<mosaic_0001>
module attributes {stable_mosaic.version = 11 : i64} {
  func.func @_icm_kernel(%arg0: memref<16x32xf32, #tpu.memory_space<vmem>>, %arg1: memref<8x32xf32, #tpu.memory_space<vmem>>, %arg2: memref<32x256xbf16, #tpu.memory_space<vmem>>, %arg3: memref<5x256x256xbf16, #tpu.memory_space<vmem>>, %arg4: memref<32x768xbf16, #tpu.memory_space<vmem>>, %arg5: memref<256x128xbf16, #tpu.memory_space<vmem>>, %arg6: memref<21x256xf32, #tpu.memory_space<vmem>>, %arg7: memref<1x128xf32, #tpu.memory_space<vmem>>, %arg8: memref<12x256x256xbf16, #tpu.memory_space<any>>, %arg9: memref<8x256xf32, #tpu.memory_space<vmem>>, %arg10: memref<8x256xf32, #tpu.memory_space<vmem>>, %arg11: memref<8x128xf32, #tpu.memory_space<vmem>>, %arg12: memref<12x256x256xbf16, #tpu.memory_space<vmem>>, %arg13: memref<!tpu.dma_semaphore, #tpu.memory_space<semaphore_mem>>) attributes {dimension_semantics = [], scalar_prefetch = 0 : i64, scratch_operands = 2 : i64, tpu.core_type = #tpu.core_type<tc>} {
    tpu.enqueue_dma source(%arg8 : memref<12x256x256xbf16, #tpu.memory_space<any>>) target(%arg12 : memref<12x256x256xbf16, #tpu.memory_space<vmem>>) target_semaphore(%arg13 : memref<!tpu.dma_semaphore, #tpu.memory_space<semaphore_mem>>)
    %c0 = arith.constant 0 : index
    %c0_0 = arith.constant 0 : index
    %0 = vector.load %arg0[%c0, %c0_0] : memref<16x32xf32, #tpu.memory_space<vmem>>, vector<16x32xf32>
    %c0_1 = arith.constant 0 : index
    %c0_2 = arith.constant 0 : index
    %1 = vector.load %arg1[%c0_1, %c0_2] : memref<8x32xf32, #tpu.memory_space<vmem>>, vector<8x32xf32>
    %2 = arith.truncf %1 : vector<8x32xf32> to vector<8x32xbf16>
    %c0_3 = arith.constant 0 : index
    %c0_4 = arith.constant 0 : index
    %3 = vector.load %arg2[%c0_3, %c0_4] : memref<32x256xbf16, #tpu.memory_space<vmem>>, vector<32x256xbf16>
    %4 = arith.truncf %0 : vector<16x32xf32> to vector<16x32xbf16>
    %cst = arith.constant dense<0.000000e+00> : vector<16x256xf32>
    %5 = tpu.matmul %4, %3, %cst {dimension_numbers = #tpu.dot_dimension_numbers<[1], [0], [0], [1], [0, 0, 1, 1], [], []>} : vector<16x32xbf16>, vector<32x256xbf16>, vector<16x256xf32> -> vector<16x256xf32>
    %c0_5 = arith.constant 0 : index
    %c0_6 = arith.constant 0 : index
    %6 = vector.load %arg6[%c0_5, %c0_6] : memref<21x256xf32, #tpu.memory_space<vmem>>, vector<1x256xf32>
    %7 = vector.broadcast %6 : vector<1x256xf32> to vector<16x256xf32>
    %8 = arith.addf %5, %7 : vector<16x256xf32>
    %cst_7 = arith.constant 0.000000e+00 : f32
    %9 = vector.broadcast %cst_7 : f32 to vector<16x256xf32>
    %10 = arith.subf %9, %8 : vector<16x256xf32>
    %11 = math.exp %10 : vector<16x256xf32>
    %cst_8 = arith.constant 1.000000e+00 : f32
    %12 = vector.broadcast %cst_8 : f32 to vector<16x256xf32>
    %13 = arith.addf %12, %11 : vector<16x256xf32>
    %14 = tpu.reciprocal %13 : vector<16x256xf32> -> vector<16x256xf32>
    %15 = arith.mulf %8, %14 : vector<16x256xf32>
    %c0_9 = arith.constant 0 : index
    %c0_10 = arith.constant 0 : index
    %c0_11 = arith.constant 0 : index
    %16 = vector.load %arg3[%c0_9, %c0_10, %c0_11] : memref<5x256x256xbf16, #tpu.memory_space<vmem>>, vector<1x256x256xbf16>
    %17 = vector.shape_cast %16 : vector<1x256x256xbf16> to vector<256x256xbf16>
    %18 = arith.truncf %15 : vector<16x256xf32> to vector<16x256xbf16>
    %cst_12 = arith.constant dense<0.000000e+00> : vector<16x256xf32>
    %19 = tpu.matmul %18, %17, %cst_12 {dimension_numbers = #tpu.dot_dimension_numbers<[1], [0], [0], [1], [0, 0, 1, 1], [], []>} : vector<16x256xbf16>, vector<256x256xbf16>, vector<16x256xf32> -> vector<16x256xf32>
    %c1 = arith.constant 1 : index
    %c0_13 = arith.constant 0 : index
    %20 = vector.load %arg6[%c1, %c0_13] : memref<21x256xf32, #tpu.memory_space<vmem>>, vector<1x256xf32>
    %21 = vector.broadcast %20 : vector<1x256xf32> to vector<16x256xf32>
    %22 = arith.addf %19, %21 : vector<16x256xf32>
    %cst_14 = arith.constant 0.000000e+00 : f32
    %23 = vector.broadcast %cst_14 : f32 to vector<16x256xf32>
    %24 = arith.subf %23, %22 : vector<16x256xf32>
    %25 = math.exp %24 : vector<16x256xf32>
    %cst_15 = arith.constant 1.000000e+00 : f32
    %26 = vector.broadcast %cst_15 : f32 to vector<16x256xf32>
    %27 = arith.addf %26, %25 : vector<16x256xf32>
    %28 = tpu.reciprocal %27 : vector<16x256xf32> -> vector<16x256xf32>
    %29 = arith.mulf %22, %28 : vector<16x256xf32>
    %c1_16 = arith.constant 1 : index
    %c0_17 = arith.constant 0 : index
    %c0_18 = arith.constant 0 : index
    %30 = vector.load %arg3[%c1_16, %c0_17, %c0_18] : memref<5x256x256xbf16, #tpu.memory_space<vmem>>, vector<1x256x256xbf16>
    %31 = vector.shape_cast %30 : vector<1x256x256xbf16> to vector<256x256xbf16>
    %32 = arith.truncf %29 : vector<16x256xf32> to vector<16x256xbf16>
    %cst_19 = arith.constant dense<0.000000e+00> : vector<16x256xf32>
    %33 = tpu.matmul %32, %31, %cst_19 {dimension_numbers = #tpu.dot_dimension_numbers<[1], [0], [0], [1], [0, 0, 1, 1], [], []>} : vector<16x256xbf16>, vector<256x256xbf16>, vector<16x256xf32> -> vector<16x256xf32>
    %c2 = arith.constant 2 : index
    %c0_20 = arith.constant 0 : index
    %34 = vector.load %arg6[%c2, %c0_20] : memref<21x256xf32, #tpu.memory_space<vmem>>, vector<1x256xf32>
    %35 = vector.broadcast %34 : vector<1x256xf32> to vector<16x256xf32>
    %36 = arith.addf %33, %35 : vector<16x256xf32>
    %37 = vector.extract_strided_slice %36 {offsets = [0, 0], sizes = [8, 256], strides = [1, 1]} : vector<16x256xf32> to vector<8x256xf32>
    %38 = vector.extract_strided_slice %36 {offsets = [8, 0], sizes = [8, 256], strides = [1, 1]} : vector<16x256xf32> to vector<8x256xf32>
    %c2_21 = arith.constant 2 : index
    %c0_22 = arith.constant 0 : index
    %c0_23 = arith.constant 0 : index
    %39 = vector.load %arg3[%c2_21, %c0_22, %c0_23] : memref<5x256x256xbf16, #tpu.memory_space<vmem>>, vector<1x256x256xbf16>
    %40 = vector.shape_cast %39 : vector<1x256x256xbf16> to vector<256x256xbf16>
    %41 = arith.truncf %37 : vector<8x256xf32> to vector<8x256xbf16>
    %cst_24 = arith.constant dense<0.000000e+00> : vector<8x256xf32>
    %42 = tpu.matmul %41, %40, %cst_24 {dimension_numbers = #tpu.dot_dimension_numbers<[1], [0], [0], [1], [0, 0, 1, 1], [], []>} : vector<8x256xbf16>, vector<256x256xbf16>, vector<8x256xf32> -> vector<8x256xf32>
    %c3 = arith.constant 3 : index
    %c0_25 = arith.constant 0 : index
    %c0_26 = arith.constant 0 : index
    %43 = vector.load %arg3[%c3, %c0_25, %c0_26] : memref<5x256x256xbf16, #tpu.memory_space<vmem>>, vector<1x256x256xbf16>
    %44 = vector.shape_cast %43 : vector<1x256x256xbf16> to vector<256x256xbf16>
    %45 = arith.truncf %38 : vector<8x256xf32> to vector<8x256xbf16>
    %cst_27 = arith.constant dense<0.000000e+00> : vector<8x256xf32>
    %46 = tpu.matmul %45, %44, %cst_27 {dimension_numbers = #tpu.dot_dimension_numbers<[1], [0], [0], [1], [0, 0, 1, 1], [], []>} : vector<8x256xbf16>, vector<256x256xbf16>, vector<8x256xf32> -> vector<8x256xf32>
    %47 = arith.addf %42, %46 : vector<8x256xf32>
    %c3_28 = arith.constant 3 : index
    %c0_29 = arith.constant 0 : index
    %48 = vector.load %arg6[%c3_28, %c0_29] : memref<21x256xf32, #tpu.memory_space<vmem>>, vector<1x256xf32>
    %49 = vector.broadcast %48 : vector<1x256xf32> to vector<8x256xf32>
    %50 = arith.addf %47, %49 : vector<8x256xf32>
    %cst_30 = arith.constant dense<0.000000e+00> : vector<256xf32>
    %51 = vector.multi_reduction <add>, %50, %cst_30 [0] : vector<8x256xf32> to vector<256xf32>
    %52 = vector.shape_cast %51 : vector<256xf32> to vector<1x256xf32>
    %cst_31 = arith.constant 8.000000e+00 : f32
    %53 = vector.broadcast %cst_31 : f32 to vector<1x256xf32>
    %54 = arith.divf %52, %53 : vector<1x256xf32>
    %55 = vector.broadcast %54 : vector<1x256xf32> to vector<8x256xf32>
    %56 = arith.subf %50, %55 : vector<8x256xf32>
    %57 = arith.mulf %56, %56 : vector<8x256xf32>
    %cst_32 = arith.constant dense<0.000000e+00> : vector<256xf32>
    %58 = vector.multi_reduction <add>, %57, %cst_32 [0] : vector<8x256xf32> to vector<256xf32>
    %59 = vector.shape_cast %58 : vector<256xf32> to vector<1x256xf32>
    %cst_33 = arith.constant 8.000000e+00 : f32
    %60 = vector.broadcast %cst_33 : f32 to vector<1x256xf32>
    %61 = arith.divf %59, %60 : vector<1x256xf32>
    %62 = vector.broadcast %54 : vector<1x256xf32> to vector<8x256xf32>
    %63 = arith.subf %50, %62 : vector<8x256xf32>
    %cst_34 = arith.constant 9.99999974E-6 : f32
    %64 = vector.broadcast %cst_34 : f32 to vector<1x256xf32>
    %65 = arith.addf %61, %64 : vector<1x256xf32>
    %66 = math.rsqrt %65 : vector<1x256xf32>
    %67 = vector.broadcast %66 : vector<1x256xf32> to vector<8x256xf32>
    %68 = arith.mulf %63, %67 : vector<8x256xf32>
    %c4 = arith.constant 4 : index
    %c0_35 = arith.constant 0 : index
    %69 = vector.load %arg6[%c4, %c0_35] : memref<21x256xf32, #tpu.memory_space<vmem>>, vector<1x256xf32>
    %70 = vector.broadcast %69 : vector<1x256xf32> to vector<8x256xf32>
    %71 = arith.mulf %68, %70 : vector<8x256xf32>
    %c5 = arith.constant 5 : index
    %c0_36 = arith.constant 0 : index
    %72 = vector.load %arg6[%c5, %c0_36] : memref<21x256xf32, #tpu.memory_space<vmem>>, vector<1x256xf32>
    %73 = vector.broadcast %72 : vector<1x256xf32> to vector<8x256xf32>
    %74 = arith.addf %71, %73 : vector<8x256xf32>
    %cst_37 = arith.constant 0.000000e+00 : f32
    %75 = vector.broadcast %cst_37 : f32 to vector<8x256xf32>
    %76 = arith.subf %75, %74 : vector<8x256xf32>
    %77 = math.exp %76 : vector<8x256xf32>
    %cst_38 = arith.constant 1.000000e+00 : f32
    %78 = vector.broadcast %cst_38 : f32 to vector<8x256xf32>
    %79 = arith.addf %78, %77 : vector<8x256xf32>
    %80 = tpu.reciprocal %79 : vector<8x256xf32> -> vector<8x256xf32>
    %81 = arith.mulf %74, %80 : vector<8x256xf32>
    %c4_39 = arith.constant 4 : index
    %c0_40 = arith.constant 0 : index
    %c0_41 = arith.constant 0 : index
    %82 = vector.load %arg3[%c4_39, %c0_40, %c0_41] : memref<5x256x256xbf16, #tpu.memory_space<vmem>>, vector<1x256x256xbf16>
    %83 = vector.shape_cast %82 : vector<1x256x256xbf16> to vector<256x256xbf16>
    %84 = arith.truncf %81 : vector<8x256xf32> to vector<8x256xbf16>
    %cst_42 = arith.constant dense<0.000000e+00> : vector<8x256xf32>
    %85 = tpu.matmul %84, %83, %cst_42 {dimension_numbers = #tpu.dot_dimension_numbers<[1], [0], [0], [1], [0, 0, 1, 1], [], []>} : vector<8x256xbf16>, vector<256x256xbf16>, vector<8x256xf32> -> vector<8x256xf32>
    %c6 = arith.constant 6 : index
    %c0_43 = arith.constant 0 : index
    %86 = vector.load %arg6[%c6, %c0_43] : memref<21x256xf32, #tpu.memory_space<vmem>>, vector<1x256xf32>
    %87 = vector.broadcast %86 : vector<1x256xf32> to vector<8x256xf32>
    %88 = arith.addf %85, %87 : vector<8x256xf32>
    %cst_44 = arith.constant dense<0.000000e+00> : vector<256xf32>
    %89 = vector.multi_reduction <add>, %88, %cst_44 [0] : vector<8x256xf32> to vector<256xf32>
    %90 = vector.shape_cast %89 : vector<256xf32> to vector<1x256xf32>
    %cst_45 = arith.constant 8.000000e+00 : f32
    %91 = vector.broadcast %cst_45 : f32 to vector<1x256xf32>
    %92 = arith.divf %90, %91 : vector<1x256xf32>
    %93 = vector.broadcast %92 : vector<1x256xf32> to vector<8x256xf32>
    %94 = arith.subf %88, %93 : vector<8x256xf32>
    %95 = arith.mulf %94, %94 : vector<8x256xf32>
    %cst_46 = arith.constant dense<0.000000e+00> : vector<256xf32>
    %96 = vector.multi_reduction <add>, %95, %cst_46 [0] : vector<8x256xf32> to vector<256xf32>
    %97 = vector.shape_cast %96 : vector<256xf32> to vector<1x256xf32>
    %cst_47 = arith.constant 8.000000e+00 : f32
    %98 = vector.broadcast %cst_47 : f32 to vector<1x256xf32>
    %99 = arith.divf %97, %98 : vector<1x256xf32>
    %100 = vector.broadcast %92 : vector<1x256xf32> to vector<8x256xf32>
    %101 = arith.subf %88, %100 : vector<8x256xf32>
    %cst_48 = arith.constant 9.99999974E-6 : f32
    %102 = vector.broadcast %cst_48 : f32 to vector<1x256xf32>
    %103 = arith.addf %99, %102 : vector<1x256xf32>
    %104 = math.rsqrt %103 : vector<1x256xf32>
    %105 = vector.broadcast %104 : vector<1x256xf32> to vector<8x256xf32>
    %106 = arith.mulf %101, %105 : vector<8x256xf32>
    %c7 = arith.constant 7 : index
    %c0_49 = arith.constant 0 : index
    %107 = vector.load %arg6[%c7, %c0_49] : memref<21x256xf32, #tpu.memory_space<vmem>>, vector<1x256xf32>
    %108 = vector.broadcast %107 : vector<1x256xf32> to vector<8x256xf32>
    %109 = arith.mulf %106, %108 : vector<8x256xf32>
    %c8 = arith.constant 8 : index
    %c0_50 = arith.constant 0 : index
    %110 = vector.load %arg6[%c8, %c0_50] : memref<21x256xf32, #tpu.memory_space<vmem>>, vector<1x256xf32>
    %111 = vector.broadcast %110 : vector<1x256xf32> to vector<8x256xf32>
    %112 = arith.addf %109, %111 : vector<8x256xf32>
    %cst_51 = arith.constant 0.000000e+00 : f32
    %113 = vector.broadcast %cst_51 : f32 to vector<8x256xf32>
    %114 = arith.subf %113, %112 : vector<8x256xf32>
    %115 = math.exp %114 : vector<8x256xf32>
    %cst_52 = arith.constant 1.000000e+00 : f32
    %116 = vector.broadcast %cst_52 : f32 to vector<8x256xf32>
    %117 = arith.addf %116, %115 : vector<8x256xf32>
    %118 = tpu.reciprocal %117 : vector<8x256xf32> -> vector<8x256xf32>
    %119 = arith.mulf %112, %118 : vector<8x256xf32>
    %c0_53 = arith.constant 0 : index
    %c0_54 = arith.constant 0 : index
    %120 = vector.load %arg5[%c0_53, %c0_54] : memref<256x128xbf16, #tpu.memory_space<vmem>>, vector<256x128xbf16>
    %121 = arith.truncf %119 : vector<8x256xf32> to vector<8x256xbf16>
    %cst_55 = arith.constant dense<0.000000e+00> : vector<8x128xf32>
    %122 = tpu.matmul %121, %120, %cst_55 {dimension_numbers = #tpu.dot_dimension_numbers<[1], [0], [0], [1], [0, 0, 1, 1], [], []>} : vector<8x256xbf16>, vector<256x128xbf16>, vector<8x128xf32> -> vector<8x128xf32>
    %c0_56 = arith.constant 0 : index
    %c0_57 = arith.constant 0 : index
    %123 = vector.load %arg7[%c0_56, %c0_57] : memref<1x128xf32, #tpu.memory_space<vmem>>, vector<1x128xf32>
    %124 = vector.broadcast %123 : vector<1x128xf32> to vector<8x128xf32>
    %125 = arith.addf %122, %124 : vector<8x128xf32>
    %c0_58 = arith.constant 0 : index
    %c0_59 = arith.constant 0 : index
    %126 = vector.load %arg9[%c0_58, %c0_59] : memref<8x256xf32, #tpu.memory_space<vmem>>, vector<8x256xf32>
    tpu.vector_store %arg9[%c0_58, %c0_59], %38 {strides = array<i32>} : memref<8x256xf32, #tpu.memory_space<vmem>>, vector<8x256xf32>,
    %c0_60 = arith.constant 0 : index
    %c0_61 = arith.constant 0 : index
    %127 = vector.load %arg11[%c0_60, %c0_61] : memref<8x128xf32, #tpu.memory_space<vmem>>, vector<8x128xf32>
    tpu.vector_store %arg11[%c0_60, %c0_61], %125 {strides = array<i32>} : memref<8x128xf32, #tpu.memory_space<vmem>>, vector<8x128xf32>,
    %c0_62 = arith.constant 0 : index
    %c0_63 = arith.constant 0 : index
    %128 = vector.load %arg4[%c0_62, %c0_63] : memref<32x768xbf16, #tpu.memory_space<vmem>>, vector<32x768xbf16>
    %cst_64 = arith.constant dense<0.000000e+00> : vector<8x768xf32>
    %129 = tpu.matmul %2, %128, %cst_64 {dimension_numbers = #tpu.dot_dimension_numbers<[1], [0], [0], [1], [0, 0, 1, 1], [], []>} : vector<8x32xbf16>, vector<32x768xbf16>, vector<8x768xf32> -> vector<8x768xf32>
    %130 = vector.extract_strided_slice %129 {offsets = [0, 0], sizes = [8, 256], strides = [1, 1]} : vector<8x768xf32> to vector<8x256xf32>
    %c9 = arith.constant 9 : index
    %c0_65 = arith.constant 0 : index
    %131 = vector.load %arg6[%c9, %c0_65] : memref<21x256xf32, #tpu.memory_space<vmem>>, vector<1x256xf32>
    %132 = vector.broadcast %131 : vector<1x256xf32> to vector<8x256xf32>
    %133 = arith.addf %130, %132 : vector<8x256xf32>
    %134 = vector.extract_strided_slice %129 {offsets = [0, 256], sizes = [8, 256], strides = [1, 1]} : vector<8x768xf32> to vector<8x256xf32>
    %c11 = arith.constant 11 : index
    %c0_66 = arith.constant 0 : index
    %135 = vector.load %arg6[%c11, %c0_66] : memref<21x256xf32, #tpu.memory_space<vmem>>, vector<1x256xf32>
    %136 = vector.broadcast %135 : vector<1x256xf32> to vector<8x256xf32>
    %137 = arith.addf %134, %136 : vector<8x256xf32>
    %138 = vector.extract_strided_slice %129 {offsets = [0, 512], sizes = [8, 256], strides = [1, 1]} : vector<8x768xf32> to vector<8x256xf32>
    %c16 = arith.constant 16 : index
    %c0_67 = arith.constant 0 : index
    %139 = vector.load %arg6[%c16, %c0_67] : memref<21x256xf32, #tpu.memory_space<vmem>>, vector<1x256xf32>
    %140 = vector.broadcast %139 : vector<1x256xf32> to vector<8x256xf32>
    %141 = arith.addf %138, %140 : vector<8x256xf32>
    tpu.wait_dma2 semaphore(%arg13 : memref<!tpu.dma_semaphore, #tpu.memory_space<semaphore_mem>>) src(%arg8 : memref<12x256x256xbf16, #tpu.memory_space<any>>) dst(%arg12 : memref<12x256x256xbf16, #tpu.memory_space<vmem>>)
    %c0_68 = arith.constant 0 : index
    %c0_69 = arith.constant 0 : index
    %c0_70 = arith.constant 0 : index
    %142 = vector.load %arg12[%c0_68, %c0_69, %c0_70] : memref<12x256x256xbf16, #tpu.memory_space<vmem>>, vector<1x256x256xbf16>
    %143 = vector.shape_cast %142 : vector<1x256x256xbf16> to vector<256x256xbf16>
    %c1_71 = arith.constant 1 : index
    %c0_72 = arith.constant 0 : index
    %c0_73 = arith.constant 0 : index
    %144 = vector.load %arg12[%c1_71, %c0_72, %c0_73] : memref<12x256x256xbf16, #tpu.memory_space<vmem>>, vector<1x256x256xbf16>
    %145 = vector.shape_cast %144 : vector<1x256x256xbf16> to vector<256x256xbf16>
    %c10 = arith.constant 10 : index
    %c0_74 = arith.constant 0 : index
    %146 = vector.load %arg6[%c10, %c0_74] : memref<21x256xf32, #tpu.memory_space<vmem>>, vector<1x256xf32>
    %c2_75 = arith.constant 2 : index
    %c0_76 = arith.constant 0 : index
    %c0_77 = arith.constant 0 : index
    %147 = vector.load %arg12[%c2_75, %c0_76, %c0_77] : memref<12x256x256xbf16, #tpu.memory_space<vmem>>, vector<1x256x256xbf16>
    %148 = vector.shape_cast %147 : vector<1x256x256xbf16> to vector<256x256xbf16>
    %149 = arith.truncf %37 : vector<8x256xf32> to vector<8x256xbf16>
    %cst_78 = arith.constant dense<0.000000e+00> : vector<8x256xf32>
    %150 = tpu.matmul %149, %148, %cst_78 {dimension_numbers = #tpu.dot_dimension_numbers<[1], [0], [0], [1], [0, 0, 1, 1], [], []>} : vector<8x256xbf16>, vector<256x256xbf16>, vector<8x256xf32> -> vector<8x256xf32>
    %151 = arith.addf %150, %137 : vector<8x256xf32>
    %cst_79 = arith.constant 0.000000e+00 : f32
    %152 = vector.broadcast %cst_79 : f32 to vector<8x256xf32>
    %153 = arith.subf %152, %151 : vector<8x256xf32>
    %154 = math.exp %153 : vector<8x256xf32>
    %cst_80 = arith.constant 1.000000e+00 : f32
    %155 = vector.broadcast %cst_80 : f32 to vector<8x256xf32>
    %156 = arith.addf %155, %154 : vector<8x256xf32>
    %157 = tpu.reciprocal %156 : vector<8x256xf32> -> vector<8x256xf32>
    %158 = arith.mulf %151, %157 : vector<8x256xf32>
    %c3_81 = arith.constant 3 : index
    %c0_82 = arith.constant 0 : index
    %c0_83 = arith.constant 0 : index
    %159 = vector.load %arg12[%c3_81, %c0_82, %c0_83] : memref<12x256x256xbf16, #tpu.memory_space<vmem>>, vector<1x256x256xbf16>
    %160 = vector.shape_cast %159 : vector<1x256x256xbf16> to vector<256x256xbf16>
    %161 = arith.truncf %158 : vector<8x256xf32> to vector<8x256xbf16>
    %cst_84 = arith.constant dense<0.000000e+00> : vector<8x256xf32>
    %162 = tpu.matmul %161, %160, %cst_84 {dimension_numbers = #tpu.dot_dimension_numbers<[1], [0], [0], [1], [0, 0, 1, 1], [], []>} : vector<8x256xbf16>, vector<256x256xbf16>, vector<8x256xf32> -> vector<8x256xf32>
    %c12 = arith.constant 12 : index
    %c0_85 = arith.constant 0 : index
    %163 = vector.load %arg6[%c12, %c0_85] : memref<21x256xf32, #tpu.memory_space<vmem>>, vector<1x256xf32>
    %164 = vector.broadcast %163 : vector<1x256xf32> to vector<8x256xf32>
    %165 = arith.addf %162, %164 : vector<8x256xf32>
    %cst_86 = arith.constant 0.000000e+00 : f32
    %166 = vector.broadcast %cst_86 : f32 to vector<8x256xf32>
    %167 = arith.subf %166, %165 : vector<8x256xf32>
    %168 = math.exp %167 : vector<8x256xf32>
    %cst_87 = arith.constant 1.000000e+00 : f32
    %169 = vector.broadcast %cst_87 : f32 to vector<8x256xf32>
    %170 = arith.addf %169, %168 : vector<8x256xf32>
    %171 = tpu.reciprocal %170 : vector<8x256xf32> -> vector<8x256xf32>
    %172 = arith.mulf %165, %171 : vector<8x256xf32>
    %c4_88 = arith.constant 4 : index
    %c0_89 = arith.constant 0 : index
    %c0_90 = arith.constant 0 : index
    %173 = vector.load %arg12[%c4_88, %c0_89, %c0_90] : memref<12x256x256xbf16, #tpu.memory_space<vmem>>, vector<1x256x256xbf16>
    %174 = vector.shape_cast %173 : vector<1x256x256xbf16> to vector<256x256xbf16>
    %175 = arith.truncf %172 : vector<8x256xf32> to vector<8x256xbf16>
    %cst_91 = arith.constant dense<0.000000e+00> : vector<8x256xf32>
    %176 = tpu.matmul %175, %174, %cst_91 {dimension_numbers = #tpu.dot_dimension_numbers<[1], [0], [0], [1], [0, 0, 1, 1], [], []>} : vector<8x256xbf16>, vector<256x256xbf16>, vector<8x256xf32> -> vector<8x256xf32>
    %c13 = arith.constant 13 : index
    %c0_92 = arith.constant 0 : index
    %177 = vector.load %arg6[%c13, %c0_92] : memref<21x256xf32, #tpu.memory_space<vmem>>, vector<1x256xf32>
    %178 = vector.broadcast %177 : vector<1x256xf32> to vector<8x256xf32>
    %179 = arith.addf %176, %178 : vector<8x256xf32>
    %cst_93 = arith.constant 0.000000e+00 : f32
    %180 = vector.broadcast %cst_93 : f32 to vector<8x256xf32>
    %181 = arith.subf %180, %179 : vector<8x256xf32>
    %182 = math.exp %181 : vector<8x256xf32>
    %cst_94 = arith.constant 1.000000e+00 : f32
    %183 = vector.broadcast %cst_94 : f32 to vector<8x256xf32>
    %184 = arith.addf %183, %182 : vector<8x256xf32>
    %185 = tpu.reciprocal %184 : vector<8x256xf32> -> vector<8x256xf32>
    %186 = arith.mulf %179, %185 : vector<8x256xf32>
    %c5_95 = arith.constant 5 : index
    %c0_96 = arith.constant 0 : index
    %c0_97 = arith.constant 0 : index
    %187 = vector.load %arg12[%c5_95, %c0_96, %c0_97] : memref<12x256x256xbf16, #tpu.memory_space<vmem>>, vector<1x256x256xbf16>
    %188 = vector.shape_cast %187 : vector<1x256x256xbf16> to vector<256x256xbf16>
    %189 = arith.truncf %186 : vector<8x256xf32> to vector<8x256xbf16>
    %cst_98 = arith.constant dense<0.000000e+00> : vector<8x256xf32>
    %190 = tpu.matmul %189, %188, %cst_98 {dimension_numbers = #tpu.dot_dimension_numbers<[1], [0], [0], [1], [0, 0, 1, 1], [], []>} : vector<8x256xbf16>, vector<256x256xbf16>, vector<8x256xf32> -> vector<8x256xf32>
    %c14 = arith.constant 14 : index
    %c0_99 = arith.constant 0 : index
    %191 = vector.load %arg6[%c14, %c0_99] : memref<21x256xf32, #tpu.memory_space<vmem>>, vector<1x256xf32>
    %192 = vector.broadcast %191 : vector<1x256xf32> to vector<8x256xf32>
    %193 = arith.addf %190, %192 : vector<8x256xf32>
    %cst_100 = arith.constant 0.000000e+00 : f32
    %194 = vector.broadcast %cst_100 : f32 to vector<8x256xf32>
    %195 = arith.subf %194, %193 : vector<8x256xf32>
    %196 = math.exp %195 : vector<8x256xf32>
    %cst_101 = arith.constant 1.000000e+00 : f32
    %197 = vector.broadcast %cst_101 : f32 to vector<8x256xf32>
    %198 = arith.addf %197, %196 : vector<8x256xf32>
    %199 = tpu.reciprocal %198 : vector<8x256xf32> -> vector<8x256xf32>
    %200 = arith.mulf %193, %199 : vector<8x256xf32>
    %c6_102 = arith.constant 6 : index
    %c0_103 = arith.constant 0 : index
    %c0_104 = arith.constant 0 : index
    %201 = vector.load %arg12[%c6_102, %c0_103, %c0_104] : memref<12x256x256xbf16, #tpu.memory_space<vmem>>, vector<1x256x256xbf16>
    %202 = vector.shape_cast %201 : vector<1x256x256xbf16> to vector<256x256xbf16>
    %203 = arith.truncf %200 : vector<8x256xf32> to vector<8x256xbf16>
    %cst_105 = arith.constant dense<0.000000e+00> : vector<8x256xf32>
    %204 = tpu.matmul %203, %202, %cst_105 {dimension_numbers = #tpu.dot_dimension_numbers<[1], [0], [0], [1], [0, 0, 1, 1], [], []>} : vector<8x256xbf16>, vector<256x256xbf16>, vector<8x256xf32> -> vector<8x256xf32>
    %c15 = arith.constant 15 : index
    %c0_106 = arith.constant 0 : index
    %205 = vector.load %arg6[%c15, %c0_106] : memref<21x256xf32, #tpu.memory_space<vmem>>, vector<1x256xf32>
    %206 = vector.broadcast %205 : vector<1x256xf32> to vector<8x256xf32>
    %207 = arith.addf %204, %206 : vector<8x256xf32>
    %208 = arith.truncf %207 : vector<8x256xf32> to vector<8x256xbf16>
    %cst_107 = arith.constant dense<0.000000e+00> : vector<8x256xf32>
    %209 = tpu.matmul %208, %143, %cst_107 {dimension_numbers = #tpu.dot_dimension_numbers<[1], [0], [0], [1], [0, 0, 1, 1], [], []>} : vector<8x256xbf16>, vector<256x256xbf16>, vector<8x256xf32> -> vector<8x256xf32>
    %210 = arith.addf %209, %133 : vector<8x256xf32>
    %cst_108 = arith.constant 0.000000e+00 : f32
    %211 = vector.broadcast %cst_108 : f32 to vector<8x256xf32>
    %212 = arith.subf %211, %210 : vector<8x256xf32>
    %213 = math.exp %212 : vector<8x256xf32>
    %cst_109 = arith.constant 1.000000e+00 : f32
    %214 = vector.broadcast %cst_109 : f32 to vector<8x256xf32>
    %215 = arith.addf %214, %213 : vector<8x256xf32>
    %216 = tpu.reciprocal %215 : vector<8x256xf32> -> vector<8x256xf32>
    %217 = arith.mulf %210, %216 : vector<8x256xf32>
    %218 = arith.truncf %217 : vector<8x256xf32> to vector<8x256xbf16>
    %cst_110 = arith.constant dense<0.000000e+00> : vector<8x256xf32>
    %219 = tpu.matmul %218, %145, %cst_110 {dimension_numbers = #tpu.dot_dimension_numbers<[1], [0], [0], [1], [0, 0, 1, 1], [], []>} : vector<8x256xbf16>, vector<256x256xbf16>, vector<8x256xf32> -> vector<8x256xf32>
    %220 = vector.broadcast %146 : vector<1x256xf32> to vector<8x256xf32>
    %221 = arith.addf %219, %220 : vector<8x256xf32>
    %222 = arith.truncf %221 : vector<8x256xf32> to vector<8x256xbf16>
    %cst_111 = arith.constant dense<0.000000e+00> : vector<8x256xf32>
    %223 = tpu.matmul %222, %143, %cst_111 {dimension_numbers = #tpu.dot_dimension_numbers<[1], [0], [0], [1], [0, 0, 1, 1], [], []>} : vector<8x256xbf16>, vector<256x256xbf16>, vector<8x256xf32> -> vector<8x256xf32>
    %224 = arith.addf %223, %133 : vector<8x256xf32>
    %cst_112 = arith.constant 0.000000e+00 : f32
    %225 = vector.broadcast %cst_112 : f32 to vector<8x256xf32>
    %226 = arith.subf %225, %224 : vector<8x256xf32>
    %227 = math.exp %226 : vector<8x256xf32>
    %cst_113 = arith.constant 1.000000e+00 : f32
    %228 = vector.broadcast %cst_113 : f32 to vector<8x256xf32>
    %229 = arith.addf %228, %227 : vector<8x256xf32>
    %230 = tpu.reciprocal %229 : vector<8x256xf32> -> vector<8x256xf32>
    %231 = arith.mulf %224, %230 : vector<8x256xf32>
    %232 = arith.truncf %231 : vector<8x256xf32> to vector<8x256xbf16>
    %cst_114 = arith.constant dense<0.000000e+00> : vector<8x256xf32>
    %233 = tpu.matmul %232, %145, %cst_114 {dimension_numbers = #tpu.dot_dimension_numbers<[1], [0], [0], [1], [0, 0, 1, 1], [], []>} : vector<8x256xbf16>, vector<256x256xbf16>, vector<8x256xf32> -> vector<8x256xf32>
    %234 = vector.broadcast %146 : vector<1x256xf32> to vector<8x256xf32>
    %235 = arith.addf %233, %234 : vector<8x256xf32>
    %236 = arith.addf %235, %207 : vector<8x256xf32>
    %237 = arith.truncf %236 : vector<8x256xf32> to vector<8x256xbf16>
    %cst_115 = arith.constant dense<0.000000e+00> : vector<8x256xf32>
    %238 = tpu.matmul %237, %143, %cst_115 {dimension_numbers = #tpu.dot_dimension_numbers<[1], [0], [0], [1], [0, 0, 1, 1], [], []>} : vector<8x256xbf16>, vector<256x256xbf16>, vector<8x256xf32> -> vector<8x256xf32>
    %239 = arith.addf %238, %133 : vector<8x256xf32>
    %cst_116 = arith.constant 0.000000e+00 : f32
    %240 = vector.broadcast %cst_116 : f32 to vector<8x256xf32>
    %241 = arith.subf %240, %239 : vector<8x256xf32>
    %242 = math.exp %241 : vector<8x256xf32>
    %cst_117 = arith.constant 1.000000e+00 : f32
    %243 = vector.broadcast %cst_117 : f32 to vector<8x256xf32>
    %244 = arith.addf %243, %242 : vector<8x256xf32>
    %245 = tpu.reciprocal %244 : vector<8x256xf32> -> vector<8x256xf32>
    %246 = arith.mulf %239, %245 : vector<8x256xf32>
    %247 = arith.truncf %246 : vector<8x256xf32> to vector<8x256xbf16>
    %cst_118 = arith.constant dense<0.000000e+00> : vector<8x256xf32>
    %248 = tpu.matmul %247, %145, %cst_118 {dimension_numbers = #tpu.dot_dimension_numbers<[1], [0], [0], [1], [0, 0, 1, 1], [], []>} : vector<8x256xbf16>, vector<256x256xbf16>, vector<8x256xf32> -> vector<8x256xf32>
    %249 = vector.broadcast %146 : vector<1x256xf32> to vector<8x256xf32>
    %250 = arith.addf %248, %249 : vector<8x256xf32>
    %251 = arith.truncf %250 : vector<8x256xf32> to vector<8x256xbf16>
    %cst_119 = arith.constant dense<0.000000e+00> : vector<8x256xf32>
    %252 = tpu.matmul %251, %143, %cst_119 {dimension_numbers = #tpu.dot_dimension_numbers<[1], [0], [0], [1], [0, 0, 1, 1], [], []>} : vector<8x256xbf16>, vector<256x256xbf16>, vector<8x256xf32> -> vector<8x256xf32>
    %253 = arith.addf %252, %133 : vector<8x256xf32>
    %cst_120 = arith.constant 0.000000e+00 : f32
    %254 = vector.broadcast %cst_120 : f32 to vector<8x256xf32>
    %255 = arith.subf %254, %253 : vector<8x256xf32>
    %256 = math.exp %255 : vector<8x256xf32>
    %cst_121 = arith.constant 1.000000e+00 : f32
    %257 = vector.broadcast %cst_121 : f32 to vector<8x256xf32>
    %258 = arith.addf %257, %256 : vector<8x256xf32>
    %259 = tpu.reciprocal %258 : vector<8x256xf32> -> vector<8x256xf32>
    %260 = arith.mulf %253, %259 : vector<8x256xf32>
    %261 = arith.truncf %260 : vector<8x256xf32> to vector<8x256xbf16>
    %cst_122 = arith.constant dense<0.000000e+00> : vector<8x256xf32>
    %262 = tpu.matmul %261, %145, %cst_122 {dimension_numbers = #tpu.dot_dimension_numbers<[1], [0], [0], [1], [0, 0, 1, 1], [], []>} : vector<8x256xbf16>, vector<256x256xbf16>, vector<8x256xf32> -> vector<8x256xf32>
    %263 = vector.broadcast %146 : vector<1x256xf32> to vector<8x256xf32>
    %264 = arith.addf %262, %263 : vector<8x256xf32>
    %265 = arith.addf %264, %236 : vector<8x256xf32>
    %266 = arith.truncf %265 : vector<8x256xf32> to vector<8x256xbf16>
    %cst_123 = arith.constant dense<0.000000e+00> : vector<8x256xf32>
    %267 = tpu.matmul %266, %143, %cst_123 {dimension_numbers = #tpu.dot_dimension_numbers<[1], [0], [0], [1], [0, 0, 1, 1], [], []>} : vector<8x256xbf16>, vector<256x256xbf16>, vector<8x256xf32> -> vector<8x256xf32>
    %268 = arith.addf %267, %133 : vector<8x256xf32>
    %cst_124 = arith.constant 0.000000e+00 : f32
    %269 = vector.broadcast %cst_124 : f32 to vector<8x256xf32>
    %270 = arith.subf %269, %268 : vector<8x256xf32>
    %271 = math.exp %270 : vector<8x256xf32>
    %cst_125 = arith.constant 1.000000e+00 : f32
    %272 = vector.broadcast %cst_125 : f32 to vector<8x256xf32>
    %273 = arith.addf %272, %271 : vector<8x256xf32>
    %274 = tpu.reciprocal %273 : vector<8x256xf32> -> vector<8x256xf32>
    %275 = arith.mulf %268, %274 : vector<8x256xf32>
    %276 = arith.truncf %275 : vector<8x256xf32> to vector<8x256xbf16>
    %cst_126 = arith.constant dense<0.000000e+00> : vector<8x256xf32>
    %277 = tpu.matmul %276, %145, %cst_126 {dimension_numbers = #tpu.dot_dimension_numbers<[1], [0], [0], [1], [0, 0, 1, 1], [], []>} : vector<8x256xbf16>, vector<256x256xbf16>, vector<8x256xf32> -> vector<8x256xf32>
    %278 = vector.broadcast %146 : vector<1x256xf32> to vector<8x256xf32>
    %279 = arith.addf %277, %278 : vector<8x256xf32>
    %280 = arith.truncf %279 : vector<8x256xf32> to vector<8x256xbf16>
    %cst_127 = arith.constant dense<0.000000e+00> : vector<8x256xf32>
    %281 = tpu.matmul %280, %143, %cst_127 {dimension_numbers = #tpu.dot_dimension_numbers<[1], [0], [0], [1], [0, 0, 1, 1], [], []>} : vector<8x256xbf16>, vector<256x256xbf16>, vector<8x256xf32> -> vector<8x256xf32>
    %282 = arith.addf %281, %133 : vector<8x256xf32>
    %cst_128 = arith.constant 0.000000e+00 : f32
    %283 = vector.broadcast %cst_128 : f32 to vector<8x256xf32>
    %284 = arith.subf %283, %282 : vector<8x256xf32>
    %285 = math.exp %284 : vector<8x256xf32>
    %cst_129 = arith.constant 1.000000e+00 : f32
    %286 = vector.broadcast %cst_129 : f32 to vector<8x256xf32>
    %287 = arith.addf %286, %285 : vector<8x256xf32>
    %288 = tpu.reciprocal %287 : vector<8x256xf32> -> vector<8x256xf32>
    %289 = arith.mulf %282, %288 : vector<8x256xf32>
    %290 = arith.truncf %289 : vector<8x256xf32> to vector<8x256xbf16>
    %cst_130 = arith.constant dense<0.000000e+00> : vector<8x256xf32>
    %291 = tpu.matmul %290, %145, %cst_130 {dimension_numbers = #tpu.dot_dimension_numbers<[1], [0], [0], [1], [0, 0, 1, 1], [], []>} : vector<8x256xbf16>, vector<256x256xbf16>, vector<8x256xf32> -> vector<8x256xf32>
    %292 = vector.broadcast %146 : vector<1x256xf32> to vector<8x256xf32>
    %293 = arith.addf %291, %292 : vector<8x256xf32>
    %294 = arith.addf %293, %265 : vector<8x256xf32>
    %295 = arith.truncf %294 : vector<8x256xf32> to vector<8x256xbf16>
    %cst_131 = arith.constant dense<0.000000e+00> : vector<8x256xf32>
    %296 = tpu.matmul %295, %143, %cst_131 {dimension_numbers = #tpu.dot_dimension_numbers<[1], [0], [0], [1], [0, 0, 1, 1], [], []>} : vector<8x256xbf16>, vector<256x256xbf16>, vector<8x256xf32> -> vector<8x256xf32>
    %297 = arith.addf %296, %133 : vector<8x256xf32>
    %cst_132 = arith.constant 0.000000e+00 : f32
    %298 = vector.broadcast %cst_132 : f32 to vector<8x256xf32>
    %299 = arith.subf %298, %297 : vector<8x256xf32>
    %300 = math.exp %299 : vector<8x256xf32>
    %cst_133 = arith.constant 1.000000e+00 : f32
    %301 = vector.broadcast %cst_133 : f32 to vector<8x256xf32>
    %302 = arith.addf %301, %300 : vector<8x256xf32>
    %303 = tpu.reciprocal %302 : vector<8x256xf32> -> vector<8x256xf32>
    %304 = arith.mulf %297, %303 : vector<8x256xf32>
    %305 = arith.truncf %304 : vector<8x256xf32> to vector<8x256xbf16>
    %cst_134 = arith.constant dense<0.000000e+00> : vector<8x256xf32>
    %306 = tpu.matmul %305, %145, %cst_134 {dimension_numbers = #tpu.dot_dimension_numbers<[1], [0], [0], [1], [0, 0, 1, 1], [], []>} : vector<8x256xbf16>, vector<256x256xbf16>, vector<8x256xf32> -> vector<8x256xf32>
    %307 = vector.broadcast %146 : vector<1x256xf32> to vector<8x256xf32>
    %308 = arith.addf %306, %307 : vector<8x256xf32>
    %309 = arith.truncf %308 : vector<8x256xf32> to vector<8x256xbf16>
    %cst_135 = arith.constant dense<0.000000e+00> : vector<8x256xf32>
    %310 = tpu.matmul %309, %143, %cst_135 {dimension_numbers = #tpu.dot_dimension_numbers<[1], [0], [0], [1], [0, 0, 1, 1], [], []>} : vector<8x256xbf16>, vector<256x256xbf16>, vector<8x256xf32> -> vector<8x256xf32>
    %311 = arith.addf %310, %133 : vector<8x256xf32>
    %cst_136 = arith.constant 0.000000e+00 : f32
    %312 = vector.broadcast %cst_136 : f32 to vector<8x256xf32>
    %313 = arith.subf %312, %311 : vector<8x256xf32>
    %314 = math.exp %313 : vector<8x256xf32>
    %cst_137 = arith.constant 1.000000e+00 : f32
    %315 = vector.broadcast %cst_137 : f32 to vector<8x256xf32>
    %316 = arith.addf %315, %314 : vector<8x256xf32>
    %317 = tpu.reciprocal %316 : vector<8x256xf32> -> vector<8x256xf32>
    %318 = arith.mulf %311, %317 : vector<8x256xf32>
    %319 = arith.truncf %318 : vector<8x256xf32> to vector<8x256xbf16>
    %cst_138 = arith.constant dense<0.000000e+00> : vector<8x256xf32>
    %320 = tpu.matmul %319, %145, %cst_138 {dimension_numbers = #tpu.dot_dimension_numbers<[1], [0], [0], [1], [0, 0, 1, 1], [], []>} : vector<8x256xbf16>, vector<256x256xbf16>, vector<8x256xf32> -> vector<8x256xf32>
    %321 = vector.broadcast %146 : vector<1x256xf32> to vector<8x256xf32>
    %322 = arith.addf %320, %321 : vector<8x256xf32>
    %323 = arith.addf %322, %294 : vector<8x256xf32>
    %c7_139 = arith.constant 7 : index
    %c0_140 = arith.constant 0 : index
    %c0_141 = arith.constant 0 : index
    %324 = vector.load %arg12[%c7_139, %c0_140, %c0_141] : memref<12x256x256xbf16, #tpu.memory_space<vmem>>, vector<1x256x256xbf16>
    %325 = vector.shape_cast %324 : vector<1x256x256xbf16> to vector<256x256xbf16>
    %326 = arith.truncf %323 : vector<8x256xf32> to vector<8x256xbf16>
    %cst_142 = arith.constant dense<0.000000e+00> : vector<8x256xf32>
    %327 = tpu.matmul %326, %325, %cst_142 {dimension_numbers = #tpu.dot_dimension_numbers<[1], [0], [0], [1], [0, 0, 1, 1], [], []>} : vector<8x256xbf16>, vector<256x256xbf16>, vector<8x256xf32> -> vector<8x256xf32>
    %328 = arith.addf %327, %141 : vector<8x256xf32>
    %cst_143 = arith.constant 0.000000e+00 : f32
    %329 = vector.broadcast %cst_143 : f32 to vector<8x256xf32>
    %330 = arith.subf %329, %328 : vector<8x256xf32>
    %331 = math.exp %330 : vector<8x256xf32>
    %cst_144 = arith.constant 1.000000e+00 : f32
    %332 = vector.broadcast %cst_144 : f32 to vector<8x256xf32>
    %333 = arith.addf %332, %331 : vector<8x256xf32>
    %334 = tpu.reciprocal %333 : vector<8x256xf32> -> vector<8x256xf32>
    %335 = arith.mulf %328, %334 : vector<8x256xf32>
    %c8_145 = arith.constant 8 : index
    %c0_146 = arith.constant 0 : index
    %c0_147 = arith.constant 0 : index
    %336 = vector.load %arg12[%c8_145, %c0_146, %c0_147] : memref<12x256x256xbf16, #tpu.memory_space<vmem>>, vector<1x256x256xbf16>
    %337 = vector.shape_cast %336 : vector<1x256x256xbf16> to vector<256x256xbf16>
    %338 = arith.truncf %335 : vector<8x256xf32> to vector<8x256xbf16>
    %cst_148 = arith.constant dense<0.000000e+00> : vector<8x256xf32>
    %339 = tpu.matmul %338, %337, %cst_148 {dimension_numbers = #tpu.dot_dimension_numbers<[1], [0], [0], [1], [0, 0, 1, 1], [], []>} : vector<8x256xbf16>, vector<256x256xbf16>, vector<8x256xf32> -> vector<8x256xf32>
    %c17 = arith.constant 17 : index
    %c0_149 = arith.constant 0 : index
    %340 = vector.load %arg6[%c17, %c0_149] : memref<21x256xf32, #tpu.memory_space<vmem>>, vector<1x256xf32>
    %341 = vector.broadcast %340 : vector<1x256xf32> to vector<8x256xf32>
    %342 = arith.addf %339, %341 : vector<8x256xf32>
    %cst_150 = arith.constant 0.000000e+00 : f32
    %343 = vector.broadcast %cst_150 : f32 to vector<8x256xf32>
    %344 = arith.subf %343, %342 : vector<8x256xf32>
    %345 = math.exp %344 : vector<8x256xf32>
    %cst_151 = arith.constant 1.000000e+00 : f32
    %346 = vector.broadcast %cst_151 : f32 to vector<8x256xf32>
    %347 = arith.addf %346, %345 : vector<8x256xf32>
    %348 = tpu.reciprocal %347 : vector<8x256xf32> -> vector<8x256xf32>
    %349 = arith.mulf %342, %348 : vector<8x256xf32>
    %c9_152 = arith.constant 9 : index
    %c0_153 = arith.constant 0 : index
    %c0_154 = arith.constant 0 : index
    %350 = vector.load %arg12[%c9_152, %c0_153, %c0_154] : memref<12x256x256xbf16, #tpu.memory_space<vmem>>, vector<1x256x256xbf16>
    %351 = vector.shape_cast %350 : vector<1x256x256xbf16> to vector<256x256xbf16>
    %352 = arith.truncf %349 : vector<8x256xf32> to vector<8x256xbf16>
    %cst_155 = arith.constant dense<0.000000e+00> : vector<8x256xf32>
    %353 = tpu.matmul %352, %351, %cst_155 {dimension_numbers = #tpu.dot_dimension_numbers<[1], [0], [0], [1], [0, 0, 1, 1], [], []>} : vector<8x256xbf16>, vector<256x256xbf16>, vector<8x256xf32> -> vector<8x256xf32>
    %c18 = arith.constant 18 : index
    %c0_156 = arith.constant 0 : index
    %354 = vector.load %arg6[%c18, %c0_156] : memref<21x256xf32, #tpu.memory_space<vmem>>, vector<1x256xf32>
    %355 = vector.broadcast %354 : vector<1x256xf32> to vector<8x256xf32>
    %356 = arith.addf %353, %355 : vector<8x256xf32>
    %cst_157 = arith.constant 0.000000e+00 : f32
    %357 = vector.broadcast %cst_157 : f32 to vector<8x256xf32>
    %358 = arith.subf %357, %356 : vector<8x256xf32>
    %359 = math.exp %358 : vector<8x256xf32>
    %cst_158 = arith.constant 1.000000e+00 : f32
    %360 = vector.broadcast %cst_158 : f32 to vector<8x256xf32>
    %361 = arith.addf %360, %359 : vector<8x256xf32>
    %362 = tpu.reciprocal %361 : vector<8x256xf32> -> vector<8x256xf32>
    %363 = arith.mulf %356, %362 : vector<8x256xf32>
    %c10_159 = arith.constant 10 : index
    %c0_160 = arith.constant 0 : index
    %c0_161 = arith.constant 0 : index
    %364 = vector.load %arg12[%c10_159, %c0_160, %c0_161] : memref<12x256x256xbf16, #tpu.memory_space<vmem>>, vector<1x256x256xbf16>
    %365 = vector.shape_cast %364 : vector<1x256x256xbf16> to vector<256x256xbf16>
    %366 = arith.truncf %363 : vector<8x256xf32> to vector<8x256xbf16>
    %cst_162 = arith.constant dense<0.000000e+00> : vector<8x256xf32>
    %367 = tpu.matmul %366, %365, %cst_162 {dimension_numbers = #tpu.dot_dimension_numbers<[1], [0], [0], [1], [0, 0, 1, 1], [], []>} : vector<8x256xbf16>, vector<256x256xbf16>, vector<8x256xf32> -> vector<8x256xf32>
    %c19 = arith.constant 19 : index
    %c0_163 = arith.constant 0 : index
    %368 = vector.load %arg6[%c19, %c0_163] : memref<21x256xf32, #tpu.memory_space<vmem>>, vector<1x256xf32>
    %369 = vector.broadcast %368 : vector<1x256xf32> to vector<8x256xf32>
    %370 = arith.addf %367, %369 : vector<8x256xf32>
    %cst_164 = arith.constant 0.000000e+00 : f32
    %371 = vector.broadcast %cst_164 : f32 to vector<8x256xf32>
    %372 = arith.subf %371, %370 : vector<8x256xf32>
    %373 = math.exp %372 : vector<8x256xf32>
    %cst_165 = arith.constant 1.000000e+00 : f32
    %374 = vector.broadcast %cst_165 : f32 to vector<8x256xf32>
    %375 = arith.addf %374, %373 : vector<8x256xf32>
    %376 = tpu.reciprocal %375 : vector<8x256xf32> -> vector<8x256xf32>
    %377 = arith.mulf %370, %376 : vector<8x256xf32>
    %c11_166 = arith.constant 11 : index
    %c0_167 = arith.constant 0 : index
    %c0_168 = arith.constant 0 : index
    %378 = vector.load %arg12[%c11_166, %c0_167, %c0_168] : memref<12x256x256xbf16, #tpu.memory_space<vmem>>, vector<1x256x256xbf16>
    %379 = vector.shape_cast %378 : vector<1x256x256xbf16> to vector<256x256xbf16>
    %380 = arith.truncf %377 : vector<8x256xf32> to vector<8x256xbf16>
    %cst_169 = arith.constant dense<0.000000e+00> : vector<8x256xf32>
    %381 = tpu.matmul %380, %379, %cst_169 {dimension_numbers = #tpu.dot_dimension_numbers<[1], [0], [0], [1], [0, 0, 1, 1], [], []>} : vector<8x256xbf16>, vector<256x256xbf16>, vector<8x256xf32> -> vector<8x256xf32>
    %c20 = arith.constant 20 : index
    %c0_170 = arith.constant 0 : index
    %382 = vector.load %arg6[%c20, %c0_170] : memref<21x256xf32, #tpu.memory_space<vmem>>, vector<1x256xf32>
    %383 = vector.broadcast %382 : vector<1x256xf32> to vector<8x256xf32>
    %384 = arith.addf %381, %383 : vector<8x256xf32>
    %c0_171 = arith.constant 0 : index
    %c0_172 = arith.constant 0 : index
    %385 = vector.load %arg10[%c0_171, %c0_172] : memref<8x256xf32, #tpu.memory_space<vmem>>, vector<8x256xf32>
    tpu.vector_store %arg10[%c0_171, %c0_172], %384 {strides = array<i32>} : memref<8x256xf32, #tpu.memory_space<vmem>>, vector<8x256xf32>,
    return
  }
}

</mosaic_0001>

<llo_original>
// kernel: icm_forward.1
$region0: #{icm_forward.1}
  #allocation0 [shape = 'u32[]', space=smem, size = 0x4, offset = 0x4, fixed_abs, tag = 'smem constant byte address 0x4 - core index']
  #allocation1 [shape = 'u32[72,128]{1,0:T(1,128)}', space=vmem, size = 0x9000, scoped, tag = 'internal scratch']
  #allocation2 [shape = 'bf16[12,256,256]{2,1,0:T(8,128)(2,1)}', space=vmem, size = 0x180000, scoped, tag = 'scratch operand']
  #allocation3 [shape = 's32[1]{0}', space=sflag, size = 0x4, scoped, tag = 'scratch operand']
  #allocation19 [shape = 's32[]', space=sflag, size = 0x4, offset = 0, fixed_abs, tag = 'sflag constant byte address 0x0 - dummy sync flag']
  #allocation20 [shape = 's32[]', space=sflag, size = 0x4, offset = 0, fixed_abs, tag = 'sflag constant byte address 0x0 - dummy sync flag']
  #allocation21 [shape = 'u32[]', space=smem, size = 0x4, offset = 0x44, fixed_abs, tag = 'smem constant byte address 0x44 - assertion arg 0']
  #allocation22 [shape = 'u32[]', space=smem, size = 0x4, offset = 0x48, fixed_abs, tag = 'smem constant byte address 0x48 - assertion arg 1']
  %s0 = inlined_call_operand.vmem [shape: f32[16,32], index: 0, kind: input, shape index: {}]
  %s1 = inlined_call_operand.vmem [shape: f32[8,32], index: 1, kind: input, shape index: {}]
  %s2 = inlined_call_operand.hbm [shape: bf16[32,256], index: 2, kind: input, shape index: {}]
  %s3 = inlined_call_operand.hbm [shape: bf16[5,256,256], index: 3, kind: input, shape index: {}]
  %s4 = inlined_call_operand.hbm [shape: bf16[32,768], index: 4, kind: input, shape index: {}]
  %s5 = inlined_call_operand.hbm [shape: bf16[256,128], index: 5, kind: input, shape index: {}]
  %s6 = inlined_call_operand.hbm [shape: f32[21,256], index: 6, kind: input, shape index: {}]
  %s7 = inlined_call_operand.hbm [shape: f32[1,128], index: 7, kind: input, shape index: {}]
  %s8 = inlined_call_operand.hbm [shape: bf16[12,256,256], index: 8, kind: input, shape index: {}]
  %s9 = inlined_call_operand.hbm [shape: f32[8,256], index: 9, kind: output, shape index: {0}]
  %s10 = inlined_call_operand.hbm [shape: f32[8,256], index: 10, kind: output, shape index: {1}]
  %s11 = inlined_call_operand.hbm [shape: f32[8,128], index: 11, kind: output, shape index: {2}]
  %12 = xla_tuple %s9, %s10, %s11
  %s13 = sld [smem:[#allocation0]]
  $region86: #{icm_forward.1} parent=0
    _
  %s15 = ssub.s32 1, %s13
  %s16 = scalar_select 0, %s15, %s13
  $region1: #{icm_forward.1} parent=0
    #allocation4 [shape = 'u8[16384]{0}', space=vmem, size = 0x4000, scoped, tag = 'input window, operand 2, single buffered']
    #allocation5 [shape = 's32[1]{0}', space=sflag, size = 0x4, scoped, tag = 'scoped memory for icm_forward.1']
    #allocation6 [shape = 's32[1]{0}', space=sflag, size = 0x4, scoped, tag = 'scoped memory for icm_forward.1']
    #allocation7 [shape = 'u8[655360]{0}', space=vmem, size = 0xa0000, scoped, tag = 'input window, operand 3, single buffered']
    #allocation8 [shape = 's32[1]{0}', space=sflag, size = 0x4, scoped, tag = 'scoped memory for icm_forward.1']
    #allocation9 [shape = 'u8[49152]{0}', space=vmem, size = 0xc000, scoped, tag = 'input window, operand 4, single buffered']
    #allocation10 [shape = 'u8[65536]{0}', space=vmem, size = 0x10000, scoped, tag = 'input window, operand 5, single buffered']
    #allocation11 [shape = 's32[1]{0}', space=sflag, size = 0x4, scoped, tag = 'scoped memory for icm_forward.1']
    #allocation12 [shape = 'u8[24576]{0}', space=vmem, size = 0x6000, scoped, tag = 'input window, operand 6, single buffered']
    #allocation13 [shape = 'u8[512]{0}', space=vmem, size = 0x400, scoped, tag = 'input window, operand 7, single buffered']
    #allocation14 [shape = 's32[1]{0}', space=sflag, size = 0x4, scoped, tag = 'scoped memory for icm_forward.1']
    #allocation15 [shape = 'u8[8192]{0}', space=vmem, size = 0x2000, scoped, tag = 'output window, operand 0, single buffered']
    #allocation16 [shape = 'u8[8192]{0}', space=vmem, size = 0x2000, scoped, tag = 'output window, operand 1, single buffered']
    #allocation17 [shape = 's32[1]{0}', space=sflag, size = 0x4, scoped, tag = 'scoped memory for icm_forward.1']
    #allocation18 [shape = 'u8[4096]{0}', space=vmem, size = 0x1000, scoped, tag = 'output window, operand 2, single buffered']
    %17 = vsyncpa [#allocation5], 0
    %18 = vsyncpa [#allocation8], 0
    %19 = vsyncpa [#allocation11], 0
    %20 = vsyncpa [#allocation14], 0
    %21 = vsyncpa [#allocation6], 0
    %22 = vsyncpa [#allocation17], 0
    // Predicated region
    $region2: #{icm_forward.1} parent=1 // pred_check
      _
    $region3: #{icm_forward.1} parent=1 // pred_check_branch
      %24 = sbr.rel (0) target = $region5
    $region4: #{icm_forward.1} parent=1 // pred_region
      _
    $region5: #{icm_forward.1} parent=1 // pred_fallthru
      _
    // Predicated region
    $region6: #{icm_forward.1} parent=1 // pred_check
      _
    $region7: #{icm_forward.1} parent=1 // pred_check_branch
      %26 = sbr.rel (0) target = $region9
    $region8: #{icm_forward.1} parent=1 // pred_region
      _
    $region9: #{icm_forward.1} parent=1 // pred_fallthru
      _
    // Predicated region
    $region10: #{icm_forward.1} parent=1 // pred_check
      _
    $region11: #{icm_forward.1} parent=1 // pred_check_branch
      %28 = sbr.rel (0) target = $region13
    $region12: #{icm_forward.1} parent=1 // pred_region
      %30 = vsyncadd [#allocation5], 0
      %s31 = sshll.u32 %s2, 4
      %s32 = int_to_ptr.hbm [resolvable:$true] %s31
      %s33 = sshll.u32 [#allocation4], 4
      %s34 = int_to_ptr.vmem [resolvable:$true] %s33
      %39 = dma.hbm_to_vmem [thread:$0]  %s32, 512, %s34, [#allocation5], 128, 128, 8
    $region13: #{icm_forward.1} parent=1 // pred_fallthru
      _
    // Predicated region
    $region14: #{icm_forward.1} parent=1 // pred_check
      _
    $region15: #{icm_forward.1} parent=1 // pred_check_branch
      %41 = sbr.rel (0) target = $region17
    $region16: #{icm_forward.1} parent=1 // pred_region
      %43 = vsyncadd [#allocation8], 0
      %s44 = sshll.u32 %s3, 4
      %s45 = int_to_ptr.hbm [resolvable:$true] %s44
      %s46 = sshll.u32 [#allocation7], 4
      %s47 = int_to_ptr.vmem [resolvable:$true] %s46
      %52 = dma.hbm_to_vmem [thread:$0]  %s45, 20480, %s47, [#allocation8], 128, 128, 8
    $region17: #{icm_forward.1} parent=1 // pred_fallthru
      _
    // Predicated region
    $region18: #{icm_forward.1} parent=1 // pred_check
      _
    $region19: #{icm_forward.1} parent=1 // pred_check_branch
      %54 = sbr.rel (0) target = $region21
    $region20: #{icm_forward.1} parent=1 // pred_region
      %56 = vsyncadd [#allocation8], 0
      %s57 = sshll.u32 %s4, 4
      %s58 = int_to_ptr.hbm [resolvable:$true] %s57
      %s59 = sshll.u32 [#allocation9], 4
      %s60 = int_to_ptr.vmem [resolvable:$true] %s59
      %65 = dma.hbm_to_vmem [thread:$0]  %s58, 1536, %s60, [#allocation8], 384, 384, 24
    $region21: #{icm_forward.1} parent=1 // pred_fallthru
      _
    // Predicated region
    $region22: #{icm_forward.1} parent=1 // pred_check
      _
    $region23: #{icm_forward.1} parent=1 // pred_check_branch
      %67 = sbr.rel (0) target = $region25
    $region24: #{icm_forward.1} parent=1 // pred_region
      %69 = vsyncadd [#allocation11], 0
      %s70 = sshll.u32 %s5, 4
      %s71 = int_to_ptr.hbm [resolvable:$true] %s70
      %s72 = sshll.u32 [#allocation10], 4
      %s73 = int_to_ptr.vmem [resolvable:$true] %s72
      %78 = dma.hbm_to_vmem [thread:$0]  %s71, 2048, %s73, [#allocation11], 64, 64, 4
    $region25: #{icm_forward.1} parent=1 // pred_fallthru
      _
    // Predicated region
    $region26: #{icm_forward.1} parent=1 // pred_check
      _
    $region27: #{icm_forward.1} parent=1 // pred_check_branch
      %80 = sbr.rel (0) target = $region29
    $region28: #{icm_forward.1} parent=1 // pred_region
      %82 = vsyncadd [#allocation11], 0
      %s83 = sshll.u32 %s6, 4
      %s84 = int_to_ptr.hbm [resolvable:$true] %s83
      %s85 = sshll.u32 [#allocation12], 4
      %s86 = int_to_ptr.vmem [resolvable:$true] %s85
      %91 = dma.hbm_to_vmem [thread:$0]  %s84, 768, %s86, [#allocation11], 256, 256, 16
    $region29: #{icm_forward.1} parent=1 // pred_fallthru
      _
    // Predicated region
    $region30: #{icm_forward.1} parent=1 // pred_check
      _
    $region31: #{icm_forward.1} parent=1 // pred_check_branch
      %93 = sbr.rel (0) target = $region33
    $region32: #{icm_forward.1} parent=1 // pred_region
      %95 = vsyncadd [#allocation14], 0
      %s97 = sshll.u32 %s7, 4
      %s98 = int_to_ptr.hbm [resolvable:$true] %s97
      %s99 = sshll.u32 [#allocation13], 4
      %s100 = int_to_ptr.vmem [resolvable:$true] %s99
      %102 = dma.hbm_to_vmem [thread:$0]  %s98, 16, %s100, [#allocation14]
    $region33: #{icm_forward.1} parent=1 // pred_fallthru
      _
    // Predicated region
    $region34: #{icm_forward.1} parent=1 // pred_check
      _
    $region35: #{icm_forward.1} parent=1 // pred_check_branch
      %104 = sbr.rel (0) target = $region37
    $region36: #{icm_forward.1} parent=1 // pred_region
      %106 = dma.done [#allocation5], 512
    $region37: #{icm_forward.1} parent=1 // pred_fallthru
      _
    // Predicated region
    $region38: #{icm_forward.1} parent=1 // pred_check
      _
    $region39: #{icm_forward.1} parent=1 // pred_check_branch
      %108 = sbr.rel (0) target = $region41
    $region40: #{icm_forward.1} parent=1 // pred_region
      %110 = dma.done [#allocation8], 20480
    $region41: #{icm_forward.1} parent=1 // pred_fallthru
      _
    // Predicated region
    $region42: #{icm_forward.1} parent=1 // pred_check
      _
    $region43: #{icm_forward.1} parent=1 // pred_check_branch
      %112 = sbr.rel (0) target = $region45
    $region44: #{icm_forward.1} parent=1 // pred_region
      %114 = dma.done [#allocation8], 1536
    $region45: #{icm_forward.1} parent=1 // pred_fallthru
      _
    // Predicated region
    $region46: #{icm_forward.1} parent=1 // pred_check
      _
    $region47: #{icm_forward.1} parent=1 // pred_check_branch
      %116 = sbr.rel (0) target = $region49
    $region48: #{icm_forward.1} parent=1 // pred_region
      %118 = dma.done [#allocation11], 2048
    $region49: #{icm_forward.1} parent=1 // pred_fallthru
      _
    // Predicated region
    $region50: #{icm_forward.1} parent=1 // pred_check
      _
    $region51: #{icm_forward.1} parent=1 // pred_check_branch
      %120 = sbr.rel (0) target = $region53
    $region52: #{icm_forward.1} parent=1 // pred_region
      %122 = dma.done [#allocation11], 768
    $region53: #{icm_forward.1} parent=1 // pred_fallthru
      _
    // Predicated region
    $region54: #{icm_forward.1} parent=1 // pred_check
      _
    $region55: #{icm_forward.1} parent=1 // pred_check_branch
      %124 = sbr.rel (0) target = $region57
    $region56: #{icm_forward.1} parent=1 // pred_region
      %126 = dma.done [#allocation14], 16
    $region57: #{icm_forward.1} parent=1 // pred_fallthru
      _
    // Predicated region
    $region58: #{icm_forward.1} parent=1 // pred_check
      _
    $region59: #{icm_forward.1} parent=1 // pred_check_branch
      %129 = sbr.rel target = $region61
    $region60: #{icm_forward.1} parent=1 // pred_region
      %130 = sst [smem:[#allocation21]] [#allocation20]
      %131 = sst [smem:[#allocation22]] [#allocation19]
    $region61: #{icm_forward.1} parent=1 // pred_fallthru
      _
    %133 = shalt.err (0)
    %s135 = sshll.u32 %s8, 4
    %s136 = int_to_ptr.hbm [resolvable:$true] %s135
    %s137 = sshll.u32 [#allocation2], 4
    %s138 = int_to_ptr.vmem [resolvable:$true] %s137
    %140 = dma.hbm_to_vmem [thread:$0]  %s136, 49152, %s138, [#allocation3]
    %v141 = vld [vmem:[%s0] sm:$0xff]
    %v142 = vld [vmem:[%s0 + $0x8] sm:$0xff]
    %v143 = vld [vmem:[%s1] sm:$0xff]
    %v144 = vpack.c.bf16 %v143, %v143
    %v145 = vld [vmem:[#allocation4] sm:$0xff]
    %v146 = vld [vmem:[#allocation4 + $0x8] sm:$0xff]
    %v147 = vld [vmem:[#allocation4 + $0x10] sm:$0xff]
    %v148 = vld [vmem:[#allocation4 + $0x18] sm:$0xff]
    %v149 = vpack.c.bf16 %v142, %v141
    %v150 = vld [vmem:[#allocation12] ss:$8 sm:$0x3]
    %v152 = vperm.slane %v150, 0
    %v153 = vperm.slane %v150, 1
    %v160 = vunpack.c.l.b16 %v145
    %v161 = vunpack.c.h.b16 %v145
    %v162 = vunpack.c.l.b16 %v146
    %v163 = vunpack.c.h.b16 %v146
    %v164 = vunpack.c.l.b16 %v147
    %v165 = vunpack.c.h.b16 %v147
    %v166 = vunpack.c.l.b16 %v148
    %v167 = vunpack.c.h.b16 %v148
    %v168 = vpack.c.b16 %v162, %v160
    %v169 = vpack.c.b16 %v163, %v161
    %v170 = vpack.c.b16 %v166, %v164
    %v171 = vpack.c.b16 %v167, %v165
    %vm176 = vcmask 261120
    %v178 = vsel %vm176, %v149, 0
    %180 = vmatpush.bf16.msra.mxu0 0
    %181 = vmatpush.bf16.msra.mxu0 0
    %182 = vmatpush.bf16.msra.mxu0 0
    %183 = vmatpush.bf16.msra.mxu0 0
    %184 = vmatpush.bf16.msra.mxu0 0
    %185 = vmatpush.bf16.msra.mxu0 0
    %186 = vmatpush.bf16.msra.mxu0 %v170
    %187 = vmatpush.bf16.msra.mxu0 %v168
    %188 = vmatmul.bf16.gmra.mxu0 %v178
    %v189 = vpop.f32.mrf.mxu0
    %v190 = vadd.f32 %v152, %v189
    %v191 = vpop.f32.mrf.mxu0
    %v192 = vadd.f32 %v152, %v191
    %193 = vdwg.mxu0
    %194 = vmatpush.bf16.msra.mxu0 0
    %195 = vmatpush.bf16.msra.mxu0 0
    %196 = vmatpush.bf16.msra.mxu0 0
    %197 = vmatpush.bf16.msra.mxu0 0
    %198 = vmatpush.bf16.msra.mxu0 0
    %199 = vmatpush.bf16.msra.mxu0 0
    %200 = vmatpush.bf16.msra.mxu0 %v171
    %201 = vmatpush.bf16.msra.mxu0 %v169
    %202 = vmatmul.bf16.gmra.mxu0 %v178
    %v203 = vpop.f32.mrf.mxu0
    %v204 = vadd.f32 %v153, %v203
    %v205 = vpop.f32.mrf.mxu0
    %v206 = vadd.f32 %v153, %v205
    %207 = vdwg.mxu0
    %v208 = vsub.f32 0.0, %v190
    %v209 = vsub.f32 0.0, %v204
    %v210 = vsub.f32 0.0, %v192
    %v211 = vsub.f32 0.0, %v206
    %v212 = vmul.f32 %v208, 1.442695
    %v213 = vpow.pop %v212
    %v214 = vmul.f32 %v209, 1.442695
    %v215 = vpow.pop %v214
    %v216 = vmul.f32 %v210, 1.442695
    %v217 = vpow.pop %v216
    %v218 = vmul.f32 %v211, 1.442695
    %v219 = vpow.pop %v218
    %v220 = vadd.f32 %v213, 1.0
    %v221 = vadd.f32 %v215, 1.0
    %v222 = vadd.f32 %v217, 1.0
    %v223 = vadd.f32 %v219, 1.0
    %v224 = vrcp.pop %v220
    %v225 = vmul.f32 %v220, %v224
    %v226 = vsub.f32 1.0, %v225
    %v227 = vmul.f32 %v224, %v226
    %v228 = vadd.f32 %v224, %v227
    %vm229 = vweird.f32 %v220
    %vm230 = vweird.f32 %v224
    %vm231 = vmor %vm229, %vm230
    %v232 = vsel %vm231, %v224, %v228
    %v233 = vand.u32 2147483647, %v220
    %vm234 = vcmp.eq.f32.partialorder %v233, 8.507059e+37
    %v235 = vand.u32 %v220, 2147483648
    %v236 = vor.u32 1.1754944e-38, %v235
    %v237 = vsel %vm234, %v236, %v232
    %v238 = vrcp.pop %v221
    %v239 = vmul.f32 %v221, %v238
    %v240 = vsub.f32 1.0, %v239
    %v241 = vmul.f32 %v238, %v240
    %v242 = vadd.f32 %v238, %v241
    %vm243 = vweird.f32 %v221
    %vm244 = vweird.f32 %v238
    %vm245 = vmor %vm243, %vm244
    %v246 = vsel %vm245, %v238, %v242
    %v247 = vand.u32 2147483647, %v221
    %vm248 = vcmp.eq.f32.partialorder %v247, 8.507059e+37
    %v249 = vand.u32 %v221, 2147483648
    %v250 = vor.u32 1.1754944e-38, %v249
    %v251 = vsel %vm248, %v250, %v246
    %v252 = vrcp.pop %v222
    %v253 = vmul.f32 %v222, %v252
    %v254 = vsub.f32 1.0, %v253
    %v255 = vmul.f32 %v252, %v254
    %v256 = vadd.f32 %v252, %v255
    %vm257 = vweird.f32 %v222
    %vm258 = vweird.f32 %v252
    %vm259 = vmor %vm257, %vm258
    %v260 = vsel %vm259, %v252, %v256
    %v261 = vand.u32 2147483647, %v222
    %vm262 = vcmp.eq.f32.partialorder %v261, 8.507059e+37
    %v263 = vand.u32 %v222, 2147483648
    %v264 = vor.u32 1.1754944e-38, %v263
    %v265 = vsel %vm262, %v264, %v260
    %v266 = vrcp.pop %v223
    %v267 = vmul.f32 %v223, %v266
    %v268 = vsub.f32 1.0, %v267
    %v269 = vmul.f32 %v266, %v268
    %v270 = vadd.f32 %v266, %v269
    %vm271 = vweird.f32 %v223
    %vm272 = vweird.f32 %v266
    %vm273 = vmor %vm271, %vm272
    %v274 = vsel %vm273, %v266, %v270
    %v275 = vand.u32 2147483647, %v223
    %vm276 = vcmp.eq.f32.partialorder %v275, 8.507059e+37
    %v277 = vand.u32 %v223, 2147483648
    %v278 = vor.u32 1.1754944e-38, %v277
    %v279 = vsel %vm276, %v278, %v274
    %v280 = vmul.f32 %v190, %v237
    %v281 = vmul.f32 %v204, %v251
    %v282 = vmul.f32 %v192, %v265
    %v283 = vmul.f32 %v206, %v279
    %v284 = vld [vmem:[#allocation7] sm:$0xff]
    %v285 = vld [vmem:[#allocation7 + $0x8] sm:$0xff]
    %v286 = vld [vmem:[#allocation7 + $0x10] sm:$0xff]
    %v287 = vld [vmem:[#allocation7 + $0x18] sm:$0xff]
    %v288 = vld [vmem:[#allocation7 + $0x20] sm:$0xff]
    %v289 = vld [vmem:[#allocation7 + $0x28] sm:$0xff]
    %v290 = vld [vmem:[#allocation7 + $0x30] sm:$0xff]
    %v291 = vld [vmem:[#allocation7 + $0x38] sm:$0xff]
    %v292 = vld [vmem:[#allocation7 + $0x40] sm:$0xff]
    %v293 = vld [vmem:[#allocation7 + $0x48] sm:$0xff]
    %v294 = vld [vmem:[#allocation7 + $0x50] sm:$0xff]
    %v295 = vld [vmem:[#allocation7 + $0x58] sm:$0xff]
    %v296 = vld [vmem:[#allocation7 + $0x60] sm:$0xff]
    %v297 = vld [vmem:[#allocation7 + $0x68] sm:$0xff]
    %v298 = vld [vmem:[#allocation7 + $0x70] sm:$0xff]
    %v299 = vld [vmem:[#allocation7 + $0x78] sm:$0xff]
    %v300 = vld [vmem:[#allocation7 + $0x80] sm:$0xff]
    %v301 = vld [vmem:[#allocation7 + $0x88] sm:$0xff]
    %v302 = vld [vmem:[#allocation7 + $0x90] sm:$0xff]
    %v303 = vld [vmem:[#allocation7 + $0x98] sm:$0xff]
    %v304 = vld [vmem:[#allocation7 + $0xa0] sm:$0xff]
    %v305 = vld [vmem:[#allocation7 + $0xa8] sm:$0xff]
    %v306 = vld [vmem:[#allocation7 + $0xb0] sm:$0xff]
    %v307 = vld [vmem:[#allocation7 + $0xb8] sm:$0xff]
    %v308 = vld [vmem:[#allocation7 + $0xc0] sm:$0xff]
    %v309 = vld [vmem:[#allocation7 + $0xc8] sm:$0xff]
    %v310 = vld [vmem:[#allocation7 + $0xd0] sm:$0xff]
    %v311 = vld [vmem:[#allocation7 + $0xd8] sm:$0xff]
    %v312 = vld [vmem:[#allocation7 + $0xe0] sm:$0xff]
    %v313 = vld [vmem:[#allocation7 + $0xe8] sm:$0xff]
    %v314 = vld [vmem:[#allocation7 + $0xf0] sm:$0xff]
    %v315 = vld [vmem:[#allocation7 + $0xf8] sm:$0xff]
    %v316 = vpack.c.bf16 %v282, %v280
    %v317 = vpack.c.bf16 %v283, %v281
    %s318 = scalar_lea.vmem [#allocation12], 1
    %v319 = vld [vmem:[%s318] ss:$8 sm:$0x3]
    %v321 = vperm.slane %v319, 0
    %v322 = vperm.slane %v319, 1
    %v357 = vunpack.c.l.b16 %v284
    %v358 = vunpack.c.h.b16 %v284
    %v359 = vunpack.c.l.b16 %v285
    %v360 = vunpack.c.h.b16 %v285
    %v361 = vunpack.c.l.b16 %v286
    %v362 = vunpack.c.h.b16 %v286
    %v363 = vunpack.c.l.b16 %v287
    %v364 = vunpack.c.h.b16 %v287
    %v365 = vunpack.c.l.b16 %v288
    %v366 = vunpack.c.h.b16 %v288
    %v367 = vunpack.c.l.b16 %v289
    %v368 = vunpack.c.h.b16 %v289
    %v369 = vunpack.c.l.b16 %v290
    %v370 = vunpack.c.h.b16 %v290
    %v371 = vunpack.c.l.b16 %v291
    %v372 = vunpack.c.h.b16 %v291
    %v373 = vunpack.c.l.b16 %v292
    %v374 = vunpack.c.h.b16 %v292
    %v375 = vunpack.c.l.b16 %v293
    %v376 = vunpack.c.h.b16 %v293
    %v377 = vunpack.c.l.b16 %v294
    %v378 = vunpack.c.h.b16 %v294
    %v379 = vunpack.c.l.b16 %v295
    %v380 = vunpack.c.h.b16 %v295
    %v381 = vunpack.c.l.b16 %v296
    %v382 = vunpack.c.h.b16 %v296
    %v383 = vunpack.c.l.b16 %v297
    %v384 = vunpack.c.h.b16 %v297
    %v385 = vunpack.c.l.b16 %v298
    %v386 = vunpack.c.h.b16 %v298
    %v387 = vunpack.c.l.b16 %v299
    %v388 = vunpack.c.h.b16 %v299
    %v389 = vunpack.c.l.b16 %v300
    %v390 = vunpack.c.h.b16 %v300
    %v391 = vunpack.c.l.b16 %v301
    %v392 = vunpack.c.h.b16 %v301
    %v393 = vunpack.c.l.b16 %v302
    %v394 = vunpack.c.h.b16 %v302
    %v395 = vunpack.c.l.b16 %v303
    %v396 = vunpack.c.h.b16 %v303
    %v397 = vunpack.c.l.b16 %v304
    %v398 = vunpack.c.h.b16 %v304
    %v399 = vunpack.c.l.b16 %v305
    %v400 = vunpack.c.h.b16 %v305
    %v401 = vunpack.c.l.b16 %v306
    %v402 = vunpack.c.h.b16 %v306
    %v403 = vunpack.c.l.b16 %v307
    %v404 = vunpack.c.h.b16 %v307
    %v405 = vunpack.c.l.b16 %v308
    %v406 = vunpack.c.h.b16 %v308
    %v407 = vunpack.c.l.b16 %v309
    %v408 = vunpack.c.h.b16 %v309
    %v409 = vunpack.c.l.b16 %v310
    %v410 = vunpack.c.h.b16 %v310
    %v411 = vunpack.c.l.b16 %v311
    %v412 = vunpack.c.h.b16 %v311
    %v413 = vunpack.c.l.b16 %v312
    %v414 = vunpack.c.h.b16 %v312
    %v415 = vunpack.c.l.b16 %v313
    %v416 = vunpack.c.h.b16 %v313
    %v417 = vunpack.c.l.b16 %v314
    %v418 = vunpack.c.h.b16 %v314
    %v419 = vunpack.c.l.b16 %v315
    %v420 = vunpack.c.h.b16 %v315
    %v421 = vpack.c.b16 %v359, %v357
    %v422 = vpack.c.b16 %v360, %v358
    %v423 = vpack.c.b16 %v363, %v361
    %v424 = vpack.c.b16 %v364, %v362
    %v425 = vpack.c.b16 %v367, %v365
    %v426 = vpack.c.b16 %v368, %v366
    %v427 = vpack.c.b16 %v371, %v369
    %v428 = vpack.c.b16 %v372, %v370
    %v429 = vpack.c.b16 %v375, %v373
    %v430 = vpack.c.b16 %v376, %v374
    %v431 = vpack.c.b16 %v379, %v377
    %v432 = vpack.c.b16 %v380, %v378
    %v433 = vpack.c.b16 %v383, %v381
    %v434 = vpack.c.b16 %v384, %v382
    %v435 = vpack.c.b16 %v387, %v385
    %v436 = vpack.c.b16 %v388, %v386
    %v437 = vpack.c.b16 %v391, %v389
    %v438 = vpack.c.b16 %v392, %v390
    %v439 = vpack.c.b16 %v395, %v393
    %v440 = vpack.c.b16 %v396, %v394
    %v441 = vpack.c.b16 %v399, %v397
    %v442 = vpack.c.b16 %v400, %v398
    %v443 = vpack.c.b16 %v403, %v401
    %v444 = vpack.c.b16 %v404, %v402
    %v445 = vpack.c.b16 %v407, %v405
    %v446 = vpack.c.b16 %v408, %v406
    %v447 = vpack.c.b16 %v411, %v409
    %v448 = vpack.c.b16 %v412, %v410
    %v449 = vpack.c.b16 %v415, %v413
    %v450 = vpack.c.b16 %v416, %v414
    %v451 = vpack.c.b16 %v419, %v417
    %v452 = vpack.c.b16 %v420, %v418
    %485 = vmatpush.bf16.msra.mxu0 %v435
    %486 = vmatpush.bf16.msra.mxu0 %v433
    %487 = vmatpush.bf16.msra.mxu0 %v431
    %488 = vmatpush.bf16.msra.mxu0 %v429
    %489 = vmatpush.bf16.msra.mxu0 %v427
    %490 = vmatpush.bf16.msra.mxu0 %v425
    %491 = vmatpush.bf16.msra.mxu0 %v423
    %492 = vmatpush.bf16.msra.mxu0 %v421
    %493 = vmatmul.bf16.gmra.mxu0 %v316
    %v494 = vpop.f32.mrf.mxu0
    %v495 = vadd.f32 %v321, %v494
    %v496 = vpop.f32.mrf.mxu0
    %v497 = vadd.f32 %v321, %v496
    %498 = vdwg.mxu0
    %499 = vmatpush.bf16.msra.mxu0 %v451
    %500 = vmatpush.bf16.msra.mxu0 %v449
    %501 = vmatpush.bf16.msra.mxu0 %v447
    %502 = vmatpush.bf16.msra.mxu0 %v445
    %503 = vmatpush.bf16.msra.mxu0 %v443
    %504 = vmatpush.bf16.msra.mxu0 %v441
    %505 = vmatpush.bf16.msra.mxu0 %v439
    %506 = vmatpush.bf16.msra.mxu0 %v437
    %507 = vmatmul.bf16.gmra.mxu0 %v317
    %v508 = vpop.f32.mrf.mxu0
    %v509 = vadd.f32 %v495, %v508
    %v510 = vpop.f32.mrf.mxu0
    %v511 = vadd.f32 %v497, %v510
    %512 = vdwg.mxu0
    %513 = vmatpush.bf16.msra.mxu0 %v436
    %514 = vmatpush.bf16.msra.mxu0 %v434
    %515 = vmatpush.bf16.msra.mxu0 %v432
    %516 = vmatpush.bf16.msra.mxu0 %v430
    %517 = vmatpush.bf16.msra.mxu0 %v428
    %518 = vmatpush.bf16.msra.mxu0 %v426
    %519 = vmatpush.bf16.msra.mxu0 %v424
    %520 = vmatpush.bf16.msra.mxu0 %v422
    %521 = vmatmul.bf16.gmra.mxu0 %v316
    %v522 = vpop.f32.mrf.mxu0
    %v523 = vadd.f32 %v322, %v522
    %v524 = vpop.f32.mrf.mxu0
    %v525 = vadd.f32 %v322, %v524
    %526 = vdwg.mxu0
    %527 = vmatpush.bf16.msra.mxu0 %v452
    %528 = vmatpush.bf16.msra.mxu0 %v450
    %529 = vmatpush.bf16.msra.mxu0 %v448
    %530 = vmatpush.bf16.msra.mxu0 %v446
    %531 = vmatpush.bf16.msra.mxu0 %v444
    %532 = vmatpush.bf16.msra.mxu0 %v442
    %533 = vmatpush.bf16.msra.mxu0 %v440
    %534 = vmatpush.bf16.msra.mxu0 %v438
    %535 = vmatmul.bf16.gmra.mxu0 %v317
    %v536 = vpop.f32.mrf.mxu0
    %v537 = vadd.f32 %v523, %v536
    %v538 = vpop.f32.mrf.mxu0
    %v539 = vadd.f32 %v525, %v538
    %540 = vdwg.mxu0
    %v541 = vsub.f32 0.0, %v509
    %v542 = vsub.f32 0.0, %v537
    %v543 = vsub.f32 0.0, %v511
    %v544 = vsub.f32 0.0, %v539
    %v545 = vmul.f32 %v541, 1.442695
    %v546 = vpow.pop %v545
    %v547 = vmul.f32 %v542, 1.442695
    %v548 = vpow.pop %v547
    %v549 = vmul.f32 %v543, 1.442695
    %v550 = vpow.pop %v549
    %v551 = vmul.f32 %v544, 1.442695
    %v552 = vpow.pop %v551
    %v553 = vadd.f32 %v546, 1.0
    %v554 = vadd.f32 %v548, 1.0
    %v555 = vadd.f32 %v550, 1.0
    %v556 = vadd.f32 %v552, 1.0
    %v557 = vrcp.pop %v553
    %v558 = vmul.f32 %v553, %v557
    %v559 = vsub.f32 1.0, %v558
    %v560 = vmul.f32 %v557, %v559
    %v561 = vadd.f32 %v557, %v560
    %vm562 = vweird.f32 %v553
    %vm563 = vweird.f32 %v557
    %vm564 = vmor %vm562, %vm563
    %v565 = vsel %vm564, %v557, %v561
    %v566 = vand.u32 2147483647, %v553
    %vm567 = vcmp.eq.f32.partialorder %v566, 8.507059e+37
    %v568 = vand.u32 %v553, 2147483648
    %v569 = vor.u32 1.1754944e-38, %v568
    %v570 = vsel %vm567, %v569, %v565
    %v571 = vrcp.pop %v554
    %v572 = vmul.f32 %v554, %v571
    %v573 = vsub.f32 1.0, %v572
    %v574 = vmul.f32 %v571, %v573
    %v575 = vadd.f32 %v571, %v574
    %vm576 = vweird.f32 %v554
    %vm577 = vweird.f32 %v571
    %vm578 = vmor %vm576, %vm577
    %v579 = vsel %vm578, %v571, %v575
    %v580 = vand.u32 2147483647, %v554
    %vm581 = vcmp.eq.f32.partialorder %v580, 8.507059e+37
    %v582 = vand.u32 %v554, 2147483648
    %v583 = vor.u32 1.1754944e-38, %v582
    %v584 = vsel %vm581, %v583, %v579
    %v585 = vrcp.pop %v555
    %v586 = vmul.f32 %v555, %v585
    %v587 = vsub.f32 1.0, %v586
    %v588 = vmul.f32 %v585, %v587
    %v589 = vadd.f32 %v585, %v588
    %vm590 = vweird.f32 %v555
    %vm591 = vweird.f32 %v585
    %vm592 = vmor %vm590, %vm591
    %v593 = vsel %vm592, %v585, %v589
    %v594 = vand.u32 2147483647, %v555
    %vm595 = vcmp.eq.f32.partialorder %v594, 8.507059e+37
    %v596 = vand.u32 %v555, 2147483648
    %v597 = vor.u32 1.1754944e-38, %v596
    %v598 = vsel %vm595, %v597, %v593
    %v599 = vrcp.pop %v556
    %v600 = vmul.f32 %v556, %v599
    %v601 = vsub.f32 1.0, %v600
    %v602 = vmul.f32 %v599, %v601
    %v603 = vadd.f32 %v599, %v602
    %vm604 = vweird.f32 %v556
    %vm605 = vweird.f32 %v599
    %vm606 = vmor %vm604, %vm605
    %v607 = vsel %vm606, %v599, %v603
    %v608 = vand.u32 2147483647, %v556
    %vm609 = vcmp.eq.f32.partialorder %v608, 8.507059e+37
    %v610 = vand.u32 %v556, 2147483648
    %v611 = vor.u32 1.1754944e-38, %v610
    %v612 = vsel %vm609, %v611, %v607
    %v613 = vmul.f32 %v509, %v570
    %v614 = vmul.f32 %v537, %v584
    %v615 = vmul.f32 %v511, %v598
    %v616 = vmul.f32 %v539, %v612
    %s617 = scalar_lea.vmem [#allocation7], 256
    %v618 = vld [vmem:[%s617] sm:$0xff]
    %v619 = vld [vmem:[%s617 + $0x8] sm:$0xff]
    %v620 = vld [vmem:[%s617 + $0x10] sm:$0xff]
    %v621 = vld [vmem:[%s617 + $0x18] sm:$0xff]
    %v622 = vld [vmem:[%s617 + $0x20] sm:$0xff]
    %v623 = vld [vmem:[%s617 + $0x28] sm:$0xff]
    %v624 = vld [vmem:[%s617 + $0x30] sm:$0xff]
    %v625 = vld [vmem:[%s617 + $0x38] sm:$0xff]
    %v626 = vld [vmem:[%s617 + $0x40] sm:$0xff]
    %v627 = vld [vmem:[%s617 + $0x48] sm:$0xff]
    %v628 = vld [vmem:[%s617 + $0x50] sm:$0xff]
    %v629 = vld [vmem:[%s617 + $0x58] sm:$0xff]
    %v630 = vld [vmem:[%s617 + $0x60] sm:$0xff]
    %v631 = vld [vmem:[%s617 + $0x68] sm:$0xff]
    %v632 = vld [vmem:[%s617 + $0x70] sm:$0xff]
    %v633 = vld [vmem:[%s617 + $0x78] sm:$0xff]
    %v634 = vld [vmem:[%s617 + $0x80] sm:$0xff]
    %v635 = vld [vmem:[%s617 + $0x88] sm:$0xff]
    %v636 = vld [vmem:[%s617 + $0x90] sm:$0xff]
    %v637 = vld [vmem:[%s617 + $0x98] sm:$0xff]
    %v638 = vld [vmem:[%s617 + $0xa0] sm:$0xff]
    %v639 = vld [vmem:[%s617 + $0xa8] sm:$0xff]
    %v640 = vld [vmem:[%s617 + $0xb0] sm:$0xff]
    %v641 = vld [vmem:[%s617 + $0xb8] sm:$0xff]
    %v642 = vld [vmem:[%s617 + $0xc0] sm:$0xff]
    %v643 = vld [vmem:[%s617 + $0xc8] sm:$0xff]
    %v644 = vld [vmem:[%s617 + $0xd0] sm:$0xff]
    %v645 = vld [vmem:[%s617 + $0xd8] sm:$0xff]
    %v646 = vld [vmem:[%s617 + $0xe0] sm:$0xff]
    %v647 = vld [vmem:[%s617 + $0xe8] sm:$0xff]
    %v648 = vld [vmem:[%s617 + $0xf0] sm:$0xff]
    %v649 = vld [vmem:[%s617 + $0xf8] sm:$0xff]
    %v650 = vpack.c.bf16 %v615, %v613
    %v651 = vpack.c.bf16 %v616, %v614
    %s652 = scalar_lea.vmem [#allocation12], 2
    %v653 = vld [vmem:[%s652] ss:$8 sm:$0x3]
    %v655 = vperm.slane %v653, 0
    %v656 = vperm.slane %v653, 1
    %v691 = vunpack.c.l.b16 %v618
    %v692 = vunpack.c.h.b16 %v618
    %v693 = vunpack.c.l.b16 %v619
    %v694 = vunpack.c.h.b16 %v619
    %v695 = vunpack.c.l.b16 %v620
    %v696 = vunpack.c.h.b16 %v620
    %v697 = vunpack.c.l.b16 %v621
    %v698 = vunpack.c.h.b16 %v621
    %v699 = vunpack.c.l.b16 %v622
    %v700 = vunpack.c.h.b16 %v622
    %v701 = vunpack.c.l.b16 %v623
    %v702 = vunpack.c.h.b16 %v623
    %v703 = vunpack.c.l.b16 %v624
    %v704 = vunpack.c.h.b16 %v624
    %v705 = vunpack.c.l.b16 %v625
    %v706 = vunpack.c.h.b16 %v625
    %v707 = vunpack.c.l.b16 %v626
    %v708 = vunpack.c.h.b16 %v626
    %v709 = vunpack.c.l.b16 %v627
    %v710 = vunpack.c.h.b16 %v627
    %v711 = vunpack.c.l.b16 %v628
    %v712 = vunpack.c.h.b16 %v628
    %v713 = vunpack.c.l.b16 %v629
    %v714 = vunpack.c.h.b16 %v629
    %v715 = vunpack.c.l.b16 %v630
    %v716 = vunpack.c.h.b16 %v630
    %v717 = vunpack.c.l.b16 %v631
    %v718 = vunpack.c.h.b16 %v631
    %v719 = vunpack.c.l.b16 %v632
    %v720 = vunpack.c.h.b16 %v632
    %v721 = vunpack.c.l.b16 %v633
    %v722 = vunpack.c.h.b16 %v633
    %v723 = vunpack.c.l.b16 %v634
    %v724 = vunpack.c.h.b16 %v634
    %v725 = vunpack.c.l.b16 %v635
    %v726 = vunpack.c.h.b16 %v635
    %v727 = vunpack.c.l.b16 %v636
    %v728 = vunpack.c.h.b16 %v636
    %v729 = vunpack.c.l.b16 %v637
    %v730 = vunpack.c.h.b16 %v637
    %v731 = vunpack.c.l.b16 %v638
    %v732 = vunpack.c.h.b16 %v638
    %v733 = vunpack.c.l.b16 %v639
    %v734 = vunpack.c.h.b16 %v639
    %v735 = vunpack.c.l.b16 %v640
    %v736 = vunpack.c.h.b16 %v640
    %v737 = vunpack.c.l.b16 %v641
    %v738 = vunpack.c.h.b16 %v641
    %v739 = vunpack.c.l.b16 %v642
    %v740 = vunpack.c.h.b16 %v642
    %v741 = vunpack.c.l.b16 %v643
    %v742 = vunpack.c.h.b16 %v643
    %v743 = vunpack.c.l.b16 %v644
    %v744 = vunpack.c.h.b16 %v644
    %v745 = vunpack.c.l.b16 %v645
    %v746 = vunpack.c.h.b16 %v645
    %v747 = vunpack.c.l.b16 %v646
    %v748 = vunpack.c.h.b16 %v646
    %v749 = vunpack.c.l.b16 %v647
    %v750 = vunpack.c.h.b16 %v647
    %v751 = vunpack.c.l.b16 %v648
    %v752 = vunpack.c.h.b16 %v648
    %v753 = vunpack.c.l.b16 %v649
    %v754 = vunpack.c.h.b16 %v649
    %v755 = vpack.c.b16 %v693, %v691
    %v756 = vpack.c.b16 %v694, %v692
    %v757 = vpack.c.b16 %v697, %v695
    %v758 = vpack.c.b16 %v698, %v696
    %v759 = vpack.c.b16 %v701, %v699
    %v760 = vpack.c.b16 %v702, %v700
    %v761 = vpack.c.b16 %v705, %v703
    %v762 = vpack.c.b16 %v706, %v704
    %v763 = vpack.c.b16 %v709, %v707
    %v764 = vpack.c.b16 %v710, %v708
    %v765 = vpack.c.b16 %v713, %v711
    %v766 = vpack.c.b16 %v714, %v712
    %v767 = vpack.c.b16 %v717, %v715
    %v768 = vpack.c.b16 %v718, %v716
    %v769 = vpack.c.b16 %v721, %v719
    %v770 = vpack.c.b16 %v722, %v720
    %v771 = vpack.c.b16 %v725, %v723
    %v772 = vpack.c.b16 %v726, %v724
    %v773 = vpack.c.b16 %v729, %v727
    %v774 = vpack.c.b16 %v730, %v728
    %v775 = vpack.c.b16 %v733, %v731
    %v776 = vpack.c.b16 %v734, %v732
    %v777 = vpack.c.b16 %v737, %v735
    %v778 = vpack.c.b16 %v738, %v736
    %v779 = vpack.c.b16 %v741, %v739
    %v780 = vpack.c.b16 %v742, %v740
    %v781 = vpack.c.b16 %v745, %v743
    %v782 = vpack.c.b16 %v746, %v744
    %v783 = vpack.c.b16 %v749, %v747
    %v784 = vpack.c.b16 %v750, %v748
    %v785 = vpack.c.b16 %v753, %v751
    %v786 = vpack.c.b16 %v754, %v752
    %819 = vmatpush.bf16.msra.mxu0 %v769
    %820 = vmatpush.bf16.msra.mxu0 %v767
    %821 = vmatpush.bf16.msra.mxu0 %v765
    %822 = vmatpush.bf16.msra.mxu0 %v763
    %823 = vmatpush.bf16.msra.mxu0 %v761
    %824 = vmatpush.bf16.msra.mxu0 %v759
    %825 = vmatpush.bf16.msra.mxu0 %v757
    %826 = vmatpush.bf16.msra.mxu0 %v755
    %827 = vmatmul.bf16.gmra.mxu0 %v650
    %v828 = vpop.f32.mrf.mxu0
    %v829 = vadd.f32 %v655, %v828
    %v830 = vpop.f32.mrf.mxu0
    %v831 = vadd.f32 %v655, %v830
    %832 = vdwg.mxu0
    %833 = vmatpush.bf16.msra.mxu0 %v785
    %834 = vmatpush.bf16.msra.mxu0 %v783
    %835 = vmatpush.bf16.msra.mxu0 %v781
    %836 = vmatpush.bf16.msra.mxu0 %v779
    %837 = vmatpush.bf16.msra.mxu0 %v777
    %838 = vmatpush.bf16.msra.mxu0 %v775
    %839 = vmatpush.bf16.msra.mxu0 %v773
    %840 = vmatpush.bf16.msra.mxu0 %v771
    %841 = vmatmul.bf16.gmra.mxu0 %v651
    %v842 = vpop.f32.mrf.mxu0
    %v843 = vadd.f32 %v829, %v842
    %v844 = vpop.f32.mrf.mxu0
    %v845 = vadd.f32 %v831, %v844
    %846 = vdwg.mxu0
    %847 = vmatpush.bf16.msra.mxu0 %v770
    %848 = vmatpush.bf16.msra.mxu0 %v768
    %849 = vmatpush.bf16.msra.mxu0 %v766
    %850 = vmatpush.bf16.msra.mxu0 %v764
    %851 = vmatpush.bf16.msra.mxu0 %v762
    %852 = vmatpush.bf16.msra.mxu0 %v760
    %853 = vmatpush.bf16.msra.mxu0 %v758
    %854 = vmatpush.bf16.msra.mxu0 %v756
    %855 = vmatmul.bf16.gmra.mxu0 %v650
    %v856 = vpop.f32.mrf.mxu0
    %v857 = vadd.f32 %v656, %v856
    %v858 = vpop.f32.mrf.mxu0
    %v859 = vadd.f32 %v656, %v858
    %860 = vdwg.mxu0
    %861 = vmatpush.bf16.msra.mxu0 %v786
    %862 = vmatpush.bf16.msra.mxu0 %v784
    %863 = vmatpush.bf16.msra.mxu0 %v782
    %864 = vmatpush.bf16.msra.mxu0 %v780
    %865 = vmatpush.bf16.msra.mxu0 %v778
    %866 = vmatpush.bf16.msra.mxu0 %v776
    %867 = vmatpush.bf16.msra.mxu0 %v774
    %868 = vmatpush.bf16.msra.mxu0 %v772
    %869 = vmatmul.bf16.gmra.mxu0 %v651
    %v870 = vpop.f32.mrf.mxu0
    %v871 = vadd.f32 %v857, %v870
    %v872 = vpop.f32.mrf.mxu0
    %v873 = vadd.f32 %v859, %v872
    %874 = vdwg.mxu0
    %s875 = scalar_lea.vmem [#allocation7], 512
    %v876 = vld [vmem:[%s875] sm:$0xff]
    %v877 = vld [vmem:[%s875 + $0x8] sm:$0xff]
    %v878 = vld [vmem:[%s875 + $0x10] sm:$0xff]
    %v879 = vld [vmem:[%s875 + $0x18] sm:$0xff]
    %v880 = vld [vmem:[%s875 + $0x20] sm:$0xff]
    %v881 = vld [vmem:[%s875 + $0x28] sm:$0xff]
    %v882 = vld [vmem:[%s875 + $0x30] sm:$0xff]
    %v883 = vld [vmem:[%s875 + $0x38] sm:$0xff]
    %v884 = vld [vmem:[%s875 + $0x40] sm:$0xff]
    %v885 = vld [vmem:[%s875 + $0x48] sm:$0xff]
    %v886 = vld [vmem:[%s875 + $0x50] sm:$0xff]
    %v887 = vld [vmem:[%s875 + $0x58] sm:$0xff]
    %v888 = vld [vmem:[%s875 + $0x60] sm:$0xff]
    %v889 = vld [vmem:[%s875 + $0x68] sm:$0xff]
    %v890 = vld [vmem:[%s875 + $0x70] sm:$0xff]
    %v891 = vld [vmem:[%s875 + $0x78] sm:$0xff]
    %v892 = vld [vmem:[%s875 + $0x80] sm:$0xff]
    %v893 = vld [vmem:[%s875 + $0x88] sm:$0xff]
    %v894 = vld [vmem:[%s875 + $0x90] sm:$0xff]
    %v895 = vld [vmem:[%s875 + $0x98] sm:$0xff]
    %v896 = vld [vmem:[%s875 + $0xa0] sm:$0xff]
    %v897 = vld [vmem:[%s875 + $0xa8] sm:$0xff]
    %v898 = vld [vmem:[%s875 + $0xb0] sm:$0xff]
    %v899 = vld [vmem:[%s875 + $0xb8] sm:$0xff]
    %v900 = vld [vmem:[%s875 + $0xc0] sm:$0xff]
    %v901 = vld [vmem:[%s875 + $0xc8] sm:$0xff]
    %v902 = vld [vmem:[%s875 + $0xd0] sm:$0xff]
    %v903 = vld [vmem:[%s875 + $0xd8] sm:$0xff]
    %v904 = vld [vmem:[%s875 + $0xe0] sm:$0xff]
    %v905 = vld [vmem:[%s875 + $0xe8] sm:$0xff]
    %v906 = vld [vmem:[%s875 + $0xf0] sm:$0xff]
    %v907 = vld [vmem:[%s875 + $0xf8] sm:$0xff]
    %v908 = vpack.c.bf16 %v843, %v843
    %v909 = vpack.c.bf16 %v871, %v871
    %s910 = scalar_lea.vmem [#allocation7], 768
    %v911 = vld [vmem:[%s910] sm:$0xff]
    %v912 = vld [vmem:[%s910 + $0x8] sm:$0xff]
    %v913 = vld [vmem:[%s910 + $0x10] sm:$0xff]
    %v914 = vld [vmem:[%s910 + $0x18] sm:$0xff]
    %v915 = vld [vmem:[%s910 + $0x20] sm:$0xff]
    %v916 = vld [vmem:[%s910 + $0x28] sm:$0xff]
    %v917 = vld [vmem:[%s910 + $0x30] sm:$0xff]
    %v918 = vld [vmem:[%s910 + $0x38] sm:$0xff]
    %v919 = vld [vmem:[%s910 + $0x40] sm:$0xff]
    %v920 = vld [vmem:[%s910 + $0x48] sm:$0xff]
    %v921 = vld [vmem:[%s910 + $0x50] sm:$0xff]
    %v922 = vld [vmem:[%s910 + $0x58] sm:$0xff]
    %v923 = vld [vmem:[%s910 + $0x60] sm:$0xff]
    %v924 = vld [vmem:[%s910 + $0x68] sm:$0xff]
    %v925 = vld [vmem:[%s910 + $0x70] sm:$0xff]
    %v926 = vld [vmem:[%s910 + $0x78] sm:$0xff]
    %v927 = vld [vmem:[%s910 + $0x80] sm:$0xff]
    %v928 = vld [vmem:[%s910 + $0x88] sm:$0xff]
    %v929 = vld [vmem:[%s910 + $0x90] sm:$0xff]
    %v930 = vld [vmem:[%s910 + $0x98] sm:$0xff]
    %v931 = vld [vmem:[%s910 + $0xa0] sm:$0xff]
    %v932 = vld [vmem:[%s910 + $0xa8] sm:$0xff]
    %v933 = vld [vmem:[%s910 + $0xb0] sm:$0xff]
    %v934 = vld [vmem:[%s910 + $0xb8] sm:$0xff]
    %v935 = vld [vmem:[%s910 + $0xc0] sm:$0xff]
    %v936 = vld [vmem:[%s910 + $0xc8] sm:$0xff]
    %v937 = vld [vmem:[%s910 + $0xd0] sm:$0xff]
    %v938 = vld [vmem:[%s910 + $0xd8] sm:$0xff]
    %v939 = vld [vmem:[%s910 + $0xe0] sm:$0xff]
    %v940 = vld [vmem:[%s910 + $0xe8] sm:$0xff]
    %v941 = vld [vmem:[%s910 + $0xf0] sm:$0xff]
    %v942 = vld [vmem:[%s910 + $0xf8] sm:$0xff]
    %v943 = vpack.c.bf16 %v845, %v845
    %v944 = vpack.c.bf16 %v873, %v873
    %v977 = vunpack.c.l.b16 %v911
    %v978 = vunpack.c.h.b16 %v911
    %v979 = vunpack.c.l.b16 %v912
    %v980 = vunpack.c.h.b16 %v912
    %v981 = vunpack.c.l.b16 %v913
    %v982 = vunpack.c.h.b16 %v913
    %v983 = vunpack.c.l.b16 %v914
    %v984 = vunpack.c.h.b16 %v914
    %v985 = vunpack.c.l.b16 %v915
    %v986 = vunpack.c.h.b16 %v915
    %v987 = vunpack.c.l.b16 %v916
    %v988 = vunpack.c.h.b16 %v916
    %v989 = vunpack.c.l.b16 %v917
    %v990 = vunpack.c.h.b16 %v917
    %v991 = vunpack.c.l.b16 %v918
    %v992 = vunpack.c.h.b16 %v918
    %v993 = vunpack.c.l.b16 %v919
    %v994 = vunpack.c.h.b16 %v919
    %v995 = vunpack.c.l.b16 %v920
    %v996 = vunpack.c.h.b16 %v920
    %v997 = vunpack.c.l.b16 %v921
    %v998 = vunpack.c.h.b16 %v921
    %v999 = vunpack.c.l.b16 %v922
    %v1000 = vunpack.c.h.b16 %v922
    %v1001 = vunpack.c.l.b16 %v923
    %v1002 = vunpack.c.h.b16 %v923
    %v1003 = vunpack.c.l.b16 %v924
    %v1004 = vunpack.c.h.b16 %v924
    %v1005 = vunpack.c.l.b16 %v925
    %v1006 = vunpack.c.h.b16 %v925
    %v1007 = vunpack.c.l.b16 %v926
    %v1008 = vunpack.c.h.b16 %v926
    %v1009 = vunpack.c.l.b16 %v927
    %v1010 = vunpack.c.h.b16 %v927
    %v1011 = vunpack.c.l.b16 %v928
    %v1012 = vunpack.c.h.b16 %v928
    %v1013 = vunpack.c.l.b16 %v929
    %v1014 = vunpack.c.h.b16 %v929
    %v1015 = vunpack.c.l.b16 %v930
    %v1016 = vunpack.c.h.b16 %v930
    %v1017 = vunpack.c.l.b16 %v931
    %v1018 = vunpack.c.h.b16 %v931
    %v1019 = vunpack.c.l.b16 %v932
    %v1020 = vunpack.c.h.b16 %v932
    %v1021 = vunpack.c.l.b16 %v933
    %v1022 = vunpack.c.h.b16 %v933
    %v1023 = vunpack.c.l.b16 %v934
    %v1024 = vunpack.c.h.b16 %v934
    %v1025 = vunpack.c.l.b16 %v935
    %v1026 = vunpack.c.h.b16 %v935
    %v1027 = vunpack.c.l.b16 %v936
    %v1028 = vunpack.c.h.b16 %v936
    %v1029 = vunpack.c.l.b16 %v937
    %v1030 = vunpack.c.h.b16 %v937
    %v1031 = vunpack.c.l.b16 %v938
    %v1032 = vunpack.c.h.b16 %v938
    %v1033 = vunpack.c.l.b16 %v939
    %v1034 = vunpack.c.h.b16 %v939
    %v1035 = vunpack.c.l.b16 %v940
    %v1036 = vunpack.c.h.b16 %v940
    %v1037 = vunpack.c.l.b16 %v941
    %v1038 = vunpack.c.h.b16 %v941
    %v1039 = vunpack.c.l.b16 %v942
    %v1040 = vunpack.c.h.b16 %v942
    %v1041 = vpack.c.b16 %v979, %v977
    %v1042 = vpack.c.b16 %v980, %v978
    %v1043 = vpack.c.b16 %v983, %v981
    %v1044 = vpack.c.b16 %v984, %v982
    %v1045 = vpack.c.b16 %v987, %v985
    %v1046 = vpack.c.b16 %v988, %v986
    %v1047 = vpack.c.b16 %v991, %v989
    %v1048 = vpack.c.b16 %v992, %v990
    %v1049 = vpack.c.b16 %v995, %v993
    %v1050 = vpack.c.b16 %v996, %v994
    %v1051 = vpack.c.b16 %v999, %v997
    %v1052 = vpack.c.b16 %v1000, %v998
    %v1053 = vpack.c.b16 %v1003, %v1001
    %v1054 = vpack.c.b16 %v1004, %v1002
    %v1055 = vpack.c.b16 %v1007, %v1005
    %v1056 = vpack.c.b16 %v1008, %v1006
    %v1057 = vpack.c.b16 %v1011, %v1009
    %v1058 = vpack.c.b16 %v1012, %v1010
    %v1059 = vpack.c.b16 %v1015, %v1013
    %v1060 = vpack.c.b16 %v1016, %v1014
    %v1061 = vpack.c.b16 %v1019, %v1017
    %v1062 = vpack.c.b16 %v1020, %v1018
    %v1063 = vpack.c.b16 %v1023, %v1021
    %v1064 = vpack.c.b16 %v1024, %v1022
    %v1065 = vpack.c.b16 %v1027, %v1025
    %v1066 = vpack.c.b16 %v1028, %v1026
    %v1067 = vpack.c.b16 %v1031, %v1029
    %v1068 = vpack.c.b16 %v1032, %v1030
    %v1069 = vpack.c.b16 %v1035, %v1033
    %v1070 = vpack.c.b16 %v1036, %v1034
    %v1071 = vpack.c.b16 %v1039, %v1037
    %v1072 = vpack.c.b16 %v1040, %v1038
    %1105 = vmatpush.bf16.msra.mxu0 %v1055
    %1106 = vmatpush.bf16.msra.mxu0 %v1053
    %1107 = vmatpush.bf16.msra.mxu0 %v1051
    %1108 = vmatpush.bf16.msra.mxu0 %v1049
    %1109 = vmatpush.bf16.msra.mxu0 %v1047
    %1110 = vmatpush.bf16.msra.mxu0 %v1045
    %1111 = vmatpush.bf16.msra.mxu0 %v1043
    %1112 = vmatpush.bf16.msra.mxu0 %v1041
    %1113 = vmatmul.bf16.gmra.mxu0 %v943
    %v1114 = vpop.f32.mrf.mxu0
    %v1115 = vadd.f32 0.0, %v1114
    %v1116 = vpop.f32.mrf.mxu0
    %1117 = vdwg.mxu0
    %1118 = vmatpush.bf16.msra.mxu0 %v1071
    %1119 = vmatpush.bf16.msra.mxu0 %v1069
    %1120 = vmatpush.bf16.msra.mxu0 %v1067
    %1121 = vmatpush.bf16.msra.mxu0 %v1065
    %1122 = vmatpush.bf16.msra.mxu0 %v1063
    %1123 = vmatpush.bf16.msra.mxu0 %v1061
    %1124 = vmatpush.bf16.msra.mxu0 %v1059
    %1125 = vmatpush.bf16.msra.mxu0 %v1057
    %1126 = vmatmul.bf16.gmra.mxu0 %v944
    %v1127 = vpop.f32.mrf.mxu0
    %v1128 = vadd.f32 %v1115, %v1127
    %v1129 = vpop.f32.mrf.mxu0
    %1130 = vdwg.mxu0
    %1131 = vmatpush.bf16.msra.mxu0 %v1056
    %1132 = vmatpush.bf16.msra.mxu0 %v1054
    %1133 = vmatpush.bf16.msra.mxu0 %v1052
    %1134 = vmatpush.bf16.msra.mxu0 %v1050
    %1135 = vmatpush.bf16.msra.mxu0 %v1048
    %1136 = vmatpush.bf16.msra.mxu0 %v1046
    %1137 = vmatpush.bf16.msra.mxu0 %v1044
    %1138 = vmatpush.bf16.msra.mxu0 %v1042
    %1139 = vmatmul.bf16.gmra.mxu0 %v943
    %v1140 = vpop.f32.mrf.mxu0
    %v1141 = vadd.f32 0.0, %v1140
    %v1142 = vpop.f32.mrf.mxu0
    %1143 = vdwg.mxu0
    %1144 = vmatpush.bf16.msra.mxu0 %v1072
    %1145 = vmatpush.bf16.msra.mxu0 %v1070
    %1146 = vmatpush.bf16.msra.mxu0 %v1068
    %1147 = vmatpush.bf16.msra.mxu0 %v1066
    %1148 = vmatpush.bf16.msra.mxu0 %v1064
    %1149 = vmatpush.bf16.msra.mxu0 %v1062
    %1150 = vmatpush.bf16.msra.mxu0 %v1060
    %1151 = vmatpush.bf16.msra.mxu0 %v1058
    %1152 = vmatmul.bf16.gmra.mxu0 %v944
    %v1153 = vpop.f32.mrf.mxu0
    %v1154 = vadd.f32 %v1141, %v1153
    %v1155 = vpop.f32.mrf.mxu0
    %1156 = vdwg.mxu0
    %v1189 = vunpack.c.l.b16 %v876
    %v1190 = vunpack.c.h.b16 %v876
    %v1191 = vunpack.c.l.b16 %v877
    %v1192 = vunpack.c.h.b16 %v877
    %v1193 = vunpack.c.l.b16 %v878
    %v1194 = vunpack.c.h.b16 %v878
    %v1195 = vunpack.c.l.b16 %v879
    %v1196 = vunpack.c.h.b16 %v879
    %v1197 = vunpack.c.l.b16 %v880
    %v1198 = vunpack.c.h.b16 %v880
    %v1199 = vunpack.c.l.b16 %v881
    %v1200 = vunpack.c.h.b16 %v881
    %v1201 = vunpack.c.l.b16 %v882
    %v1202 = vunpack.c.h.b16 %v882
    %v1203 = vunpack.c.l.b16 %v883
    %v1204 = vunpack.c.h.b16 %v883
    %v1205 = vunpack.c.l.b16 %v884
    %v1206 = vunpack.c.h.b16 %v884
    %v1207 = vunpack.c.l.b16 %v885
    %v1208 = vunpack.c.h.b16 %v885
    %v1209 = vunpack.c.l.b16 %v886
    %v1210 = vunpack.c.h.b16 %v886
    %v1211 = vunpack.c.l.b16 %v887
    %v1212 = vunpack.c.h.b16 %v887
    %v1213 = vunpack.c.l.b16 %v888
    %v1214 = vunpack.c.h.b16 %v888
    %v1215 = vunpack.c.l.b16 %v889
    %v1216 = vunpack.c.h.b16 %v889
    %v1217 = vunpack.c.l.b16 %v890
    %v1218 = vunpack.c.h.b16 %v890
    %v1219 = vunpack.c.l.b16 %v891
    %v1220 = vunpack.c.h.b16 %v891
    %v1221 = vunpack.c.l.b16 %v892
    %v1222 = vunpack.c.h.b16 %v892
    %v1223 = vunpack.c.l.b16 %v893
    %v1224 = vunpack.c.h.b16 %v893
    %v1225 = vunpack.c.l.b16 %v894
    %v1226 = vunpack.c.h.b16 %v894
    %v1227 = vunpack.c.l.b16 %v895
    %v1228 = vunpack.c.h.b16 %v895
    %v1229 = vunpack.c.l.b16 %v896
    %v1230 = vunpack.c.h.b16 %v896
    %v1231 = vunpack.c.l.b16 %v897
    %v1232 = vunpack.c.h.b16 %v897
    %v1233 = vunpack.c.l.b16 %v898
    %v1234 = vunpack.c.h.b16 %v898
    %v1235 = vunpack.c.l.b16 %v899
    %v1236 = vunpack.c.h.b16 %v899
    %v1237 = vunpack.c.l.b16 %v900
    %v1238 = vunpack.c.h.b16 %v900
    %v1239 = vunpack.c.l.b16 %v901
    %v1240 = vunpack.c.h.b16 %v901
    %v1241 = vunpack.c.l.b16 %v902
    %v1242 = vunpack.c.h.b16 %v902
    %v1243 = vunpack.c.l.b16 %v903
    %v1244 = vunpack.c.h.b16 %v903
    %v1245 = vunpack.c.l.b16 %v904
    %v1246 = vunpack.c.h.b16 %v904
    %v1247 = vunpack.c.l.b16 %v905
    %v1248 = vunpack.c.h.b16 %v905
    %v1249 = vunpack.c.l.b16 %v906
    %v1250 = vunpack.c.h.b16 %v906
    %v1251 = vunpack.c.l.b16 %v907
    %v1252 = vunpack.c.h.b16 %v907
    %v1253 = vpack.c.b16 %v1191, %v1189
    %v1254 = vpack.c.b16 %v1192, %v1190
    %v1255 = vpack.c.b16 %v1195, %v1193
    %v1256 = vpack.c.b16 %v1196, %v1194
    %v1257 = vpack.c.b16 %v1199, %v1197
    %v1258 = vpack.c.b16 %v1200, %v1198
    %v1259 = vpack.c.b16 %v1203, %v1201
    %v1260 = vpack.c.b16 %v1204, %v1202
    %v1261 = vpack.c.b16 %v1207, %v1205
    %v1262 = vpack.c.b16 %v1208, %v1206
    %v1263 = vpack.c.b16 %v1211, %v1209
    %v1264 = vpack.c.b16 %v1212, %v1210
    %v1265 = vpack.c.b16 %v1215, %v1213
    %v1266 = vpack.c.b16 %v1216, %v1214
    %v1267 = vpack.c.b16 %v1219, %v1217
    %v1268 = vpack.c.b16 %v1220, %v1218
    %v1269 = vpack.c.b16 %v1223, %v1221
    %v1270 = vpack.c.b16 %v1224, %v1222
    %v1271 = vpack.c.b16 %v1227, %v1225
    %v1272 = vpack.c.b16 %v1228, %v1226
    %v1273 = vpack.c.b16 %v1231, %v1229
    %v1274 = vpack.c.b16 %v1232, %v1230
    %v1275 = vpack.c.b16 %v1235, %v1233
    %v1276 = vpack.c.b16 %v1236, %v1234
    %v1277 = vpack.c.b16 %v1239, %v1237
    %v1278 = vpack.c.b16 %v1240, %v1238
    %v1279 = vpack.c.b16 %v1243, %v1241
    %v1280 = vpack.c.b16 %v1244, %v1242
    %v1281 = vpack.c.b16 %v1247, %v1245
    %v1282 = vpack.c.b16 %v1248, %v1246
    %v1283 = vpack.c.b16 %v1251, %v1249
    %v1284 = vpack.c.b16 %v1252, %v1250
    %1317 = vmatpush.bf16.msra.mxu0 %v1267
    %1318 = vmatpush.bf16.msra.mxu0 %v1265
    %1319 = vmatpush.bf16.msra.mxu0 %v1263
    %1320 = vmatpush.bf16.msra.mxu0 %v1261
    %1321 = vmatpush.bf16.msra.mxu0 %v1259
    %1322 = vmatpush.bf16.msra.mxu0 %v1257
    %1323 = vmatpush.bf16.msra.mxu0 %v1255
    %1324 = vmatpush.bf16.msra.mxu0 %v1253
    %1325 = vmatmul.bf16.gmra.mxu0 %v908
    %v1326 = vpop.f32.mrf.mxu0
    %v1327 = vadd.f32 %v1128, %v1326
    %v1328 = vpop.f32.mrf.mxu0
    %1329 = vdwg.mxu0
    %1330 = vmatpush.bf16.msra.mxu0 %v1283
    %1331 = vmatpush.bf16.msra.mxu0 %v1281
    %1332 = vmatpush.bf16.msra.mxu0 %v1279
    %1333 = vmatpush.bf16.msra.mxu0 %v1277
    %1334 = vmatpush.bf16.msra.mxu0 %v1275
    %1335 = vmatpush.bf16.msra.mxu0 %v1273
    %1336 = vmatpush.bf16.msra.mxu0 %v1271
    %1337 = vmatpush.bf16.msra.mxu0 %v1269
    %1338 = vmatmul.bf16.gmra.mxu0 %v909
    %v1339 = vpop.f32.mrf.mxu0
    %v1340 = vadd.f32 %v1327, %v1339
    %v1341 = vpop.f32.mrf.mxu0
    %1342 = vdwg.mxu0
    %1343 = vmatpush.bf16.msra.mxu0 %v1268
    %1344 = vmatpush.bf16.msra.mxu0 %v1266
    %1345 = vmatpush.bf16.msra.mxu0 %v1264
    %1346 = vmatpush.bf16.msra.mxu0 %v1262
    %1347 = vmatpush.bf16.msra.mxu0 %v1260
    %1348 = vmatpush.bf16.msra.mxu0 %v1258
    %1349 = vmatpush.bf16.msra.mxu0 %v1256
    %1350 = vmatpush.bf16.msra.mxu0 %v1254
    %1351 = vmatmul.bf16.gmra.mxu0 %v908
    %v1352 = vpop.f32.mrf.mxu0
    %v1353 = vadd.f32 %v1154, %v1352
    %v1354 = vpop.f32.mrf.mxu0
    %1355 = vdwg.mxu0
    %1356 = vmatpush.bf16.msra.mxu0 %v1284
    %1357 = vmatpush.bf16.msra.mxu0 %v1282
    %1358 = vmatpush.bf16.msra.mxu0 %v1280
    %1359 = vmatpush.bf16.msra.mxu0 %v1278
    %1360 = vmatpush.bf16.msra.mxu0 %v1276
    %1361 = vmatpush.bf16.msra.mxu0 %v1274
    %1362 = vmatpush.bf16.msra.mxu0 %v1272
    %1363 = vmatpush.bf16.msra.mxu0 %v1270
    %1364 = vmatmul.bf16.gmra.mxu0 %v909
    %v1365 = vpop.f32.mrf.mxu0
    %v1366 = vadd.f32 %v1353, %v1365
    %v1367 = vpop.f32.mrf.mxu0
    %1368 = vdwg.mxu0
    %s1369 = scalar_lea.vmem [#allocation12], 3
    %v1370 = vld [vmem:[%s1369] ss:$8 sm:$0x3]
    %v1372 = vperm.slane %v1370, 0
    %v1373 = vperm.slane %v1370, 1
    %v1376 = vadd.f32 %v1340, %v1372
    %v1377 = vadd.f32 %v1366, %v1373
    %v1378 = vrot.slane %v1376, 4
    %v1379 = vadd.f32 %v1376, %v1378
    %v1380 = vrot.slane %v1379, 2
    %v1381 = vadd.f32 %v1379, %v1380
    %v1382 = vrot.slane %v1381, 1
    %v1383 = vadd.f32 %v1381, %v1382
    %v1384 = vrot.slane %v1377, 4
    %v1385 = vadd.f32 %v1377, %v1384
    %v1386 = vrot.slane %v1385, 2
    %v1387 = vadd.f32 %v1385, %v1386
    %v1388 = vrot.slane %v1387, 1
    %v1389 = vadd.f32 %v1387, %v1388
    %v1390 = vrcp.pop 8.0
    %v1391 = vmul.f32 8.0, %v1390
    %v1392 = vsub.f32 1.0, %v1391
    %v1393 = vmul.f32 %v1390, %v1392
    %v1394 = vadd.f32 %v1390, %v1393
    %vm1395 = vweird.f32 %v1390
    %v1396 = vsel %vm1395, %v1390, %v1394
    %v1397 = vmul.f32 %v1383, %v1396
    %v1398 = vmul.f32 %v1389, %v1396
    %v1399 = vsub.f32 %v1376, %v1397
    %v1400 = vsub.f32 %v1377, %v1398
    %v1401 = vmul.f32 %v1399, %v1399
    %v1402 = vmul.f32 %v1400, %v1400
    %v1403 = vrot.slane %v1401, 4
    %v1404 = vadd.f32 %v1401, %v1403
    %v1405 = vrot.slane %v1404, 2
    %v1406 = vadd.f32 %v1404, %v1405
    %v1407 = vrot.slane %v1406, 1
    %v1408 = vadd.f32 %v1406, %v1407
    %v1409 = vrot.slane %v1402, 4
    %v1410 = vadd.f32 %v1402, %v1409
    %v1411 = vrot.slane %v1410, 2
    %v1412 = vadd.f32 %v1410, %v1411
    %v1413 = vrot.slane %v1412, 1
    %v1414 = vadd.f32 %v1412, %v1413
    %v1415 = vmul.f32 %v1408, %v1396
    %v1416 = vmul.f32 %v1414, %v1396
    %v1417 = vadd.f32 %v1415, 1e-05
    %v1418 = vadd.f32 %v1416, 1e-05
    %v1419 = vrsqrt.pop %v1417
    %v1420 = vmul.f32 %v1419, %v1417
    %v1421 = vmul.f32 %v1420, %v1419
    %v1422 = vmul.f32 0.5, %v1421
    %v1423 = vsub.f32 1.5, %v1422
    %v1424 = vmul.f32 %v1419, %v1423
    %vm1425 = vweird.f32 %v1417
    %vm1426 = vweird.f32 %v1419
    %vm1427 = vmor %vm1425, %vm1426
    %v1428 = vsel %vm1427, %v1419, %v1424
    %v1429 = vrsqrt.pop %v1418
    %v1430 = vmul.f32 %v1429, %v1418
    %v1431 = vmul.f32 %v1430, %v1429
    %v1432 = vmul.f32 0.5, %v1431
    %v1433 = vsub.f32 1.5, %v1432
    %v1434 = vmul.f32 %v1429, %v1433
    %vm1435 = vweird.f32 %v1418
    %vm1436 = vweird.f32 %v1429
    %vm1437 = vmor %vm1435, %vm1436
    %v1438 = vsel %vm1437, %v1429, %v1434
    %v1439 = vmul.f32 %v1399, %v1428
    %v1440 = vmul.f32 %v1400, %v1438
    %s1441 = scalar_lea.vmem [#allocation12], 4
    %v1442 = vld [vmem:[%s1441] ss:$8 sm:$0x3]
    %v1444 = vperm.slane %v1442, 0
    %v1445 = vperm.slane %v1442, 1
    %v1448 = vmul.f32 %v1439, %v1444
    %v1449 = vmul.f32 %v1440, %v1445
    %s1450 = scalar_lea.vmem [#allocation12], 5
    %v1451 = vld [vmem:[%s1450] ss:$8 sm:$0x3]
    %v1453 = vperm.slane %v1451, 0
    %v1454 = vperm.slane %v1451, 1
    %v1457 = vadd.f32 %v1448, %v1453
    %v1458 = vadd.f32 %v1449, %v1454
    %v1459 = vsub.f32 0.0, %v1457
    %v1460 = vsub.f32 0.0, %v1458
    %v1461 = vmul.f32 %v1459, 1.442695
    %v1462 = vpow.pop %v1461
    %v1463 = vmul.f32 %v1460, 1.442695
    %v1464 = vpow.pop %v1463
    %v1465 = vadd.f32 %v1462, 1.0
    %v1466 = vadd.f32 %v1464, 1.0
    %v1467 = vrcp.pop %v1465
    %v1468 = vmul.f32 %v1465, %v1467
    %v1469 = vsub.f32 1.0, %v1468
    %v1470 = vmul.f32 %v1467, %v1469
    %v1471 = vadd.f32 %v1467, %v1470
    %vm1472 = vweird.f32 %v1465
    %vm1473 = vweird.f32 %v1467
    %vm1474 = vmor %vm1472, %vm1473
    %v1475 = vsel %vm1474, %v1467, %v1471
    %v1476 = vand.u32 2147483647, %v1465
    %vm1477 = vcmp.eq.f32.partialorder %v1476, 8.507059e+37
    %v1478 = vand.u32 %v1465, 2147483648
    %v1479 = vor.u32 1.1754944e-38, %v1478
    %v1480 = vsel %vm1477, %v1479, %v1475
    %v1481 = vrcp.pop %v1466
    %v1482 = vmul.f32 %v1466, %v1481
    %v1483 = vsub.f32 1.0, %v1482
    %v1484 = vmul.f32 %v1481, %v1483
    %v1485 = vadd.f32 %v1481, %v1484
    %vm1486 = vweird.f32 %v1466
    %vm1487 = vweird.f32 %v1481
    %vm1488 = vmor %vm1486, %vm1487
    %v1489 = vsel %vm1488, %v1481, %v1485
    %v1490 = vand.u32 2147483647, %v1466
    %vm1491 = vcmp.eq.f32.partialorder %v1490, 8.507059e+37
    %v1492 = vand.u32 %v1466, 2147483648
    %v1493 = vor.u32 1.1754944e-38, %v1492
    %v1494 = vsel %vm1491, %v1493, %v1489
    %v1495 = vmul.f32 %v1457, %v1480
    %v1496 = vmul.f32 %v1458, %v1494
    %s1497 = scalar_lea.vmem [#allocation7], 1024
    %v1498 = vld [vmem:[%s1497] sm:$0xff]
    %v1499 = vld [vmem:[%s1497 + $0x8] sm:$0xff]
    %v1500 = vld [vmem:[%s1497 + $0x10] sm:$0xff]
    %v1501 = vld [vmem:[%s1497 + $0x18] sm:$0xff]
    %v1502 = vld [vmem:[%s1497 + $0x20] sm:$0xff]
    %v1503 = vld [vmem:[%s1497 + $0x28] sm:$0xff]
    %v1504 = vld [vmem:[%s1497 + $0x30] sm:$0xff]
    %v1505 = vld [vmem:[%s1497 + $0x38] sm:$0xff]
    %v1506 = vld [vmem:[%s1497 + $0x40] sm:$0xff]
    %v1507 = vld [vmem:[%s1497 + $0x48] sm:$0xff]
    %v1508 = vld [vmem:[%s1497 + $0x50] sm:$0xff]
    %v1509 = vld [vmem:[%s1497 + $0x58] sm:$0xff]
    %v1510 = vld [vmem:[%s1497 + $0x60] sm:$0xff]
    %v1511 = vld [vmem:[%s1497 + $0x68] sm:$0xff]
    %v1512 = vld [vmem:[%s1497 + $0x70] sm:$0xff]
    %v1513 = vld [vmem:[%s1497 + $0x78] sm:$0xff]
    %v1514 = vld [vmem:[%s1497 + $0x80] sm:$0xff]
    %v1515 = vld [vmem:[%s1497 + $0x88] sm:$0xff]
    %v1516 = vld [vmem:[%s1497 + $0x90] sm:$0xff]
    %v1517 = vld [vmem:[%s1497 + $0x98] sm:$0xff]
    %v1518 = vld [vmem:[%s1497 + $0xa0] sm:$0xff]
    %v1519 = vld [vmem:[%s1497 + $0xa8] sm:$0xff]
    %v1520 = vld [vmem:[%s1497 + $0xb0] sm:$0xff]
    %v1521 = vld [vmem:[%s1497 + $0xb8] sm:$0xff]
    %v1522 = vld [vmem:[%s1497 + $0xc0] sm:$0xff]
    %v1523 = vld [vmem:[%s1497 + $0xc8] sm:$0xff]
    %v1524 = vld [vmem:[%s1497 + $0xd0] sm:$0xff]
    %v1525 = vld [vmem:[%s1497 + $0xd8] sm:$0xff]
    %v1526 = vld [vmem:[%s1497 + $0xe0] sm:$0xff]
    %v1527 = vld [vmem:[%s1497 + $0xe8] sm:$0xff]
    %v1528 = vld [vmem:[%s1497 + $0xf0] sm:$0xff]
    %v1529 = vld [vmem:[%s1497 + $0xf8] sm:$0xff]
    %v1530 = vpack.c.bf16 %v1495, %v1495
    %v1531 = vpack.c.bf16 %v1496, %v1496
    %s1532 = scalar_lea.vmem [#allocation12], 6
    %v1533 = vld [vmem:[%s1532] ss:$8 sm:$0x3]
    %v1535 = vperm.slane %v1533, 0
    %v1536 = vperm.slane %v1533, 1
    %v1571 = vunpack.c.l.b16 %v1498
    %v1572 = vunpack.c.h.b16 %v1498
    %v1573 = vunpack.c.l.b16 %v1499
    %v1574 = vunpack.c.h.b16 %v1499
    %v1575 = vunpack.c.l.b16 %v1500
    %v1576 = vunpack.c.h.b16 %v1500
    %v1577 = vunpack.c.l.b16 %v1501
    %v1578 = vunpack.c.h.b16 %v1501
    %v1579 = vunpack.c.l.b16 %v1502
    %v1580 = vunpack.c.h.b16 %v1502
    %v1581 = vunpack.c.l.b16 %v1503
    %v1582 = vunpack.c.h.b16 %v1503
    %v1583 = vunpack.c.l.b16 %v1504
    %v1584 = vunpack.c.h.b16 %v1504
    %v1585 = vunpack.c.l.b16 %v1505
    %v1586 = vunpack.c.h.b16 %v1505
    %v1587 = vunpack.c.l.b16 %v1506
    %v1588 = vunpack.c.h.b16 %v1506
    %v1589 = vunpack.c.l.b16 %v1507
    %v1590 = vunpack.c.h.b16 %v1507
    %v1591 = vunpack.c.l.b16 %v1508
    %v1592 = vunpack.c.h.b16 %v1508
    %v1593 = vunpack.c.l.b16 %v1509
    %v1594 = vunpack.c.h.b16 %v1509
    %v1595 = vunpack.c.l.b16 %v1510
    %v1596 = vunpack.c.h.b16 %v1510
    %v1597 = vunpack.c.l.b16 %v1511
    %v1598 = vunpack.c.h.b16 %v1511
    %v1599 = vunpack.c.l.b16 %v1512
    %v1600 = vunpack.c.h.b16 %v1512
    %v1601 = vunpack.c.l.b16 %v1513
    %v1602 = vunpack.c.h.b16 %v1513
    %v1603 = vunpack.c.l.b16 %v1514
    %v1604 = vunpack.c.h.b16 %v1514
    %v1605 = vunpack.c.l.b16 %v1515
    %v1606 = vunpack.c.h.b16 %v1515
    %v1607 = vunpack.c.l.b16 %v1516
    %v1608 = vunpack.c.h.b16 %v1516
    %v1609 = vunpack.c.l.b16 %v1517
    %v1610 = vunpack.c.h.b16 %v1517
    %v1611 = vunpack.c.l.b16 %v1518
    %v1612 = vunpack.c.h.b16 %v1518
    %v1613 = vunpack.c.l.b16 %v1519
    %v1614 = vunpack.c.h.b16 %v1519
    %v1615 = vunpack.c.l.b16 %v1520
    %v1616 = vunpack.c.h.b16 %v1520
    %v1617 = vunpack.c.l.b16 %v1521
    %v1618 = vunpack.c.h.b16 %v1521
    %v1619 = vunpack.c.l.b16 %v1522
    %v1620 = vunpack.c.h.b16 %v1522
    %v1621 = vunpack.c.l.b16 %v1523
    %v1622 = vunpack.c.h.b16 %v1523
    %v1623 = vunpack.c.l.b16 %v1524
    %v1624 = vunpack.c.h.b16 %v1524
    %v1625 = vunpack.c.l.b16 %v1525
    %v1626 = vunpack.c.h.b16 %v1525
    %v1627 = vunpack.c.l.b16 %v1526
    %v1628 = vunpack.c.h.b16 %v1526
    %v1629 = vunpack.c.l.b16 %v1527
    %v1630 = vunpack.c.h.b16 %v1527
    %v1631 = vunpack.c.l.b16 %v1528
    %v1632 = vunpack.c.h.b16 %v1528
    %v1633 = vunpack.c.l.b16 %v1529
    %v1634 = vunpack.c.h.b16 %v1529
    %v1635 = vpack.c.b16 %v1573, %v1571
    %v1636 = vpack.c.b16 %v1574, %v1572
    %v1637 = vpack.c.b16 %v1577, %v1575
    %v1638 = vpack.c.b16 %v1578, %v1576
    %v1639 = vpack.c.b16 %v1581, %v1579
    %v1640 = vpack.c.b16 %v1582, %v1580
    %v1641 = vpack.c.b16 %v1585, %v1583
    %v1642 = vpack.c.b16 %v1586, %v1584
    %v1643 = vpack.c.b16 %v1589, %v1587
    %v1644 = vpack.c.b16 %v1590, %v1588
    %v1645 = vpack.c.b16 %v1593, %v1591
    %v1646 = vpack.c.b16 %v1594, %v1592
    %v1647 = vpack.c.b16 %v1597, %v1595
    %v1648 = vpack.c.b16 %v1598, %v1596
    %v1649 = vpack.c.b16 %v1601, %v1599
    %v1650 = vpack.c.b16 %v1602, %v1600
    %v1651 = vpack.c.b16 %v1605, %v1603
    %v1652 = vpack.c.b16 %v1606, %v1604
    %v1653 = vpack.c.b16 %v1609, %v1607
    %v1654 = vpack.c.b16 %v1610, %v1608
    %v1655 = vpack.c.b16 %v1613, %v1611
    %v1656 = vpack.c.b16 %v1614, %v1612
    %v1657 = vpack.c.b16 %v1617, %v1615
    %v1658 = vpack.c.b16 %v1618, %v1616
    %v1659 = vpack.c.b16 %v1621, %v1619
    %v1660 = vpack.c.b16 %v1622, %v1620
    %v1661 = vpack.c.b16 %v1625, %v1623
    %v1662 = vpack.c.b16 %v1626, %v1624
    %v1663 = vpack.c.b16 %v1629, %v1627
    %v1664 = vpack.c.b16 %v1630, %v1628
    %v1665 = vpack.c.b16 %v1633, %v1631
    %v1666 = vpack.c.b16 %v1634, %v1632
    %1699 = vmatpush.bf16.msra.mxu0 %v1649
    %1700 = vmatpush.bf16.msra.mxu0 %v1647
    %1701 = vmatpush.bf16.msra.mxu0 %v1645
    %1702 = vmatpush.bf16.msra.mxu0 %v1643
    %1703 = vmatpush.bf16.msra.mxu0 %v1641
    %1704 = vmatpush.bf16.msra.mxu0 %v1639
    %1705 = vmatpush.bf16.msra.mxu0 %v1637
    %1706 = vmatpush.bf16.msra.mxu0 %v1635
    %1707 = vmatmul.bf16.gmra.mxu0 %v1530
    %v1708 = vpop.f32.mrf.mxu0
    %v1709 = vadd.f32 %v1535, %v1708
    %v1710 = vpop.f32.mrf.mxu0
    %1711 = vdwg.mxu0
    %1712 = vmatpush.bf16.msra.mxu0 %v1665
    %1713 = vmatpush.bf16.msra.mxu0 %v1663
    %1714 = vmatpush.bf16.msra.mxu0 %v1661
    %1715 = vmatpush.bf16.msra.mxu0 %v1659
    %1716 = vmatpush.bf16.msra.mxu0 %v1657
    %1717 = vmatpush.bf16.msra.mxu0 %v1655
    %1718 = vmatpush.bf16.msra.mxu0 %v1653
    %1719 = vmatpush.bf16.msra.mxu0 %v1651
    %1720 = vmatmul.bf16.gmra.mxu0 %v1531
    %v1721 = vpop.f32.mrf.mxu0
    %v1722 = vadd.f32 %v1709, %v1721
    %v1723 = vpop.f32.mrf.mxu0
    %1724 = vdwg.mxu0
    %1725 = vmatpush.bf16.msra.mxu0 %v1650
    %1726 = vmatpush.bf16.msra.mxu0 %v1648
    %1727 = vmatpush.bf16.msra.mxu0 %v1646
    %1728 = vmatpush.bf16.msra.mxu0 %v1644
    %1729 = vmatpush.bf16.msra.mxu0 %v1642
    %1730 = vmatpush.bf16.msra.mxu0 %v1640
    %1731 = vmatpush.bf16.msra.mxu0 %v1638
    %1732 = vmatpush.bf16.msra.mxu0 %v1636
    %1733 = vmatmul.bf16.gmra.mxu0 %v1530
    %v1734 = vpop.f32.mrf.mxu0
    %v1735 = vadd.f32 %v1536, %v1734
    %v1736 = vpop.f32.mrf.mxu0
    %1737 = vdwg.mxu0
    %1738 = vmatpush.bf16.msra.mxu0 %v1666
    %1739 = vmatpush.bf16.msra.mxu0 %v1664
    %1740 = vmatpush.bf16.msra.mxu0 %v1662
    %1741 = vmatpush.bf16.msra.mxu0 %v1660
    %1742 = vmatpush.bf16.msra.mxu0 %v1658
    %1743 = vmatpush.bf16.msra.mxu0 %v1656
    %1744 = vmatpush.bf16.msra.mxu0 %v1654
    %1745 = vmatpush.bf16.msra.mxu0 %v1652
    %1746 = vmatmul.bf16.gmra.mxu0 %v1531
    %v1747 = vpop.f32.mrf.mxu0
    %v1748 = vadd.f32 %v1735, %v1747
    %v1749 = vpop.f32.mrf.mxu0
    %1750 = vdwg.mxu0
    %v1751 = vrot.slane %v1722, 4
    %v1752 = vadd.f32 %v1722, %v1751
    %v1753 = vrot.slane %v1752, 2
    %v1754 = vadd.f32 %v1752, %v1753
    %v1755 = vrot.slane %v1754, 1
    %v1756 = vadd.f32 %v1754, %v1755
    %v1757 = vrot.slane %v1748, 4
    %v1758 = vadd.f32 %v1748, %v1757
    %v1759 = vrot.slane %v1758, 2
    %v1760 = vadd.f32 %v1758, %v1759
    %v1761 = vrot.slane %v1760, 1
    %v1762 = vadd.f32 %v1760, %v1761
    %v1763 = vmul.f32 %v1756, %v1396
    %v1764 = vmul.f32 %v1762, %v1396
    %v1765 = vsub.f32 %v1722, %v1763
    %v1766 = vsub.f32 %v1748, %v1764
    %v1767 = vmul.f32 %v1765, %v1765
    %v1768 = vmul.f32 %v1766, %v1766
    %v1769 = vrot.slane %v1767, 4
    %v1770 = vadd.f32 %v1767, %v1769
    %v1771 = vrot.slane %v1770, 2
    %v1772 = vadd.f32 %v1770, %v1771
    %v1773 = vrot.slane %v1772, 1
    %v1774 = vadd.f32 %v1772, %v1773
    %v1775 = vrot.slane %v1768, 4
    %v1776 = vadd.f32 %v1768, %v1775
    %v1777 = vrot.slane %v1776, 2
    %v1778 = vadd.f32 %v1776, %v1777
    %v1779 = vrot.slane %v1778, 1
    %v1780 = vadd.f32 %v1778, %v1779
    %v1781 = vmul.f32 %v1774, %v1396
    %v1782 = vmul.f32 %v1780, %v1396
    %v1783 = vadd.f32 %v1781, 1e-05
    %v1784 = vadd.f32 %v1782, 1e-05
    %v1785 = vrsqrt.pop %v1783
    %v1786 = vmul.f32 %v1785, %v1783
    %v1787 = vmul.f32 %v1786, %v1785
    %v1788 = vmul.f32 0.5, %v1787
    %v1789 = vsub.f32 1.5, %v1788
    %v1790 = vmul.f32 %v1785, %v1789
    %vm1791 = vweird.f32 %v1783
    %vm1792 = vweird.f32 %v1785
    %vm1793 = vmor %vm1791, %vm1792
    %v1794 = vsel %vm1793, %v1785, %v1790
    %v1795 = vrsqrt.pop %v1784
    %v1796 = vmul.f32 %v1795, %v1784
    %v1797 = vmul.f32 %v1796, %v1795
    %v1798 = vmul.f32 0.5, %v1797
    %v1799 = vsub.f32 1.5, %v1798
    %v1800 = vmul.f32 %v1795, %v1799
    %vm1801 = vweird.f32 %v1784
    %vm1802 = vweird.f32 %v1795
    %vm1803 = vmor %vm1801, %vm1802
    %v1804 = vsel %vm1803, %v1795, %v1800
    %v1805 = vmul.f32 %v1765, %v1794
    %v1806 = vmul.f32 %v1766, %v1804
    %s1807 = scalar_lea.vmem [#allocation12], 7
    %v1808 = vld [vmem:[%s1807] ss:$8 sm:$0x3]
    %v1810 = vperm.slane %v1808, 0
    %v1811 = vperm.slane %v1808, 1
    %v1814 = vmul.f32 %v1805, %v1810
    %v1815 = vmul.f32 %v1806, %v1811
    %s1816 = scalar_lea.vmem [#allocation12], 16
    %v1817 = vld [vmem:[%s1816] ss:$8 sm:$0x3]
    %v1819 = vperm.slane %v1817, 0
    %v1820 = vperm.slane %v1817, 1
    %v1823 = vadd.f32 %v1814, %v1819
    %v1824 = vadd.f32 %v1815, %v1820
    %v1825 = vsub.f32 0.0, %v1823
    %v1826 = vsub.f32 0.0, %v1824
    %v1827 = vmul.f32 %v1825, 1.442695
    %v1828 = vpow.pop %v1827
    %v1829 = vmul.f32 %v1826, 1.442695
    %v1830 = vpow.pop %v1829
    %v1831 = vadd.f32 %v1828, 1.0
    %v1832 = vadd.f32 %v1830, 1.0
    %v1833 = vrcp.pop %v1831
    %v1834 = vmul.f32 %v1831, %v1833
    %v1835 = vsub.f32 1.0, %v1834
    %v1836 = vmul.f32 %v1833, %v1835
    %v1837 = vadd.f32 %v1833, %v1836
    %vm1838 = vweird.f32 %v1831
    %vm1839 = vweird.f32 %v1833
    %vm1840 = vmor %vm1838, %vm1839
    %v1841 = vsel %vm1840, %v1833, %v1837
    %v1842 = vand.u32 2147483647, %v1831
    %vm1843 = vcmp.eq.f32.partialorder %v1842, 8.507059e+37
    %v1844 = vand.u32 %v1831, 2147483648
    %v1845 = vor.u32 1.1754944e-38, %v1844
    %v1846 = vsel %vm1843, %v1845, %v1841
    %v1847 = vrcp.pop %v1832
    %v1848 = vmul.f32 %v1832, %v1847
    %v1849 = vsub.f32 1.0, %v1848
    %v1850 = vmul.f32 %v1847, %v1849
    %v1851 = vadd.f32 %v1847, %v1850
    %vm1852 = vweird.f32 %v1832
    %vm1853 = vweird.f32 %v1847
    %vm1854 = vmor %vm1852, %vm1853
    %v1855 = vsel %vm1854, %v1847, %v1851
    %v1856 = vand.u32 2147483647, %v1832
    %vm1857 = vcmp.eq.f32.partialorder %v1856, 8.507059e+37
    %v1858 = vand.u32 %v1832, 2147483648
    %v1859 = vor.u32 1.1754944e-38, %v1858
    %v1860 = vsel %vm1857, %v1859, %v1855
    %v1861 = vmul.f32 %v1823, %v1846
    %v1862 = vmul.f32 %v1824, %v1860
    %v1863 = vld [vmem:[#allocation10] sm:$0xf]
    %v1864 = vld [vmem:[#allocation10 + $0x4] sm:$0xf]
    %v1865 = vld [vmem:[#allocation10 + $0x8] sm:$0xf]
    %v1866 = vld [vmem:[#allocation10 + $0xc] sm:$0xf]
    %v1867 = vld [vmem:[#allocation10 + $0x10] sm:$0xf]
    %v1868 = vld [vmem:[#allocation10 + $0x14] sm:$0xf]
    %v1869 = vld [vmem:[#allocation10 + $0x18] sm:$0xf]
    %v1870 = vld [vmem:[#allocation10 + $0x1c] sm:$0xf]
    %v1871 = vld [vmem:[#allocation10 + $0x20] sm:$0xf]
    %v1872 = vld [vmem:[#allocation10 + $0x24] sm:$0xf]
    %v1873 = vld [vmem:[#allocation10 + $0x28] sm:$0xf]
    %v1874 = vld [vmem:[#allocation10 + $0x2c] sm:$0xf]
    %v1875 = vld [vmem:[#allocation10 + $0x30] sm:$0xf]
    %v1876 = vld [vmem:[#allocation10 + $0x34] sm:$0xf]
    %v1877 = vld [vmem:[#allocation10 + $0x38] sm:$0xf]
    %v1878 = vld [vmem:[#allocation10 + $0x3c] sm:$0xf]
    %v1879 = vld [vmem:[#allocation10 + $0x40] sm:$0xf]
    %v1880 = vld [vmem:[#allocation10 + $0x44] sm:$0xf]
    %v1881 = vld [vmem:[#allocation10 + $0x48] sm:$0xf]
    %v1882 = vld [vmem:[#allocation10 + $0x4c] sm:$0xf]
    %v1883 = vld [vmem:[#allocation10 + $0x50] sm:$0xf]
    %v1884 = vld [vmem:[#allocation10 + $0x54] sm:$0xf]
    %v1885 = vld [vmem:[#allocation10 + $0x58] sm:$0xf]
    %v1886 = vld [vmem:[#allocation10 + $0x5c] sm:$0xf]
    %v1887 = vld [vmem:[#allocation10 + $0x60] sm:$0xf]
    %v1888 = vld [vmem:[#allocation10 + $0x64] sm:$0xf]
    %v1889 = vld [vmem:[#allocation10 + $0x68] sm:$0xf]
    %v1890 = vld [vmem:[#allocation10 + $0x6c] sm:$0xf]
    %v1891 = vld [vmem:[#allocation10 + $0x70] sm:$0xf]
    %v1892 = vld [vmem:[#allocation10 + $0x74] sm:$0xf]
    %v1893 = vld [vmem:[#allocation10 + $0x78] sm:$0xf]
    %v1894 = vld [vmem:[#allocation10 + $0x7c] sm:$0xf]
    %v1895 = vpack.c.bf16 %v1861, %v1861
    %v1896 = vpack.c.bf16 %v1862, %v1862
    %v1897 = vld [vmem:[#allocation13] sm:$0x1]
    %v1899 = vperm.slane %v1897, 0
    %v1933 = vunpack.c.l.b16 %v1863
    %v1934 = vunpack.c.l.b16 %v1864
    %v1935 = vunpack.c.l.b16 %v1865
    %v1936 = vunpack.c.l.b16 %v1866
    %v1937 = vunpack.c.l.b16 %v1867
    %v1938 = vunpack.c.l.b16 %v1868
    %v1939 = vunpack.c.l.b16 %v1869
    %v1940 = vunpack.c.l.b16 %v1870
    %v1941 = vunpack.c.l.b16 %v1871
    %v1942 = vunpack.c.l.b16 %v1872
    %v1943 = vunpack.c.l.b16 %v1873
    %v1944 = vunpack.c.l.b16 %v1874
    %v1945 = vunpack.c.l.b16 %v1875
    %v1946 = vunpack.c.l.b16 %v1876
    %v1947 = vunpack.c.l.b16 %v1877
    %v1948 = vunpack.c.l.b16 %v1878
    %v1949 = vunpack.c.l.b16 %v1879
    %v1950 = vunpack.c.l.b16 %v1880
    %v1951 = vunpack.c.l.b16 %v1881
    %v1952 = vunpack.c.l.b16 %v1882
    %v1953 = vunpack.c.l.b16 %v1883
    %v1954 = vunpack.c.l.b16 %v1884
    %v1955 = vunpack.c.l.b16 %v1885
    %v1956 = vunpack.c.l.b16 %v1886
    %v1957 = vunpack.c.l.b16 %v1887
    %v1958 = vunpack.c.l.b16 %v1888
    %v1959 = vunpack.c.l.b16 %v1889
    %v1960 = vunpack.c.l.b16 %v1890
    %v1961 = vunpack.c.l.b16 %v1891
    %v1962 = vunpack.c.l.b16 %v1892
    %v1963 = vunpack.c.l.b16 %v1893
    %v1964 = vunpack.c.l.b16 %v1894
    %v1965 = vpack.c.b16 %v1934, %v1933
    %v1966 = vpack.c.b16 %v1936, %v1935
    %v1967 = vpack.c.b16 %v1938, %v1937
    %v1968 = vpack.c.b16 %v1940, %v1939
    %v1969 = vpack.c.b16 %v1942, %v1941
    %v1970 = vpack.c.b16 %v1944, %v1943
    %v1971 = vpack.c.b16 %v1946, %v1945
    %v1972 = vpack.c.b16 %v1948, %v1947
    %v1973 = vpack.c.b16 %v1950, %v1949
    %v1974 = vpack.c.b16 %v1952, %v1951
    %v1975 = vpack.c.b16 %v1954, %v1953
    %v1976 = vpack.c.b16 %v1956, %v1955
    %v1977 = vpack.c.b16 %v1958, %v1957
    %v1978 = vpack.c.b16 %v1960, %v1959
    %v1979 = vpack.c.b16 %v1962, %v1961
    %v1980 = vpack.c.b16 %v1964, %v1963
    %1997 = vmatpush.bf16.msra.mxu0 %v1972
    %1998 = vmatpush.bf16.msra.mxu0 %v1971
    %1999 = vmatpush.bf16.msra.mxu0 %v1970
    %2000 = vmatpush.bf16.msra.mxu0 %v1969
    %2001 = vmatpush.bf16.msra.mxu0 %v1968
    %2002 = vmatpush.bf16.msra.mxu0 %v1967
    %2003 = vmatpush.bf16.msra.mxu0 %v1966
    %2004 = vmatpush.bf16.msra.mxu0 %v1965
    %2005 = vmatmul.bf16.gmra.mxu0 %v1895
    %v2006 = vpop.f32.mrf.mxu0
    %v2007 = vadd.f32 %v1899, %v2006
    %v2008 = vpop.f32.mrf.mxu0
    %2009 = vdwg.mxu0
    %2010 = vmatpush.bf16.msra.mxu0 %v1980
    %2011 = vmatpush.bf16.msra.mxu0 %v1979
    %2012 = vmatpush.bf16.msra.mxu0 %v1978
    %2013 = vmatpush.bf16.msra.mxu0 %v1977
    %2014 = vmatpush.bf16.msra.mxu0 %v1976
    %2015 = vmatpush.bf16.msra.mxu0 %v1975
    %2016 = vmatpush.bf16.msra.mxu0 %v1974
    %2017 = vmatpush.bf16.msra.mxu0 %v1973
    %2018 = vmatmul.bf16.gmra.mxu0 %v1896
    %v2019 = vpop.f32.mrf.mxu0
    %v2020 = vadd.f32 %v2007, %v2019
    %v2021 = vpop.f32.mrf.mxu0
    %2022 = vdwg.mxu0
    %2023 = vst [vmem:[#allocation15] sm:$0xff] %v845
    %2024 = vst [vmem:[#allocation15 + $0x8] sm:$0xff] %v873
    %2025 = vst [vmem:[#allocation18] sm:$0xff] %v2020
    %v2026 = vld [vmem:[#allocation9] sm:$0xff]
    %v2027 = vld [vmem:[#allocation9 + $0x8] sm:$0xff]
    %v2028 = vld [vmem:[#allocation9 + $0x10] sm:$0xff]
    %v2029 = vld [vmem:[#allocation9 + $0x18] sm:$0xff]
    %v2030 = vld [vmem:[#allocation9 + $0x20] sm:$0xff]
    %v2031 = vld [vmem:[#allocation9 + $0x28] sm:$0xff]
    %v2032 = vld [vmem:[#allocation9 + $0x30] sm:$0xff]
    %v2033 = vld [vmem:[#allocation9 + $0x38] sm:$0xff]
    %v2034 = vld [vmem:[#allocation9 + $0x40] sm:$0xff]
    %v2035 = vld [vmem:[#allocation9 + $0x48] sm:$0xff]
    %v2036 = vld [vmem:[#allocation9 + $0x50] sm:$0xff]
    %v2037 = vld [vmem:[#allocation9 + $0x58] sm:$0xff]
    %v2050 = vunpack.c.l.b16 %v2026
    %v2051 = vunpack.c.h.b16 %v2026
    %v2052 = vunpack.c.l.b16 %v2027
    %v2053 = vunpack.c.h.b16 %v2027
    %v2054 = vunpack.c.l.b16 %v2028
    %v2055 = vunpack.c.h.b16 %v2028
    %v2056 = vunpack.c.l.b16 %v2029
    %v2057 = vunpack.c.h.b16 %v2029
    %v2058 = vunpack.c.l.b16 %v2030
    %v2059 = vunpack.c.h.b16 %v2030
    %v2060 = vunpack.c.l.b16 %v2031
    %v2061 = vunpack.c.h.b16 %v2031
    %v2062 = vunpack.c.l.b16 %v2032
    %v2063 = vunpack.c.h.b16 %v2032
    %v2064 = vunpack.c.l.b16 %v2033
    %v2065 = vunpack.c.h.b16 %v2033
    %v2066 = vunpack.c.l.b16 %v2034
    %v2067 = vunpack.c.h.b16 %v2034
    %v2068 = vunpack.c.l.b16 %v2035
    %v2069 = vunpack.c.h.b16 %v2035
    %v2070 = vunpack.c.l.b16 %v2036
    %v2071 = vunpack.c.h.b16 %v2036
    %v2072 = vunpack.c.l.b16 %v2037
    %v2073 = vunpack.c.h.b16 %v2037
    %v2074 = vpack.c.b16 %v2056, %v2050
    %v2075 = vpack.c.b16 %v2057, %v2051
    %v2076 = vpack.c.b16 %v2058, %v2052
    %v2077 = vpack.c.b16 %v2059, %v2053
    %v2078 = vpack.c.b16 %v2060, %v2054
    %v2079 = vpack.c.b16 %v2061, %v2055
    %v2080 = vpack.c.b16 %v2068, %v2062
    %v2081 = vpack.c.b16 %v2069, %v2063
    %v2082 = vpack.c.b16 %v2070, %v2064
    %v2083 = vpack.c.b16 %v2071, %v2065
    %v2084 = vpack.c.b16 %v2072, %v2066
    %v2085 = vpack.c.b16 %v2073, %v2067
    %v2099 = vsel %vm176, %v144, 0
    %2101 = vmatpush.bf16.msra.mxu0 0
    %2102 = vmatpush.bf16.msra.mxu0 0
    %2103 = vmatpush.bf16.msra.mxu0 0
    %2104 = vmatpush.bf16.msra.mxu0 0
    %2105 = vmatpush.bf16.msra.mxu0 0
    %2106 = vmatpush.bf16.msra.mxu0 0
    %2107 = vmatpush.bf16.msra.mxu0 %v2080
    %2108 = vmatpush.bf16.msra.mxu0 %v2074
    %2109 = vmatmul.bf16.gmra.mxu0 %v2099
    %v2110 = vpop.f32.mrf.mxu0
    %v2111 = vadd.f32 0.0, %v2110
    %v2112 = vpop.f32.mrf.mxu0
    %2113 = vdwg.mxu0
    %2114 = vmatpush.bf16.msra.mxu0 0
    %2115 = vmatpush.bf16.msra.mxu0 0
    %2116 = vmatpush.bf16.msra.mxu0 0
    %2117 = vmatpush.bf16.msra.mxu0 0
    %2118 = vmatpush.bf16.msra.mxu0 0
    %2119 = vmatpush.bf16.msra.mxu0 0
    %2120 = vmatpush.bf16.msra.mxu0 %v2081
    %2121 = vmatpush.bf16.msra.mxu0 %v2075
    %2122 = vmatmul.bf16.gmra.mxu0 %v2099
    %v2123 = vpop.f32.mrf.mxu0
    %v2124 = vadd.f32 0.0, %v2123
    %v2125 = vpop.f32.mrf.mxu0
    %2126 = vdwg.mxu0
    %2127 = vmatpush.bf16.msra.mxu0 0
    %2128 = vmatpush.bf16.msra.mxu0 0
    %2129 = vmatpush.bf16.msra.mxu0 0
    %2130 = vmatpush.bf16.msra.mxu0 0
    %2131 = vmatpush.bf16.msra.mxu0 0
    %2132 = vmatpush.bf16.msra.mxu0 0
    %2133 = vmatpush.bf16.msra.mxu0 %v2082
    %2134 = vmatpush.bf16.msra.mxu0 %v2076
    %2135 = vmatmul.bf16.gmra.mxu0 %v2099
    %v2136 = vpop.f32.mrf.mxu0
    %v2137 = vadd.f32 0.0, %v2136
    %v2138 = vpop.f32.mrf.mxu0
    %2139 = vdwg.mxu0
    %2140 = vmatpush.bf16.msra.mxu0 0
    %2141 = vmatpush.bf16.msra.mxu0 0
    %2142 = vmatpush.bf16.msra.mxu0 0
    %2143 = vmatpush.bf16.msra.mxu0 0
    %2144 = vmatpush.bf16.msra.mxu0 0
    %2145 = vmatpush.bf16.msra.mxu0 0
    %2146 = vmatpush.bf16.msra.mxu0 %v2083
    %2147 = vmatpush.bf16.msra.mxu0 %v2077
    %2148 = vmatmul.bf16.gmra.mxu0 %v2099
    %v2149 = vpop.f32.mrf.mxu0
    %v2150 = vadd.f32 0.0, %v2149
    %v2151 = vpop.f32.mrf.mxu0
    %2152 = vdwg.mxu0
    %2153 = vmatpush.bf16.msra.mxu0 0
    %2154 = vmatpush.bf16.msra.mxu0 0
    %2155 = vmatpush.bf16.msra.mxu0 0
    %2156 = vmatpush.bf16.msra.mxu0 0
    %2157 = vmatpush.bf16.msra.mxu0 0
    %2158 = vmatpush.bf16.msra.mxu0 0
    %2159 = vmatpush.bf16.msra.mxu0 %v2084
    %2160 = vmatpush.bf16.msra.mxu0 %v2078
    %2161 = vmatmul.bf16.gmra.mxu0 %v2099
    %v2162 = vpop.f32.mrf.mxu0
    %v2163 = vadd.f32 0.0, %v2162
    %v2164 = vpop.f32.mrf.mxu0
    %2165 = vdwg.mxu0
    %2166 = vmatpush.bf16.msra.mxu0 0
    %2167 = vmatpush.bf16.msra.mxu0 0
    %2168 = vmatpush.bf16.msra.mxu0 0
    %2169 = vmatpush.bf16.msra.mxu0 0
    %2170 = vmatpush.bf16.msra.mxu0 0
    %2171 = vmatpush.bf16.msra.mxu0 0
    %2172 = vmatpush.bf16.msra.mxu0 %v2085
    %2173 = vmatpush.bf16.msra.mxu0 %v2079
    %2174 = vmatmul.bf16.gmra.mxu0 %v2099
    %v2175 = vpop.f32.mrf.mxu0
    %v2176 = vadd.f32 0.0, %v2175
    %v2177 = vpop.f32.mrf.mxu0
    %2178 = vdwg.mxu0
    %s2179 = scalar_lea.vmem [#allocation12], 17
    %v2180 = vld [vmem:[%s2179] ss:$8 sm:$0x3]
    %v2182 = vperm.slane %v2180, 0
    %v2183 = vperm.slane %v2180, 1
    %v2186 = vadd.f32 %v2111, %v2182
    %v2187 = vadd.f32 %v2124, %v2183
    %s2188 = scalar_lea.vmem [#allocation12], 19
    %v2189 = vld [vmem:[%s2188] ss:$8 sm:$0x3]
    %v2191 = vperm.slane %v2189, 0
    %v2192 = vperm.slane %v2189, 1
    %v2195 = vadd.f32 %v2137, %v2191
    %v2196 = vadd.f32 %v2150, %v2192
    %s2197 = scalar_lea.vmem [#allocation12], 32
    %v2198 = vld [vmem:[%s2197] ss:$8 sm:$0x3]
    %v2200 = vperm.slane %v2198, 0
    %v2201 = vperm.slane %v2198, 1
    %v2204 = vadd.f32 %v2163, %v2200
    %v2205 = vadd.f32 %v2176, %v2201
    %s2206 = smul.u32 4, 12
    %s2207 = smul.u32 %s2206, 32
    %s2208 = smul.u32 %s2207, 2
    %s2209 = sshll.u32 %s2208, 4
    %2210 = dma.done [#allocation3], %s2209
    %v2211 = vld [vmem:[#allocation2] sm:$0xff]
    %v2212 = vld [vmem:[#allocation2 + $0x8] sm:$0xff]
    %v2213 = vld [vmem:[#allocation2 + $0x10] sm:$0xff]
    %v2214 = vld [vmem:[#allocation2 + $0x18] sm:$0xff]
    %v2215 = vld [vmem:[#allocation2 + $0x20] sm:$0xff]
    %v2216 = vld [vmem:[#allocation2 + $0x28] sm:$0xff]
    %v2217 = vld [vmem:[#allocation2 + $0x30] sm:$0xff]
    %v2218 = vld [vmem:[#allocation2 + $0x38] sm:$0xff]
    %v2219 = vld [vmem:[#allocation2 + $0x40] sm:$0xff]
    %v2220 = vld [vmem:[#allocation2 + $0x48] sm:$0xff]
    %v2221 = vld [vmem:[#allocation2 + $0x50] sm:$0xff]
    %v2222 = vld [vmem:[#allocation2 + $0x58] sm:$0xff]
    %v2223 = vld [vmem:[#allocation2 + $0x60] sm:$0xff]
    %v2224 = vld [vmem:[#allocation2 + $0x68] sm:$0xff]
    %v2225 = vld [vmem:[#allocation2 + $0x70] sm:$0xff]
    %v2226 = vld [vmem:[#allocation2 + $0x78] sm:$0xff]
    %v2227 = vld [vmem:[#allocation2 + $0x80] sm:$0xff]
    %v2228 = vld [vmem:[#allocation2 + $0x88] sm:$0xff]
    %v2229 = vld [vmem:[#allocation2 + $0x90] sm:$0xff]
    %v2230 = vld [vmem:[#allocation2 + $0x98] sm:$0xff]
    %v2231 = vld [vmem:[#allocation2 + $0xa0] sm:$0xff]
    %v2232 = vld [vmem:[#allocation2 + $0xa8] sm:$0xff]
    %v2233 = vld [vmem:[#allocation2 + $0xb0] sm:$0xff]
    %v2234 = vld [vmem:[#allocation2 + $0xb8] sm:$0xff]
    %v2235 = vld [vmem:[#allocation2 + $0xc0] sm:$0xff]
    %v2236 = vld [vmem:[#allocation2 + $0xc8] sm:$0xff]
    %v2237 = vld [vmem:[#allocation2 + $0xd0] sm:$0xff]
    %v2238 = vld [vmem:[#allocation2 + $0xd8] sm:$0xff]
    %v2239 = vld [vmem:[#allocation2 + $0xe0] sm:$0xff]
    %v2240 = vld [vmem:[#allocation2 + $0xe8] sm:$0xff]
    %v2241 = vld [vmem:[#allocation2 + $0xf0] sm:$0xff]
    %v2242 = vld [vmem:[#allocation2 + $0xf8] sm:$0xff]
    %s2243 = scalar_lea.vmem [#allocation2], 256
    %v2244 = vld [vmem:[%s2243] sm:$0xff]
    %v2245 = vld [vmem:[%s2243 + $0x8] sm:$0xff]
    %v2246 = vld [vmem:[%s2243 + $0x10] sm:$0xff]
    %v2247 = vld [vmem:[%s2243 + $0x18] sm:$0xff]
    %v2248 = vld [vmem:[%s2243 + $0x20] sm:$0xff]
    %v2249 = vld [vmem:[%s2243 + $0x28] sm:$0xff]
    %v2250 = vld [vmem:[%s2243 + $0x30] sm:$0xff]
    %v2251 = vld [vmem:[%s2243 + $0x38] sm:$0xff]
    %v2252 = vld [vmem:[%s2243 + $0x40] sm:$0xff]
    %v2253 = vld [vmem:[%s2243 + $0x48] sm:$0xff]
    %v2254 = vld [vmem:[%s2243 + $0x50] sm:$0xff]
    %v2255 = vld [vmem:[%s2243 + $0x58] sm:$0xff]
    %v2256 = vld [vmem:[%s2243 + $0x60] sm:$0xff]
    %v2257 = vld [vmem:[%s2243 + $0x68] sm:$0xff]
    %v2258 = vld [vmem:[%s2243 + $0x70] sm:$0xff]
    %v2259 = vld [vmem:[%s2243 + $0x78] sm:$0xff]
    %v2260 = vld [vmem:[%s2243 + $0x80] sm:$0xff]
    %v2261 = vld [vmem:[%s2243 + $0x88] sm:$0xff]
    %v2262 = vld [vmem:[%s2243 + $0x90] sm:$0xff]
    %v2263 = vld [vmem:[%s2243 + $0x98] sm:$0xff]
    %v2264 = vld [vmem:[%s2243 + $0xa0] sm:$0xff]
    %v2265 = vld [vmem:[%s2243 + $0xa8] sm:$0xff]
    %v2266 = vld [vmem:[%s2243 + $0xb0] sm:$0xff]
    %v2267 = vld [vmem:[%s2243 + $0xb8] sm:$0xff]
    %v2268 = vld [vmem:[%s2243 + $0xc0] sm:$0xff]
    %v2269 = vld [vmem:[%s2243 + $0xc8] sm:$0xff]
    %v2270 = vld [vmem:[%s2243 + $0xd0] sm:$0xff]
    %v2271 = vld [vmem:[%s2243 + $0xd8] sm:$0xff]
    %v2272 = vld [vmem:[%s2243 + $0xe0] sm:$0xff]
    %v2273 = vld [vmem:[%s2243 + $0xe8] sm:$0xff]
    %v2274 = vld [vmem:[%s2243 + $0xf0] sm:$0xff]
    %v2275 = vld [vmem:[%s2243 + $0xf8] sm:$0xff]
    %s2276 = scalar_lea.vmem [#allocation12], 18
    %v2277 = vld [vmem:[%s2276] ss:$8 sm:$0x3]
    %s2278 = scalar_lea.vmem [#allocation2], 512
    %v2279 = vld [vmem:[%s2278] sm:$0xff]
    %v2280 = vld [vmem:[%s2278 + $0x8] sm:$0xff]
    %v2281 = vld [vmem:[%s2278 + $0x10] sm:$0xff]
    %v2282 = vld [vmem:[%s2278 + $0x18] sm:$0xff]
    %v2283 = vld [vmem:[%s2278 + $0x20] sm:$0xff]
    %v2284 = vld [vmem:[%s2278 + $0x28] sm:$0xff]
    %v2285 = vld [vmem:[%s2278 + $0x30] sm:$0xff]
    %v2286 = vld [vmem:[%s2278 + $0x38] sm:$0xff]
    %v2287 = vld [vmem:[%s2278 + $0x40] sm:$0xff]
    %v2288 = vld [vmem:[%s2278 + $0x48] sm:$0xff]
    %v2289 = vld [vmem:[%s2278 + $0x50] sm:$0xff]
    %v2290 = vld [vmem:[%s2278 + $0x58] sm:$0xff]
    %v2291 = vld [vmem:[%s2278 + $0x60] sm:$0xff]
    %v2292 = vld [vmem:[%s2278 + $0x68] sm:$0xff]
    %v2293 = vld [vmem:[%s2278 + $0x70] sm:$0xff]
    %v2294 = vld [vmem:[%s2278 + $0x78] sm:$0xff]
    %v2295 = vld [vmem:[%s2278 + $0x80] sm:$0xff]
    %v2296 = vld [vmem:[%s2278 + $0x88] sm:$0xff]
    %v2297 = vld [vmem:[%s2278 + $0x90] sm:$0xff]
    %v2298 = vld [vmem:[%s2278 + $0x98] sm:$0xff]
    %v2299 = vld [vmem:[%s2278 + $0xa0] sm:$0xff]
    %v2300 = vld [vmem:[%s2278 + $0xa8] sm:$0xff]
    %v2301 = vld [vmem:[%s2278 + $0xb0] sm:$0xff]
    %v2302 = vld [vmem:[%s2278 + $0xb8] sm:$0xff]
    %v2303 = vld [vmem:[%s2278 + $0xc0] sm:$0xff]
    %v2304 = vld [vmem:[%s2278 + $0xc8] sm:$0xff]
    %v2305 = vld [vmem:[%s2278 + $0xd0] sm:$0xff]
    %v2306 = vld [vmem:[%s2278 + $0xd8] sm:$0xff]
    %v2307 = vld [vmem:[%s2278 + $0xe0] sm:$0xff]
    %v2308 = vld [vmem:[%s2278 + $0xe8] sm:$0xff]
    %v2309 = vld [vmem:[%s2278 + $0xf0] sm:$0xff]
    %v2310 = vld [vmem:[%s2278 + $0xf8] sm:$0xff]
    %v2343 = vunpack.c.l.b16 %v2279
    %v2344 = vunpack.c.h.b16 %v2279
    %v2345 = vunpack.c.l.b16 %v2280
    %v2346 = vunpack.c.h.b16 %v2280
    %v2347 = vunpack.c.l.b16 %v2281
    %v2348 = vunpack.c.h.b16 %v2281
    %v2349 = vunpack.c.l.b16 %v2282
    %v2350 = vunpack.c.h.b16 %v2282
    %v2351 = vunpack.c.l.b16 %v2283
    %v2352 = vunpack.c.h.b16 %v2283
    %v2353 = vunpack.c.l.b16 %v2284
    %v2354 = vunpack.c.h.b16 %v2284
    %v2355 = vunpack.c.l.b16 %v2285
    %v2356 = vunpack.c.h.b16 %v2285
    %v2357 = vunpack.c.l.b16 %v2286
    %v2358 = vunpack.c.h.b16 %v2286
    %v2359 = vunpack.c.l.b16 %v2287
    %v2360 = vunpack.c.h.b16 %v2287
    %v2361 = vunpack.c.l.b16 %v2288
    %v2362 = vunpack.c.h.b16 %v2288
    %v2363 = vunpack.c.l.b16 %v2289
    %v2364 = vunpack.c.h.b16 %v2289
    %v2365 = vunpack.c.l.b16 %v2290
    %v2366 = vunpack.c.h.b16 %v2290
    %v2367 = vunpack.c.l.b16 %v2291
    %v2368 = vunpack.c.h.b16 %v2291
    %v2369 = vunpack.c.l.b16 %v2292
    %v2370 = vunpack.c.h.b16 %v2292
    %v2371 = vunpack.c.l.b16 %v2293
    %v2372 = vunpack.c.h.b16 %v2293
    %v2373 = vunpack.c.l.b16 %v2294
    %v2374 = vunpack.c.h.b16 %v2294
    %v2375 = vunpack.c.l.b16 %v2295
    %v2376 = vunpack.c.h.b16 %v2295
    %v2377 = vunpack.c.l.b16 %v2296
    %v2378 = vunpack.c.h.b16 %v2296
    %v2379 = vunpack.c.l.b16 %v2297
    %v2380 = vunpack.c.h.b16 %v2297
    %v2381 = vunpack.c.l.b16 %v2298
    %v2382 = vunpack.c.h.b16 %v2298
    %v2383 = vunpack.c.l.b16 %v2299
    %v2384 = vunpack.c.h.b16 %v2299
    %v2385 = vunpack.c.l.b16 %v2300
    %v2386 = vunpack.c.h.b16 %v2300
    %v2387 = vunpack.c.l.b16 %v2301
    %v2388 = vunpack.c.h.b16 %v2301
    %v2389 = vunpack.c.l.b16 %v2302
    %v2390 = vunpack.c.h.b16 %v2302
    %v2391 = vunpack.c.l.b16 %v2303
    %v2392 = vunpack.c.h.b16 %v2303
    %v2393 = vunpack.c.l.b16 %v2304
    %v2394 = vunpack.c.h.b16 %v2304
    %v2395 = vunpack.c.l.b16 %v2305
    %v2396 = vunpack.c.h.b16 %v2305
    %v2397 = vunpack.c.l.b16 %v2306
    %v2398 = vunpack.c.h.b16 %v2306
    %v2399 = vunpack.c.l.b16 %v2307
    %v2400 = vunpack.c.h.b16 %v2307
    %v2401 = vunpack.c.l.b16 %v2308
    %v2402 = vunpack.c.h.b16 %v2308
    %v2403 = vunpack.c.l.b16 %v2309
    %v2404 = vunpack.c.h.b16 %v2309
    %v2405 = vunpack.c.l.b16 %v2310
    %v2406 = vunpack.c.h.b16 %v2310
    %v2407 = vpack.c.b16 %v2345, %v2343
    %v2408 = vpack.c.b16 %v2346, %v2344
    %v2409 = vpack.c.b16 %v2349, %v2347
    %v2410 = vpack.c.b16 %v2350, %v2348
    %v2411 = vpack.c.b16 %v2353, %v2351
    %v2412 = vpack.c.b16 %v2354, %v2352
    %v2413 = vpack.c.b16 %v2357, %v2355
    %v2414 = vpack.c.b16 %v2358, %v2356
    %v2415 = vpack.c.b16 %v2361, %v2359
    %v2416 = vpack.c.b16 %v2362, %v2360
    %v2417 = vpack.c.b16 %v2365, %v2363
    %v2418 = vpack.c.b16 %v2366, %v2364
    %v2419 = vpack.c.b16 %v2369, %v2367
    %v2420 = vpack.c.b16 %v2370, %v2368
    %v2421 = vpack.c.b16 %v2373, %v2371
    %v2422 = vpack.c.b16 %v2374, %v2372
    %v2423 = vpack.c.b16 %v2377, %v2375
    %v2424 = vpack.c.b16 %v2378, %v2376
    %v2425 = vpack.c.b16 %v2381, %v2379
    %v2426 = vpack.c.b16 %v2382, %v2380
    %v2427 = vpack.c.b16 %v2385, %v2383
    %v2428 = vpack.c.b16 %v2386, %v2384
    %v2429 = vpack.c.b16 %v2389, %v2387
    %v2430 = vpack.c.b16 %v2390, %v2388
    %v2431 = vpack.c.b16 %v2393, %v2391
    %v2432 = vpack.c.b16 %v2394, %v2392
    %v2433 = vpack.c.b16 %v2397, %v2395
    %v2434 = vpack.c.b16 %v2398, %v2396
    %v2435 = vpack.c.b16 %v2401, %v2399
    %v2436 = vpack.c.b16 %v2402, %v2400
    %v2437 = vpack.c.b16 %v2405, %v2403
    %v2438 = vpack.c.b16 %v2406, %v2404
    %2471 = vmatpush.bf16.msra.mxu0 %v2421
    %2472 = vmatpush.bf16.msra.mxu0 %v2419
    %2473 = vmatpush.bf16.msra.mxu0 %v2417
    %2474 = vmatpush.bf16.msra.mxu0 %v2415
    %2475 = vmatpush.bf16.msra.mxu0 %v2413
    %2476 = vmatpush.bf16.msra.mxu0 %v2411
    %2477 = vmatpush.bf16.msra.mxu0 %v2409
    %2478 = vmatpush.bf16.msra.mxu0 %v2407
    %2479 = vmatmul.bf16.gmra.mxu0 %v908
    %v2480 = vpop.f32.mrf.mxu0
    %v2481 = vadd.f32 %v2195, %v2480
    %v2482 = vpop.f32.mrf.mxu0
    %2483 = vdwg.mxu0
    %2484 = vmatpush.bf16.msra.mxu0 %v2437
    %2485 = vmatpush.bf16.msra.mxu0 %v2435
    %2486 = vmatpush.bf16.msra.mxu0 %v2433
    %2487 = vmatpush.bf16.msra.mxu0 %v2431
    %2488 = vmatpush.bf16.msra.mxu0 %v2429
    %2489 = vmatpush.bf16.msra.mxu0 %v2427
    %2490 = vmatpush.bf16.msra.mxu0 %v2425
    %2491 = vmatpush.bf16.msra.mxu0 %v2423
    %2492 = vmatmul.bf16.gmra.mxu0 %v909
    %v2493 = vpop.f32.mrf.mxu0
    %v2494 = vadd.f32 %v2481, %v2493
    %v2495 = vpop.f32.mrf.mxu0
    %2496 = vdwg.mxu0
    %2497 = vmatpush.bf16.msra.mxu0 %v2422
    %2498 = vmatpush.bf16.msra.mxu0 %v2420
    %2499 = vmatpush.bf16.msra.mxu0 %v2418
    %2500 = vmatpush.bf16.msra.mxu0 %v2416
    %2501 = vmatpush.bf16.msra.mxu0 %v2414
    %2502 = vmatpush.bf16.msra.mxu0 %v2412
    %2503 = vmatpush.bf16.msra.mxu0 %v2410
    %2504 = vmatpush.bf16.msra.mxu0 %v2408
    %2505 = vmatmul.bf16.gmra.mxu0 %v908
    %v2506 = vpop.f32.mrf.mxu0
    %v2507 = vadd.f32 %v2196, %v2506
    %v2508 = vpop.f32.mrf.mxu0
    %2509 = vdwg.mxu0
    %2510 = vmatpush.bf16.msra.mxu0 %v2438
    %2511 = vmatpush.bf16.msra.mxu0 %v2436
    %2512 = vmatpush.bf16.msra.mxu0 %v2434
    %2513 = vmatpush.bf16.msra.mxu0 %v2432
    %2514 = vmatpush.bf16.msra.mxu0 %v2430
    %2515 = vmatpush.bf16.msra.mxu0 %v2428
    %2516 = vmatpush.bf16.msra.mxu0 %v2426
    %2517 = vmatpush.bf16.msra.mxu0 %v2424
    %2518 = vmatmul.bf16.gmra.mxu0 %v909
    %v2519 = vpop.f32.mrf.mxu0
    %v2520 = vadd.f32 %v2507, %v2519
    %v2521 = vpop.f32.mrf.mxu0
    %2522 = vdwg.mxu0
    %v2523 = vsub.f32 0.0, %v2494
    %v2524 = vsub.f32 0.0, %v2520
    %v2525 = vmul.f32 %v2523, 1.442695
    %v2526 = vpow.pop %v2525
    %v2527 = vmul.f32 %v2524, 1.442695
    %v2528 = vpow.pop %v2527
    %v2529 = vadd.f32 %v2526, 1.0
    %v2530 = vadd.f32 %v2528, 1.0
    %v2531 = vrcp.pop %v2529
    %v2532 = vmul.f32 %v2529, %v2531
    %v2533 = vsub.f32 1.0, %v2532
    %v2534 = vmul.f32 %v2531, %v2533
    %v2535 = vadd.f32 %v2531, %v2534
    %vm2536 = vweird.f32 %v2529
    %vm2537 = vweird.f32 %v2531
    %vm2538 = vmor %vm2536, %vm2537
    %v2539 = vsel %vm2538, %v2531, %v2535
    %v2540 = vand.u32 2147483647, %v2529
    %vm2541 = vcmp.eq.f32.partialorder %v2540, 8.507059e+37
    %v2542 = vand.u32 %v2529, 2147483648
    %v2543 = vor.u32 1.1754944e-38, %v2542
    %v2544 = vsel %vm2541, %v2543, %v2539
    %v2545 = vrcp.pop %v2530
    %v2546 = vmul.f32 %v2530, %v2545
    %v2547 = vsub.f32 1.0, %v2546
    %v2548 = vmul.f32 %v2545, %v2547
    %v2549 = vadd.f32 %v2545, %v2548
    %vm2550 = vweird.f32 %v2530
    %vm2551 = vweird.f32 %v2545
    %vm2552 = vmor %vm2550, %vm2551
    %v2553 = vsel %vm2552, %v2545, %v2549
    %v2554 = vand.u32 2147483647, %v2530
    %vm2555 = vcmp.eq.f32.partialorder %v2554, 8.507059e+37
    %v2556 = vand.u32 %v2530, 2147483648
    %v2557 = vor.u32 1.1754944e-38, %v2556
    %v2558 = vsel %vm2555, %v2557, %v2553
    %v2559 = vmul.f32 %v2494, %v2544
    %v2560 = vmul.f32 %v2520, %v2558
    %s2561 = scalar_lea.vmem [#allocation2], 768
    %v2562 = vld [vmem:[%s2561] sm:$0xff]
    %v2563 = vld [vmem:[%s2561 + $0x8] sm:$0xff]
    %v2564 = vld [vmem:[%s2561 + $0x10] sm:$0xff]
    %v2565 = vld [vmem:[%s2561 + $0x18] sm:$0xff]
    %v2566 = vld [vmem:[%s2561 + $0x20] sm:$0xff]
    %v2567 = vld [vmem:[%s2561 + $0x28] sm:$0xff]
    %v2568 = vld [vmem:[%s2561 + $0x30] sm:$0xff]
    %v2569 = vld [vmem:[%s2561 + $0x38] sm:$0xff]
    %v2570 = vld [vmem:[%s2561 + $0x40] sm:$0xff]
    %v2571 = vld [vmem:[%s2561 + $0x48] sm:$0xff]
    %v2572 = vld [vmem:[%s2561 + $0x50] sm:$0xff]
    %v2573 = vld [vmem:[%s2561 + $0x58] sm:$0xff]
    %v2574 = vld [vmem:[%s2561 + $0x60] sm:$0xff]
    %v2575 = vld [vmem:[%s2561 + $0x68] sm:$0xff]
    %v2576 = vld [vmem:[%s2561 + $0x70] sm:$0xff]
    %v2577 = vld [vmem:[%s2561 + $0x78] sm:$0xff]
    %v2578 = vld [vmem:[%s2561 + $0x80] sm:$0xff]
    %v2579 = vld [vmem:[%s2561 + $0x88] sm:$0xff]
    %v2580 = vld [vmem:[%s2561 + $0x90] sm:$0xff]
    %v2581 = vld [vmem:[%s2561 + $0x98] sm:$0xff]
    %v2582 = vld [vmem:[%s2561 + $0xa0] sm:$0xff]
    %v2583 = vld [vmem:[%s2561 + $0xa8] sm:$0xff]
    %v2584 = vld [vmem:[%s2561 + $0xb0] sm:$0xff]
    %v2585 = vld [vmem:[%s2561 + $0xb8] sm:$0xff]
    %v2586 = vld [vmem:[%s2561 + $0xc0] sm:$0xff]
    %v2587 = vld [vmem:[%s2561 + $0xc8] sm:$0xff]
    %v2588 = vld [vmem:[%s2561 + $0xd0] sm:$0xff]
    %v2589 = vld [vmem:[%s2561 + $0xd8] sm:$0xff]
    %v2590 = vld [vmem:[%s2561 + $0xe0] sm:$0xff]
    %v2591 = vld [vmem:[%s2561 + $0xe8] sm:$0xff]
    %v2592 = vld [vmem:[%s2561 + $0xf0] sm:$0xff]
    %v2593 = vld [vmem:[%s2561 + $0xf8] sm:$0xff]
    %v2594 = vpack.c.bf16 %v2559, %v2559
    %v2595 = vpack.c.bf16 %v2560, %v2560
    %s2596 = scalar_lea.vmem [#allocation12], 20
    %v2597 = vld [vmem:[%s2596] ss:$8 sm:$0x3]
    %v2599 = vperm.slane %v2597, 0
    %v2600 = vperm.slane %v2597, 1
    %v2635 = vunpack.c.l.b16 %v2562
    %v2636 = vunpack.c.h.b16 %v2562
    %v2637 = vunpack.c.l.b16 %v2563
    %v2638 = vunpack.c.h.b16 %v2563
    %v2639 = vunpack.c.l.b16 %v2564
    %v2640 = vunpack.c.h.b16 %v2564
    %v2641 = vunpack.c.l.b16 %v2565
    %v2642 = vunpack.c.h.b16 %v2565
    %v2643 = vunpack.c.l.b16 %v2566
    %v2644 = vunpack.c.h.b16 %v2566
    %v2645 = vunpack.c.l.b16 %v2567
    %v2646 = vunpack.c.h.b16 %v2567
    %v2647 = vunpack.c.l.b16 %v2568
    %v2648 = vunpack.c.h.b16 %v2568
    %v2649 = vunpack.c.l.b16 %v2569
    %v2650 = vunpack.c.h.b16 %v2569
    %v2651 = vunpack.c.l.b16 %v2570
    %v2652 = vunpack.c.h.b16 %v2570
    %v2653 = vunpack.c.l.b16 %v2571
    %v2654 = vunpack.c.h.b16 %v2571
    %v2655 = vunpack.c.l.b16 %v2572
    %v2656 = vunpack.c.h.b16 %v2572
    %v2657 = vunpack.c.l.b16 %v2573
    %v2658 = vunpack.c.h.b16 %v2573
    %v2659 = vunpack.c.l.b16 %v2574
    %v2660 = vunpack.c.h.b16 %v2574
    %v2661 = vunpack.c.l.b16 %v2575
    %v2662 = vunpack.c.h.b16 %v2575
    %v2663 = vunpack.c.l.b16 %v2576
    %v2664 = vunpack.c.h.b16 %v2576
    %v2665 = vunpack.c.l.b16 %v2577
    %v2666 = vunpack.c.h.b16 %v2577
    %v2667 = vunpack.c.l.b16 %v2578
    %v2668 = vunpack.c.h.b16 %v2578
    %v2669 = vunpack.c.l.b16 %v2579
    %v2670 = vunpack.c.h.b16 %v2579
    %v2671 = vunpack.c.l.b16 %v2580
    %v2672 = vunpack.c.h.b16 %v2580
    %v2673 = vunpack.c.l.b16 %v2581
    %v2674 = vunpack.c.h.b16 %v2581
    %v2675 = vunpack.c.l.b16 %v2582
    %v2676 = vunpack.c.h.b16 %v2582
    %v2677 = vunpack.c.l.b16 %v2583
    %v2678 = vunpack.c.h.b16 %v2583
    %v2679 = vunpack.c.l.b16 %v2584
    %v2680 = vunpack.c.h.b16 %v2584
    %v2681 = vunpack.c.l.b16 %v2585
    %v2682 = vunpack.c.h.b16 %v2585
    %v2683 = vunpack.c.l.b16 %v2586
    %v2684 = vunpack.c.h.b16 %v2586
    %v2685 = vunpack.c.l.b16 %v2587
    %v2686 = vunpack.c.h.b16 %v2587
    %v2687 = vunpack.c.l.b16 %v2588
    %v2688 = vunpack.c.h.b16 %v2588
    %v2689 = vunpack.c.l.b16 %v2589
    %v2690 = vunpack.c.h.b16 %v2589
    %v2691 = vunpack.c.l.b16 %v2590
    %v2692 = vunpack.c.h.b16 %v2590
    %v2693 = vunpack.c.l.b16 %v2591
    %v2694 = vunpack.c.h.b16 %v2591
    %v2695 = vunpack.c.l.b16 %v2592
    %v2696 = vunpack.c.h.b16 %v2592
    %v2697 = vunpack.c.l.b16 %v2593
    %v2698 = vunpack.c.h.b16 %v2593
    %v2699 = vpack.c.b16 %v2637, %v2635
    %v2700 = vpack.c.b16 %v2638, %v2636
    %v2701 = vpack.c.b16 %v2641, %v2639
    %v2702 = vpack.c.b16 %v2642, %v2640
    %v2703 = vpack.c.b16 %v2645, %v2643
    %v2704 = vpack.c.b16 %v2646, %v2644
    %v2705 = vpack.c.b16 %v2649, %v2647
    %v2706 = vpack.c.b16 %v2650, %v2648
    %v2707 = vpack.c.b16 %v2653, %v2651
    %v2708 = vpack.c.b16 %v2654, %v2652
    %v2709 = vpack.c.b16 %v2657, %v2655
    %v2710 = vpack.c.b16 %v2658, %v2656
    %v2711 = vpack.c.b16 %v2661, %v2659
    %v2712 = vpack.c.b16 %v2662, %v2660
    %v2713 = vpack.c.b16 %v2665, %v2663
    %v2714 = vpack.c.b16 %v2666, %v2664
    %v2715 = vpack.c.b16 %v2669, %v2667
    %v2716 = vpack.c.b16 %v2670, %v2668
    %v2717 = vpack.c.b16 %v2673, %v2671
    %v2718 = vpack.c.b16 %v2674, %v2672
    %v2719 = vpack.c.b16 %v2677, %v2675
    %v2720 = vpack.c.b16 %v2678, %v2676
    %v2721 = vpack.c.b16 %v2681, %v2679
    %v2722 = vpack.c.b16 %v2682, %v2680
    %v2723 = vpack.c.b16 %v2685, %v2683
    %v2724 = vpack.c.b16 %v2686, %v2684
    %v2725 = vpack.c.b16 %v2689, %v2687
    %v2726 = vpack.c.b16 %v2690, %v2688
    %v2727 = vpack.c.b16 %v2693, %v2691
    %v2728 = vpack.c.b16 %v2694, %v2692
    %v2729 = vpack.c.b16 %v2697, %v2695
    %v2730 = vpack.c.b16 %v2698, %v2696
    %2763 = vmatpush.bf16.msra.mxu0 %v2713
    %2764 = vmatpush.bf16.msra.mxu0 %v2711
    %2765 = vmatpush.bf16.msra.mxu0 %v2709
    %2766 = vmatpush.bf16.msra.mxu0 %v2707
    %2767 = vmatpush.bf16.msra.mxu0 %v2705
    %2768 = vmatpush.bf16.msra.mxu0 %v2703
    %2769 = vmatpush.bf16.msra.mxu0 %v2701
    %2770 = vmatpush.bf16.msra.mxu0 %v2699
    %2771 = vmatmul.bf16.gmra.mxu0 %v2594
    %v2772 = vpop.f32.mrf.mxu0
    %v2773 = vadd.f32 %v2599, %v2772
    %v2774 = vpop.f32.mrf.mxu0
    %2775 = vdwg.mxu0
    %2776 = vmatpush.bf16.msra.mxu0 %v2729
    %2777 = vmatpush.bf16.msra.mxu0 %v2727
    %2778 = vmatpush.bf16.msra.mxu0 %v2725
    %2779 = vmatpush.bf16.msra.mxu0 %v2723
    %2780 = vmatpush.bf16.msra.mxu0 %v2721
    %2781 = vmatpush.bf16.msra.mxu0 %v2719
    %2782 = vmatpush.bf16.msra.mxu0 %v2717
    %2783 = vmatpush.bf16.msra.mxu0 %v2715
    %2784 = vmatmul.bf16.gmra.mxu0 %v2595
    %v2785 = vpop.f32.mrf.mxu0
    %v2786 = vadd.f32 %v2773, %v2785
    %v2787 = vpop.f32.mrf.mxu0
    %2788 = vdwg.mxu0
    %2789 = vmatpush.bf16.msra.mxu0 %v2714
    %2790 = vmatpush.bf16.msra.mxu0 %v2712
    %2791 = vmatpush.bf16.msra.mxu0 %v2710
    %2792 = vmatpush.bf16.msra.mxu0 %v2708
    %2793 = vmatpush.bf16.msra.mxu0 %v2706
    %2794 = vmatpush.bf16.msra.mxu0 %v2704
    %2795 = vmatpush.bf16.msra.mxu0 %v2702
    %2796 = vmatpush.bf16.msra.mxu0 %v2700
    %2797 = vmatmul.bf16.gmra.mxu0 %v2594
    %v2798 = vpop.f32.mrf.mxu0
    %v2799 = vadd.f32 %v2600, %v2798
    %v2800 = vpop.f32.mrf.mxu0
    %2801 = vdwg.mxu0
    %2802 = vmatpush.bf16.msra.mxu0 %v2730
    %2803 = vmatpush.bf16.msra.mxu0 %v2728
    %2804 = vmatpush.bf16.msra.mxu0 %v2726
    %2805 = vmatpush.bf16.msra.mxu0 %v2724
    %2806 = vmatpush.bf16.msra.mxu0 %v2722
    %2807 = vmatpush.bf16.msra.mxu0 %v2720
    %2808 = vmatpush.bf16.msra.mxu0 %v2718
    %2809 = vmatpush.bf16.msra.mxu0 %v2716
    %2810 = vmatmul.bf16.gmra.mxu0 %v2595
    %v2811 = vpop.f32.mrf.mxu0
    %v2812 = vadd.f32 %v2799, %v2811
    %v2813 = vpop.f32.mrf.mxu0
    %2814 = vdwg.mxu0
    %v2815 = vsub.f32 0.0, %v2786
    %v2816 = vsub.f32 0.0, %v2812
    %v2817 = vmul.f32 %v2815, 1.442695
    %v2818 = vpow.pop %v2817
    %v2819 = vmul.f32 %v2816, 1.442695
    %v2820 = vpow.pop %v2819
    %v2821 = vadd.f32 %v2818, 1.0
    %v2822 = vadd.f32 %v2820, 1.0
    %v2823 = vrcp.pop %v2821
    %v2824 = vmul.f32 %v2821, %v2823
    %v2825 = vsub.f32 1.0, %v2824
    %v2826 = vmul.f32 %v2823, %v2825
    %v2827 = vadd.f32 %v2823, %v2826
    %vm2828 = vweird.f32 %v2821
    %vm2829 = vweird.f32 %v2823
    %vm2830 = vmor %vm2828, %vm2829
    %v2831 = vsel %vm2830, %v2823, %v2827
    %v2832 = vand.u32 2147483647, %v2821
    %vm2833 = vcmp.eq.f32.partialorder %v2832, 8.507059e+37
    %v2834 = vand.u32 %v2821, 2147483648
    %v2835 = vor.u32 1.1754944e-38, %v2834
    %v2836 = vsel %vm2833, %v2835, %v2831
    %v2837 = vrcp.pop %v2822
    %v2838 = vmul.f32 %v2822, %v2837
    %v2839 = vsub.f32 1.0, %v2838
    %v2840 = vmul.f32 %v2837, %v2839
    %v2841 = vadd.f32 %v2837, %v2840
    %vm2842 = vweird.f32 %v2822
    %vm2843 = vweird.f32 %v2837
    %vm2844 = vmor %vm2842, %vm2843
    %v2845 = vsel %vm2844, %v2837, %v2841
    %v2846 = vand.u32 2147483647, %v2822
    %vm2847 = vcmp.eq.f32.partialorder %v2846, 8.507059e+37
    %v2848 = vand.u32 %v2822, 2147483648
    %v2849 = vor.u32 1.1754944e-38, %v2848
    %v2850 = vsel %vm2847, %v2849, %v2845
    %v2851 = vmul.f32 %v2786, %v2836
    %v2852 = vmul.f32 %v2812, %v2850
    %s2853 = scalar_lea.vmem [#allocation2], 1024
    %v2854 = vld [vmem:[%s2853] sm:$0xff]
    %v2855 = vld [vmem:[%s2853 + $0x8] sm:$0xff]
    %v2856 = vld [vmem:[%s2853 + $0x10] sm:$0xff]
    %v2857 = vld [vmem:[%s2853 + $0x18] sm:$0xff]
    %v2858 = vld [vmem:[%s2853 + $0x20] sm:$0xff]
    %v2859 = vld [vmem:[%s2853 + $0x28] sm:$0xff]
    %v2860 = vld [vmem:[%s2853 + $0x30] sm:$0xff]
    %v2861 = vld [vmem:[%s2853 + $0x38] sm:$0xff]
    %v2862 = vld [vmem:[%s2853 + $0x40] sm:$0xff]
    %v2863 = vld [vmem:[%s2853 + $0x48] sm:$0xff]
    %v2864 = vld [vmem:[%s2853 + $0x50] sm:$0xff]
    %v2865 = vld [vmem:[%s2853 + $0x58] sm:$0xff]
    %v2866 = vld [vmem:[%s2853 + $0x60] sm:$0xff]
    %v2867 = vld [vmem:[%s2853 + $0x68] sm:$0xff]
    %v2868 = vld [vmem:[%s2853 + $0x70] sm:$0xff]
    %v2869 = vld [vmem:[%s2853 + $0x78] sm:$0xff]
    %v2870 = vld [vmem:[%s2853 + $0x80] sm:$0xff]
    %v2871 = vld [vmem:[%s2853 + $0x88] sm:$0xff]
    %v2872 = vld [vmem:[%s2853 + $0x90] sm:$0xff]
    %v2873 = vld [vmem:[%s2853 + $0x98] sm:$0xff]
    %v2874 = vld [vmem:[%s2853 + $0xa0] sm:$0xff]
    %v2875 = vld [vmem:[%s2853 + $0xa8] sm:$0xff]
    %v2876 = vld [vmem:[%s2853 + $0xb0] sm:$0xff]
    %v2877 = vld [vmem:[%s2853 + $0xb8] sm:$0xff]
    %v2878 = vld [vmem:[%s2853 + $0xc0] sm:$0xff]
    %v2879 = vld [vmem:[%s2853 + $0xc8] sm:$0xff]
    %v2880 = vld [vmem:[%s2853 + $0xd0] sm:$0xff]
    %v2881 = vld [vmem:[%s2853 + $0xd8] sm:$0xff]
    %v2882 = vld [vmem:[%s2853 + $0xe0] sm:$0xff]
    %v2883 = vld [vmem:[%s2853 + $0xe8] sm:$0xff]
    %v2884 = vld [vmem:[%s2853 + $0xf0] sm:$0xff]
    %v2885 = vld [vmem:[%s2853 + $0xf8] sm:$0xff]
    %v2886 = vpack.c.bf16 %v2851, %v2851
    %v2887 = vpack.c.bf16 %v2852, %v2852
    %s2888 = scalar_lea.vmem [#allocation12], 21
    %v2889 = vld [vmem:[%s2888] ss:$8 sm:$0x3]
    %v2891 = vperm.slane %v2889, 0
    %v2892 = vperm.slane %v2889, 1
    %v2927 = vunpack.c.l.b16 %v2854
    %v2928 = vunpack.c.h.b16 %v2854
    %v2929 = vunpack.c.l.b16 %v2855
    %v2930 = vunpack.c.h.b16 %v2855
    %v2931 = vunpack.c.l.b16 %v2856
    %v2932 = vunpack.c.h.b16 %v2856
    %v2933 = vunpack.c.l.b16 %v2857
    %v2934 = vunpack.c.h.b16 %v2857
    %v2935 = vunpack.c.l.b16 %v2858
    %v2936 = vunpack.c.h.b16 %v2858
    %v2937 = vunpack.c.l.b16 %v2859
    %v2938 = vunpack.c.h.b16 %v2859
    %v2939 = vunpack.c.l.b16 %v2860
    %v2940 = vunpack.c.h.b16 %v2860
    %v2941 = vunpack.c.l.b16 %v2861
    %v2942 = vunpack.c.h.b16 %v2861
    %v2943 = vunpack.c.l.b16 %v2862
    %v2944 = vunpack.c.h.b16 %v2862
    %v2945 = vunpack.c.l.b16 %v2863
    %v2946 = vunpack.c.h.b16 %v2863
    %v2947 = vunpack.c.l.b16 %v2864
    %v2948 = vunpack.c.h.b16 %v2864
    %v2949 = vunpack.c.l.b16 %v2865
    %v2950 = vunpack.c.h.b16 %v2865
    %v2951 = vunpack.c.l.b16 %v2866
    %v2952 = vunpack.c.h.b16 %v2866
    %v2953 = vunpack.c.l.b16 %v2867
    %v2954 = vunpack.c.h.b16 %v2867
    %v2955 = vunpack.c.l.b16 %v2868
    %v2956 = vunpack.c.h.b16 %v2868
    %v2957 = vunpack.c.l.b16 %v2869
    %v2958 = vunpack.c.h.b16 %v2869
    %v2959 = vunpack.c.l.b16 %v2870
    %v2960 = vunpack.c.h.b16 %v2870
    %v2961 = vunpack.c.l.b16 %v2871
    %v2962 = vunpack.c.h.b16 %v2871
    %v2963 = vunpack.c.l.b16 %v2872
    %v2964 = vunpack.c.h.b16 %v2872
    %v2965 = vunpack.c.l.b16 %v2873
    %v2966 = vunpack.c.h.b16 %v2873
    %v2967 = vunpack.c.l.b16 %v2874
    %v2968 = vunpack.c.h.b16 %v2874
    %v2969 = vunpack.c.l.b16 %v2875
    %v2970 = vunpack.c.h.b16 %v2875
    %v2971 = vunpack.c.l.b16 %v2876
    %v2972 = vunpack.c.h.b16 %v2876
    %v2973 = vunpack.c.l.b16 %v2877
    %v2974 = vunpack.c.h.b16 %v2877
    %v2975 = vunpack.c.l.b16 %v2878
    %v2976 = vunpack.c.h.b16 %v2878
    %v2977 = vunpack.c.l.b16 %v2879
    %v2978 = vunpack.c.h.b16 %v2879
    %v2979 = vunpack.c.l.b16 %v2880
    %v2980 = vunpack.c.h.b16 %v2880
    %v2981 = vunpack.c.l.b16 %v2881
    %v2982 = vunpack.c.h.b16 %v2881
    %v2983 = vunpack.c.l.b16 %v2882
    %v2984 = vunpack.c.h.b16 %v2882
    %v2985 = vunpack.c.l.b16 %v2883
    %v2986 = vunpack.c.h.b16 %v2883
    %v2987 = vunpack.c.l.b16 %v2884
    %v2988 = vunpack.c.h.b16 %v2884
    %v2989 = vunpack.c.l.b16 %v2885
    %v2990 = vunpack.c.h.b16 %v2885
    %v2991 = vpack.c.b16 %v2929, %v2927
    %v2992 = vpack.c.b16 %v2930, %v2928
    %v2993 = vpack.c.b16 %v2933, %v2931
    %v2994 = vpack.c.b16 %v2934, %v2932
    %v2995 = vpack.c.b16 %v2937, %v2935
    %v2996 = vpack.c.b16 %v2938, %v2936
    %v2997 = vpack.c.b16 %v2941, %v2939
    %v2998 = vpack.c.b16 %v2942, %v2940
    %v2999 = vpack.c.b16 %v2945, %v2943
    %v3000 = vpack.c.b16 %v2946, %v2944
    %v3001 = vpack.c.b16 %v2949, %v2947
    %v3002 = vpack.c.b16 %v2950, %v2948
    %v3003 = vpack.c.b16 %v2953, %v2951
    %v3004 = vpack.c.b16 %v2954, %v2952
    %v3005 = vpack.c.b16 %v2957, %v2955
    %v3006 = vpack.c.b16 %v2958, %v2956
    %v3007 = vpack.c.b16 %v2961, %v2959
    %v3008 = vpack.c.b16 %v2962, %v2960
    %v3009 = vpack.c.b16 %v2965, %v2963
    %v3010 = vpack.c.b16 %v2966, %v2964
    %v3011 = vpack.c.b16 %v2969, %v2967
    %v3012 = vpack.c.b16 %v2970, %v2968
    %v3013 = vpack.c.b16 %v2973, %v2971
    %v3014 = vpack.c.b16 %v2974, %v2972
    %v3015 = vpack.c.b16 %v2977, %v2975
    %v3016 = vpack.c.b16 %v2978, %v2976
    %v3017 = vpack.c.b16 %v2981, %v2979
    %v3018 = vpack.c.b16 %v2982, %v2980
    %v3019 = vpack.c.b16 %v2985, %v2983
    %v3020 = vpack.c.b16 %v2986, %v2984
    %v3021 = vpack.c.b16 %v2989, %v2987
    %v3022 = vpack.c.b16 %v2990, %v2988
    %3055 = vmatpush.bf16.msra.mxu0 %v3005
    %3056 = vmatpush.bf16.msra.mxu0 %v3003
    %3057 = vmatpush.bf16.msra.mxu0 %v3001
    %3058 = vmatpush.bf16.msra.mxu0 %v2999
    %3059 = vmatpush.bf16.msra.mxu0 %v2997
    %3060 = vmatpush.bf16.msra.mxu0 %v2995
    %3061 = vmatpush.bf16.msra.mxu0 %v2993
    %3062 = vmatpush.bf16.msra.mxu0 %v2991
    %3063 = vmatmul.bf16.gmra.mxu0 %v2886
    %v3064 = vpop.f32.mrf.mxu0
    %v3065 = vadd.f32 %v2891, %v3064
    %v3066 = vpop.f32.mrf.mxu0
    %3067 = vdwg.mxu0
    %3068 = vmatpush.bf16.msra.mxu0 %v3021
    %3069 = vmatpush.bf16.msra.mxu0 %v3019
    %3070 = vmatpush.bf16.msra.mxu0 %v3017
    %3071 = vmatpush.bf16.msra.mxu0 %v3015
    %3072 = vmatpush.bf16.msra.mxu0 %v3013
    %3073 = vmatpush.bf16.msra.mxu0 %v3011
    %3074 = vmatpush.bf16.msra.mxu0 %v3009
    %3075 = vmatpush.bf16.msra.mxu0 %v3007
    %3076 = vmatmul.bf16.gmra.mxu0 %v2887
    %v3077 = vpop.f32.mrf.mxu0
    %v3078 = vadd.f32 %v3065, %v3077
    %v3079 = vpop.f32.mrf.mxu0
    %3080 = vdwg.mxu0
    %3081 = vmatpush.bf16.msra.mxu0 %v3006
    %3082 = vmatpush.bf16.msra.mxu0 %v3004
    %3083 = vmatpush.bf16.msra.mxu0 %v3002
    %3084 = vmatpush.bf16.msra.mxu0 %v3000
    %3085 = vmatpush.bf16.msra.mxu0 %v2998
    %3086 = vmatpush.bf16.msra.mxu0 %v2996
    %3087 = vmatpush.bf16.msra.mxu0 %v2994
    %3088 = vmatpush.bf16.msra.mxu0 %v2992
    %3089 = vmatmul.bf16.gmra.mxu0 %v2886
    %v3090 = vpop.f32.mrf.mxu0
    %v3091 = vadd.f32 %v2892, %v3090
    %v3092 = vpop.f32.mrf.mxu0
    %3093 = vdwg.mxu0
    %3094 = vmatpush.bf16.msra.mxu0 %v3022
    %3095 = vmatpush.bf16.msra.mxu0 %v3020
    %3096 = vmatpush.bf16.msra.mxu0 %v3018
    %3097 = vmatpush.bf16.msra.mxu0 %v3016
    %3098 = vmatpush.bf16.msra.mxu0 %v3014
    %3099 = vmatpush.bf16.msra.mxu0 %v3012
    %3100 = vmatpush.bf16.msra.mxu0 %v3010
    %3101 = vmatpush.bf16.msra.mxu0 %v3008
    %3102 = vmatmul.bf16.gmra.mxu0 %v2887
    %v3103 = vpop.f32.mrf.mxu0
    %v3104 = vadd.f32 %v3091, %v3103
    %v3105 = vpop.f32.mrf.mxu0
    %3106 = vdwg.mxu0
    %v3107 = vsub.f32 0.0, %v3078
    %v3108 = vsub.f32 0.0, %v3104
    %v3109 = vmul.f32 %v3107, 1.442695
    %v3110 = vpow.pop %v3109
    %v3111 = vmul.f32 %v3108, 1.442695
    %v3112 = vpow.pop %v3111
    %v3113 = vadd.f32 %v3110, 1.0
    %v3114 = vadd.f32 %v3112, 1.0
    %v3115 = vrcp.pop %v3113
    %v3116 = vmul.f32 %v3113, %v3115
    %v3117 = vsub.f32 1.0, %v3116
    %v3118 = vmul.f32 %v3115, %v3117
    %v3119 = vadd.f32 %v3115, %v3118
    %vm3120 = vweird.f32 %v3113
    %vm3121 = vweird.f32 %v3115
    %vm3122 = vmor %vm3120, %vm3121
    %v3123 = vsel %vm3122, %v3115, %v3119
    %v3124 = vand.u32 2147483647, %v3113
    %vm3125 = vcmp.eq.f32.partialorder %v3124, 8.507059e+37
    %v3126 = vand.u32 %v3113, 2147483648
    %v3127 = vor.u32 1.1754944e-38, %v3126
    %v3128 = vsel %vm3125, %v3127, %v3123
    %v3129 = vrcp.pop %v3114
    %v3130 = vmul.f32 %v3114, %v3129
    %v3131 = vsub.f32 1.0, %v3130
    %v3132 = vmul.f32 %v3129, %v3131
    %v3133 = vadd.f32 %v3129, %v3132
    %vm3134 = vweird.f32 %v3114
    %vm3135 = vweird.f32 %v3129
    %vm3136 = vmor %vm3134, %vm3135
    %v3137 = vsel %vm3136, %v3129, %v3133
    %v3138 = vand.u32 2147483647, %v3114
    %vm3139 = vcmp.eq.f32.partialorder %v3138, 8.507059e+37
    %v3140 = vand.u32 %v3114, 2147483648
    %v3141 = vor.u32 1.1754944e-38, %v3140
    %v3142 = vsel %vm3139, %v3141, %v3137
    %v3143 = vmul.f32 %v3078, %v3128
    %v3144 = vmul.f32 %v3104, %v3142
    %s3145 = scalar_lea.vmem [#allocation2], 1280
    %v3146 = vld [vmem:[%s3145] sm:$0xff]
    %v3147 = vld [vmem:[%s3145 + $0x8] sm:$0xff]
    %v3148 = vld [vmem:[%s3145 + $0x10] sm:$0xff]
    %v3149 = vld [vmem:[%s3145 + $0x18] sm:$0xff]
    %v3150 = vld [vmem:[%s3145 + $0x20] sm:$0xff]
    %v3151 = vld [vmem:[%s3145 + $0x28] sm:$0xff]
    %v3152 = vld [vmem:[%s3145 + $0x30] sm:$0xff]
    %v3153 = vld [vmem:[%s3145 + $0x38] sm:$0xff]
    %v3154 = vld [vmem:[%s3145 + $0x40] sm:$0xff]
    %v3155 = vld [vmem:[%s3145 + $0x48] sm:$0xff]
    %v3156 = vld [vmem:[%s3145 + $0x50] sm:$0xff]
    %v3157 = vld [vmem:[%s3145 + $0x58] sm:$0xff]
    %v3158 = vld [vmem:[%s3145 + $0x60] sm:$0xff]
    %v3159 = vld [vmem:[%s3145 + $0x68] sm:$0xff]
    %v3160 = vld [vmem:[%s3145 + $0x70] sm:$0xff]
    %v3161 = vld [vmem:[%s3145 + $0x78] sm:$0xff]
    %v3162 = vld [vmem:[%s3145 + $0x80] sm:$0xff]
    %v3163 = vld [vmem:[%s3145 + $0x88] sm:$0xff]
    %v3164 = vld [vmem:[%s3145 + $0x90] sm:$0xff]
    %v3165 = vld [vmem:[%s3145 + $0x98] sm:$0xff]
    %v3166 = vld [vmem:[%s3145 + $0xa0] sm:$0xff]
    %v3167 = vld [vmem:[%s3145 + $0xa8] sm:$0xff]
    %v3168 = vld [vmem:[%s3145 + $0xb0] sm:$0xff]
    %v3169 = vld [vmem:[%s3145 + $0xb8] sm:$0xff]
    %v3170 = vld [vmem:[%s3145 + $0xc0] sm:$0xff]
    %v3171 = vld [vmem:[%s3145 + $0xc8] sm:$0xff]
    %v3172 = vld [vmem:[%s3145 + $0xd0] sm:$0xff]
    %v3173 = vld [vmem:[%s3145 + $0xd8] sm:$0xff]
    %v3174 = vld [vmem:[%s3145 + $0xe0] sm:$0xff]
    %v3175 = vld [vmem:[%s3145 + $0xe8] sm:$0xff]
    %v3176 = vld [vmem:[%s3145 + $0xf0] sm:$0xff]
    %v3177 = vld [vmem:[%s3145 + $0xf8] sm:$0xff]
    %v3178 = vpack.c.bf16 %v3143, %v3143
    %v3179 = vpack.c.bf16 %v3144, %v3144
    %s3180 = scalar_lea.vmem [#allocation12], 22
    %v3181 = vld [vmem:[%s3180] ss:$8 sm:$0x3]
    %v3183 = vperm.slane %v3181, 0
    %v3184 = vperm.slane %v3181, 1
    %v3219 = vunpack.c.l.b16 %v3146
    %v3220 = vunpack.c.h.b16 %v3146
    %v3221 = vunpack.c.l.b16 %v3147
    %v3222 = vunpack.c.h.b16 %v3147
    %v3223 = vunpack.c.l.b16 %v3148
    %v3224 = vunpack.c.h.b16 %v3148
    %v3225 = vunpack.c.l.b16 %v3149
    %v3226 = vunpack.c.h.b16 %v3149
    %v3227 = vunpack.c.l.b16 %v3150
    %v3228 = vunpack.c.h.b16 %v3150
    %v3229 = vunpack.c.l.b16 %v3151
    %v3230 = vunpack.c.h.b16 %v3151
    %v3231 = vunpack.c.l.b16 %v3152
    %v3232 = vunpack.c.h.b16 %v3152
    %v3233 = vunpack.c.l.b16 %v3153
    %v3234 = vunpack.c.h.b16 %v3153
    %v3235 = vunpack.c.l.b16 %v3154
    %v3236 = vunpack.c.h.b16 %v3154
    %v3237 = vunpack.c.l.b16 %v3155
    %v3238 = vunpack.c.h.b16 %v3155
    %v3239 = vunpack.c.l.b16 %v3156
    %v3240 = vunpack.c.h.b16 %v3156
    %v3241 = vunpack.c.l.b16 %v3157
    %v3242 = vunpack.c.h.b16 %v3157
    %v3243 = vunpack.c.l.b16 %v3158
    %v3244 = vunpack.c.h.b16 %v3158
    %v3245 = vunpack.c.l.b16 %v3159
    %v3246 = vunpack.c.h.b16 %v3159
    %v3247 = vunpack.c.l.b16 %v3160
    %v3248 = vunpack.c.h.b16 %v3160
    %v3249 = vunpack.c.l.b16 %v3161
    %v3250 = vunpack.c.h.b16 %v3161
    %v3251 = vunpack.c.l.b16 %v3162
    %v3252 = vunpack.c.h.b16 %v3162
    %v3253 = vunpack.c.l.b16 %v3163
    %v3254 = vunpack.c.h.b16 %v3163
    %v3255 = vunpack.c.l.b16 %v3164
    %v3256 = vunpack.c.h.b16 %v3164
    %v3257 = vunpack.c.l.b16 %v3165
    %v3258 = vunpack.c.h.b16 %v3165
    %v3259 = vunpack.c.l.b16 %v3166
    %v3260 = vunpack.c.h.b16 %v3166
    %v3261 = vunpack.c.l.b16 %v3167
    %v3262 = vunpack.c.h.b16 %v3167
    %v3263 = vunpack.c.l.b16 %v3168
    %v3264 = vunpack.c.h.b16 %v3168
    %v3265 = vunpack.c.l.b16 %v3169
    %v3266 = vunpack.c.h.b16 %v3169
    %v3267 = vunpack.c.l.b16 %v3170
    %v3268 = vunpack.c.h.b16 %v3170
    %v3269 = vunpack.c.l.b16 %v3171
    %v3270 = vunpack.c.h.b16 %v3171
    %v3271 = vunpack.c.l.b16 %v3172
    %v3272 = vunpack.c.h.b16 %v3172
    %v3273 = vunpack.c.l.b16 %v3173
    %v3274 = vunpack.c.h.b16 %v3173
    %v3275 = vunpack.c.l.b16 %v3174
    %v3276 = vunpack.c.h.b16 %v3174
    %v3277 = vunpack.c.l.b16 %v3175
    %v3278 = vunpack.c.h.b16 %v3175
    %v3279 = vunpack.c.l.b16 %v3176
    %v3280 = vunpack.c.h.b16 %v3176
    %v3281 = vunpack.c.l.b16 %v3177
    %v3282 = vunpack.c.h.b16 %v3177
    %v3283 = vpack.c.b16 %v3221, %v3219
    %v3284 = vpack.c.b16 %v3222, %v3220
    %v3285 = vpack.c.b16 %v3225, %v3223
    %v3286 = vpack.c.b16 %v3226, %v3224
    %v3287 = vpack.c.b16 %v3229, %v3227
    %v3288 = vpack.c.b16 %v3230, %v3228
    %v3289 = vpack.c.b16 %v3233, %v3231
    %v3290 = vpack.c.b16 %v3234, %v3232
    %v3291 = vpack.c.b16 %v3237, %v3235
    %v3292 = vpack.c.b16 %v3238, %v3236
    %v3293 = vpack.c.b16 %v3241, %v3239
    %v3294 = vpack.c.b16 %v3242, %v3240
    %v3295 = vpack.c.b16 %v3245, %v3243
    %v3296 = vpack.c.b16 %v3246, %v3244
    %v3297 = vpack.c.b16 %v3249, %v3247
    %v3298 = vpack.c.b16 %v3250, %v3248
    %v3299 = vpack.c.b16 %v3253, %v3251
    %v3300 = vpack.c.b16 %v3254, %v3252
    %v3301 = vpack.c.b16 %v3257, %v3255
    %v3302 = vpack.c.b16 %v3258, %v3256
    %v3303 = vpack.c.b16 %v3261, %v3259
    %v3304 = vpack.c.b16 %v3262, %v3260
    %v3305 = vpack.c.b16 %v3265, %v3263
    %v3306 = vpack.c.b16 %v3266, %v3264
    %v3307 = vpack.c.b16 %v3269, %v3267
    %v3308 = vpack.c.b16 %v3270, %v3268
    %v3309 = vpack.c.b16 %v3273, %v3271
    %v3310 = vpack.c.b16 %v3274, %v3272
    %v3311 = vpack.c.b16 %v3277, %v3275
    %v3312 = vpack.c.b16 %v3278, %v3276
    %v3313 = vpack.c.b16 %v3281, %v3279
    %v3314 = vpack.c.b16 %v3282, %v3280
    %3347 = vmatpush.bf16.msra.mxu0 %v3297
    %3348 = vmatpush.bf16.msra.mxu0 %v3295
    %3349 = vmatpush.bf16.msra.mxu0 %v3293
    %3350 = vmatpush.bf16.msra.mxu0 %v3291
    %3351 = vmatpush.bf16.msra.mxu0 %v3289
    %3352 = vmatpush.bf16.msra.mxu0 %v3287
    %3353 = vmatpush.bf16.msra.mxu0 %v3285
    %3354 = vmatpush.bf16.msra.mxu0 %v3283
    %3355 = vmatmul.bf16.gmra.mxu0 %v3178
    %v3356 = vpop.f32.mrf.mxu0
    %v3357 = vadd.f32 %v3183, %v3356
    %v3358 = vpop.f32.mrf.mxu0
    %3359 = vdwg.mxu0
    %3360 = vmatpush.bf16.msra.mxu0 %v3313
    %3361 = vmatpush.bf16.msra.mxu0 %v3311
    %3362 = vmatpush.bf16.msra.mxu0 %v3309
    %3363 = vmatpush.bf16.msra.mxu0 %v3307
    %3364 = vmatpush.bf16.msra.mxu0 %v3305
    %3365 = vmatpush.bf16.msra.mxu0 %v3303
    %3366 = vmatpush.bf16.msra.mxu0 %v3301
    %3367 = vmatpush.bf16.msra.mxu0 %v3299
    %3368 = vmatmul.bf16.gmra.mxu0 %v3179
    %v3369 = vpop.f32.mrf.mxu0
    %v3370 = vadd.f32 %v3357, %v3369
    %v3371 = vpop.f32.mrf.mxu0
    %3372 = vdwg.mxu0
    %3373 = vmatpush.bf16.msra.mxu0 %v3298
    %3374 = vmatpush.bf16.msra.mxu0 %v3296
    %3375 = vmatpush.bf16.msra.mxu0 %v3294
    %3376 = vmatpush.bf16.msra.mxu0 %v3292
    %3377 = vmatpush.bf16.msra.mxu0 %v3290
    %3378 = vmatpush.bf16.msra.mxu0 %v3288
    %3379 = vmatpush.bf16.msra.mxu0 %v3286
    %3380 = vmatpush.bf16.msra.mxu0 %v3284
    %3381 = vmatmul.bf16.gmra.mxu0 %v3178
    %v3382 = vpop.f32.mrf.mxu0
    %v3383 = vadd.f32 %v3184, %v3382
    %v3384 = vpop.f32.mrf.mxu0
    %3385 = vdwg.mxu0
    %3386 = vmatpush.bf16.msra.mxu0 %v3314
    %3387 = vmatpush.bf16.msra.mxu0 %v3312
    %3388 = vmatpush.bf16.msra.mxu0 %v3310
    %3389 = vmatpush.bf16.msra.mxu0 %v3308
    %3390 = vmatpush.bf16.msra.mxu0 %v3306
    %3391 = vmatpush.bf16.msra.mxu0 %v3304
    %3392 = vmatpush.bf16.msra.mxu0 %v3302
    %3393 = vmatpush.bf16.msra.mxu0 %v3300
    %3394 = vmatmul.bf16.gmra.mxu0 %v3179
    %v3395 = vpop.f32.mrf.mxu0
    %v3396 = vadd.f32 %v3383, %v3395
    %v3397 = vpop.f32.mrf.mxu0
    %3398 = vdwg.mxu0
    %v3399 = vsub.f32 0.0, %v3370
    %v3400 = vsub.f32 0.0, %v3396
    %v3401 = vmul.f32 %v3399, 1.442695
    %v3402 = vpow.pop %v3401
    %v3403 = vmul.f32 %v3400, 1.442695
    %v3404 = vpow.pop %v3403
    %v3405 = vadd.f32 %v3402, 1.0
    %v3406 = vadd.f32 %v3404, 1.0
    %v3407 = vrcp.pop %v3405
    %v3408 = vmul.f32 %v3405, %v3407
    %v3409 = vsub.f32 1.0, %v3408
    %v3410 = vmul.f32 %v3407, %v3409
    %v3411 = vadd.f32 %v3407, %v3410
    %vm3412 = vweird.f32 %v3405
    %vm3413 = vweird.f32 %v3407
    %vm3414 = vmor %vm3412, %vm3413
    %v3415 = vsel %vm3414, %v3407, %v3411
    %v3416 = vand.u32 2147483647, %v3405
    %vm3417 = vcmp.eq.f32.partialorder %v3416, 8.507059e+37
    %v3418 = vand.u32 %v3405, 2147483648
    %v3419 = vor.u32 1.1754944e-38, %v3418
    %v3420 = vsel %vm3417, %v3419, %v3415
    %v3421 = vrcp.pop %v3406
    %v3422 = vmul.f32 %v3406, %v3421
    %v3423 = vsub.f32 1.0, %v3422
    %v3424 = vmul.f32 %v3421, %v3423
    %v3425 = vadd.f32 %v3421, %v3424
    %vm3426 = vweird.f32 %v3406
    %vm3427 = vweird.f32 %v3421
    %vm3428 = vmor %vm3426, %vm3427
    %v3429 = vsel %vm3428, %v3421, %v3425
    %v3430 = vand.u32 2147483647, %v3406
    %vm3431 = vcmp.eq.f32.partialorder %v3430, 8.507059e+37
    %v3432 = vand.u32 %v3406, 2147483648
    %v3433 = vor.u32 1.1754944e-38, %v3432
    %v3434 = vsel %vm3431, %v3433, %v3429
    %v3435 = vmul.f32 %v3370, %v3420
    %v3436 = vmul.f32 %v3396, %v3434
    %s3437 = scalar_lea.vmem [#allocation2], 1536
    %v3438 = vld [vmem:[%s3437] sm:$0xff]
    %v3439 = vld [vmem:[%s3437 + $0x8] sm:$0xff]
    %v3440 = vld [vmem:[%s3437 + $0x10] sm:$0xff]
    %v3441 = vld [vmem:[%s3437 + $0x18] sm:$0xff]
    %v3442 = vld [vmem:[%s3437 + $0x20] sm:$0xff]
    %v3443 = vld [vmem:[%s3437 + $0x28] sm:$0xff]
    %v3444 = vld [vmem:[%s3437 + $0x30] sm:$0xff]
    %v3445 = vld [vmem:[%s3437 + $0x38] sm:$0xff]
    %v3446 = vld [vmem:[%s3437 + $0x40] sm:$0xff]
    %v3447 = vld [vmem:[%s3437 + $0x48] sm:$0xff]
    %v3448 = vld [vmem:[%s3437 + $0x50] sm:$0xff]
    %v3449 = vld [vmem:[%s3437 + $0x58] sm:$0xff]
    %v3450 = vld [vmem:[%s3437 + $0x60] sm:$0xff]
    %v3451 = vld [vmem:[%s3437 + $0x68] sm:$0xff]
    %v3452 = vld [vmem:[%s3437 + $0x70] sm:$0xff]
    %v3453 = vld [vmem:[%s3437 + $0x78] sm:$0xff]
    %v3454 = vld [vmem:[%s3437 + $0x80] sm:$0xff]
    %v3455 = vld [vmem:[%s3437 + $0x88] sm:$0xff]
    %v3456 = vld [vmem:[%s3437 + $0x90] sm:$0xff]
    %v3457 = vld [vmem:[%s3437 + $0x98] sm:$0xff]
    %v3458 = vld [vmem:[%s3437 + $0xa0] sm:$0xff]
    %v3459 = vld [vmem:[%s3437 + $0xa8] sm:$0xff]
    %v3460 = vld [vmem:[%s3437 + $0xb0] sm:$0xff]
    %v3461 = vld [vmem:[%s3437 + $0xb8] sm:$0xff]
    %v3462 = vld [vmem:[%s3437 + $0xc0] sm:$0xff]
    %v3463 = vld [vmem:[%s3437 + $0xc8] sm:$0xff]
    %v3464 = vld [vmem:[%s3437 + $0xd0] sm:$0xff]
    %v3465 = vld [vmem:[%s3437 + $0xd8] sm:$0xff]
    %v3466 = vld [vmem:[%s3437 + $0xe0] sm:$0xff]
    %v3467 = vld [vmem:[%s3437 + $0xe8] sm:$0xff]
    %v3468 = vld [vmem:[%s3437 + $0xf0] sm:$0xff]
    %v3469 = vld [vmem:[%s3437 + $0xf8] sm:$0xff]
    %v3470 = vpack.c.bf16 %v3435, %v3435
    %v3471 = vpack.c.bf16 %v3436, %v3436
    %s3472 = scalar_lea.vmem [#allocation12], 23
    %v3473 = vld [vmem:[%s3472] ss:$8 sm:$0x3]
    %v3475 = vperm.slane %v3473, 0
    %v3476 = vperm.slane %v3473, 1
    %v3511 = vunpack.c.l.b16 %v3438
    %v3512 = vunpack.c.h.b16 %v3438
    %v3513 = vunpack.c.l.b16 %v3439
    %v3514 = vunpack.c.h.b16 %v3439
    %v3515 = vunpack.c.l.b16 %v3440
    %v3516 = vunpack.c.h.b16 %v3440
    %v3517 = vunpack.c.l.b16 %v3441
    %v3518 = vunpack.c.h.b16 %v3441
    %v3519 = vunpack.c.l.b16 %v3442
    %v3520 = vunpack.c.h.b16 %v3442
    %v3521 = vunpack.c.l.b16 %v3443
    %v3522 = vunpack.c.h.b16 %v3443
    %v3523 = vunpack.c.l.b16 %v3444
    %v3524 = vunpack.c.h.b16 %v3444
    %v3525 = vunpack.c.l.b16 %v3445
    %v3526 = vunpack.c.h.b16 %v3445
    %v3527 = vunpack.c.l.b16 %v3446
    %v3528 = vunpack.c.h.b16 %v3446
    %v3529 = vunpack.c.l.b16 %v3447
    %v3530 = vunpack.c.h.b16 %v3447
    %v3531 = vunpack.c.l.b16 %v3448
    %v3532 = vunpack.c.h.b16 %v3448
    %v3533 = vunpack.c.l.b16 %v3449
    %v3534 = vunpack.c.h.b16 %v3449
    %v3535 = vunpack.c.l.b16 %v3450
    %v3536 = vunpack.c.h.b16 %v3450
    %v3537 = vunpack.c.l.b16 %v3451
    %v3538 = vunpack.c.h.b16 %v3451
    %v3539 = vunpack.c.l.b16 %v3452
    %v3540 = vunpack.c.h.b16 %v3452
    %v3541 = vunpack.c.l.b16 %v3453
    %v3542 = vunpack.c.h.b16 %v3453
    %v3543 = vunpack.c.l.b16 %v3454
    %v3544 = vunpack.c.h.b16 %v3454
    %v3545 = vunpack.c.l.b16 %v3455
    %v3546 = vunpack.c.h.b16 %v3455
    %v3547 = vunpack.c.l.b16 %v3456
    %v3548 = vunpack.c.h.b16 %v3456
    %v3549 = vunpack.c.l.b16 %v3457
    %v3550 = vunpack.c.h.b16 %v3457
    %v3551 = vunpack.c.l.b16 %v3458
    %v3552 = vunpack.c.h.b16 %v3458
    %v3553 = vunpack.c.l.b16 %v3459
    %v3554 = vunpack.c.h.b16 %v3459
    %v3555 = vunpack.c.l.b16 %v3460
    %v3556 = vunpack.c.h.b16 %v3460
    %v3557 = vunpack.c.l.b16 %v3461
    %v3558 = vunpack.c.h.b16 %v3461
    %v3559 = vunpack.c.l.b16 %v3462
    %v3560 = vunpack.c.h.b16 %v3462
    %v3561 = vunpack.c.l.b16 %v3463
    %v3562 = vunpack.c.h.b16 %v3463
    %v3563 = vunpack.c.l.b16 %v3464
    %v3564 = vunpack.c.h.b16 %v3464
    %v3565 = vunpack.c.l.b16 %v3465
    %v3566 = vunpack.c.h.b16 %v3465
    %v3567 = vunpack.c.l.b16 %v3466
    %v3568 = vunpack.c.h.b16 %v3466
    %v3569 = vunpack.c.l.b16 %v3467
    %v3570 = vunpack.c.h.b16 %v3467
    %v3571 = vunpack.c.l.b16 %v3468
    %v3572 = vunpack.c.h.b16 %v3468
    %v3573 = vunpack.c.l.b16 %v3469
    %v3574 = vunpack.c.h.b16 %v3469
    %v3575 = vpack.c.b16 %v3513, %v3511
    %v3576 = vpack.c.b16 %v3514, %v3512
    %v3577 = vpack.c.b16 %v3517, %v3515
    %v3578 = vpack.c.b16 %v3518, %v3516
    %v3579 = vpack.c.b16 %v3521, %v3519
    %v3580 = vpack.c.b16 %v3522, %v3520
    %v3581 = vpack.c.b16 %v3525, %v3523
    %v3582 = vpack.c.b16 %v3526, %v3524
    %v3583 = vpack.c.b16 %v3529, %v3527
    %v3584 = vpack.c.b16 %v3530, %v3528
    %v3585 = vpack.c.b16 %v3533, %v3531
    %v3586 = vpack.c.b16 %v3534, %v3532
    %v3587 = vpack.c.b16 %v3537, %v3535
    %v3588 = vpack.c.b16 %v3538, %v3536
    %v3589 = vpack.c.b16 %v3541, %v3539
    %v3590 = vpack.c.b16 %v3542, %v3540
    %v3591 = vpack.c.b16 %v3545, %v3543
    %v3592 = vpack.c.b16 %v3546, %v3544
    %v3593 = vpack.c.b16 %v3549, %v3547
    %v3594 = vpack.c.b16 %v3550, %v3548
    %v3595 = vpack.c.b16 %v3553, %v3551
    %v3596 = vpack.c.b16 %v3554, %v3552
    %v3597 = vpack.c.b16 %v3557, %v3555
    %v3598 = vpack.c.b16 %v3558, %v3556
    %v3599 = vpack.c.b16 %v3561, %v3559
    %v3600 = vpack.c.b16 %v3562, %v3560
    %v3601 = vpack.c.b16 %v3565, %v3563
    %v3602 = vpack.c.b16 %v3566, %v3564
    %v3603 = vpack.c.b16 %v3569, %v3567
    %v3604 = vpack.c.b16 %v3570, %v3568
    %v3605 = vpack.c.b16 %v3573, %v3571
    %v3606 = vpack.c.b16 %v3574, %v3572
    %3639 = vmatpush.bf16.msra.mxu0 %v3589
    %3640 = vmatpush.bf16.msra.mxu0 %v3587
    %3641 = vmatpush.bf16.msra.mxu0 %v3585
    %3642 = vmatpush.bf16.msra.mxu0 %v3583
    %3643 = vmatpush.bf16.msra.mxu0 %v3581
    %3644 = vmatpush.bf16.msra.mxu0 %v3579
    %3645 = vmatpush.bf16.msra.mxu0 %v3577
    %3646 = vmatpush.bf16.msra.mxu0 %v3575
    %3647 = vmatmul.bf16.gmra.mxu0 %v3470
    %v3648 = vpop.f32.mrf.mxu0
    %v3649 = vadd.f32 %v3475, %v3648
    %v3650 = vpop.f32.mrf.mxu0
    %3651 = vdwg.mxu0
    %3652 = vmatpush.bf16.msra.mxu0 %v3605
    %3653 = vmatpush.bf16.msra.mxu0 %v3603
    %3654 = vmatpush.bf16.msra.mxu0 %v3601
    %3655 = vmatpush.bf16.msra.mxu0 %v3599
    %3656 = vmatpush.bf16.msra.mxu0 %v3597
    %3657 = vmatpush.bf16.msra.mxu0 %v3595
    %3658 = vmatpush.bf16.msra.mxu0 %v3593
    %3659 = vmatpush.bf16.msra.mxu0 %v3591
    %3660 = vmatmul.bf16.gmra.mxu0 %v3471
    %v3661 = vpop.f32.mrf.mxu0
    %v3662 = vadd.f32 %v3649, %v3661
    %v3663 = vpop.f32.mrf.mxu0
    %3664 = vdwg.mxu0
    %3665 = vmatpush.bf16.msra.mxu0 %v3590
    %3666 = vmatpush.bf16.msra.mxu0 %v3588
    %3667 = vmatpush.bf16.msra.mxu0 %v3586
    %3668 = vmatpush.bf16.msra.mxu0 %v3584
    %3669 = vmatpush.bf16.msra.mxu0 %v3582
    %3670 = vmatpush.bf16.msra.mxu0 %v3580
    %3671 = vmatpush.bf16.msra.mxu0 %v3578
    %3672 = vmatpush.bf16.msra.mxu0 %v3576
    %3673 = vmatmul.bf16.gmra.mxu0 %v3470
    %v3674 = vpop.f32.mrf.mxu0
    %v3675 = vadd.f32 %v3476, %v3674
    %v3676 = vpop.f32.mrf.mxu0
    %3677 = vdwg.mxu0
    %3678 = vmatpush.bf16.msra.mxu0 %v3606
    %3679 = vmatpush.bf16.msra.mxu0 %v3604
    %3680 = vmatpush.bf16.msra.mxu0 %v3602
    %3681 = vmatpush.bf16.msra.mxu0 %v3600
    %3682 = vmatpush.bf16.msra.mxu0 %v3598
    %3683 = vmatpush.bf16.msra.mxu0 %v3596
    %3684 = vmatpush.bf16.msra.mxu0 %v3594
    %3685 = vmatpush.bf16.msra.mxu0 %v3592
    %3686 = vmatmul.bf16.gmra.mxu0 %v3471
    %v3687 = vpop.f32.mrf.mxu0
    %v3688 = vadd.f32 %v3675, %v3687
    %v3689 = vpop.f32.mrf.mxu0
    %3690 = vdwg.mxu0
    %v3691 = vpack.c.bf16 %v3662, %v3662
    %v3692 = vpack.c.bf16 %v3688, %v3688
    %v3725 = vunpack.c.l.b16 %v2211
    %v3726 = vunpack.c.h.b16 %v2211
    %v3727 = vunpack.c.l.b16 %v2212
    %v3728 = vunpack.c.h.b16 %v2212
    %v3729 = vunpack.c.l.b16 %v2213
    %v3730 = vunpack.c.h.b16 %v2213
    %v3731 = vunpack.c.l.b16 %v2214
    %v3732 = vunpack.c.h.b16 %v2214
    %v3733 = vunpack.c.l.b16 %v2215
    %v3734 = vunpack.c.h.b16 %v2215
    %v3735 = vunpack.c.l.b16 %v2216
    %v3736 = vunpack.c.h.b16 %v2216
    %v3737 = vunpack.c.l.b16 %v2217
    %v3738 = vunpack.c.h.b16 %v2217
    %v3739 = vunpack.c.l.b16 %v2218
    %v3740 = vunpack.c.h.b16 %v2218
    %v3741 = vunpack.c.l.b16 %v2219
    %v3742 = vunpack.c.h.b16 %v2219
    %v3743 = vunpack.c.l.b16 %v2220
    %v3744 = vunpack.c.h.b16 %v2220
    %v3745 = vunpack.c.l.b16 %v2221
    %v3746 = vunpack.c.h.b16 %v2221
    %v3747 = vunpack.c.l.b16 %v2222
    %v3748 = vunpack.c.h.b16 %v2222
    %v3749 = vunpack.c.l.b16 %v2223
    %v3750 = vunpack.c.h.b16 %v2223
    %v3751 = vunpack.c.l.b16 %v2224
    %v3752 = vunpack.c.h.b16 %v2224
    %v3753 = vunpack.c.l.b16 %v2225
    %v3754 = vunpack.c.h.b16 %v2225
    %v3755 = vunpack.c.l.b16 %v2226
    %v3756 = vunpack.c.h.b16 %v2226
    %v3757 = vunpack.c.l.b16 %v2227
    %v3758 = vunpack.c.h.b16 %v2227
    %v3759 = vunpack.c.l.b16 %v2228
    %v3760 = vunpack.c.h.b16 %v2228
    %v3761 = vunpack.c.l.b16 %v2229
    %v3762 = vunpack.c.h.b16 %v2229
    %v3763 = vunpack.c.l.b16 %v2230
    %v3764 = vunpack.c.h.b16 %v2230
    %v3765 = vunpack.c.l.b16 %v2231
    %v3766 = vunpack.c.h.b16 %v2231
    %v3767 = vunpack.c.l.b16 %v2232
    %v3768 = vunpack.c.h.b16 %v2232
    %v3769 = vunpack.c.l.b16 %v2233
    %v3770 = vunpack.c.h.b16 %v2233
    %v3771 = vunpack.c.l.b16 %v2234
    %v3772 = vunpack.c.h.b16 %v2234
    %v3773 = vunpack.c.l.b16 %v2235
    %v3774 = vunpack.c.h.b16 %v2235
    %v3775 = vunpack.c.l.b16 %v2236
    %v3776 = vunpack.c.h.b16 %v2236
    %v3777 = vunpack.c.l.b16 %v2237
    %v3778 = vunpack.c.h.b16 %v2237
    %v3779 = vunpack.c.l.b16 %v2238
    %v3780 = vunpack.c.h.b16 %v2238
    %v3781 = vunpack.c.l.b16 %v2239
    %v3782 = vunpack.c.h.b16 %v2239
    %v3783 = vunpack.c.l.b16 %v2240
    %v3784 = vunpack.c.h.b16 %v2240
    %v3785 = vunpack.c.l.b16 %v2241
    %v3786 = vunpack.c.h.b16 %v2241
    %v3787 = vunpack.c.l.b16 %v2242
    %v3788 = vunpack.c.h.b16 %v2242
    %v3789 = vpack.c.b16 %v3727, %v3725
    %v3790 = vpack.c.b16 %v3728, %v3726
    %v3791 = vpack.c.b16 %v3731, %v3729
    %v3792 = vpack.c.b16 %v3732, %v3730
    %v3793 = vpack.c.b16 %v3735, %v3733
    %v3794 = vpack.c.b16 %v3736, %v3734
    %v3795 = vpack.c.b16 %v3739, %v3737
    %v3796 = vpack.c.b16 %v3740, %v3738
    %v3797 = vpack.c.b16 %v3743, %v3741
    %v3798 = vpack.c.b16 %v3744, %v3742
    %v3799 = vpack.c.b16 %v3747, %v3745
    %v3800 = vpack.c.b16 %v3748, %v3746
    %v3801 = vpack.c.b16 %v3751, %v3749
    %v3802 = vpack.c.b16 %v3752, %v3750
    %v3803 = vpack.c.b16 %v3755, %v3753
    %v3804 = vpack.c.b16 %v3756, %v3754
    %v3805 = vpack.c.b16 %v3759, %v3757
    %v3806 = vpack.c.b16 %v3760, %v3758
    %v3807 = vpack.c.b16 %v3763, %v3761
    %v3808 = vpack.c.b16 %v3764, %v3762
    %v3809 = vpack.c.b16 %v3767, %v3765
    %v3810 = vpack.c.b16 %v3768, %v3766
    %v3811 = vpack.c.b16 %v3771, %v3769
    %v3812 = vpack.c.b16 %v3772, %v3770
    %v3813 = vpack.c.b16 %v3775, %v3773
    %v3814 = vpack.c.b16 %v3776, %v3774
    %v3815 = vpack.c.b16 %v3779, %v3777
    %v3816 = vpack.c.b16 %v3780, %v3778
    %v3817 = vpack.c.b16 %v3783, %v3781
    %v3818 = vpack.c.b16 %v3784, %v3782
    %v3819 = vpack.c.b16 %v3787, %v3785
    %v3820 = vpack.c.b16 %v3788, %v3786
    %3853 = vmatpush.bf16.msra.mxu0 %v3803
    %3854 = vmatpush.bf16.msra.mxu0 %v3801
    %3855 = vmatpush.bf16.msra.mxu0 %v3799
    %3856 = vmatpush.bf16.msra.mxu0 %v3797
    %3857 = vmatpush.bf16.msra.mxu0 %v3795
    %3858 = vmatpush.bf16.msra.mxu0 %v3793
    %3859 = vmatpush.bf16.msra.mxu0 %v3791
    %3860 = vmatpush.bf16.msra.mxu0 %v3789
    %3861 = vmatmul.bf16.gmra.mxu0 %v3691
    %v3862 = vpop.f32.mrf.mxu0
    %v3863 = vadd.f32 %v2186, %v3862
    %v3864 = vpop.f32.mrf.mxu0
    %3865 = vdwg.mxu0
    %3866 = vmatpush.bf16.msra.mxu0 %v3819
    %3867 = vmatpush.bf16.msra.mxu0 %v3817
    %3868 = vmatpush.bf16.msra.mxu0 %v3815
    %3869 = vmatpush.bf16.msra.mxu0 %v3813
    %3870 = vmatpush.bf16.msra.mxu0 %v3811
    %3871 = vmatpush.bf16.msra.mxu0 %v3809
    %3872 = vmatpush.bf16.msra.mxu0 %v3807
    %3873 = vmatpush.bf16.msra.mxu0 %v3805
    %3874 = vmatmul.bf16.gmra.mxu0 %v3692
    %v3875 = vpop.f32.mrf.mxu0
    %v3876 = vadd.f32 %v3863, %v3875
    %v3877 = vpop.f32.mrf.mxu0
    %3878 = vdwg.mxu0
    %3879 = vmatpush.bf16.msra.mxu0 %v3804
    %3880 = vmatpush.bf16.msra.mxu0 %v3802
    %3881 = vmatpush.bf16.msra.mxu0 %v3800
    %3882 = vmatpush.bf16.msra.mxu0 %v3798
    %3883 = vmatpush.bf16.msra.mxu0 %v3796
    %3884 = vmatpush.bf16.msra.mxu0 %v3794
    %3885 = vmatpush.bf16.msra.mxu0 %v3792
    %3886 = vmatpush.bf16.msra.mxu0 %v3790
    %3887 = vmatmul.bf16.gmra.mxu0 %v3691
    %v3888 = vpop.f32.mrf.mxu0
    %v3889 = vadd.f32 %v2187, %v3888
    %v3890 = vpop.f32.mrf.mxu0
    %3891 = vdwg.mxu0
    %3892 = vmatpush.bf16.msra.mxu0 %v3820
    %3893 = vmatpush.bf16.msra.mxu0 %v3818
    %3894 = vmatpush.bf16.msra.mxu0 %v3816
    %3895 = vmatpush.bf16.msra.mxu0 %v3814
    %3896 = vmatpush.bf16.msra.mxu0 %v3812
    %3897 = vmatpush.bf16.msra.mxu0 %v3810
    %3898 = vmatpush.bf16.msra.mxu0 %v3808
    %3899 = vmatpush.bf16.msra.mxu0 %v3806
    %3900 = vmatmul.bf16.gmra.mxu0 %v3692
    %v3901 = vpop.f32.mrf.mxu0
    %v3902 = vadd.f32 %v3889, %v3901
    %v3903 = vpop.f32.mrf.mxu0
    %3904 = vdwg.mxu0
    %v3905 = vsub.f32 0.0, %v3876
    %v3906 = vsub.f32 0.0, %v3902
    %v3907 = vmul.f32 %v3905, 1.442695
    %v3908 = vpow.pop %v3907
    %v3909 = vmul.f32 %v3906, 1.442695
    %v3910 = vpow.pop %v3909
    %v3911 = vadd.f32 %v3908, 1.0
    %v3912 = vadd.f32 %v3910, 1.0
    %v3913 = vrcp.pop %v3911
    %v3914 = vmul.f32 %v3911, %v3913
    %v3915 = vsub.f32 1.0, %v3914
    %v3916 = vmul.f32 %v3913, %v3915
    %v3917 = vadd.f32 %v3913, %v3916
    %vm3918 = vweird.f32 %v3911
    %vm3919 = vweird.f32 %v3913
    %vm3920 = vmor %vm3918, %vm3919
    %v3921 = vsel %vm3920, %v3913, %v3917
    %v3922 = vand.u32 2147483647, %v3911
    %vm3923 = vcmp.eq.f32.partialorder %v3922, 8.507059e+37
    %v3924 = vand.u32 %v3911, 2147483648
    %v3925 = vor.u32 1.1754944e-38, %v3924
    %v3926 = vsel %vm3923, %v3925, %v3921
    %v3927 = vrcp.pop %v3912
    %v3928 = vmul.f32 %v3912, %v3927
    %v3929 = vsub.f32 1.0, %v3928
    %v3930 = vmul.f32 %v3927, %v3929
    %v3931 = vadd.f32 %v3927, %v3930
    %vm3932 = vweird.f32 %v3912
    %vm3933 = vweird.f32 %v3927
    %vm3934 = vmor %vm3932, %vm3933
    %v3935 = vsel %vm3934, %v3927, %v3931
    %v3936 = vand.u32 2147483647, %v3912
    %vm3937 = vcmp.eq.f32.partialorder %v3936, 8.507059e+37
    %v3938 = vand.u32 %v3912, 2147483648
    %v3939 = vor.u32 1.1754944e-38, %v3938
    %v3940 = vsel %vm3937, %v3939, %v3935
    %v3941 = vmul.f32 %v3876, %v3926
    %v3942 = vmul.f32 %v3902, %v3940
    %v3943 = vpack.c.bf16 %v3941, %v3941
    %v3944 = vpack.c.bf16 %v3942, %v3942
    %v3946 = vperm.slane %v2277, 0
    %v3947 = vperm.slane %v2277, 1
    %v3982 = vunpack.c.l.b16 %v2244
    %v3983 = vunpack.c.h.b16 %v2244
    %v3984 = vunpack.c.l.b16 %v2245
    %v3985 = vunpack.c.h.b16 %v2245
    %v3986 = vunpack.c.l.b16 %v2246
    %v3987 = vunpack.c.h.b16 %v2246
    %v3988 = vunpack.c.l.b16 %v2247
    %v3989 = vunpack.c.h.b16 %v2247
    %v3990 = vunpack.c.l.b16 %v2248
    %v3991 = vunpack.c.h.b16 %v2248
    %v3992 = vunpack.c.l.b16 %v2249
    %v3993 = vunpack.c.h.b16 %v2249
    %v3994 = vunpack.c.l.b16 %v2250
    %v3995 = vunpack.c.h.b16 %v2250
    %v3996 = vunpack.c.l.b16 %v2251
    %v3997 = vunpack.c.h.b16 %v2251
    %v3998 = vunpack.c.l.b16 %v2252
    %v3999 = vunpack.c.h.b16 %v2252
    %v4000 = vunpack.c.l.b16 %v2253
    %v4001 = vunpack.c.h.b16 %v2253
    %v4002 = vunpack.c.l.b16 %v2254
    %v4003 = vunpack.c.h.b16 %v2254
    %v4004 = vunpack.c.l.b16 %v2255
    %v4005 = vunpack.c.h.b16 %v2255
    %v4006 = vunpack.c.l.b16 %v2256
    %v4007 = vunpack.c.h.b16 %v2256
    %v4008 = vunpack.c.l.b16 %v2257
    %v4009 = vunpack.c.h.b16 %v2257
    %v4010 = vunpack.c.l.b16 %v2258
    %v4011 = vunpack.c.h.b16 %v2258
    %v4012 = vunpack.c.l.b16 %v2259
    %v4013 = vunpack.c.h.b16 %v2259
    %v4014 = vunpack.c.l.b16 %v2260
    %v4015 = vunpack.c.h.b16 %v2260
    %v4016 = vunpack.c.l.b16 %v2261
    %v4017 = vunpack.c.h.b16 %v2261
    %v4018 = vunpack.c.l.b16 %v2262
    %v4019 = vunpack.c.h.b16 %v2262
    %v4020 = vunpack.c.l.b16 %v2263
    %v4021 = vunpack.c.h.b16 %v2263
    %v4022 = vunpack.c.l.b16 %v2264
    %v4023 = vunpack.c.h.b16 %v2264
    %v4024 = vunpack.c.l.b16 %v2265
    %v4025 = vunpack.c.h.b16 %v2265
    %v4026 = vunpack.c.l.b16 %v2266
    %v4027 = vunpack.c.h.b16 %v2266
    %v4028 = vunpack.c.l.b16 %v2267
    %v4029 = vunpack.c.h.b16 %v2267
    %v4030 = vunpack.c.l.b16 %v2268
    %v4031 = vunpack.c.h.b16 %v2268
    %v4032 = vunpack.c.l.b16 %v2269
    %v4033 = vunpack.c.h.b16 %v2269
    %v4034 = vunpack.c.l.b16 %v2270
    %v4035 = vunpack.c.h.b16 %v2270
    %v4036 = vunpack.c.l.b16 %v2271
    %v4037 = vunpack.c.h.b16 %v2271
    %v4038 = vunpack.c.l.b16 %v2272
    %v4039 = vunpack.c.h.b16 %v2272
    %v4040 = vunpack.c.l.b16 %v2273
    %v4041 = vunpack.c.h.b16 %v2273
    %v4042 = vunpack.c.l.b16 %v2274
    %v4043 = vunpack.c.h.b16 %v2274
    %v4044 = vunpack.c.l.b16 %v2275
    %v4045 = vunpack.c.h.b16 %v2275
    %v4046 = vpack.c.b16 %v3984, %v3982
    %v4047 = vpack.c.b16 %v3985, %v3983
    %v4048 = vpack.c.b16 %v3988, %v3986
    %v4049 = vpack.c.b16 %v3989, %v3987
    %v4050 = vpack.c.b16 %v3992, %v3990
    %v4051 = vpack.c.b16 %v3993, %v3991
    %v4052 = vpack.c.b16 %v3996, %v3994
    %v4053 = vpack.c.b16 %v3997, %v3995
    %v4054 = vpack.c.b16 %v4000, %v3998
    %v4055 = vpack.c.b16 %v4001, %v3999
    %v4056 = vpack.c.b16 %v4004, %v4002
    %v4057 = vpack.c.b16 %v4005, %v4003
    %v4058 = vpack.c.b16 %v4008, %v4006
    %v4059 = vpack.c.b16 %v4009, %v4007
    %v4060 = vpack.c.b16 %v4012, %v4010
    %v4061 = vpack.c.b16 %v4013, %v4011
    %v4062 = vpack.c.b16 %v4016, %v4014
    %v4063 = vpack.c.b16 %v4017, %v4015
    %v4064 = vpack.c.b16 %v4020, %v4018
    %v4065 = vpack.c.b16 %v4021, %v4019
    %v4066 = vpack.c.b16 %v4024, %v4022
    %v4067 = vpack.c.b16 %v4025, %v4023
    %v4068 = vpack.c.b16 %v4028, %v4026
    %v4069 = vpack.c.b16 %v4029, %v4027
    %v4070 = vpack.c.b16 %v4032, %v4030
    %v4071 = vpack.c.b16 %v4033, %v4031
    %v4072 = vpack.c.b16 %v4036, %v4034
    %v4073 = vpack.c.b16 %v4037, %v4035
    %v4074 = vpack.c.b16 %v4040, %v4038
    %v4075 = vpack.c.b16 %v4041, %v4039
    %v4076 = vpack.c.b16 %v4044, %v4042
    %v4077 = vpack.c.b16 %v4045, %v4043
    %4110 = vmatpush.bf16.msra.mxu0 %v4060
    %4111 = vmatpush.bf16.msra.mxu0 %v4058
    %4112 = vmatpush.bf16.msra.mxu0 %v4056
    %4113 = vmatpush.bf16.msra.mxu0 %v4054
    %4114 = vmatpush.bf16.msra.mxu0 %v4052
    %4115 = vmatpush.bf16.msra.mxu0 %v4050
    %4116 = vmatpush.bf16.msra.mxu0 %v4048
    %4117 = vmatpush.bf16.msra.mxu0 %v4046
    %4118 = vmatmul.bf16.gmra.mxu0 %v3943
    %v4119 = vpop.f32.mrf.mxu0
    %v4120 = vadd.f32 %v3946, %v4119
    %v4121 = vpop.f32.mrf.mxu0
    %4122 = vdwg.mxu0
    %4123 = vmatpush.bf16.msra.mxu0 %v4076
    %4124 = vmatpush.bf16.msra.mxu0 %v4074
    %4125 = vmatpush.bf16.msra.mxu0 %v4072
    %4126 = vmatpush.bf16.msra.mxu0 %v4070
    %4127 = vmatpush.bf16.msra.mxu0 %v4068
    %4128 = vmatpush.bf16.msra.mxu0 %v4066
    %4129 = vmatpush.bf16.msra.mxu0 %v4064
    %4130 = vmatpush.bf16.msra.mxu0 %v4062
    %4131 = vmatmul.bf16.gmra.mxu0 %v3944
    %v4132 = vpop.f32.mrf.mxu0
    %v4133 = vadd.f32 %v4120, %v4132
    %v4134 = vpop.f32.mrf.mxu0
    %4135 = vdwg.mxu0
    %4136 = vmatpush.bf16.msra.mxu0 %v4061
    %4137 = vmatpush.bf16.msra.mxu0 %v4059
    %4138 = vmatpush.bf16.msra.mxu0 %v4057
    %4139 = vmatpush.bf16.msra.mxu0 %v4055
    %4140 = vmatpush.bf16.msra.mxu0 %v4053
    %4141 = vmatpush.bf16.msra.mxu0 %v4051
    %4142 = vmatpush.bf16.msra.mxu0 %v4049
    %4143 = vmatpush.bf16.msra.mxu0 %v4047
    %4144 = vmatmul.bf16.gmra.mxu0 %v3943
    %v4145 = vpop.f32.mrf.mxu0
    %v4146 = vadd.f32 %v3947, %v4145
    %v4147 = vpop.f32.mrf.mxu0
    %4148 = vdwg.mxu0
    %4149 = vmatpush.bf16.msra.mxu0 %v4077
    %4150 = vmatpush.bf16.msra.mxu0 %v4075
    %4151 = vmatpush.bf16.msra.mxu0 %v4073
    %4152 = vmatpush.bf16.msra.mxu0 %v4071
    %4153 = vmatpush.bf16.msra.mxu0 %v4069
    %4154 = vmatpush.bf16.msra.mxu0 %v4067
    %4155 = vmatpush.bf16.msra.mxu0 %v4065
    %4156 = vmatpush.bf16.msra.mxu0 %v4063
    %4157 = vmatmul.bf16.gmra.mxu0 %v3944
    %v4158 = vpop.f32.mrf.mxu0
    %v4159 = vadd.f32 %v4146, %v4158
    %v4160 = vpop.f32.mrf.mxu0
    %4161 = vdwg.mxu0
    %v4162 = vpack.c.bf16 %v4133, %v4133
    %v4163 = vpack.c.bf16 %v4159, %v4159
    %4164 = vmatpush.bf16.msra.mxu0 %v3803
    %4165 = vmatpush.bf16.msra.mxu0 %v3801
    %4166 = vmatpush.bf16.msra.mxu0 %v3799
    %4167 = vmatpush.bf16.msra.mxu0 %v3797
    %4168 = vmatpush.bf16.msra.mxu0 %v3795
    %4169 = vmatpush.bf16.msra.mxu0 %v3793
    %4170 = vmatpush.bf16.msra.mxu0 %v3791
    %4171 = vmatpush.bf16.msra.mxu0 %v3789
    %4172 = vmatmul.bf16.gmra.mxu0 %v4162
    %v4173 = vpop.f32.mrf.mxu0
    %v4174 = vadd.f32 %v2186, %v4173
    %v4175 = vpop.f32.mrf.mxu0
    %4176 = vdwg.mxu0
    %4177 = vmatpush.bf16.msra.mxu0 %v3819
    %4178 = vmatpush.bf16.msra.mxu0 %v3817
    %4179 = vmatpush.bf16.msra.mxu0 %v3815
    %4180 = vmatpush.bf16.msra.mxu0 %v3813
    %4181 = vmatpush.bf16.msra.mxu0 %v3811
    %4182 = vmatpush.bf16.msra.mxu0 %v3809
    %4183 = vmatpush.bf16.msra.mxu0 %v3807
    %4184 = vmatpush.bf16.msra.mxu0 %v3805
    %4185 = vmatmul.bf16.gmra.mxu0 %v4163
    %v4186 = vpop.f32.mrf.mxu0
    %v4187 = vadd.f32 %v4174, %v4186
    %v4188 = vpop.f32.mrf.mxu0
    %4189 = vdwg.mxu0
    %4190 = vmatpush.bf16.msra.mxu0 %v3804
    %4191 = vmatpush.bf16.msra.mxu0 %v3802
    %4192 = vmatpush.bf16.msra.mxu0 %v3800
    %4193 = vmatpush.bf16.msra.mxu0 %v3798
    %4194 = vmatpush.bf16.msra.mxu0 %v3796
    %4195 = vmatpush.bf16.msra.mxu0 %v3794
    %4196 = vmatpush.bf16.msra.mxu0 %v3792
    %4197 = vmatpush.bf16.msra.mxu0 %v3790
    %4198 = vmatmul.bf16.gmra.mxu0 %v4162
    %v4199 = vpop.f32.mrf.mxu0
    %v4200 = vadd.f32 %v2187, %v4199
    %v4201 = vpop.f32.mrf.mxu0
    %4202 = vdwg.mxu0
    %4203 = vmatpush.bf16.msra.mxu0 %v3820
    %4204 = vmatpush.bf16.msra.mxu0 %v3818
    %4205 = vmatpush.bf16.msra.mxu0 %v3816
    %4206 = vmatpush.bf16.msra.mxu0 %v3814
    %4207 = vmatpush.bf16.msra.mxu0 %v3812
    %4208 = vmatpush.bf16.msra.mxu0 %v3810
    %4209 = vmatpush.bf16.msra.mxu0 %v3808
    %4210 = vmatpush.bf16.msra.mxu0 %v3806
    %4211 = vmatmul.bf16.gmra.mxu0 %v4163
    %v4212 = vpop.f32.mrf.mxu0
    %v4213 = vadd.f32 %v4200, %v4212
    %v4214 = vpop.f32.mrf.mxu0
    %4215 = vdwg.mxu0
    %v4216 = vsub.f32 0.0, %v4187
    %v4217 = vsub.f32 0.0, %v4213
    %v4218 = vmul.f32 %v4216, 1.442695
    %v4219 = vpow.pop %v4218
    %v4220 = vmul.f32 %v4217, 1.442695
    %v4221 = vpow.pop %v4220
    %v4222 = vadd.f32 %v4219, 1.0
    %v4223 = vadd.f32 %v4221, 1.0
    %v4224 = vrcp.pop %v4222
    %v4225 = vmul.f32 %v4222, %v4224
    %v4226 = vsub.f32 1.0, %v4225
    %v4227 = vmul.f32 %v4224, %v4226
    %v4228 = vadd.f32 %v4224, %v4227
    %vm4229 = vweird.f32 %v4222
    %vm4230 = vweird.f32 %v4224
    %vm4231 = vmor %vm4229, %vm4230
    %v4232 = vsel %vm4231, %v4224, %v4228
    %v4233 = vand.u32 2147483647, %v4222
    %vm4234 = vcmp.eq.f32.partialorder %v4233, 8.507059e+37
    %v4235 = vand.u32 %v4222, 2147483648
    %v4236 = vor.u32 1.1754944e-38, %v4235
    %v4237 = vsel %vm4234, %v4236, %v4232
    %v4238 = vrcp.pop %v4223
    %v4239 = vmul.f32 %v4223, %v4238
    %v4240 = vsub.f32 1.0, %v4239
    %v4241 = vmul.f32 %v4238, %v4240
    %v4242 = vadd.f32 %v4238, %v4241
    %vm4243 = vweird.f32 %v4223
    %vm4244 = vweird.f32 %v4238
    %vm4245 = vmor %vm4243, %vm4244
    %v4246 = vsel %vm4245, %v4238, %v4242
    %v4247 = vand.u32 2147483647, %v4223
    %vm4248 = vcmp.eq.f32.partialorder %v4247, 8.507059e+37
    %v4249 = vand.u32 %v4223, 2147483648
    %v4250 = vor.u32 1.1754944e-38, %v4249
    %v4251 = vsel %vm4248, %v4250, %v4246
    %v4252 = vmul.f32 %v4187, %v4237
    %v4253 = vmul.f32 %v4213, %v4251
    %v4254 = vpack.c.bf16 %v4252, %v4252
    %v4255 = vpack.c.bf16 %v4253, %v4253
    %4256 = vmatpush.bf16.msra.mxu0 %v4060
    %4257 = vmatpush.bf16.msra.mxu0 %v4058
    %4258 = vmatpush.bf16.msra.mxu0 %v4056
    %4259 = vmatpush.bf16.msra.mxu0 %v4054
    %4260 = vmatpush.bf16.msra.mxu0 %v4052
    %4261 = vmatpush.bf16.msra.mxu0 %v4050
    %4262 = vmatpush.bf16.msra.mxu0 %v4048
    %4263 = vmatpush.bf16.msra.mxu0 %v4046
    %4264 = vmatmul.bf16.gmra.mxu0 %v4254
    %v4265 = vpop.f32.mrf.mxu0
    %v4266 = vadd.f32 %v3946, %v4265
    %v4267 = vpop.f32.mrf.mxu0
    %4268 = vdwg.mxu0
    %4269 = vmatpush.bf16.msra.mxu0 %v4076
    %4270 = vmatpush.bf16.msra.mxu0 %v4074
    %4271 = vmatpush.bf16.msra.mxu0 %v4072
    %4272 = vmatpush.bf16.msra.mxu0 %v4070
    %4273 = vmatpush.bf16.msra.mxu0 %v4068
    %4274 = vmatpush.bf16.msra.mxu0 %v4066
    %4275 = vmatpush.bf16.msra.mxu0 %v4064
    %4276 = vmatpush.bf16.msra.mxu0 %v4062
    %4277 = vmatmul.bf16.gmra.mxu0 %v4255
    %v4278 = vpop.f32.mrf.mxu0
    %v4279 = vadd.f32 %v4266, %v4278
    %v4280 = vpop.f32.mrf.mxu0
    %4281 = vdwg.mxu0
    %4282 = vmatpush.bf16.msra.mxu0 %v4061
    %4283 = vmatpush.bf16.msra.mxu0 %v4059
    %4284 = vmatpush.bf16.msra.mxu0 %v4057
    %4285 = vmatpush.bf16.msra.mxu0 %v4055
    %4286 = vmatpush.bf16.msra.mxu0 %v4053
    %4287 = vmatpush.bf16.msra.mxu0 %v4051
    %4288 = vmatpush.bf16.msra.mxu0 %v4049
    %4289 = vmatpush.bf16.msra.mxu0 %v4047
    %4290 = vmatmul.bf16.gmra.mxu0 %v4254
    %v4291 = vpop.f32.mrf.mxu0
    %v4292 = vadd.f32 %v3947, %v4291
    %v4293 = vpop.f32.mrf.mxu0
    %4294 = vdwg.mxu0
    %4295 = vmatpush.bf16.msra.mxu0 %v4077
    %4296 = vmatpush.bf16.msra.mxu0 %v4075
    %4297 = vmatpush.bf16.msra.mxu0 %v4073
    %4298 = vmatpush.bf16.msra.mxu0 %v4071
    %4299 = vmatpush.bf16.msra.mxu0 %v4069
    %4300 = vmatpush.bf16.msra.mxu0 %v4067
    %4301 = vmatpush.bf16.msra.mxu0 %v4065
    %4302 = vmatpush.bf16.msra.mxu0 %v4063
    %4303 = vmatmul.bf16.gmra.mxu0 %v4255
    %v4304 = vpop.f32.mrf.mxu0
    %v4305 = vadd.f32 %v4292, %v4304
    %v4306 = vpop.f32.mrf.mxu0
    %4307 = vdwg.mxu0
    %v4308 = vadd.f32 %v4279, %v3662
    %v4309 = vadd.f32 %v4305, %v3688
    %v4310 = vpack.c.bf16 %v4308, %v4308
    %v4311 = vpack.c.bf16 %v4309, %v4309
    %4312 = vmatpush.bf16.msra.mxu0 %v3803
    %4313 = vmatpush.bf16.msra.mxu0 %v3801
    %4314 = vmatpush.bf16.msra.mxu0 %v3799
    %4315 = vmatpush.bf16.msra.mxu0 %v3797
    %4316 = vmatpush.bf16.msra.mxu0 %v3795
    %4317 = vmatpush.bf16.msra.mxu0 %v3793
    %4318 = vmatpush.bf16.msra.mxu0 %v3791
    %4319 = vmatpush.bf16.msra.mxu0 %v3789
    %4320 = vmatmul.bf16.gmra.mxu0 %v4310
    %v4321 = vpop.f32.mrf.mxu0
    %v4322 = vadd.f32 %v2186, %v4321
    %v4323 = vpop.f32.mrf.mxu0
    %4324 = vdwg.mxu0
    %4325 = vmatpush.bf16.msra.mxu0 %v3819
    %4326 = vmatpush.bf16.msra.mxu0 %v3817
    %4327 = vmatpush.bf16.msra.mxu0 %v3815
    %4328 = vmatpush.bf16.msra.mxu0 %v3813
    %4329 = vmatpush.bf16.msra.mxu0 %v3811
    %4330 = vmatpush.bf16.msra.mxu0 %v3809
    %4331 = vmatpush.bf16.msra.mxu0 %v3807
    %4332 = vmatpush.bf16.msra.mxu0 %v3805
    %4333 = vmatmul.bf16.gmra.mxu0 %v4311
    %v4334 = vpop.f32.mrf.mxu0
    %v4335 = vadd.f32 %v4322, %v4334
    %v4336 = vpop.f32.mrf.mxu0
    %4337 = vdwg.mxu0
    %4338 = vmatpush.bf16.msra.mxu0 %v3804
    %4339 = vmatpush.bf16.msra.mxu0 %v3802
    %4340 = vmatpush.bf16.msra.mxu0 %v3800
    %4341 = vmatpush.bf16.msra.mxu0 %v3798
    %4342 = vmatpush.bf16.msra.mxu0 %v3796
    %4343 = vmatpush.bf16.msra.mxu0 %v3794
    %4344 = vmatpush.bf16.msra.mxu0 %v3792
    %4345 = vmatpush.bf16.msra.mxu0 %v3790
    %4346 = vmatmul.bf16.gmra.mxu0 %v4310
    %v4347 = vpop.f32.mrf.mxu0
    %v4348 = vadd.f32 %v2187, %v4347
    %v4349 = vpop.f32.mrf.mxu0
    %4350 = vdwg.mxu0
    %4351 = vmatpush.bf16.msra.mxu0 %v3820
    %4352 = vmatpush.bf16.msra.mxu0 %v3818
    %4353 = vmatpush.bf16.msra.mxu0 %v3816
    %4354 = vmatpush.bf16.msra.mxu0 %v3814
    %4355 = vmatpush.bf16.msra.mxu0 %v3812
    %4356 = vmatpush.bf16.msra.mxu0 %v3810
    %4357 = vmatpush.bf16.msra.mxu0 %v3808
    %4358 = vmatpush.bf16.msra.mxu0 %v3806
    %4359 = vmatmul.bf16.gmra.mxu0 %v4311
    %v4360 = vpop.f32.mrf.mxu0
    %v4361 = vadd.f32 %v4348, %v4360
    %v4362 = vpop.f32.mrf.mxu0
    %4363 = vdwg.mxu0
    %v4364 = vsub.f32 0.0, %v4335
    %v4365 = vsub.f32 0.0, %v4361
    %v4366 = vmul.f32 %v4364, 1.442695
    %v4367 = vpow.pop %v4366
    %v4368 = vmul.f32 %v4365, 1.442695
    %v4369 = vpow.pop %v4368
    %v4370 = vadd.f32 %v4367, 1.0
    %v4371 = vadd.f32 %v4369, 1.0
    %v4372 = vrcp.pop %v4370
    %v4373 = vmul.f32 %v4370, %v4372
    %v4374 = vsub.f32 1.0, %v4373
    %v4375 = vmul.f32 %v4372, %v4374
    %v4376 = vadd.f32 %v4372, %v4375
    %vm4377 = vweird.f32 %v4370
    %vm4378 = vweird.f32 %v4372
    %vm4379 = vmor %vm4377, %vm4378
    %v4380 = vsel %vm4379, %v4372, %v4376
    %v4381 = vand.u32 2147483647, %v4370
    %vm4382 = vcmp.eq.f32.partialorder %v4381, 8.507059e+37
    %v4383 = vand.u32 %v4370, 2147483648
    %v4384 = vor.u32 1.1754944e-38, %v4383
    %v4385 = vsel %vm4382, %v4384, %v4380
    %v4386 = vrcp.pop %v4371
    %v4387 = vmul.f32 %v4371, %v4386
    %v4388 = vsub.f32 1.0, %v4387
    %v4389 = vmul.f32 %v4386, %v4388
    %v4390 = vadd.f32 %v4386, %v4389
    %vm4391 = vweird.f32 %v4371
    %vm4392 = vweird.f32 %v4386
    %vm4393 = vmor %vm4391, %vm4392
    %v4394 = vsel %vm4393, %v4386, %v4390
    %v4395 = vand.u32 2147483647, %v4371
    %vm4396 = vcmp.eq.f32.partialorder %v4395, 8.507059e+37
    %v4397 = vand.u32 %v4371, 2147483648
    %v4398 = vor.u32 1.1754944e-38, %v4397
    %v4399 = vsel %vm4396, %v4398, %v4394
    %v4400 = vmul.f32 %v4335, %v4385
    %v4401 = vmul.f32 %v4361, %v4399
    %v4402 = vpack.c.bf16 %v4400, %v4400
    %v4403 = vpack.c.bf16 %v4401, %v4401
    %4404 = vmatpush.bf16.msra.mxu0 %v4060
    %4405 = vmatpush.bf16.msra.mxu0 %v4058
    %4406 = vmatpush.bf16.msra.mxu0 %v4056
    %4407 = vmatpush.bf16.msra.mxu0 %v4054
    %4408 = vmatpush.bf16.msra.mxu0 %v4052
    %4409 = vmatpush.bf16.msra.mxu0 %v4050
    %4410 = vmatpush.bf16.msra.mxu0 %v4048
    %4411 = vmatpush.bf16.msra.mxu0 %v4046
    %4412 = vmatmul.bf16.gmra.mxu0 %v4402
    %v4413 = vpop.f32.mrf.mxu0
    %v4414 = vadd.f32 %v3946, %v4413
    %v4415 = vpop.f32.mrf.mxu0
    %4416 = vdwg.mxu0
    %4417 = vmatpush.bf16.msra.mxu0 %v4076
    %4418 = vmatpush.bf16.msra.mxu0 %v4074
    %4419 = vmatpush.bf16.msra.mxu0 %v4072
    %4420 = vmatpush.bf16.msra.mxu0 %v4070
    %4421 = vmatpush.bf16.msra.mxu0 %v4068
    %4422 = vmatpush.bf16.msra.mxu0 %v4066
    %4423 = vmatpush.bf16.msra.mxu0 %v4064
    %4424 = vmatpush.bf16.msra.mxu0 %v4062
    %4425 = vmatmul.bf16.gmra.mxu0 %v4403
    %v4426 = vpop.f32.mrf.mxu0
    %v4427 = vadd.f32 %v4414, %v4426
    %v4428 = vpop.f32.mrf.mxu0
    %4429 = vdwg.mxu0
    %4430 = vmatpush.bf16.msra.mxu0 %v4061
    %4431 = vmatpush.bf16.msra.mxu0 %v4059
    %4432 = vmatpush.bf16.msra.mxu0 %v4057
    %4433 = vmatpush.bf16.msra.mxu0 %v4055
    %4434 = vmatpush.bf16.msra.mxu0 %v4053
    %4435 = vmatpush.bf16.msra.mxu0 %v4051
    %4436 = vmatpush.bf16.msra.mxu0 %v4049
    %4437 = vmatpush.bf16.msra.mxu0 %v4047
    %4438 = vmatmul.bf16.gmra.mxu0 %v4402
    %v4439 = vpop.f32.mrf.mxu0
    %v4440 = vadd.f32 %v3947, %v4439
    %v4441 = vpop.f32.mrf.mxu0
    %4442 = vdwg.mxu0
    %4443 = vmatpush.bf16.msra.mxu0 %v4077
    %4444 = vmatpush.bf16.msra.mxu0 %v4075
    %4445 = vmatpush.bf16.msra.mxu0 %v4073
    %4446 = vmatpush.bf16.msra.mxu0 %v4071
    %4447 = vmatpush.bf16.msra.mxu0 %v4069
    %4448 = vmatpush.bf16.msra.mxu0 %v4067
    %4449 = vmatpush.bf16.msra.mxu0 %v4065
    %4450 = vmatpush.bf16.msra.mxu0 %v4063
    %4451 = vmatmul.bf16.gmra.mxu0 %v4403
    %v4452 = vpop.f32.mrf.mxu0
    %v4453 = vadd.f32 %v4440, %v4452
    %v4454 = vpop.f32.mrf.mxu0
    %4455 = vdwg.mxu0
    %v4456 = vpack.c.bf16 %v4427, %v4427
    %v4457 = vpack.c.bf16 %v4453, %v4453
    %4458 = vmatpush.bf16.msra.mxu0 %v3803
    %4459 = vmatpush.bf16.msra.mxu0 %v3801
    %4460 = vmatpush.bf16.msra.mxu0 %v3799
    %4461 = vmatpush.bf16.msra.mxu0 %v3797
    %4462 = vmatpush.bf16.msra.mxu0 %v3795
    %4463 = vmatpush.bf16.msra.mxu0 %v3793
    %4464 = vmatpush.bf16.msra.mxu0 %v3791
    %4465 = vmatpush.bf16.msra.mxu0 %v3789
    %4466 = vmatmul.bf16.gmra.mxu0 %v4456
    %v4467 = vpop.f32.mrf.mxu0
    %v4468 = vadd.f32 %v2186, %v4467
    %v4469 = vpop.f32.mrf.mxu0
    %4470 = vdwg.mxu0
    %4471 = vmatpush.bf16.msra.mxu0 %v3819
    %4472 = vmatpush.bf16.msra.mxu0 %v3817
    %4473 = vmatpush.bf16.msra.mxu0 %v3815
    %4474 = vmatpush.bf16.msra.mxu0 %v3813
    %4475 = vmatpush.bf16.msra.mxu0 %v3811
    %4476 = vmatpush.bf16.msra.mxu0 %v3809
    %4477 = vmatpush.bf16.msra.mxu0 %v3807
    %4478 = vmatpush.bf16.msra.mxu0 %v3805
    %4479 = vmatmul.bf16.gmra.mxu0 %v4457
    %v4480 = vpop.f32.mrf.mxu0
    %v4481 = vadd.f32 %v4468, %v4480
    %v4482 = vpop.f32.mrf.mxu0
    %4483 = vdwg.mxu0
    %4484 = vmatpush.bf16.msra.mxu0 %v3804
    %4485 = vmatpush.bf16.msra.mxu0 %v3802
    %4486 = vmatpush.bf16.msra.mxu0 %v3800
    %4487 = vmatpush.bf16.msra.mxu0 %v3798
    %4488 = vmatpush.bf16.msra.mxu0 %v3796
    %4489 = vmatpush.bf16.msra.mxu0 %v3794
    %4490 = vmatpush.bf16.msra.mxu0 %v3792
    %4491 = vmatpush.bf16.msra.mxu0 %v3790
    %4492 = vmatmul.bf16.gmra.mxu0 %v4456
    %v4493 = vpop.f32.mrf.mxu0
    %v4494 = vadd.f32 %v2187, %v4493
    %v4495 = vpop.f32.mrf.mxu0
    %4496 = vdwg.mxu0
    %4497 = vmatpush.bf16.msra.mxu0 %v3820
    %4498 = vmatpush.bf16.msra.mxu0 %v3818
    %4499 = vmatpush.bf16.msra.mxu0 %v3816
    %4500 = vmatpush.bf16.msra.mxu0 %v3814
    %4501 = vmatpush.bf16.msra.mxu0 %v3812
    %4502 = vmatpush.bf16.msra.mxu0 %v3810
    %4503 = vmatpush.bf16.msra.mxu0 %v3808
    %4504 = vmatpush.bf16.msra.mxu0 %v3806
    %4505 = vmatmul.bf16.gmra.mxu0 %v4457
    %v4506 = vpop.f32.mrf.mxu0
    %v4507 = vadd.f32 %v4494, %v4506
    %v4508 = vpop.f32.mrf.mxu0
    %4509 = vdwg.mxu0
    %v4510 = vsub.f32 0.0, %v4481
    %v4511 = vsub.f32 0.0, %v4507
    %v4512 = vmul.f32 %v4510, 1.442695
    %v4513 = vpow.pop %v4512
    %v4514 = vmul.f32 %v4511, 1.442695
    %v4515 = vpow.pop %v4514
    %v4516 = vadd.f32 %v4513, 1.0
    %v4517 = vadd.f32 %v4515, 1.0
    %v4518 = vrcp.pop %v4516
    %v4519 = vmul.f32 %v4516, %v4518
    %v4520 = vsub.f32 1.0, %v4519
    %v4521 = vmul.f32 %v4518, %v4520
    %v4522 = vadd.f32 %v4518, %v4521
    %vm4523 = vweird.f32 %v4516
    %vm4524 = vweird.f32 %v4518
    %vm4525 = vmor %vm4523, %vm4524
    %v4526 = vsel %vm4525, %v4518, %v4522
    %v4527 = vand.u32 2147483647, %v4516
    %vm4528 = vcmp.eq.f32.partialorder %v4527, 8.507059e+37
    %v4529 = vand.u32 %v4516, 2147483648
    %v4530 = vor.u32 1.1754944e-38, %v4529
    %v4531 = vsel %vm4528, %v4530, %v4526
    %v4532 = vrcp.pop %v4517
    %v4533 = vmul.f32 %v4517, %v4532
    %v4534 = vsub.f32 1.0, %v4533
    %v4535 = vmul.f32 %v4532, %v4534
    %v4536 = vadd.f32 %v4532, %v4535
    %vm4537 = vweird.f32 %v4517
    %vm4538 = vweird.f32 %v4532
    %vm4539 = vmor %vm4537, %vm4538
    %v4540 = vsel %vm4539, %v4532, %v4536
    %v4541 = vand.u32 2147483647, %v4517
    %vm4542 = vcmp.eq.f32.partialorder %v4541, 8.507059e+37
    %v4543 = vand.u32 %v4517, 2147483648
    %v4544 = vor.u32 1.1754944e-38, %v4543
    %v4545 = vsel %vm4542, %v4544, %v4540
    %v4546 = vmul.f32 %v4481, %v4531
    %v4547 = vmul.f32 %v4507, %v4545
    %v4548 = vpack.c.bf16 %v4546, %v4546
    %v4549 = vpack.c.bf16 %v4547, %v4547
    %4550 = vmatpush.bf16.msra.mxu0 %v4060
    %4551 = vmatpush.bf16.msra.mxu0 %v4058
    %4552 = vmatpush.bf16.msra.mxu0 %v4056
    %4553 = vmatpush.bf16.msra.mxu0 %v4054
    %4554 = vmatpush.bf16.msra.mxu0 %v4052
    %4555 = vmatpush.bf16.msra.mxu0 %v4050
    %4556 = vmatpush.bf16.msra.mxu0 %v4048
    %4557 = vmatpush.bf16.msra.mxu0 %v4046
    %4558 = vmatmul.bf16.gmra.mxu0 %v4548
    %v4559 = vpop.f32.mrf.mxu0
    %v4560 = vadd.f32 %v3946, %v4559
    %v4561 = vpop.f32.mrf.mxu0
    %4562 = vdwg.mxu0
    %4563 = vmatpush.bf16.msra.mxu0 %v4076
    %4564 = vmatpush.bf16.msra.mxu0 %v4074
    %4565 = vmatpush.bf16.msra.mxu0 %v4072
    %4566 = vmatpush.bf16.msra.mxu0 %v4070
    %4567 = vmatpush.bf16.msra.mxu0 %v4068
    %4568 = vmatpush.bf16.msra.mxu0 %v4066
    %4569 = vmatpush.bf16.msra.mxu0 %v4064
    %4570 = vmatpush.bf16.msra.mxu0 %v4062
    %4571 = vmatmul.bf16.gmra.mxu0 %v4549
    %v4572 = vpop.f32.mrf.mxu0
    %v4573 = vadd.f32 %v4560, %v4572
    %v4574 = vpop.f32.mrf.mxu0
    %4575 = vdwg.mxu0
    %4576 = vmatpush.bf16.msra.mxu0 %v4061
    %4577 = vmatpush.bf16.msra.mxu0 %v4059
    %4578 = vmatpush.bf16.msra.mxu0 %v4057
    %4579 = vmatpush.bf16.msra.mxu0 %v4055
    %4580 = vmatpush.bf16.msra.mxu0 %v4053
    %4581 = vmatpush.bf16.msra.mxu0 %v4051
    %4582 = vmatpush.bf16.msra.mxu0 %v4049
    %4583 = vmatpush.bf16.msra.mxu0 %v4047
    %4584 = vmatmul.bf16.gmra.mxu0 %v4548
    %v4585 = vpop.f32.mrf.mxu0
    %v4586 = vadd.f32 %v3947, %v4585
    %v4587 = vpop.f32.mrf.mxu0
    %4588 = vdwg.mxu0
    %4589 = vmatpush.bf16.msra.mxu0 %v4077
    %4590 = vmatpush.bf16.msra.mxu0 %v4075
    %4591 = vmatpush.bf16.msra.mxu0 %v4073
    %4592 = vmatpush.bf16.msra.mxu0 %v4071
    %4593 = vmatpush.bf16.msra.mxu0 %v4069
    %4594 = vmatpush.bf16.msra.mxu0 %v4067
    %4595 = vmatpush.bf16.msra.mxu0 %v4065
    %4596 = vmatpush.bf16.msra.mxu0 %v4063
    %4597 = vmatmul.bf16.gmra.mxu0 %v4549
    %v4598 = vpop.f32.mrf.mxu0
    %v4599 = vadd.f32 %v4586, %v4598
    %v4600 = vpop.f32.mrf.mxu0
    %4601 = vdwg.mxu0
    %v4602 = vadd.f32 %v4573, %v4308
    %v4603 = vadd.f32 %v4599, %v4309
    %v4604 = vpack.c.bf16 %v4602, %v4602
    %v4605 = vpack.c.bf16 %v4603, %v4603
    %4606 = vmatpush.bf16.msra.mxu0 %v3803
    %4607 = vmatpush.bf16.msra.mxu0 %v3801
    %4608 = vmatpush.bf16.msra.mxu0 %v3799
    %4609 = vmatpush.bf16.msra.mxu0 %v3797
    %4610 = vmatpush.bf16.msra.mxu0 %v3795
    %4611 = vmatpush.bf16.msra.mxu0 %v3793
    %4612 = vmatpush.bf16.msra.mxu0 %v3791
    %4613 = vmatpush.bf16.msra.mxu0 %v3789
    %4614 = vmatmul.bf16.gmra.mxu0 %v4604
    %v4615 = vpop.f32.mrf.mxu0
    %v4616 = vadd.f32 %v2186, %v4615
    %v4617 = vpop.f32.mrf.mxu0
    %4618 = vdwg.mxu0
    %4619 = vmatpush.bf16.msra.mxu0 %v3819
    %4620 = vmatpush.bf16.msra.mxu0 %v3817
    %4621 = vmatpush.bf16.msra.mxu0 %v3815
    %4622 = vmatpush.bf16.msra.mxu0 %v3813
    %4623 = vmatpush.bf16.msra.mxu0 %v3811
    %4624 = vmatpush.bf16.msra.mxu0 %v3809
    %4625 = vmatpush.bf16.msra.mxu0 %v3807
    %4626 = vmatpush.bf16.msra.mxu0 %v3805
    %4627 = vmatmul.bf16.gmra.mxu0 %v4605
    %v4628 = vpop.f32.mrf.mxu0
    %v4629 = vadd.f32 %v4616, %v4628
    %v4630 = vpop.f32.mrf.mxu0
    %4631 = vdwg.mxu0
    %4632 = vmatpush.bf16.msra.mxu0 %v3804
    %4633 = vmatpush.bf16.msra.mxu0 %v3802
    %4634 = vmatpush.bf16.msra.mxu0 %v3800
    %4635 = vmatpush.bf16.msra.mxu0 %v3798
    %4636 = vmatpush.bf16.msra.mxu0 %v3796
    %4637 = vmatpush.bf16.msra.mxu0 %v3794
    %4638 = vmatpush.bf16.msra.mxu0 %v3792
    %4639 = vmatpush.bf16.msra.mxu0 %v3790
    %4640 = vmatmul.bf16.gmra.mxu0 %v4604
    %v4641 = vpop.f32.mrf.mxu0
    %v4642 = vadd.f32 %v2187, %v4641
    %v4643 = vpop.f32.mrf.mxu0
    %4644 = vdwg.mxu0
    %4645 = vmatpush.bf16.msra.mxu0 %v3820
    %4646 = vmatpush.bf16.msra.mxu0 %v3818
    %4647 = vmatpush.bf16.msra.mxu0 %v3816
    %4648 = vmatpush.bf16.msra.mxu0 %v3814
    %4649 = vmatpush.bf16.msra.mxu0 %v3812
    %4650 = vmatpush.bf16.msra.mxu0 %v3810
    %4651 = vmatpush.bf16.msra.mxu0 %v3808
    %4652 = vmatpush.bf16.msra.mxu0 %v3806
    %4653 = vmatmul.bf16.gmra.mxu0 %v4605
    %v4654 = vpop.f32.mrf.mxu0
    %v4655 = vadd.f32 %v4642, %v4654
    %v4656 = vpop.f32.mrf.mxu0
    %4657 = vdwg.mxu0
    %v4658 = vsub.f32 0.0, %v4629
    %v4659 = vsub.f32 0.0, %v4655
    %v4660 = vmul.f32 %v4658, 1.442695
    %v4661 = vpow.pop %v4660
    %v4662 = vmul.f32 %v4659, 1.442695
    %v4663 = vpow.pop %v4662
    %v4664 = vadd.f32 %v4661, 1.0
    %v4665 = vadd.f32 %v4663, 1.0
    %v4666 = vrcp.pop %v4664
    %v4667 = vmul.f32 %v4664, %v4666
    %v4668 = vsub.f32 1.0, %v4667
    %v4669 = vmul.f32 %v4666, %v4668
    %v4670 = vadd.f32 %v4666, %v4669
    %vm4671 = vweird.f32 %v4664
    %vm4672 = vweird.f32 %v4666
    %vm4673 = vmor %vm4671, %vm4672
    %v4674 = vsel %vm4673, %v4666, %v4670
    %v4675 = vand.u32 2147483647, %v4664
    %vm4676 = vcmp.eq.f32.partialorder %v4675, 8.507059e+37
    %v4677 = vand.u32 %v4664, 2147483648
    %v4678 = vor.u32 1.1754944e-38, %v4677
    %v4679 = vsel %vm4676, %v4678, %v4674
    %v4680 = vrcp.pop %v4665
    %v4681 = vmul.f32 %v4665, %v4680
    %v4682 = vsub.f32 1.0, %v4681
    %v4683 = vmul.f32 %v4680, %v4682
    %v4684 = vadd.f32 %v4680, %v4683
    %vm4685 = vweird.f32 %v4665
    %vm4686 = vweird.f32 %v4680
    %vm4687 = vmor %vm4685, %vm4686
    %v4688 = vsel %vm4687, %v4680, %v4684
    %v4689 = vand.u32 2147483647, %v4665
    %vm4690 = vcmp.eq.f32.partialorder %v4689, 8.507059e+37
    %v4691 = vand.u32 %v4665, 2147483648
    %v4692 = vor.u32 1.1754944e-38, %v4691
    %v4693 = vsel %vm4690, %v4692, %v4688
    %v4694 = vmul.f32 %v4629, %v4679
    %v4695 = vmul.f32 %v4655, %v4693
    %v4696 = vpack.c.bf16 %v4694, %v4694
    %v4697 = vpack.c.bf16 %v4695, %v4695
    %4698 = vmatpush.bf16.msra.mxu0 %v4060
    %4699 = vmatpush.bf16.msra.mxu0 %v4058
    %4700 = vmatpush.bf16.msra.mxu0 %v4056
    %4701 = vmatpush.bf16.msra.mxu0 %v4054
    %4702 = vmatpush.bf16.msra.mxu0 %v4052
    %4703 = vmatpush.bf16.msra.mxu0 %v4050
    %4704 = vmatpush.bf16.msra.mxu0 %v4048
    %4705 = vmatpush.bf16.msra.mxu0 %v4046
    %4706 = vmatmul.bf16.gmra.mxu0 %v4696
    %v4707 = vpop.f32.mrf.mxu0
    %v4708 = vadd.f32 %v3946, %v4707
    %v4709 = vpop.f32.mrf.mxu0
    %4710 = vdwg.mxu0
    %4711 = vmatpush.bf16.msra.mxu0 %v4076
    %4712 = vmatpush.bf16.msra.mxu0 %v4074
    %4713 = vmatpush.bf16.msra.mxu0 %v4072
    %4714 = vmatpush.bf16.msra.mxu0 %v4070
    %4715 = vmatpush.bf16.msra.mxu0 %v4068
    %4716 = vmatpush.bf16.msra.mxu0 %v4066
    %4717 = vmatpush.bf16.msra.mxu0 %v4064
    %4718 = vmatpush.bf16.msra.mxu0 %v4062
    %4719 = vmatmul.bf16.gmra.mxu0 %v4697
    %v4720 = vpop.f32.mrf.mxu0
    %v4721 = vadd.f32 %v4708, %v4720
    %v4722 = vpop.f32.mrf.mxu0
    %4723 = vdwg.mxu0
    %4724 = vmatpush.bf16.msra.mxu0 %v4061
    %4725 = vmatpush.bf16.msra.mxu0 %v4059
    %4726 = vmatpush.bf16.msra.mxu0 %v4057
    %4727 = vmatpush.bf16.msra.mxu0 %v4055
    %4728 = vmatpush.bf16.msra.mxu0 %v4053
    %4729 = vmatpush.bf16.msra.mxu0 %v4051
    %4730 = vmatpush.bf16.msra.mxu0 %v4049
    %4731 = vmatpush.bf16.msra.mxu0 %v4047
    %4732 = vmatmul.bf16.gmra.mxu0 %v4696
    %v4733 = vpop.f32.mrf.mxu0
    %v4734 = vadd.f32 %v3947, %v4733
    %v4735 = vpop.f32.mrf.mxu0
    %4736 = vdwg.mxu0
    %4737 = vmatpush.bf16.msra.mxu0 %v4077
    %4738 = vmatpush.bf16.msra.mxu0 %v4075
    %4739 = vmatpush.bf16.msra.mxu0 %v4073
    %4740 = vmatpush.bf16.msra.mxu0 %v4071
    %4741 = vmatpush.bf16.msra.mxu0 %v4069
    %4742 = vmatpush.bf16.msra.mxu0 %v4067
    %4743 = vmatpush.bf16.msra.mxu0 %v4065
    %4744 = vmatpush.bf16.msra.mxu0 %v4063
    %4745 = vmatmul.bf16.gmra.mxu0 %v4697
    %v4746 = vpop.f32.mrf.mxu0
    %v4747 = vadd.f32 %v4734, %v4746
    %v4748 = vpop.f32.mrf.mxu0
    %4749 = vdwg.mxu0
    %v4750 = vpack.c.bf16 %v4721, %v4721
    %v4751 = vpack.c.bf16 %v4747, %v4747
    %4752 = vmatpush.bf16.msra.mxu0 %v3803
    %4753 = vmatpush.bf16.msra.mxu0 %v3801
    %4754 = vmatpush.bf16.msra.mxu0 %v3799
    %4755 = vmatpush.bf16.msra.mxu0 %v3797
    %4756 = vmatpush.bf16.msra.mxu0 %v3795
    %4757 = vmatpush.bf16.msra.mxu0 %v3793
    %4758 = vmatpush.bf16.msra.mxu0 %v3791
    %4759 = vmatpush.bf16.msra.mxu0 %v3789
    %4760 = vmatmul.bf16.gmra.mxu0 %v4750
    %v4761 = vpop.f32.mrf.mxu0
    %v4762 = vadd.f32 %v2186, %v4761
    %v4763 = vpop.f32.mrf.mxu0
    %4764 = vdwg.mxu0
    %4765 = vmatpush.bf16.msra.mxu0 %v3819
    %4766 = vmatpush.bf16.msra.mxu0 %v3817
    %4767 = vmatpush.bf16.msra.mxu0 %v3815
    %4768 = vmatpush.bf16.msra.mxu0 %v3813
    %4769 = vmatpush.bf16.msra.mxu0 %v3811
    %4770 = vmatpush.bf16.msra.mxu0 %v3809
    %4771 = vmatpush.bf16.msra.mxu0 %v3807
    %4772 = vmatpush.bf16.msra.mxu0 %v3805
    %4773 = vmatmul.bf16.gmra.mxu0 %v4751
    %v4774 = vpop.f32.mrf.mxu0
    %v4775 = vadd.f32 %v4762, %v4774
    %v4776 = vpop.f32.mrf.mxu0
    %4777 = vdwg.mxu0
    %4778 = vmatpush.bf16.msra.mxu0 %v3804
    %4779 = vmatpush.bf16.msra.mxu0 %v3802
    %4780 = vmatpush.bf16.msra.mxu0 %v3800
    %4781 = vmatpush.bf16.msra.mxu0 %v3798
    %4782 = vmatpush.bf16.msra.mxu0 %v3796
    %4783 = vmatpush.bf16.msra.mxu0 %v3794
    %4784 = vmatpush.bf16.msra.mxu0 %v3792
    %4785 = vmatpush.bf16.msra.mxu0 %v3790
    %4786 = vmatmul.bf16.gmra.mxu0 %v4750
    %v4787 = vpop.f32.mrf.mxu0
    %v4788 = vadd.f32 %v2187, %v4787
    %v4789 = vpop.f32.mrf.mxu0
    %4790 = vdwg.mxu0
    %4791 = vmatpush.bf16.msra.mxu0 %v3820
    %4792 = vmatpush.bf16.msra.mxu0 %v3818
    %4793 = vmatpush.bf16.msra.mxu0 %v3816
    %4794 = vmatpush.bf16.msra.mxu0 %v3814
    %4795 = vmatpush.bf16.msra.mxu0 %v3812
    %4796 = vmatpush.bf16.msra.mxu0 %v3810
    %4797 = vmatpush.bf16.msra.mxu0 %v3808
    %4798 = vmatpush.bf16.msra.mxu0 %v3806
    %4799 = vmatmul.bf16.gmra.mxu0 %v4751
    %v4800 = vpop.f32.mrf.mxu0
    %v4801 = vadd.f32 %v4788, %v4800
    %v4802 = vpop.f32.mrf.mxu0
    %4803 = vdwg.mxu0
    %v4804 = vsub.f32 0.0, %v4775
    %v4805 = vsub.f32 0.0, %v4801
    %v4806 = vmul.f32 %v4804, 1.442695
    %v4807 = vpow.pop %v4806
    %v4808 = vmul.f32 %v4805, 1.442695
    %v4809 = vpow.pop %v4808
    %v4810 = vadd.f32 %v4807, 1.0
    %v4811 = vadd.f32 %v4809, 1.0
    %v4812 = vrcp.pop %v4810
    %v4813 = vmul.f32 %v4810, %v4812
    %v4814 = vsub.f32 1.0, %v4813
    %v4815 = vmul.f32 %v4812, %v4814
    %v4816 = vadd.f32 %v4812, %v4815
    %vm4817 = vweird.f32 %v4810
    %vm4818 = vweird.f32 %v4812
    %vm4819 = vmor %vm4817, %vm4818
    %v4820 = vsel %vm4819, %v4812, %v4816
    %v4821 = vand.u32 2147483647, %v4810
    %vm4822 = vcmp.eq.f32.partialorder %v4821, 8.507059e+37
    %v4823 = vand.u32 %v4810, 2147483648
    %v4824 = vor.u32 1.1754944e-38, %v4823
    %v4825 = vsel %vm4822, %v4824, %v4820
    %v4826 = vrcp.pop %v4811
    %v4827 = vmul.f32 %v4811, %v4826
    %v4828 = vsub.f32 1.0, %v4827
    %v4829 = vmul.f32 %v4826, %v4828
    %v4830 = vadd.f32 %v4826, %v4829
    %vm4831 = vweird.f32 %v4811
    %vm4832 = vweird.f32 %v4826
    %vm4833 = vmor %vm4831, %vm4832
    %v4834 = vsel %vm4833, %v4826, %v4830
    %v4835 = vand.u32 2147483647, %v4811
    %vm4836 = vcmp.eq.f32.partialorder %v4835, 8.507059e+37
    %v4837 = vand.u32 %v4811, 2147483648
    %v4838 = vor.u32 1.1754944e-38, %v4837
    %v4839 = vsel %vm4836, %v4838, %v4834
    %v4840 = vmul.f32 %v4775, %v4825
    %v4841 = vmul.f32 %v4801, %v4839
    %v4842 = vpack.c.bf16 %v4840, %v4840
    %v4843 = vpack.c.bf16 %v4841, %v4841
    %4844 = vmatpush.bf16.msra.mxu0 %v4060
    %4845 = vmatpush.bf16.msra.mxu0 %v4058
    %4846 = vmatpush.bf16.msra.mxu0 %v4056
    %4847 = vmatpush.bf16.msra.mxu0 %v4054
    %4848 = vmatpush.bf16.msra.mxu0 %v4052
    %4849 = vmatpush.bf16.msra.mxu0 %v4050
    %4850 = vmatpush.bf16.msra.mxu0 %v4048
    %4851 = vmatpush.bf16.msra.mxu0 %v4046
    %4852 = vmatmul.bf16.gmra.mxu0 %v4842
    %v4853 = vpop.f32.mrf.mxu0
    %v4854 = vadd.f32 %v3946, %v4853
    %v4855 = vpop.f32.mrf.mxu0
    %4856 = vdwg.mxu0
    %4857 = vmatpush.bf16.msra.mxu0 %v4076
    %4858 = vmatpush.bf16.msra.mxu0 %v4074
    %4859 = vmatpush.bf16.msra.mxu0 %v4072
    %4860 = vmatpush.bf16.msra.mxu0 %v4070
    %4861 = vmatpush.bf16.msra.mxu0 %v4068
    %4862 = vmatpush.bf16.msra.mxu0 %v4066
    %4863 = vmatpush.bf16.msra.mxu0 %v4064
    %4864 = vmatpush.bf16.msra.mxu0 %v4062
    %4865 = vmatmul.bf16.gmra.mxu0 %v4843
    %v4866 = vpop.f32.mrf.mxu0
    %v4867 = vadd.f32 %v4854, %v4866
    %v4868 = vpop.f32.mrf.mxu0
    %4869 = vdwg.mxu0
    %4870 = vmatpush.bf16.msra.mxu0 %v4061
    %4871 = vmatpush.bf16.msra.mxu0 %v4059
    %4872 = vmatpush.bf16.msra.mxu0 %v4057
    %4873 = vmatpush.bf16.msra.mxu0 %v4055
    %4874 = vmatpush.bf16.msra.mxu0 %v4053
    %4875 = vmatpush.bf16.msra.mxu0 %v4051
    %4876 = vmatpush.bf16.msra.mxu0 %v4049
    %4877 = vmatpush.bf16.msra.mxu0 %v4047
    %4878 = vmatmul.bf16.gmra.mxu0 %v4842
    %v4879 = vpop.f32.mrf.mxu0
    %v4880 = vadd.f32 %v3947, %v4879
    %v4881 = vpop.f32.mrf.mxu0
    %4882 = vdwg.mxu0
    %4883 = vmatpush.bf16.msra.mxu0 %v4077
    %4884 = vmatpush.bf16.msra.mxu0 %v4075
    %4885 = vmatpush.bf16.msra.mxu0 %v4073
    %4886 = vmatpush.bf16.msra.mxu0 %v4071
    %4887 = vmatpush.bf16.msra.mxu0 %v4069
    %4888 = vmatpush.bf16.msra.mxu0 %v4067
    %4889 = vmatpush.bf16.msra.mxu0 %v4065
    %4890 = vmatpush.bf16.msra.mxu0 %v4063
    %4891 = vmatmul.bf16.gmra.mxu0 %v4843
    %v4892 = vpop.f32.mrf.mxu0
    %v4893 = vadd.f32 %v4880, %v4892
    %v4894 = vpop.f32.mrf.mxu0
    %4895 = vdwg.mxu0
    %v4896 = vadd.f32 %v4867, %v4602
    %v4897 = vadd.f32 %v4893, %v4603
    %v4898 = vpack.c.bf16 %v4896, %v4896
    %v4899 = vpack.c.bf16 %v4897, %v4897
    %4900 = vmatpush.bf16.msra.mxu0 %v3803
    %4901 = vmatpush.bf16.msra.mxu0 %v3801
    %4902 = vmatpush.bf16.msra.mxu0 %v3799
    %4903 = vmatpush.bf16.msra.mxu0 %v3797
    %4904 = vmatpush.bf16.msra.mxu0 %v3795
    %4905 = vmatpush.bf16.msra.mxu0 %v3793
    %4906 = vmatpush.bf16.msra.mxu0 %v3791
    %4907 = vmatpush.bf16.msra.mxu0 %v3789
    %4908 = vmatmul.bf16.gmra.mxu0 %v4898
    %v4909 = vpop.f32.mrf.mxu0
    %v4910 = vadd.f32 %v2186, %v4909
    %v4911 = vpop.f32.mrf.mxu0
    %4912 = vdwg.mxu0
    %4913 = vmatpush.bf16.msra.mxu0 %v3819
    %4914 = vmatpush.bf16.msra.mxu0 %v3817
    %4915 = vmatpush.bf16.msra.mxu0 %v3815
    %4916 = vmatpush.bf16.msra.mxu0 %v3813
    %4917 = vmatpush.bf16.msra.mxu0 %v3811
    %4918 = vmatpush.bf16.msra.mxu0 %v3809
    %4919 = vmatpush.bf16.msra.mxu0 %v3807
    %4920 = vmatpush.bf16.msra.mxu0 %v3805
    %4921 = vmatmul.bf16.gmra.mxu0 %v4899
    %v4922 = vpop.f32.mrf.mxu0
    %v4923 = vadd.f32 %v4910, %v4922
    %v4924 = vpop.f32.mrf.mxu0
    %4925 = vdwg.mxu0
    %4926 = vmatpush.bf16.msra.mxu0 %v3804
    %4927 = vmatpush.bf16.msra.mxu0 %v3802
    %4928 = vmatpush.bf16.msra.mxu0 %v3800
    %4929 = vmatpush.bf16.msra.mxu0 %v3798
    %4930 = vmatpush.bf16.msra.mxu0 %v3796
    %4931 = vmatpush.bf16.msra.mxu0 %v3794
    %4932 = vmatpush.bf16.msra.mxu0 %v3792
    %4933 = vmatpush.bf16.msra.mxu0 %v3790
    %4934 = vmatmul.bf16.gmra.mxu0 %v4898
    %v4935 = vpop.f32.mrf.mxu0
    %v4936 = vadd.f32 %v2187, %v4935
    %v4937 = vpop.f32.mrf.mxu0
    %4938 = vdwg.mxu0
    %4939 = vmatpush.bf16.msra.mxu0 %v3820
    %4940 = vmatpush.bf16.msra.mxu0 %v3818
    %4941 = vmatpush.bf16.msra.mxu0 %v3816
    %4942 = vmatpush.bf16.msra.mxu0 %v3814
    %4943 = vmatpush.bf16.msra.mxu0 %v3812
    %4944 = vmatpush.bf16.msra.mxu0 %v3810
    %4945 = vmatpush.bf16.msra.mxu0 %v3808
    %4946 = vmatpush.bf16.msra.mxu0 %v3806
    %4947 = vmatmul.bf16.gmra.mxu0 %v4899
    %v4948 = vpop.f32.mrf.mxu0
    %v4949 = vadd.f32 %v4936, %v4948
    %v4950 = vpop.f32.mrf.mxu0
    %4951 = vdwg.mxu0
    %v4952 = vsub.f32 0.0, %v4923
    %v4953 = vsub.f32 0.0, %v4949
    %v4954 = vmul.f32 %v4952, 1.442695
    %v4955 = vpow.pop %v4954
    %v4956 = vmul.f32 %v4953, 1.442695
    %v4957 = vpow.pop %v4956
    %v4958 = vadd.f32 %v4955, 1.0
    %v4959 = vadd.f32 %v4957, 1.0
    %v4960 = vrcp.pop %v4958
    %v4961 = vmul.f32 %v4958, %v4960
    %v4962 = vsub.f32 1.0, %v4961
    %v4963 = vmul.f32 %v4960, %v4962
    %v4964 = vadd.f32 %v4960, %v4963
    %vm4965 = vweird.f32 %v4958
    %vm4966 = vweird.f32 %v4960
    %vm4967 = vmor %vm4965, %vm4966
    %v4968 = vsel %vm4967, %v4960, %v4964
    %v4969 = vand.u32 2147483647, %v4958
    %vm4970 = vcmp.eq.f32.partialorder %v4969, 8.507059e+37
    %v4971 = vand.u32 %v4958, 2147483648
    %v4972 = vor.u32 1.1754944e-38, %v4971
    %v4973 = vsel %vm4970, %v4972, %v4968
    %v4974 = vrcp.pop %v4959
    %v4975 = vmul.f32 %v4959, %v4974
    %v4976 = vsub.f32 1.0, %v4975
    %v4977 = vmul.f32 %v4974, %v4976
    %v4978 = vadd.f32 %v4974, %v4977
    %vm4979 = vweird.f32 %v4959
    %vm4980 = vweird.f32 %v4974
    %vm4981 = vmor %vm4979, %vm4980
    %v4982 = vsel %vm4981, %v4974, %v4978
    %v4983 = vand.u32 2147483647, %v4959
    %vm4984 = vcmp.eq.f32.partialorder %v4983, 8.507059e+37
    %v4985 = vand.u32 %v4959, 2147483648
    %v4986 = vor.u32 1.1754944e-38, %v4985
    %v4987 = vsel %vm4984, %v4986, %v4982
    %v4988 = vmul.f32 %v4923, %v4973
    %v4989 = vmul.f32 %v4949, %v4987
    %v4990 = vpack.c.bf16 %v4988, %v4988
    %v4991 = vpack.c.bf16 %v4989, %v4989
    %4992 = vmatpush.bf16.msra.mxu0 %v4060
    %4993 = vmatpush.bf16.msra.mxu0 %v4058
    %4994 = vmatpush.bf16.msra.mxu0 %v4056
    %4995 = vmatpush.bf16.msra.mxu0 %v4054
    %4996 = vmatpush.bf16.msra.mxu0 %v4052
    %4997 = vmatpush.bf16.msra.mxu0 %v4050
    %4998 = vmatpush.bf16.msra.mxu0 %v4048
    %4999 = vmatpush.bf16.msra.mxu0 %v4046
    %5000 = vmatmul.bf16.gmra.mxu0 %v4990
    %v5001 = vpop.f32.mrf.mxu0
    %v5002 = vadd.f32 %v3946, %v5001
    %v5003 = vpop.f32.mrf.mxu0
    %5004 = vdwg.mxu0
    %5005 = vmatpush.bf16.msra.mxu0 %v4076
    %5006 = vmatpush.bf16.msra.mxu0 %v4074
    %5007 = vmatpush.bf16.msra.mxu0 %v4072
    %5008 = vmatpush.bf16.msra.mxu0 %v4070
    %5009 = vmatpush.bf16.msra.mxu0 %v4068
    %5010 = vmatpush.bf16.msra.mxu0 %v4066
    %5011 = vmatpush.bf16.msra.mxu0 %v4064
    %5012 = vmatpush.bf16.msra.mxu0 %v4062
    %5013 = vmatmul.bf16.gmra.mxu0 %v4991
    %v5014 = vpop.f32.mrf.mxu0
    %v5015 = vadd.f32 %v5002, %v5014
    %v5016 = vpop.f32.mrf.mxu0
    %5017 = vdwg.mxu0
    %5018 = vmatpush.bf16.msra.mxu0 %v4061
    %5019 = vmatpush.bf16.msra.mxu0 %v4059
    %5020 = vmatpush.bf16.msra.mxu0 %v4057
    %5021 = vmatpush.bf16.msra.mxu0 %v4055
    %5022 = vmatpush.bf16.msra.mxu0 %v4053
    %5023 = vmatpush.bf16.msra.mxu0 %v4051
    %5024 = vmatpush.bf16.msra.mxu0 %v4049
    %5025 = vmatpush.bf16.msra.mxu0 %v4047
    %5026 = vmatmul.bf16.gmra.mxu0 %v4990
    %v5027 = vpop.f32.mrf.mxu0
    %v5028 = vadd.f32 %v3947, %v5027
    %v5029 = vpop.f32.mrf.mxu0
    %5030 = vdwg.mxu0
    %5031 = vmatpush.bf16.msra.mxu0 %v4077
    %5032 = vmatpush.bf16.msra.mxu0 %v4075
    %5033 = vmatpush.bf16.msra.mxu0 %v4073
    %5034 = vmatpush.bf16.msra.mxu0 %v4071
    %5035 = vmatpush.bf16.msra.mxu0 %v4069
    %5036 = vmatpush.bf16.msra.mxu0 %v4067
    %5037 = vmatpush.bf16.msra.mxu0 %v4065
    %5038 = vmatpush.bf16.msra.mxu0 %v4063
    %5039 = vmatmul.bf16.gmra.mxu0 %v4991
    %v5040 = vpop.f32.mrf.mxu0
    %v5041 = vadd.f32 %v5028, %v5040
    %v5042 = vpop.f32.mrf.mxu0
    %5043 = vdwg.mxu0
    %v5044 = vpack.c.bf16 %v5015, %v5015
    %v5045 = vpack.c.bf16 %v5041, %v5041
    %5046 = vmatpush.bf16.msra.mxu0 %v3803
    %5047 = vmatpush.bf16.msra.mxu0 %v3801
    %5048 = vmatpush.bf16.msra.mxu0 %v3799
    %5049 = vmatpush.bf16.msra.mxu0 %v3797
    %5050 = vmatpush.bf16.msra.mxu0 %v3795
    %5051 = vmatpush.bf16.msra.mxu0 %v3793
    %5052 = vmatpush.bf16.msra.mxu0 %v3791
    %5053 = vmatpush.bf16.msra.mxu0 %v3789
    %5054 = vmatmul.bf16.gmra.mxu0 %v5044
    %v5055 = vpop.f32.mrf.mxu0
    %v5056 = vadd.f32 %v2186, %v5055
    %v5057 = vpop.f32.mrf.mxu0
    %5058 = vdwg.mxu0
    %5059 = vmatpush.bf16.msra.mxu0 %v3819
    %5060 = vmatpush.bf16.msra.mxu0 %v3817
    %5061 = vmatpush.bf16.msra.mxu0 %v3815
    %5062 = vmatpush.bf16.msra.mxu0 %v3813
    %5063 = vmatpush.bf16.msra.mxu0 %v3811
    %5064 = vmatpush.bf16.msra.mxu0 %v3809
    %5065 = vmatpush.bf16.msra.mxu0 %v3807
    %5066 = vmatpush.bf16.msra.mxu0 %v3805
    %5067 = vmatmul.bf16.gmra.mxu0 %v5045
    %v5068 = vpop.f32.mrf.mxu0
    %v5069 = vadd.f32 %v5056, %v5068
    %v5070 = vpop.f32.mrf.mxu0
    %5071 = vdwg.mxu0
    %5072 = vmatpush.bf16.msra.mxu0 %v3804
    %5073 = vmatpush.bf16.msra.mxu0 %v3802
    %5074 = vmatpush.bf16.msra.mxu0 %v3800
    %5075 = vmatpush.bf16.msra.mxu0 %v3798
    %5076 = vmatpush.bf16.msra.mxu0 %v3796
    %5077 = vmatpush.bf16.msra.mxu0 %v3794
    %5078 = vmatpush.bf16.msra.mxu0 %v3792
    %5079 = vmatpush.bf16.msra.mxu0 %v3790
    %5080 = vmatmul.bf16.gmra.mxu0 %v5044
    %v5081 = vpop.f32.mrf.mxu0
    %v5082 = vadd.f32 %v2187, %v5081
    %v5083 = vpop.f32.mrf.mxu0
    %5084 = vdwg.mxu0
    %5085 = vmatpush.bf16.msra.mxu0 %v3820
    %5086 = vmatpush.bf16.msra.mxu0 %v3818
    %5087 = vmatpush.bf16.msra.mxu0 %v3816
    %5088 = vmatpush.bf16.msra.mxu0 %v3814
    %5089 = vmatpush.bf16.msra.mxu0 %v3812
    %5090 = vmatpush.bf16.msra.mxu0 %v3810
    %5091 = vmatpush.bf16.msra.mxu0 %v3808
    %5092 = vmatpush.bf16.msra.mxu0 %v3806
    %5093 = vmatmul.bf16.gmra.mxu0 %v5045
    %v5094 = vpop.f32.mrf.mxu0
    %v5095 = vadd.f32 %v5082, %v5094
    %v5096 = vpop.f32.mrf.mxu0
    %5097 = vdwg.mxu0
    %v5098 = vsub.f32 0.0, %v5069
    %v5099 = vsub.f32 0.0, %v5095
    %v5100 = vmul.f32 %v5098, 1.442695
    %v5101 = vpow.pop %v5100
    %v5102 = vmul.f32 %v5099, 1.442695
    %v5103 = vpow.pop %v5102
    %v5104 = vadd.f32 %v5101, 1.0
    %v5105 = vadd.f32 %v5103, 1.0
    %v5106 = vrcp.pop %v5104
    %v5107 = vmul.f32 %v5104, %v5106
    %v5108 = vsub.f32 1.0, %v5107
    %v5109 = vmul.f32 %v5106, %v5108
    %v5110 = vadd.f32 %v5106, %v5109
    %vm5111 = vweird.f32 %v5104
    %vm5112 = vweird.f32 %v5106
    %vm5113 = vmor %vm5111, %vm5112
    %v5114 = vsel %vm5113, %v5106, %v5110
    %v5115 = vand.u32 2147483647, %v5104
    %vm5116 = vcmp.eq.f32.partialorder %v5115, 8.507059e+37
    %v5117 = vand.u32 %v5104, 2147483648
    %v5118 = vor.u32 1.1754944e-38, %v5117
    %v5119 = vsel %vm5116, %v5118, %v5114
    %v5120 = vrcp.pop %v5105
    %v5121 = vmul.f32 %v5105, %v5120
    %v5122 = vsub.f32 1.0, %v5121
    %v5123 = vmul.f32 %v5120, %v5122
    %v5124 = vadd.f32 %v5120, %v5123
    %vm5125 = vweird.f32 %v5105
    %vm5126 = vweird.f32 %v5120
    %vm5127 = vmor %vm5125, %vm5126
    %v5128 = vsel %vm5127, %v5120, %v5124
    %v5129 = vand.u32 2147483647, %v5105
    %vm5130 = vcmp.eq.f32.partialorder %v5129, 8.507059e+37
    %v5131 = vand.u32 %v5105, 2147483648
    %v5132 = vor.u32 1.1754944e-38, %v5131
    %v5133 = vsel %vm5130, %v5132, %v5128
    %v5134 = vmul.f32 %v5069, %v5119
    %v5135 = vmul.f32 %v5095, %v5133
    %v5136 = vpack.c.bf16 %v5134, %v5134
    %v5137 = vpack.c.bf16 %v5135, %v5135
    %5138 = vmatpush.bf16.msra.mxu0 %v4060
    %5139 = vmatpush.bf16.msra.mxu0 %v4058
    %5140 = vmatpush.bf16.msra.mxu0 %v4056
    %5141 = vmatpush.bf16.msra.mxu0 %v4054
    %5142 = vmatpush.bf16.msra.mxu0 %v4052
    %5143 = vmatpush.bf16.msra.mxu0 %v4050
    %5144 = vmatpush.bf16.msra.mxu0 %v4048
    %5145 = vmatpush.bf16.msra.mxu0 %v4046
    %5146 = vmatmul.bf16.gmra.mxu0 %v5136
    %v5147 = vpop.f32.mrf.mxu0
    %v5148 = vadd.f32 %v3946, %v5147
    %v5149 = vpop.f32.mrf.mxu0
    %5150 = vdwg.mxu0
    %5151 = vmatpush.bf16.msra.mxu0 %v4076
    %5152 = vmatpush.bf16.msra.mxu0 %v4074
    %5153 = vmatpush.bf16.msra.mxu0 %v4072
    %5154 = vmatpush.bf16.msra.mxu0 %v4070
    %5155 = vmatpush.bf16.msra.mxu0 %v4068
    %5156 = vmatpush.bf16.msra.mxu0 %v4066
    %5157 = vmatpush.bf16.msra.mxu0 %v4064
    %5158 = vmatpush.bf16.msra.mxu0 %v4062
    %5159 = vmatmul.bf16.gmra.mxu0 %v5137
    %v5160 = vpop.f32.mrf.mxu0
    %v5161 = vadd.f32 %v5148, %v5160
    %v5162 = vpop.f32.mrf.mxu0
    %5163 = vdwg.mxu0
    %5164 = vmatpush.bf16.msra.mxu0 %v4061
    %5165 = vmatpush.bf16.msra.mxu0 %v4059
    %5166 = vmatpush.bf16.msra.mxu0 %v4057
    %5167 = vmatpush.bf16.msra.mxu0 %v4055
    %5168 = vmatpush.bf16.msra.mxu0 %v4053
    %5169 = vmatpush.bf16.msra.mxu0 %v4051
    %5170 = vmatpush.bf16.msra.mxu0 %v4049
    %5171 = vmatpush.bf16.msra.mxu0 %v4047
    %5172 = vmatmul.bf16.gmra.mxu0 %v5136
    %v5173 = vpop.f32.mrf.mxu0
    %v5174 = vadd.f32 %v3947, %v5173
    %v5175 = vpop.f32.mrf.mxu0
    %5176 = vdwg.mxu0
    %5177 = vmatpush.bf16.msra.mxu0 %v4077
    %5178 = vmatpush.bf16.msra.mxu0 %v4075
    %5179 = vmatpush.bf16.msra.mxu0 %v4073
    %5180 = vmatpush.bf16.msra.mxu0 %v4071
    %5181 = vmatpush.bf16.msra.mxu0 %v4069
    %5182 = vmatpush.bf16.msra.mxu0 %v4067
    %5183 = vmatpush.bf16.msra.mxu0 %v4065
    %5184 = vmatpush.bf16.msra.mxu0 %v4063
    %5185 = vmatmul.bf16.gmra.mxu0 %v5137
    %v5186 = vpop.f32.mrf.mxu0
    %v5187 = vadd.f32 %v5174, %v5186
    %v5188 = vpop.f32.mrf.mxu0
    %5189 = vdwg.mxu0
    %v5190 = vadd.f32 %v5161, %v4896
    %v5191 = vadd.f32 %v5187, %v4897
    %s5192 = scalar_lea.vmem [#allocation2], 1792
    %v5193 = vld [vmem:[%s5192] sm:$0xff]
    %v5194 = vld [vmem:[%s5192 + $0x8] sm:$0xff]
    %v5195 = vld [vmem:[%s5192 + $0x10] sm:$0xff]
    %v5196 = vld [vmem:[%s5192 + $0x18] sm:$0xff]
    %v5197 = vld [vmem:[%s5192 + $0x20] sm:$0xff]
    %v5198 = vld [vmem:[%s5192 + $0x28] sm:$0xff]
    %v5199 = vld [vmem:[%s5192 + $0x30] sm:$0xff]
    %v5200 = vld [vmem:[%s5192 + $0x38] sm:$0xff]
    %v5201 = vld [vmem:[%s5192 + $0x40] sm:$0xff]
    %v5202 = vld [vmem:[%s5192 + $0x48] sm:$0xff]
    %v5203 = vld [vmem:[%s5192 + $0x50] sm:$0xff]
    %v5204 = vld [vmem:[%s5192 + $0x58] sm:$0xff]
    %v5205 = vld [vmem:[%s5192 + $0x60] sm:$0xff]
    %v5206 = vld [vmem:[%s5192 + $0x68] sm:$0xff]
    %v5207 = vld [vmem:[%s5192 + $0x70] sm:$0xff]
    %v5208 = vld [vmem:[%s5192 + $0x78] sm:$0xff]
    %v5209 = vld [vmem:[%s5192 + $0x80] sm:$0xff]
    %v5210 = vld [vmem:[%s5192 + $0x88] sm:$0xff]
    %v5211 = vld [vmem:[%s5192 + $0x90] sm:$0xff]
    %v5212 = vld [vmem:[%s5192 + $0x98] sm:$0xff]
    %v5213 = vld [vmem:[%s5192 + $0xa0] sm:$0xff]
    %v5214 = vld [vmem:[%s5192 + $0xa8] sm:$0xff]
    %v5215 = vld [vmem:[%s5192 + $0xb0] sm:$0xff]
    %v5216 = vld [vmem:[%s5192 + $0xb8] sm:$0xff]
    %v5217 = vld [vmem:[%s5192 + $0xc0] sm:$0xff]
    %v5218 = vld [vmem:[%s5192 + $0xc8] sm:$0xff]
    %v5219 = vld [vmem:[%s5192 + $0xd0] sm:$0xff]
    %v5220 = vld [vmem:[%s5192 + $0xd8] sm:$0xff]
    %v5221 = vld [vmem:[%s5192 + $0xe0] sm:$0xff]
    %v5222 = vld [vmem:[%s5192 + $0xe8] sm:$0xff]
    %v5223 = vld [vmem:[%s5192 + $0xf0] sm:$0xff]
    %v5224 = vld [vmem:[%s5192 + $0xf8] sm:$0xff]
    %v5225 = vpack.c.bf16 %v5190, %v5190
    %v5226 = vpack.c.bf16 %v5191, %v5191
    %v5259 = vunpack.c.l.b16 %v5193
    %v5260 = vunpack.c.h.b16 %v5193
    %v5261 = vunpack.c.l.b16 %v5194
    %v5262 = vunpack.c.h.b16 %v5194
    %v5263 = vunpack.c.l.b16 %v5195
    %v5264 = vunpack.c.h.b16 %v5195
    %v5265 = vunpack.c.l.b16 %v5196
    %v5266 = vunpack.c.h.b16 %v5196
    %v5267 = vunpack.c.l.b16 %v5197
    %v5268 = vunpack.c.h.b16 %v5197
    %v5269 = vunpack.c.l.b16 %v5198
    %v5270 = vunpack.c.h.b16 %v5198
    %v5271 = vunpack.c.l.b16 %v5199
    %v5272 = vunpack.c.h.b16 %v5199
    %v5273 = vunpack.c.l.b16 %v5200
    %v5274 = vunpack.c.h.b16 %v5200
    %v5275 = vunpack.c.l.b16 %v5201
    %v5276 = vunpack.c.h.b16 %v5201
    %v5277 = vunpack.c.l.b16 %v5202
    %v5278 = vunpack.c.h.b16 %v5202
    %v5279 = vunpack.c.l.b16 %v5203
    %v5280 = vunpack.c.h.b16 %v5203
    %v5281 = vunpack.c.l.b16 %v5204
    %v5282 = vunpack.c.h.b16 %v5204
    %v5283 = vunpack.c.l.b16 %v5205
    %v5284 = vunpack.c.h.b16 %v5205
    %v5285 = vunpack.c.l.b16 %v5206
    %v5286 = vunpack.c.h.b16 %v5206
    %v5287 = vunpack.c.l.b16 %v5207
    %v5288 = vunpack.c.h.b16 %v5207
    %v5289 = vunpack.c.l.b16 %v5208
    %v5290 = vunpack.c.h.b16 %v5208
    %v5291 = vunpack.c.l.b16 %v5209
    %v5292 = vunpack.c.h.b16 %v5209
    %v5293 = vunpack.c.l.b16 %v5210
    %v5294 = vunpack.c.h.b16 %v5210
    %v5295 = vunpack.c.l.b16 %v5211
    %v5296 = vunpack.c.h.b16 %v5211
    %v5297 = vunpack.c.l.b16 %v5212
    %v5298 = vunpack.c.h.b16 %v5212
    %v5299 = vunpack.c.l.b16 %v5213
    %v5300 = vunpack.c.h.b16 %v5213
    %v5301 = vunpack.c.l.b16 %v5214
    %v5302 = vunpack.c.h.b16 %v5214
    %v5303 = vunpack.c.l.b16 %v5215
    %v5304 = vunpack.c.h.b16 %v5215
    %v5305 = vunpack.c.l.b16 %v5216
    %v5306 = vunpack.c.h.b16 %v5216
    %v5307 = vunpack.c.l.b16 %v5217
    %v5308 = vunpack.c.h.b16 %v5217
    %v5309 = vunpack.c.l.b16 %v5218
    %v5310 = vunpack.c.h.b16 %v5218
    %v5311 = vunpack.c.l.b16 %v5219
    %v5312 = vunpack.c.h.b16 %v5219
    %v5313 = vunpack.c.l.b16 %v5220
    %v5314 = vunpack.c.h.b16 %v5220
    %v5315 = vunpack.c.l.b16 %v5221
    %v5316 = vunpack.c.h.b16 %v5221
    %v5317 = vunpack.c.l.b16 %v5222
    %v5318 = vunpack.c.h.b16 %v5222
    %v5319 = vunpack.c.l.b16 %v5223
    %v5320 = vunpack.c.h.b16 %v5223
    %v5321 = vunpack.c.l.b16 %v5224
    %v5322 = vunpack.c.h.b16 %v5224
    %v5323 = vpack.c.b16 %v5261, %v5259
    %v5324 = vpack.c.b16 %v5262, %v5260
    %v5325 = vpack.c.b16 %v5265, %v5263
    %v5326 = vpack.c.b16 %v5266, %v5264
    %v5327 = vpack.c.b16 %v5269, %v5267
    %v5328 = vpack.c.b16 %v5270, %v5268
    %v5329 = vpack.c.b16 %v5273, %v5271
    %v5330 = vpack.c.b16 %v5274, %v5272
    %v5331 = vpack.c.b16 %v5277, %v5275
    %v5332 = vpack.c.b16 %v5278, %v5276
    %v5333 = vpack.c.b16 %v5281, %v5279
    %v5334 = vpack.c.b16 %v5282, %v5280
    %v5335 = vpack.c.b16 %v5285, %v5283
    %v5336 = vpack.c.b16 %v5286, %v5284
    %v5337 = vpack.c.b16 %v5289, %v5287
    %v5338 = vpack.c.b16 %v5290, %v5288
    %v5339 = vpack.c.b16 %v5293, %v5291
    %v5340 = vpack.c.b16 %v5294, %v5292
    %v5341 = vpack.c.b16 %v5297, %v5295
    %v5342 = vpack.c.b16 %v5298, %v5296
    %v5343 = vpack.c.b16 %v5301, %v5299
    %v5344 = vpack.c.b16 %v5302, %v5300
    %v5345 = vpack.c.b16 %v5305, %v5303
    %v5346 = vpack.c.b16 %v5306, %v5304
    %v5347 = vpack.c.b16 %v5309, %v5307
    %v5348 = vpack.c.b16 %v5310, %v5308
    %v5349 = vpack.c.b16 %v5313, %v5311
    %v5350 = vpack.c.b16 %v5314, %v5312
    %v5351 = vpack.c.b16 %v5317, %v5315
    %v5352 = vpack.c.b16 %v5318, %v5316
    %v5353 = vpack.c.b16 %v5321, %v5319
    %v5354 = vpack.c.b16 %v5322, %v5320
    %5387 = vmatpush.bf16.msra.mxu0 %v5337
    %5388 = vmatpush.bf16.msra.mxu0 %v5335
    %5389 = vmatpush.bf16.msra.mxu0 %v5333
    %5390 = vmatpush.bf16.msra.mxu0 %v5331
    %5391 = vmatpush.bf16.msra.mxu0 %v5329
    %5392 = vmatpush.bf16.msra.mxu0 %v5327
    %5393 = vmatpush.bf16.msra.mxu0 %v5325
    %5394 = vmatpush.bf16.msra.mxu0 %v5323
    %5395 = vmatmul.bf16.gmra.mxu0 %v5225
    %v5396 = vpop.f32.mrf.mxu0
    %v5397 = vadd.f32 %v2204, %v5396
    %v5398 = vpop.f32.mrf.mxu0
    %5399 = vdwg.mxu0
    %5400 = vmatpush.bf16.msra.mxu0 %v5353
    %5401 = vmatpush.bf16.msra.mxu0 %v5351
    %5402 = vmatpush.bf16.msra.mxu0 %v5349
    %5403 = vmatpush.bf16.msra.mxu0 %v5347
    %5404 = vmatpush.bf16.msra.mxu0 %v5345
    %5405 = vmatpush.bf16.msra.mxu0 %v5343
    %5406 = vmatpush.bf16.msra.mxu0 %v5341
    %5407 = vmatpush.bf16.msra.mxu0 %v5339
    %5408 = vmatmul.bf16.gmra.mxu0 %v5226
    %v5409 = vpop.f32.mrf.mxu0
    %v5410 = vadd.f32 %v5397, %v5409
    %v5411 = vpop.f32.mrf.mxu0
    %5412 = vdwg.mxu0
    %5413 = vmatpush.bf16.msra.mxu0 %v5338
    %5414 = vmatpush.bf16.msra.mxu0 %v5336
    %5415 = vmatpush.bf16.msra.mxu0 %v5334
    %5416 = vmatpush.bf16.msra.mxu0 %v5332
    %5417 = vmatpush.bf16.msra.mxu0 %v5330
    %5418 = vmatpush.bf16.msra.mxu0 %v5328
    %5419 = vmatpush.bf16.msra.mxu0 %v5326
    %5420 = vmatpush.bf16.msra.mxu0 %v5324
    %5421 = vmatmul.bf16.gmra.mxu0 %v5225
    %v5422 = vpop.f32.mrf.mxu0
    %v5423 = vadd.f32 %v2205, %v5422
    %v5424 = vpop.f32.mrf.mxu0
    %5425 = vdwg.mxu0
    %5426 = vmatpush.bf16.msra.mxu0 %v5354
    %5427 = vmatpush.bf16.msra.mxu0 %v5352
    %5428 = vmatpush.bf16.msra.mxu0 %v5350
    %5429 = vmatpush.bf16.msra.mxu0 %v5348
    %5430 = vmatpush.bf16.msra.mxu0 %v5346
    %5431 = vmatpush.bf16.msra.mxu0 %v5344
    %5432 = vmatpush.bf16.msra.mxu0 %v5342
    %5433 = vmatpush.bf16.msra.mxu0 %v5340
    %5434 = vmatmul.bf16.gmra.mxu0 %v5226
    %v5435 = vpop.f32.mrf.mxu0
    %v5436 = vadd.f32 %v5423, %v5435
    %v5437 = vpop.f32.mrf.mxu0
    %5438 = vdwg.mxu0
    %v5439 = vsub.f32 0.0, %v5410
    %v5440 = vsub.f32 0.0, %v5436
    %v5441 = vmul.f32 %v5439, 1.442695
    %v5442 = vpow.pop %v5441
    %v5443 = vmul.f32 %v5440, 1.442695
    %v5444 = vpow.pop %v5443
    %v5445 = vadd.f32 %v5442, 1.0
    %v5446 = vadd.f32 %v5444, 1.0
    %v5447 = vrcp.pop %v5445
    %v5448 = vmul.f32 %v5445, %v5447
    %v5449 = vsub.f32 1.0, %v5448
    %v5450 = vmul.f32 %v5447, %v5449
    %v5451 = vadd.f32 %v5447, %v5450
    %vm5452 = vweird.f32 %v5445
    %vm5453 = vweird.f32 %v5447
    %vm5454 = vmor %vm5452, %vm5453
    %v5455 = vsel %vm5454, %v5447, %v5451
    %v5456 = vand.u32 2147483647, %v5445
    %vm5457 = vcmp.eq.f32.partialorder %v5456, 8.507059e+37
    %v5458 = vand.u32 %v5445, 2147483648
    %v5459 = vor.u32 1.1754944e-38, %v5458
    %v5460 = vsel %vm5457, %v5459, %v5455
    %v5461 = vrcp.pop %v5446
    %v5462 = vmul.f32 %v5446, %v5461
    %v5463 = vsub.f32 1.0, %v5462
    %v5464 = vmul.f32 %v5461, %v5463
    %v5465 = vadd.f32 %v5461, %v5464
    %vm5466 = vweird.f32 %v5446
    %vm5467 = vweird.f32 %v5461
    %vm5468 = vmor %vm5466, %vm5467
    %v5469 = vsel %vm5468, %v5461, %v5465
    %v5470 = vand.u32 2147483647, %v5446
    %vm5471 = vcmp.eq.f32.partialorder %v5470, 8.507059e+37
    %v5472 = vand.u32 %v5446, 2147483648
    %v5473 = vor.u32 1.1754944e-38, %v5472
    %v5474 = vsel %vm5471, %v5473, %v5469
    %v5475 = vmul.f32 %v5410, %v5460
    %v5476 = vmul.f32 %v5436, %v5474
    %s5477 = scalar_lea.vmem [#allocation2], 2048
    %v5478 = vld [vmem:[%s5477] sm:$0xff]
    %v5479 = vld [vmem:[%s5477 + $0x8] sm:$0xff]
    %v5480 = vld [vmem:[%s5477 + $0x10] sm:$0xff]
    %v5481 = vld [vmem:[%s5477 + $0x18] sm:$0xff]
    %v5482 = vld [vmem:[%s5477 + $0x20] sm:$0xff]
    %v5483 = vld [vmem:[%s5477 + $0x28] sm:$0xff]
    %v5484 = vld [vmem:[%s5477 + $0x30] sm:$0xff]
    %v5485 = vld [vmem:[%s5477 + $0x38] sm:$0xff]
    %v5486 = vld [vmem:[%s5477 + $0x40] sm:$0xff]
    %v5487 = vld [vmem:[%s5477 + $0x48] sm:$0xff]
    %v5488 = vld [vmem:[%s5477 + $0x50] sm:$0xff]
    %v5489 = vld [vmem:[%s5477 + $0x58] sm:$0xff]
    %v5490 = vld [vmem:[%s5477 + $0x60] sm:$0xff]
    %v5491 = vld [vmem:[%s5477 + $0x68] sm:$0xff]
    %v5492 = vld [vmem:[%s5477 + $0x70] sm:$0xff]
    %v5493 = vld [vmem:[%s5477 + $0x78] sm:$0xff]
    %v5494 = vld [vmem:[%s5477 + $0x80] sm:$0xff]
    %v5495 = vld [vmem:[%s5477 + $0x88] sm:$0xff]
    %v5496 = vld [vmem:[%s5477 + $0x90] sm:$0xff]
    %v5497 = vld [vmem:[%s5477 + $0x98] sm:$0xff]
    %v5498 = vld [vmem:[%s5477 + $0xa0] sm:$0xff]
    %v5499 = vld [vmem:[%s5477 + $0xa8] sm:$0xff]
    %v5500 = vld [vmem:[%s5477 + $0xb0] sm:$0xff]
    %v5501 = vld [vmem:[%s5477 + $0xb8] sm:$0xff]
    %v5502 = vld [vmem:[%s5477 + $0xc0] sm:$0xff]
    %v5503 = vld [vmem:[%s5477 + $0xc8] sm:$0xff]
    %v5504 = vld [vmem:[%s5477 + $0xd0] sm:$0xff]
    %v5505 = vld [vmem:[%s5477 + $0xd8] sm:$0xff]
    %v5506 = vld [vmem:[%s5477 + $0xe0] sm:$0xff]
    %v5507 = vld [vmem:[%s5477 + $0xe8] sm:$0xff]
    %v5508 = vld [vmem:[%s5477 + $0xf0] sm:$0xff]
    %v5509 = vld [vmem:[%s5477 + $0xf8] sm:$0xff]
    %v5510 = vpack.c.bf16 %v5475, %v5475
    %v5511 = vpack.c.bf16 %v5476, %v5476
    %s5512 = scalar_lea.vmem [#allocation12], 33
    %v5513 = vld [vmem:[%s5512] ss:$8 sm:$0x3]
    %v5515 = vperm.slane %v5513, 0
    %v5516 = vperm.slane %v5513, 1
    %v5551 = vunpack.c.l.b16 %v5478
    %v5552 = vunpack.c.h.b16 %v5478
    %v5553 = vunpack.c.l.b16 %v5479
    %v5554 = vunpack.c.h.b16 %v5479
    %v5555 = vunpack.c.l.b16 %v5480
    %v5556 = vunpack.c.h.b16 %v5480
    %v5557 = vunpack.c.l.b16 %v5481
    %v5558 = vunpack.c.h.b16 %v5481
    %v5559 = vunpack.c.l.b16 %v5482
    %v5560 = vunpack.c.h.b16 %v5482
    %v5561 = vunpack.c.l.b16 %v5483
    %v5562 = vunpack.c.h.b16 %v5483
    %v5563 = vunpack.c.l.b16 %v5484
    %v5564 = vunpack.c.h.b16 %v5484
    %v5565 = vunpack.c.l.b16 %v5485
    %v5566 = vunpack.c.h.b16 %v5485
    %v5567 = vunpack.c.l.b16 %v5486
    %v5568 = vunpack.c.h.b16 %v5486
    %v5569 = vunpack.c.l.b16 %v5487
    %v5570 = vunpack.c.h.b16 %v5487
    %v5571 = vunpack.c.l.b16 %v5488
    %v5572 = vunpack.c.h.b16 %v5488
    %v5573 = vunpack.c.l.b16 %v5489
    %v5574 = vunpack.c.h.b16 %v5489
    %v5575 = vunpack.c.l.b16 %v5490
    %v5576 = vunpack.c.h.b16 %v5490
    %v5577 = vunpack.c.l.b16 %v5491
    %v5578 = vunpack.c.h.b16 %v5491
    %v5579 = vunpack.c.l.b16 %v5492
    %v5580 = vunpack.c.h.b16 %v5492
    %v5581 = vunpack.c.l.b16 %v5493
    %v5582 = vunpack.c.h.b16 %v5493
    %v5583 = vunpack.c.l.b16 %v5494
    %v5584 = vunpack.c.h.b16 %v5494
    %v5585 = vunpack.c.l.b16 %v5495
    %v5586 = vunpack.c.h.b16 %v5495
    %v5587 = vunpack.c.l.b16 %v5496
    %v5588 = vunpack.c.h.b16 %v5496
    %v5589 = vunpack.c.l.b16 %v5497
    %v5590 = vunpack.c.h.b16 %v5497
    %v5591 = vunpack.c.l.b16 %v5498
    %v5592 = vunpack.c.h.b16 %v5498
    %v5593 = vunpack.c.l.b16 %v5499
    %v5594 = vunpack.c.h.b16 %v5499
    %v5595 = vunpack.c.l.b16 %v5500
    %v5596 = vunpack.c.h.b16 %v5500
    %v5597 = vunpack.c.l.b16 %v5501
    %v5598 = vunpack.c.h.b16 %v5501
    %v5599 = vunpack.c.l.b16 %v5502
    %v5600 = vunpack.c.h.b16 %v5502
    %v5601 = vunpack.c.l.b16 %v5503
    %v5602 = vunpack.c.h.b16 %v5503
    %v5603 = vunpack.c.l.b16 %v5504
    %v5604 = vunpack.c.h.b16 %v5504
    %v5605 = vunpack.c.l.b16 %v5505
    %v5606 = vunpack.c.h.b16 %v5505
    %v5607 = vunpack.c.l.b16 %v5506
    %v5608 = vunpack.c.h.b16 %v5506
    %v5609 = vunpack.c.l.b16 %v5507
    %v5610 = vunpack.c.h.b16 %v5507
    %v5611 = vunpack.c.l.b16 %v5508
    %v5612 = vunpack.c.h.b16 %v5508
    %v5613 = vunpack.c.l.b16 %v5509
    %v5614 = vunpack.c.h.b16 %v5509
    %v5615 = vpack.c.b16 %v5553, %v5551
    %v5616 = vpack.c.b16 %v5554, %v5552
    %v5617 = vpack.c.b16 %v5557, %v5555
    %v5618 = vpack.c.b16 %v5558, %v5556
    %v5619 = vpack.c.b16 %v5561, %v5559
    %v5620 = vpack.c.b16 %v5562, %v5560
    %v5621 = vpack.c.b16 %v5565, %v5563
    %v5622 = vpack.c.b16 %v5566, %v5564
    %v5623 = vpack.c.b16 %v5569, %v5567
    %v5624 = vpack.c.b16 %v5570, %v5568
    %v5625 = vpack.c.b16 %v5573, %v5571
    %v5626 = vpack.c.b16 %v5574, %v5572
    %v5627 = vpack.c.b16 %v5577, %v5575
    %v5628 = vpack.c.b16 %v5578, %v5576
    %v5629 = vpack.c.b16 %v5581, %v5579
    %v5630 = vpack.c.b16 %v5582, %v5580
    %v5631 = vpack.c.b16 %v5585, %v5583
    %v5632 = vpack.c.b16 %v5586, %v5584
    %v5633 = vpack.c.b16 %v5589, %v5587
    %v5634 = vpack.c.b16 %v5590, %v5588
    %v5635 = vpack.c.b16 %v5593, %v5591
    %v5636 = vpack.c.b16 %v5594, %v5592
    %v5637 = vpack.c.b16 %v5597, %v5595
    %v5638 = vpack.c.b16 %v5598, %v5596
    %v5639 = vpack.c.b16 %v5601, %v5599
    %v5640 = vpack.c.b16 %v5602, %v5600
    %v5641 = vpack.c.b16 %v5605, %v5603
    %v5642 = vpack.c.b16 %v5606, %v5604
    %v5643 = vpack.c.b16 %v5609, %v5607
    %v5644 = vpack.c.b16 %v5610, %v5608
    %v5645 = vpack.c.b16 %v5613, %v5611
    %v5646 = vpack.c.b16 %v5614, %v5612
    %5679 = vmatpush.bf16.msra.mxu0 %v5629
    %5680 = vmatpush.bf16.msra.mxu0 %v5627
    %5681 = vmatpush.bf16.msra.mxu0 %v5625
    %5682 = vmatpush.bf16.msra.mxu0 %v5623
    %5683 = vmatpush.bf16.msra.mxu0 %v5621
    %5684 = vmatpush.bf16.msra.mxu0 %v5619
    %5685 = vmatpush.bf16.msra.mxu0 %v5617
    %5686 = vmatpush.bf16.msra.mxu0 %v5615
    %5687 = vmatmul.bf16.gmra.mxu0 %v5510
    %v5688 = vpop.f32.mrf.mxu0
    %v5689 = vadd.f32 %v5515, %v5688
    %v5690 = vpop.f32.mrf.mxu0
    %5691 = vdwg.mxu0
    %5692 = vmatpush.bf16.msra.mxu0 %v5645
    %5693 = vmatpush.bf16.msra.mxu0 %v5643
    %5694 = vmatpush.bf16.msra.mxu0 %v5641
    %5695 = vmatpush.bf16.msra.mxu0 %v5639
    %5696 = vmatpush.bf16.msra.mxu0 %v5637
    %5697 = vmatpush.bf16.msra.mxu0 %v5635
    %5698 = vmatpush.bf16.msra.mxu0 %v5633
    %5699 = vmatpush.bf16.msra.mxu0 %v5631
    %5700 = vmatmul.bf16.gmra.mxu0 %v5511
    %v5701 = vpop.f32.mrf.mxu0
    %v5702 = vadd.f32 %v5689, %v5701
    %v5703 = vpop.f32.mrf.mxu0
    %5704 = vdwg.mxu0
    %5705 = vmatpush.bf16.msra.mxu0 %v5630
    %5706 = vmatpush.bf16.msra.mxu0 %v5628
    %5707 = vmatpush.bf16.msra.mxu0 %v5626
    %5708 = vmatpush.bf16.msra.mxu0 %v5624
    %5709 = vmatpush.bf16.msra.mxu0 %v5622
    %5710 = vmatpush.bf16.msra.mxu0 %v5620
    %5711 = vmatpush.bf16.msra.mxu0 %v5618
    %5712 = vmatpush.bf16.msra.mxu0 %v5616
    %5713 = vmatmul.bf16.gmra.mxu0 %v5510
    %v5714 = vpop.f32.mrf.mxu0
    %v5715 = vadd.f32 %v5516, %v5714
    %v5716 = vpop.f32.mrf.mxu0
    %5717 = vdwg.mxu0
    %5718 = vmatpush.bf16.msra.mxu0 %v5646
    %5719 = vmatpush.bf16.msra.mxu0 %v5644
    %5720 = vmatpush.bf16.msra.mxu0 %v5642
    %5721 = vmatpush.bf16.msra.mxu0 %v5640
    %5722 = vmatpush.bf16.msra.mxu0 %v5638
    %5723 = vmatpush.bf16.msra.mxu0 %v5636
    %5724 = vmatpush.bf16.msra.mxu0 %v5634
    %5725 = vmatpush.bf16.msra.mxu0 %v5632
    %5726 = vmatmul.bf16.gmra.mxu0 %v5511
    %v5727 = vpop.f32.mrf.mxu0
    %v5728 = vadd.f32 %v5715, %v5727
    %v5729 = vpop.f32.mrf.mxu0
    %5730 = vdwg.mxu0
    %v5731 = vsub.f32 0.0, %v5702
    %v5732 = vsub.f32 0.0, %v5728
    %v5733 = vmul.f32 %v5731, 1.442695
    %v5734 = vpow.pop %v5733
    %v5735 = vmul.f32 %v5732, 1.442695
    %v5736 = vpow.pop %v5735
    %v5737 = vadd.f32 %v5734, 1.0
    %v5738 = vadd.f32 %v5736, 1.0
    %v5739 = vrcp.pop %v5737
    %v5740 = vmul.f32 %v5737, %v5739
    %v5741 = vsub.f32 1.0, %v5740
    %v5742 = vmul.f32 %v5739, %v5741
    %v5743 = vadd.f32 %v5739, %v5742
    %vm5744 = vweird.f32 %v5737
    %vm5745 = vweird.f32 %v5739
    %vm5746 = vmor %vm5744, %vm5745
    %v5747 = vsel %vm5746, %v5739, %v5743
    %v5748 = vand.u32 2147483647, %v5737
    %vm5749 = vcmp.eq.f32.partialorder %v5748, 8.507059e+37
    %v5750 = vand.u32 %v5737, 2147483648
    %v5751 = vor.u32 1.1754944e-38, %v5750
    %v5752 = vsel %vm5749, %v5751, %v5747
    %v5753 = vrcp.pop %v5738
    %v5754 = vmul.f32 %v5738, %v5753
    %v5755 = vsub.f32 1.0, %v5754
    %v5756 = vmul.f32 %v5753, %v5755
    %v5757 = vadd.f32 %v5753, %v5756
    %vm5758 = vweird.f32 %v5738
    %vm5759 = vweird.f32 %v5753
    %vm5760 = vmor %vm5758, %vm5759
    %v5761 = vsel %vm5760, %v5753, %v5757
    %v5762 = vand.u32 2147483647, %v5738
    %vm5763 = vcmp.eq.f32.partialorder %v5762, 8.507059e+37
    %v5764 = vand.u32 %v5738, 2147483648
    %v5765 = vor.u32 1.1754944e-38, %v5764
    %v5766 = vsel %vm5763, %v5765, %v5761
    %v5767 = vmul.f32 %v5702, %v5752
    %v5768 = vmul.f32 %v5728, %v5766
    %s5769 = scalar_lea.vmem [#allocation2], 2304
    %v5770 = vld [vmem:[%s5769] sm:$0xff]
    %v5771 = vld [vmem:[%s5769 + $0x8] sm:$0xff]
    %v5772 = vld [vmem:[%s5769 + $0x10] sm:$0xff]
    %v5773 = vld [vmem:[%s5769 + $0x18] sm:$0xff]
    %v5774 = vld [vmem:[%s5769 + $0x20] sm:$0xff]
    %v5775 = vld [vmem:[%s5769 + $0x28] sm:$0xff]
    %v5776 = vld [vmem:[%s5769 + $0x30] sm:$0xff]
    %v5777 = vld [vmem:[%s5769 + $0x38] sm:$0xff]
    %v5778 = vld [vmem:[%s5769 + $0x40] sm:$0xff]
    %v5779 = vld [vmem:[%s5769 + $0x48] sm:$0xff]
    %v5780 = vld [vmem:[%s5769 + $0x50] sm:$0xff]
    %v5781 = vld [vmem:[%s5769 + $0x58] sm:$0xff]
    %v5782 = vld [vmem:[%s5769 + $0x60] sm:$0xff]
    %v5783 = vld [vmem:[%s5769 + $0x68] sm:$0xff]
    %v5784 = vld [vmem:[%s5769 + $0x70] sm:$0xff]
    %v5785 = vld [vmem:[%s5769 + $0x78] sm:$0xff]
    %v5786 = vld [vmem:[%s5769 + $0x80] sm:$0xff]
    %v5787 = vld [vmem:[%s5769 + $0x88] sm:$0xff]
    %v5788 = vld [vmem:[%s5769 + $0x90] sm:$0xff]
    %v5789 = vld [vmem:[%s5769 + $0x98] sm:$0xff]
    %v5790 = vld [vmem:[%s5769 + $0xa0] sm:$0xff]
    %v5791 = vld [vmem:[%s5769 + $0xa8] sm:$0xff]
    %v5792 = vld [vmem:[%s5769 + $0xb0] sm:$0xff]
    %v5793 = vld [vmem:[%s5769 + $0xb8] sm:$0xff]
    %v5794 = vld [vmem:[%s5769 + $0xc0] sm:$0xff]
    %v5795 = vld [vmem:[%s5769 + $0xc8] sm:$0xff]
    %v5796 = vld [vmem:[%s5769 + $0xd0] sm:$0xff]
    %v5797 = vld [vmem:[%s5769 + $0xd8] sm:$0xff]
    %v5798 = vld [vmem:[%s5769 + $0xe0] sm:$0xff]
    %v5799 = vld [vmem:[%s5769 + $0xe8] sm:$0xff]
    %v5800 = vld [vmem:[%s5769 + $0xf0] sm:$0xff]
    %v5801 = vld [vmem:[%s5769 + $0xf8] sm:$0xff]
    %v5802 = vpack.c.bf16 %v5767, %v5767
    %v5803 = vpack.c.bf16 %v5768, %v5768
    %s5804 = scalar_lea.vmem [#allocation12], 34
    %v5805 = vld [vmem:[%s5804] ss:$8 sm:$0x3]
    %v5807 = vperm.slane %v5805, 0
    %v5808 = vperm.slane %v5805, 1
    %v5843 = vunpack.c.l.b16 %v5770
    %v5844 = vunpack.c.h.b16 %v5770
    %v5845 = vunpack.c.l.b16 %v5771
    %v5846 = vunpack.c.h.b16 %v5771
    %v5847 = vunpack.c.l.b16 %v5772
    %v5848 = vunpack.c.h.b16 %v5772
    %v5849 = vunpack.c.l.b16 %v5773
    %v5850 = vunpack.c.h.b16 %v5773
    %v5851 = vunpack.c.l.b16 %v5774
    %v5852 = vunpack.c.h.b16 %v5774
    %v5853 = vunpack.c.l.b16 %v5775
    %v5854 = vunpack.c.h.b16 %v5775
    %v5855 = vunpack.c.l.b16 %v5776
    %v5856 = vunpack.c.h.b16 %v5776
    %v5857 = vunpack.c.l.b16 %v5777
    %v5858 = vunpack.c.h.b16 %v5777
    %v5859 = vunpack.c.l.b16 %v5778
    %v5860 = vunpack.c.h.b16 %v5778
    %v5861 = vunpack.c.l.b16 %v5779
    %v5862 = vunpack.c.h.b16 %v5779
    %v5863 = vunpack.c.l.b16 %v5780
    %v5864 = vunpack.c.h.b16 %v5780
    %v5865 = vunpack.c.l.b16 %v5781
    %v5866 = vunpack.c.h.b16 %v5781
    %v5867 = vunpack.c.l.b16 %v5782
    %v5868 = vunpack.c.h.b16 %v5782
    %v5869 = vunpack.c.l.b16 %v5783
    %v5870 = vunpack.c.h.b16 %v5783
    %v5871 = vunpack.c.l.b16 %v5784
    %v5872 = vunpack.c.h.b16 %v5784
    %v5873 = vunpack.c.l.b16 %v5785
    %v5874 = vunpack.c.h.b16 %v5785
    %v5875 = vunpack.c.l.b16 %v5786
    %v5876 = vunpack.c.h.b16 %v5786
    %v5877 = vunpack.c.l.b16 %v5787
    %v5878 = vunpack.c.h.b16 %v5787
    %v5879 = vunpack.c.l.b16 %v5788
    %v5880 = vunpack.c.h.b16 %v5788
    %v5881 = vunpack.c.l.b16 %v5789
    %v5882 = vunpack.c.h.b16 %v5789
    %v5883 = vunpack.c.l.b16 %v5790
    %v5884 = vunpack.c.h.b16 %v5790
    %v5885 = vunpack.c.l.b16 %v5791
    %v5886 = vunpack.c.h.b16 %v5791
    %v5887 = vunpack.c.l.b16 %v5792
    %v5888 = vunpack.c.h.b16 %v5792
    %v5889 = vunpack.c.l.b16 %v5793
    %v5890 = vunpack.c.h.b16 %v5793
    %v5891 = vunpack.c.l.b16 %v5794
    %v5892 = vunpack.c.h.b16 %v5794
    %v5893 = vunpack.c.l.b16 %v5795
    %v5894 = vunpack.c.h.b16 %v5795
    %v5895 = vunpack.c.l.b16 %v5796
    %v5896 = vunpack.c.h.b16 %v5796
    %v5897 = vunpack.c.l.b16 %v5797
    %v5898 = vunpack.c.h.b16 %v5797
    %v5899 = vunpack.c.l.b16 %v5798
    %v5900 = vunpack.c.h.b16 %v5798
    %v5901 = vunpack.c.l.b16 %v5799
    %v5902 = vunpack.c.h.b16 %v5799
    %v5903 = vunpack.c.l.b16 %v5800
    %v5904 = vunpack.c.h.b16 %v5800
    %v5905 = vunpack.c.l.b16 %v5801
    %v5906 = vunpack.c.h.b16 %v5801
    %v5907 = vpack.c.b16 %v5845, %v5843
    %v5908 = vpack.c.b16 %v5846, %v5844
    %v5909 = vpack.c.b16 %v5849, %v5847
    %v5910 = vpack.c.b16 %v5850, %v5848
    %v5911 = vpack.c.b16 %v5853, %v5851
    %v5912 = vpack.c.b16 %v5854, %v5852
    %v5913 = vpack.c.b16 %v5857, %v5855
    %v5914 = vpack.c.b16 %v5858, %v5856
    %v5915 = vpack.c.b16 %v5861, %v5859
    %v5916 = vpack.c.b16 %v5862, %v5860
    %v5917 = vpack.c.b16 %v5865, %v5863
    %v5918 = vpack.c.b16 %v5866, %v5864
    %v5919 = vpack.c.b16 %v5869, %v5867
    %v5920 = vpack.c.b16 %v5870, %v5868
    %v5921 = vpack.c.b16 %v5873, %v5871
    %v5922 = vpack.c.b16 %v5874, %v5872
    %v5923 = vpack.c.b16 %v5877, %v5875
    %v5924 = vpack.c.b16 %v5878, %v5876
    %v5925 = vpack.c.b16 %v5881, %v5879
    %v5926 = vpack.c.b16 %v5882, %v5880
    %v5927 = vpack.c.b16 %v5885, %v5883
    %v5928 = vpack.c.b16 %v5886, %v5884
    %v5929 = vpack.c.b16 %v5889, %v5887
    %v5930 = vpack.c.b16 %v5890, %v5888
    %v5931 = vpack.c.b16 %v5893, %v5891
    %v5932 = vpack.c.b16 %v5894, %v5892
    %v5933 = vpack.c.b16 %v5897, %v5895
    %v5934 = vpack.c.b16 %v5898, %v5896
    %v5935 = vpack.c.b16 %v5901, %v5899
    %v5936 = vpack.c.b16 %v5902, %v5900
    %v5937 = vpack.c.b16 %v5905, %v5903
    %v5938 = vpack.c.b16 %v5906, %v5904
    %5971 = vmatpush.bf16.msra.mxu0 %v5921
    %5972 = vmatpush.bf16.msra.mxu0 %v5919
    %5973 = vmatpush.bf16.msra.mxu0 %v5917
    %5974 = vmatpush.bf16.msra.mxu0 %v5915
    %5975 = vmatpush.bf16.msra.mxu0 %v5913
    %5976 = vmatpush.bf16.msra.mxu0 %v5911
    %5977 = vmatpush.bf16.msra.mxu0 %v5909
    %5978 = vmatpush.bf16.msra.mxu0 %v5907
    %5979 = vmatmul.bf16.gmra.mxu0 %v5802
    %v5980 = vpop.f32.mrf.mxu0
    %v5981 = vadd.f32 %v5807, %v5980
    %v5982 = vpop.f32.mrf.mxu0
    %5983 = vdwg.mxu0
    %5984 = vmatpush.bf16.msra.mxu0 %v5937
    %5985 = vmatpush.bf16.msra.mxu0 %v5935
    %5986 = vmatpush.bf16.msra.mxu0 %v5933
    %5987 = vmatpush.bf16.msra.mxu0 %v5931
    %5988 = vmatpush.bf16.msra.mxu0 %v5929
    %5989 = vmatpush.bf16.msra.mxu0 %v5927
    %5990 = vmatpush.bf16.msra.mxu0 %v5925
    %5991 = vmatpush.bf16.msra.mxu0 %v5923
    %5992 = vmatmul.bf16.gmra.mxu0 %v5803
    %v5993 = vpop.f32.mrf.mxu0
    %v5994 = vadd.f32 %v5981, %v5993
    %v5995 = vpop.f32.mrf.mxu0
    %5996 = vdwg.mxu0
    %5997 = vmatpush.bf16.msra.mxu0 %v5922
    %5998 = vmatpush.bf16.msra.mxu0 %v5920
    %5999 = vmatpush.bf16.msra.mxu0 %v5918
    %6000 = vmatpush.bf16.msra.mxu0 %v5916
    %6001 = vmatpush.bf16.msra.mxu0 %v5914
    %6002 = vmatpush.bf16.msra.mxu0 %v5912
    %6003 = vmatpush.bf16.msra.mxu0 %v5910
    %6004 = vmatpush.bf16.msra.mxu0 %v5908
    %6005 = vmatmul.bf16.gmra.mxu0 %v5802
    %v6006 = vpop.f32.mrf.mxu0
    %v6007 = vadd.f32 %v5808, %v6006
    %v6008 = vpop.f32.mrf.mxu0
    %6009 = vdwg.mxu0
    %6010 = vmatpush.bf16.msra.mxu0 %v5938
    %6011 = vmatpush.bf16.msra.mxu0 %v5936
    %6012 = vmatpush.bf16.msra.mxu0 %v5934
    %6013 = vmatpush.bf16.msra.mxu0 %v5932
    %6014 = vmatpush.bf16.msra.mxu0 %v5930
    %6015 = vmatpush.bf16.msra.mxu0 %v5928
    %6016 = vmatpush.bf16.msra.mxu0 %v5926
    %6017 = vmatpush.bf16.msra.mxu0 %v5924
    %6018 = vmatmul.bf16.gmra.mxu0 %v5803
    %v6019 = vpop.f32.mrf.mxu0
    %v6020 = vadd.f32 %v6007, %v6019
    %v6021 = vpop.f32.mrf.mxu0
    %6022 = vdwg.mxu0
    %v6023 = vsub.f32 0.0, %v5994
    %v6024 = vsub.f32 0.0, %v6020
    %v6025 = vmul.f32 %v6023, 1.442695
    %v6026 = vpow.pop %v6025
    %v6027 = vmul.f32 %v6024, 1.442695
    %v6028 = vpow.pop %v6027
    %v6029 = vadd.f32 %v6026, 1.0
    %v6030 = vadd.f32 %v6028, 1.0
    %v6031 = vrcp.pop %v6029
    %v6032 = vmul.f32 %v6029, %v6031
    %v6033 = vsub.f32 1.0, %v6032
    %v6034 = vmul.f32 %v6031, %v6033
    %v6035 = vadd.f32 %v6031, %v6034
    %vm6036 = vweird.f32 %v6029
    %vm6037 = vweird.f32 %v6031
    %vm6038 = vmor %vm6036, %vm6037
    %v6039 = vsel %vm6038, %v6031, %v6035
    %v6040 = vand.u32 2147483647, %v6029
    %vm6041 = vcmp.eq.f32.partialorder %v6040, 8.507059e+37
    %v6042 = vand.u32 %v6029, 2147483648
    %v6043 = vor.u32 1.1754944e-38, %v6042
    %v6044 = vsel %vm6041, %v6043, %v6039
    %v6045 = vrcp.pop %v6030
    %v6046 = vmul.f32 %v6030, %v6045
    %v6047 = vsub.f32 1.0, %v6046
    %v6048 = vmul.f32 %v6045, %v6047
    %v6049 = vadd.f32 %v6045, %v6048
    %vm6050 = vweird.f32 %v6030
    %vm6051 = vweird.f32 %v6045
    %vm6052 = vmor %vm6050, %vm6051
    %v6053 = vsel %vm6052, %v6045, %v6049
    %v6054 = vand.u32 2147483647, %v6030
    %vm6055 = vcmp.eq.f32.partialorder %v6054, 8.507059e+37
    %v6056 = vand.u32 %v6030, 2147483648
    %v6057 = vor.u32 1.1754944e-38, %v6056
    %v6058 = vsel %vm6055, %v6057, %v6053
    %v6059 = vmul.f32 %v5994, %v6044
    %v6060 = vmul.f32 %v6020, %v6058
    %s6061 = scalar_lea.vmem [#allocation2], 2560
    %v6062 = vld [vmem:[%s6061] sm:$0xff]
    %v6063 = vld [vmem:[%s6061 + $0x8] sm:$0xff]
    %v6064 = vld [vmem:[%s6061 + $0x10] sm:$0xff]
    %v6065 = vld [vmem:[%s6061 + $0x18] sm:$0xff]
    %v6066 = vld [vmem:[%s6061 + $0x20] sm:$0xff]
    %v6067 = vld [vmem:[%s6061 + $0x28] sm:$0xff]
    %v6068 = vld [vmem:[%s6061 + $0x30] sm:$0xff]
    %v6069 = vld [vmem:[%s6061 + $0x38] sm:$0xff]
    %v6070 = vld [vmem:[%s6061 + $0x40] sm:$0xff]
    %v6071 = vld [vmem:[%s6061 + $0x48] sm:$0xff]
    %v6072 = vld [vmem:[%s6061 + $0x50] sm:$0xff]
    %v6073 = vld [vmem:[%s6061 + $0x58] sm:$0xff]
    %v6074 = vld [vmem:[%s6061 + $0x60] sm:$0xff]
    %v6075 = vld [vmem:[%s6061 + $0x68] sm:$0xff]
    %v6076 = vld [vmem:[%s6061 + $0x70] sm:$0xff]
    %v6077 = vld [vmem:[%s6061 + $0x78] sm:$0xff]
    %v6078 = vld [vmem:[%s6061 + $0x80] sm:$0xff]
    %v6079 = vld [vmem:[%s6061 + $0x88] sm:$0xff]
    %v6080 = vld [vmem:[%s6061 + $0x90] sm:$0xff]
    %v6081 = vld [vmem:[%s6061 + $0x98] sm:$0xff]
    %v6082 = vld [vmem:[%s6061 + $0xa0] sm:$0xff]
    %v6083 = vld [vmem:[%s6061 + $0xa8] sm:$0xff]
    %v6084 = vld [vmem:[%s6061 + $0xb0] sm:$0xff]
    %v6085 = vld [vmem:[%s6061 + $0xb8] sm:$0xff]
    %v6086 = vld [vmem:[%s6061 + $0xc0] sm:$0xff]
    %v6087 = vld [vmem:[%s6061 + $0xc8] sm:$0xff]
    %v6088 = vld [vmem:[%s6061 + $0xd0] sm:$0xff]
    %v6089 = vld [vmem:[%s6061 + $0xd8] sm:$0xff]
    %v6090 = vld [vmem:[%s6061 + $0xe0] sm:$0xff]
    %v6091 = vld [vmem:[%s6061 + $0xe8] sm:$0xff]
    %v6092 = vld [vmem:[%s6061 + $0xf0] sm:$0xff]
    %v6093 = vld [vmem:[%s6061 + $0xf8] sm:$0xff]
    %v6094 = vpack.c.bf16 %v6059, %v6059
    %v6095 = vpack.c.bf16 %v6060, %v6060
    %s6096 = scalar_lea.vmem [#allocation12], 35
    %v6097 = vld [vmem:[%s6096] ss:$8 sm:$0x3]
    %v6099 = vperm.slane %v6097, 0
    %v6100 = vperm.slane %v6097, 1
    %v6135 = vunpack.c.l.b16 %v6062
    %v6136 = vunpack.c.h.b16 %v6062
    %v6137 = vunpack.c.l.b16 %v6063
    %v6138 = vunpack.c.h.b16 %v6063
    %v6139 = vunpack.c.l.b16 %v6064
    %v6140 = vunpack.c.h.b16 %v6064
    %v6141 = vunpack.c.l.b16 %v6065
    %v6142 = vunpack.c.h.b16 %v6065
    %v6143 = vunpack.c.l.b16 %v6066
    %v6144 = vunpack.c.h.b16 %v6066
    %v6145 = vunpack.c.l.b16 %v6067
    %v6146 = vunpack.c.h.b16 %v6067
    %v6147 = vunpack.c.l.b16 %v6068
    %v6148 = vunpack.c.h.b16 %v6068
    %v6149 = vunpack.c.l.b16 %v6069
    %v6150 = vunpack.c.h.b16 %v6069
    %v6151 = vunpack.c.l.b16 %v6070
    %v6152 = vunpack.c.h.b16 %v6070
    %v6153 = vunpack.c.l.b16 %v6071
    %v6154 = vunpack.c.h.b16 %v6071
    %v6155 = vunpack.c.l.b16 %v6072
    %v6156 = vunpack.c.h.b16 %v6072
    %v6157 = vunpack.c.l.b16 %v6073
    %v6158 = vunpack.c.h.b16 %v6073
    %v6159 = vunpack.c.l.b16 %v6074
    %v6160 = vunpack.c.h.b16 %v6074
    %v6161 = vunpack.c.l.b16 %v6075
    %v6162 = vunpack.c.h.b16 %v6075
    %v6163 = vunpack.c.l.b16 %v6076
    %v6164 = vunpack.c.h.b16 %v6076
    %v6165 = vunpack.c.l.b16 %v6077
    %v6166 = vunpack.c.h.b16 %v6077
    %v6167 = vunpack.c.l.b16 %v6078
    %v6168 = vunpack.c.h.b16 %v6078
    %v6169 = vunpack.c.l.b16 %v6079
    %v6170 = vunpack.c.h.b16 %v6079
    %v6171 = vunpack.c.l.b16 %v6080
    %v6172 = vunpack.c.h.b16 %v6080
    %v6173 = vunpack.c.l.b16 %v6081
    %v6174 = vunpack.c.h.b16 %v6081
    %v6175 = vunpack.c.l.b16 %v6082
    %v6176 = vunpack.c.h.b16 %v6082
    %v6177 = vunpack.c.l.b16 %v6083
    %v6178 = vunpack.c.h.b16 %v6083
    %v6179 = vunpack.c.l.b16 %v6084
    %v6180 = vunpack.c.h.b16 %v6084
    %v6181 = vunpack.c.l.b16 %v6085
    %v6182 = vunpack.c.h.b16 %v6085
    %v6183 = vunpack.c.l.b16 %v6086
    %v6184 = vunpack.c.h.b16 %v6086
    %v6185 = vunpack.c.l.b16 %v6087
    %v6186 = vunpack.c.h.b16 %v6087
    %v6187 = vunpack.c.l.b16 %v6088
    %v6188 = vunpack.c.h.b16 %v6088
    %v6189 = vunpack.c.l.b16 %v6089
    %v6190 = vunpack.c.h.b16 %v6089
    %v6191 = vunpack.c.l.b16 %v6090
    %v6192 = vunpack.c.h.b16 %v6090
    %v6193 = vunpack.c.l.b16 %v6091
    %v6194 = vunpack.c.h.b16 %v6091
    %v6195 = vunpack.c.l.b16 %v6092
    %v6196 = vunpack.c.h.b16 %v6092
    %v6197 = vunpack.c.l.b16 %v6093
    %v6198 = vunpack.c.h.b16 %v6093
    %v6199 = vpack.c.b16 %v6137, %v6135
    %v6200 = vpack.c.b16 %v6138, %v6136
    %v6201 = vpack.c.b16 %v6141, %v6139
    %v6202 = vpack.c.b16 %v6142, %v6140
    %v6203 = vpack.c.b16 %v6145, %v6143
    %v6204 = vpack.c.b16 %v6146, %v6144
    %v6205 = vpack.c.b16 %v6149, %v6147
    %v6206 = vpack.c.b16 %v6150, %v6148
    %v6207 = vpack.c.b16 %v6153, %v6151
    %v6208 = vpack.c.b16 %v6154, %v6152
    %v6209 = vpack.c.b16 %v6157, %v6155
    %v6210 = vpack.c.b16 %v6158, %v6156
    %v6211 = vpack.c.b16 %v6161, %v6159
    %v6212 = vpack.c.b16 %v6162, %v6160
    %v6213 = vpack.c.b16 %v6165, %v6163
    %v6214 = vpack.c.b16 %v6166, %v6164
    %v6215 = vpack.c.b16 %v6169, %v6167
    %v6216 = vpack.c.b16 %v6170, %v6168
    %v6217 = vpack.c.b16 %v6173, %v6171
    %v6218 = vpack.c.b16 %v6174, %v6172
    %v6219 = vpack.c.b16 %v6177, %v6175
    %v6220 = vpack.c.b16 %v6178, %v6176
    %v6221 = vpack.c.b16 %v6181, %v6179
    %v6222 = vpack.c.b16 %v6182, %v6180
    %v6223 = vpack.c.b16 %v6185, %v6183
    %v6224 = vpack.c.b16 %v6186, %v6184
    %v6225 = vpack.c.b16 %v6189, %v6187
    %v6226 = vpack.c.b16 %v6190, %v6188
    %v6227 = vpack.c.b16 %v6193, %v6191
    %v6228 = vpack.c.b16 %v6194, %v6192
    %v6229 = vpack.c.b16 %v6197, %v6195
    %v6230 = vpack.c.b16 %v6198, %v6196
    %6263 = vmatpush.bf16.msra.mxu0 %v6213
    %6264 = vmatpush.bf16.msra.mxu0 %v6211
    %6265 = vmatpush.bf16.msra.mxu0 %v6209
    %6266 = vmatpush.bf16.msra.mxu0 %v6207
    %6267 = vmatpush.bf16.msra.mxu0 %v6205
    %6268 = vmatpush.bf16.msra.mxu0 %v6203
    %6269 = vmatpush.bf16.msra.mxu0 %v6201
    %6270 = vmatpush.bf16.msra.mxu0 %v6199
    %6271 = vmatmul.bf16.gmra.mxu0 %v6094
    %v6272 = vpop.f32.mrf.mxu0
    %v6273 = vadd.f32 %v6099, %v6272
    %v6274 = vpop.f32.mrf.mxu0
    %6275 = vdwg.mxu0
    %6276 = vmatpush.bf16.msra.mxu0 %v6229
    %6277 = vmatpush.bf16.msra.mxu0 %v6227
    %6278 = vmatpush.bf16.msra.mxu0 %v6225
    %6279 = vmatpush.bf16.msra.mxu0 %v6223
    %6280 = vmatpush.bf16.msra.mxu0 %v6221
    %6281 = vmatpush.bf16.msra.mxu0 %v6219
    %6282 = vmatpush.bf16.msra.mxu0 %v6217
    %6283 = vmatpush.bf16.msra.mxu0 %v6215
    %6284 = vmatmul.bf16.gmra.mxu0 %v6095
    %v6285 = vpop.f32.mrf.mxu0
    %v6286 = vadd.f32 %v6273, %v6285
    %v6287 = vpop.f32.mrf.mxu0
    %6288 = vdwg.mxu0
    %6289 = vmatpush.bf16.msra.mxu0 %v6214
    %6290 = vmatpush.bf16.msra.mxu0 %v6212
    %6291 = vmatpush.bf16.msra.mxu0 %v6210
    %6292 = vmatpush.bf16.msra.mxu0 %v6208
    %6293 = vmatpush.bf16.msra.mxu0 %v6206
    %6294 = vmatpush.bf16.msra.mxu0 %v6204
    %6295 = vmatpush.bf16.msra.mxu0 %v6202
    %6296 = vmatpush.bf16.msra.mxu0 %v6200
    %6297 = vmatmul.bf16.gmra.mxu0 %v6094
    %v6298 = vpop.f32.mrf.mxu0
    %v6299 = vadd.f32 %v6100, %v6298
    %v6300 = vpop.f32.mrf.mxu0
    %6301 = vdwg.mxu0
    %6302 = vmatpush.bf16.msra.mxu0 %v6230
    %6303 = vmatpush.bf16.msra.mxu0 %v6228
    %6304 = vmatpush.bf16.msra.mxu0 %v6226
    %6305 = vmatpush.bf16.msra.mxu0 %v6224
    %6306 = vmatpush.bf16.msra.mxu0 %v6222
    %6307 = vmatpush.bf16.msra.mxu0 %v6220
    %6308 = vmatpush.bf16.msra.mxu0 %v6218
    %6309 = vmatpush.bf16.msra.mxu0 %v6216
    %6310 = vmatmul.bf16.gmra.mxu0 %v6095
    %v6311 = vpop.f32.mrf.mxu0
    %v6312 = vadd.f32 %v6299, %v6311
    %v6313 = vpop.f32.mrf.mxu0
    %6314 = vdwg.mxu0
    %v6315 = vsub.f32 0.0, %v6286
    %v6316 = vsub.f32 0.0, %v6312
    %v6317 = vmul.f32 %v6315, 1.442695
    %v6318 = vpow.pop %v6317
    %v6319 = vmul.f32 %v6316, 1.442695
    %v6320 = vpow.pop %v6319
    %v6321 = vadd.f32 %v6318, 1.0
    %v6322 = vadd.f32 %v6320, 1.0
    %v6323 = vrcp.pop %v6321
    %v6324 = vmul.f32 %v6321, %v6323
    %v6325 = vsub.f32 1.0, %v6324
    %v6326 = vmul.f32 %v6323, %v6325
    %v6327 = vadd.f32 %v6323, %v6326
    %vm6328 = vweird.f32 %v6321
    %vm6329 = vweird.f32 %v6323
    %vm6330 = vmor %vm6328, %vm6329
    %v6331 = vsel %vm6330, %v6323, %v6327
    %v6332 = vand.u32 2147483647, %v6321
    %vm6333 = vcmp.eq.f32.partialorder %v6332, 8.507059e+37
    %v6334 = vand.u32 %v6321, 2147483648
    %v6335 = vor.u32 1.1754944e-38, %v6334
    %v6336 = vsel %vm6333, %v6335, %v6331
    %v6337 = vrcp.pop %v6322
    %v6338 = vmul.f32 %v6322, %v6337
    %v6339 = vsub.f32 1.0, %v6338
    %v6340 = vmul.f32 %v6337, %v6339
    %v6341 = vadd.f32 %v6337, %v6340
    %vm6342 = vweird.f32 %v6322
    %vm6343 = vweird.f32 %v6337
    %vm6344 = vmor %vm6342, %vm6343
    %v6345 = vsel %vm6344, %v6337, %v6341
    %v6346 = vand.u32 2147483647, %v6322
    %vm6347 = vcmp.eq.f32.partialorder %v6346, 8.507059e+37
    %v6348 = vand.u32 %v6322, 2147483648
    %v6349 = vor.u32 1.1754944e-38, %v6348
    %v6350 = vsel %vm6347, %v6349, %v6345
    %v6351 = vmul.f32 %v6286, %v6336
    %v6352 = vmul.f32 %v6312, %v6350
    %s6353 = scalar_lea.vmem [#allocation2], 2816
    %v6354 = vld [vmem:[%s6353] sm:$0xff]
    %v6355 = vld [vmem:[%s6353 + $0x8] sm:$0xff]
    %v6356 = vld [vmem:[%s6353 + $0x10] sm:$0xff]
    %v6357 = vld [vmem:[%s6353 + $0x18] sm:$0xff]
    %v6358 = vld [vmem:[%s6353 + $0x20] sm:$0xff]
    %v6359 = vld [vmem:[%s6353 + $0x28] sm:$0xff]
    %v6360 = vld [vmem:[%s6353 + $0x30] sm:$0xff]
    %v6361 = vld [vmem:[%s6353 + $0x38] sm:$0xff]
    %v6362 = vld [vmem:[%s6353 + $0x40] sm:$0xff]
    %v6363 = vld [vmem:[%s6353 + $0x48] sm:$0xff]
    %v6364 = vld [vmem:[%s6353 + $0x50] sm:$0xff]
    %v6365 = vld [vmem:[%s6353 + $0x58] sm:$0xff]
    %v6366 = vld [vmem:[%s6353 + $0x60] sm:$0xff]
    %v6367 = vld [vmem:[%s6353 + $0x68] sm:$0xff]
    %v6368 = vld [vmem:[%s6353 + $0x70] sm:$0xff]
    %v6369 = vld [vmem:[%s6353 + $0x78] sm:$0xff]
    %v6370 = vld [vmem:[%s6353 + $0x80] sm:$0xff]
    %v6371 = vld [vmem:[%s6353 + $0x88] sm:$0xff]
    %v6372 = vld [vmem:[%s6353 + $0x90] sm:$0xff]
    %v6373 = vld [vmem:[%s6353 + $0x98] sm:$0xff]
    %v6374 = vld [vmem:[%s6353 + $0xa0] sm:$0xff]
    %v6375 = vld [vmem:[%s6353 + $0xa8] sm:$0xff]
    %v6376 = vld [vmem:[%s6353 + $0xb0] sm:$0xff]
    %v6377 = vld [vmem:[%s6353 + $0xb8] sm:$0xff]
    %v6378 = vld [vmem:[%s6353 + $0xc0] sm:$0xff]
    %v6379 = vld [vmem:[%s6353 + $0xc8] sm:$0xff]
    %v6380 = vld [vmem:[%s6353 + $0xd0] sm:$0xff]
    %v6381 = vld [vmem:[%s6353 + $0xd8] sm:$0xff]
    %v6382 = vld [vmem:[%s6353 + $0xe0] sm:$0xff]
    %v6383 = vld [vmem:[%s6353 + $0xe8] sm:$0xff]
    %v6384 = vld [vmem:[%s6353 + $0xf0] sm:$0xff]
    %v6385 = vld [vmem:[%s6353 + $0xf8] sm:$0xff]
    %v6386 = vpack.c.bf16 %v6351, %v6351
    %v6387 = vpack.c.bf16 %v6352, %v6352
    %s6388 = scalar_lea.vmem [#allocation12], 36
    %v6389 = vld [vmem:[%s6388] ss:$8 sm:$0x3]
    %v6391 = vperm.slane %v6389, 0
    %v6392 = vperm.slane %v6389, 1
    %v6427 = vunpack.c.l.b16 %v6354
    %v6428 = vunpack.c.h.b16 %v6354
    %v6429 = vunpack.c.l.b16 %v6355
    %v6430 = vunpack.c.h.b16 %v6355
    %v6431 = vunpack.c.l.b16 %v6356
    %v6432 = vunpack.c.h.b16 %v6356
    %v6433 = vunpack.c.l.b16 %v6357
    %v6434 = vunpack.c.h.b16 %v6357
    %v6435 = vunpack.c.l.b16 %v6358
    %v6436 = vunpack.c.h.b16 %v6358
    %v6437 = vunpack.c.l.b16 %v6359
    %v6438 = vunpack.c.h.b16 %v6359
    %v6439 = vunpack.c.l.b16 %v6360
    %v6440 = vunpack.c.h.b16 %v6360
    %v6441 = vunpack.c.l.b16 %v6361
    %v6442 = vunpack.c.h.b16 %v6361
    %v6443 = vunpack.c.l.b16 %v6362
    %v6444 = vunpack.c.h.b16 %v6362
    %v6445 = vunpack.c.l.b16 %v6363
    %v6446 = vunpack.c.h.b16 %v6363
    %v6447 = vunpack.c.l.b16 %v6364
    %v6448 = vunpack.c.h.b16 %v6364
    %v6449 = vunpack.c.l.b16 %v6365
    %v6450 = vunpack.c.h.b16 %v6365
    %v6451 = vunpack.c.l.b16 %v6366
    %v6452 = vunpack.c.h.b16 %v6366
    %v6453 = vunpack.c.l.b16 %v6367
    %v6454 = vunpack.c.h.b16 %v6367
    %v6455 = vunpack.c.l.b16 %v6368
    %v6456 = vunpack.c.h.b16 %v6368
    %v6457 = vunpack.c.l.b16 %v6369
    %v6458 = vunpack.c.h.b16 %v6369
    %v6459 = vunpack.c.l.b16 %v6370
    %v6460 = vunpack.c.h.b16 %v6370
    %v6461 = vunpack.c.l.b16 %v6371
    %v6462 = vunpack.c.h.b16 %v6371
    %v6463 = vunpack.c.l.b16 %v6372
    %v6464 = vunpack.c.h.b16 %v6372
    %v6465 = vunpack.c.l.b16 %v6373
    %v6466 = vunpack.c.h.b16 %v6373
    %v6467 = vunpack.c.l.b16 %v6374
    %v6468 = vunpack.c.h.b16 %v6374
    %v6469 = vunpack.c.l.b16 %v6375
    %v6470 = vunpack.c.h.b16 %v6375
    %v6471 = vunpack.c.l.b16 %v6376
    %v6472 = vunpack.c.h.b16 %v6376
    %v6473 = vunpack.c.l.b16 %v6377
    %v6474 = vunpack.c.h.b16 %v6377
    %v6475 = vunpack.c.l.b16 %v6378
    %v6476 = vunpack.c.h.b16 %v6378
    %v6477 = vunpack.c.l.b16 %v6379
    %v6478 = vunpack.c.h.b16 %v6379
    %v6479 = vunpack.c.l.b16 %v6380
    %v6480 = vunpack.c.h.b16 %v6380
    %v6481 = vunpack.c.l.b16 %v6381
    %v6482 = vunpack.c.h.b16 %v6381
    %v6483 = vunpack.c.l.b16 %v6382
    %v6484 = vunpack.c.h.b16 %v6382
    %v6485 = vunpack.c.l.b16 %v6383
    %v6486 = vunpack.c.h.b16 %v6383
    %v6487 = vunpack.c.l.b16 %v6384
    %v6488 = vunpack.c.h.b16 %v6384
    %v6489 = vunpack.c.l.b16 %v6385
    %v6490 = vunpack.c.h.b16 %v6385
    %v6491 = vpack.c.b16 %v6429, %v6427
    %v6492 = vpack.c.b16 %v6430, %v6428
    %v6493 = vpack.c.b16 %v6433, %v6431
    %v6494 = vpack.c.b16 %v6434, %v6432
    %v6495 = vpack.c.b16 %v6437, %v6435
    %v6496 = vpack.c.b16 %v6438, %v6436
    %v6497 = vpack.c.b16 %v6441, %v6439
    %v6498 = vpack.c.b16 %v6442, %v6440
    %v6499 = vpack.c.b16 %v6445, %v6443
    %v6500 = vpack.c.b16 %v6446, %v6444
    %v6501 = vpack.c.b16 %v6449, %v6447
    %v6502 = vpack.c.b16 %v6450, %v6448
    %v6503 = vpack.c.b16 %v6453, %v6451
    %v6504 = vpack.c.b16 %v6454, %v6452
    %v6505 = vpack.c.b16 %v6457, %v6455
    %v6506 = vpack.c.b16 %v6458, %v6456
    %v6507 = vpack.c.b16 %v6461, %v6459
    %v6508 = vpack.c.b16 %v6462, %v6460
    %v6509 = vpack.c.b16 %v6465, %v6463
    %v6510 = vpack.c.b16 %v6466, %v6464
    %v6511 = vpack.c.b16 %v6469, %v6467
    %v6512 = vpack.c.b16 %v6470, %v6468
    %v6513 = vpack.c.b16 %v6473, %v6471
    %v6514 = vpack.c.b16 %v6474, %v6472
    %v6515 = vpack.c.b16 %v6477, %v6475
    %v6516 = vpack.c.b16 %v6478, %v6476
    %v6517 = vpack.c.b16 %v6481, %v6479
    %v6518 = vpack.c.b16 %v6482, %v6480
    %v6519 = vpack.c.b16 %v6485, %v6483
    %v6520 = vpack.c.b16 %v6486, %v6484
    %v6521 = vpack.c.b16 %v6489, %v6487
    %v6522 = vpack.c.b16 %v6490, %v6488
    %6555 = vmatpush.bf16.msra.mxu0 %v6505
    %6556 = vmatpush.bf16.msra.mxu0 %v6503
    %6557 = vmatpush.bf16.msra.mxu0 %v6501
    %6558 = vmatpush.bf16.msra.mxu0 %v6499
    %6559 = vmatpush.bf16.msra.mxu0 %v6497
    %6560 = vmatpush.bf16.msra.mxu0 %v6495
    %6561 = vmatpush.bf16.msra.mxu0 %v6493
    %6562 = vmatpush.bf16.msra.mxu0 %v6491
    %6563 = vmatmul.bf16.gmra.mxu0 %v6386
    %v6564 = vpop.f32.mrf.mxu0
    %v6565 = vadd.f32 %v6391, %v6564
    %v6566 = vpop.f32.mrf.mxu0
    %6567 = vdwg.mxu0
    %6568 = vmatpush.bf16.msra.mxu0 %v6521
    %6569 = vmatpush.bf16.msra.mxu0 %v6519
    %6570 = vmatpush.bf16.msra.mxu0 %v6517
    %6571 = vmatpush.bf16.msra.mxu0 %v6515
    %6572 = vmatpush.bf16.msra.mxu0 %v6513
    %6573 = vmatpush.bf16.msra.mxu0 %v6511
    %6574 = vmatpush.bf16.msra.mxu0 %v6509
    %6575 = vmatpush.bf16.msra.mxu0 %v6507
    %6576 = vmatmul.bf16.gmra.mxu0 %v6387
    %v6577 = vpop.f32.mrf.mxu0
    %v6578 = vadd.f32 %v6565, %v6577
    %v6579 = vpop.f32.mrf.mxu0
    %6580 = vdwg.mxu0
    %6581 = vmatpush.bf16.msra.mxu0 %v6506
    %6582 = vmatpush.bf16.msra.mxu0 %v6504
    %6583 = vmatpush.bf16.msra.mxu0 %v6502
    %6584 = vmatpush.bf16.msra.mxu0 %v6500
    %6585 = vmatpush.bf16.msra.mxu0 %v6498
    %6586 = vmatpush.bf16.msra.mxu0 %v6496
    %6587 = vmatpush.bf16.msra.mxu0 %v6494
    %6588 = vmatpush.bf16.msra.mxu0 %v6492
    %6589 = vmatmul.bf16.gmra.mxu0 %v6386
    %v6590 = vpop.f32.mrf.mxu0
    %v6591 = vadd.f32 %v6392, %v6590
    %v6592 = vpop.f32.mrf.mxu0
    %6593 = vdwg.mxu0
    %6594 = vmatpush.bf16.msra.mxu0 %v6522
    %6595 = vmatpush.bf16.msra.mxu0 %v6520
    %6596 = vmatpush.bf16.msra.mxu0 %v6518
    %6597 = vmatpush.bf16.msra.mxu0 %v6516
    %6598 = vmatpush.bf16.msra.mxu0 %v6514
    %6599 = vmatpush.bf16.msra.mxu0 %v6512
    %6600 = vmatpush.bf16.msra.mxu0 %v6510
    %6601 = vmatpush.bf16.msra.mxu0 %v6508
    %6602 = vmatmul.bf16.gmra.mxu0 %v6387
    %v6603 = vpop.f32.mrf.mxu0
    %v6604 = vadd.f32 %v6591, %v6603
    %v6605 = vpop.f32.mrf.mxu0
    %6606 = vdwg.mxu0
    %6607 = vst [vmem:[#allocation16] sm:$0xff] %v6578
    %6608 = vst [vmem:[#allocation16 + $0x8] sm:$0xff] %v6604
    // Predicated region
    $region62: #{icm_forward.1} parent=1 // pred_check
      _
    $region63: #{icm_forward.1} parent=1 // pred_check_branch
      %6610 = sbr.rel (0) target = $region65
    $region64: #{icm_forward.1} parent=1 // pred_region
      %6612 = vsyncadd [#allocation6], 0
      %s6614 = sshll.u32 [#allocation15], 4
      %s6615 = int_to_ptr.vmem [resolvable:$true] %s6614
      %s6616 = sshll.u32 %s9, 4
      %s6617 = int_to_ptr.hbm [resolvable:$true] %s6616
      %6619 = dma.vmem_to_hbm [thread:$0]  %s6615, 256, %s6617, [#allocation6]
    $region65: #{icm_forward.1} parent=1 // pred_fallthru
      _
    // Predicated region
    $region66: #{icm_forward.1} parent=1 // pred_check
      _
    $region67: #{icm_forward.1} parent=1 // pred_check_branch
      %6621 = sbr.rel (0) target = $region69
    $region68: #{icm_forward.1} parent=1 // pred_region
      %6623 = vsyncadd [#allocation17], 0
      %s6625 = sshll.u32 [#allocation16], 4
      %s6626 = int_to_ptr.vmem [resolvable:$true] %s6625
      %s6627 = sshll.u32 %s10, 4
      %s6628 = int_to_ptr.hbm [resolvable:$true] %s6627
      %6630 = dma.vmem_to_hbm [thread:$0]  %s6626, 256, %s6628, [#allocation17]
    $region69: #{icm_forward.1} parent=1 // pred_fallthru
      _
    // Predicated region
    $region70: #{icm_forward.1} parent=1 // pred_check
      _
    $region71: #{icm_forward.1} parent=1 // pred_check_branch
      %6632 = sbr.rel (0) target = $region73
    $region72: #{icm_forward.1} parent=1 // pred_region
      %6634 = vsyncadd [#allocation17], 0
      %s6636 = sshll.u32 [#allocation18], 4
      %s6637 = int_to_ptr.vmem [resolvable:$true] %s6636
      %s6638 = sshll.u32 %s11, 4
      %s6639 = int_to_ptr.hbm [resolvable:$true] %s6638
      %6641 = dma.vmem_to_hbm [thread:$0]  %s6637, 128, %s6639, [#allocation17]
    $region73: #{icm_forward.1} parent=1 // pred_fallthru
      _
    // Predicated region
    $region74: #{icm_forward.1} parent=1 // pred_check
      _
    $region75: #{icm_forward.1} parent=1 // pred_check_branch
      %6643 = sbr.rel (0) target = $region77
    $region76: #{icm_forward.1} parent=1 // pred_region
      %6645 = dma.done [#allocation6], 256
    $region77: #{icm_forward.1} parent=1 // pred_fallthru
      _
    // Predicated region
    $region78: #{icm_forward.1} parent=1 // pred_check
      _
    $region79: #{icm_forward.1} parent=1 // pred_check_branch
      %6647 = sbr.rel (0) target = $region81
    $region80: #{icm_forward.1} parent=1 // pred_region
      %6649 = dma.done [#allocation17], 256
    $region81: #{icm_forward.1} parent=1 // pred_fallthru
      _
    // Predicated region
    $region82: #{icm_forward.1} parent=1 // pred_check
      _
    $region83: #{icm_forward.1} parent=1 // pred_check_branch
      %6651 = sbr.rel (0) target = $region85
    $region84: #{icm_forward.1} parent=1 // pred_region
      %6653 = dma.done [#allocation17], 128
    $region85: #{icm_forward.1} parent=1 // pred_fallthru
      _
    %6654 = vsyncpa [#allocation5], 1
    %6655 = vsyncpa [#allocation8], 1
    %6656 = vsyncpa [#allocation11], 1
    %6657 = vsyncpa [#allocation14], 1
    %6658 = vsyncpa [#allocation6], 1
    %6659 = vsyncpa [#allocation17], 1
  %6660 = vsyncmov [#allocation3]
  %s6661 = vpop.sfrf %6660
  %p6662 = scmp.eq.s32.totalorder %s6661, 0
  %p6663 = pneg %p6662
  %6665 = shalt.err (%p6663)

</llo_original>
